<compile_context>
chip_gen: v5e
topology: v5e:2x2
jax: 0.10.0
libtpu: 0.0.40
codegen_flags: <defaults>
</compile_context>

<pallas_src>
import functools

import jax
import jax.numpy as jnp
from jax import lax
from jax.experimental import pallas as pl
from jax.experimental.pallas import tpu as pltpu

# ---- small config consistent with the module (img % patch == 0) ----
IMG = 16          # img_size
PATCH = 2         # patch_size
IN_CH = 3         # in_chans
DIM = 32          # embed_dim
INTER = DIM // 2  # SpatialGCN inter_plane
STRIDE = IMG // PATCH   # LocalContext window size (= 8)
HP = IMG // PATCH       # output patch grid (8 x 8)
NTOK = HP * HP          # 64 output tokens
BN_EPS = 1e-5
LN_EPS = 1e-5
K1 = 32                 # conv1 im2col width (9*IN_CH = 27 zero-padded to 32)

_VMEM_SPEC = functools.partial(pl.BlockSpec, memory_space=pltpu.MemorySpace.VMEM)


def _call(kernel, out_shape, n_in, scratch_shapes=()):
    """Single-invocation pallas_call (no grid): whole batch resident in VMEM."""
    return pl.pallas_call(
        kernel,
        out_shape=out_shape,
        in_specs=[_VMEM_SPEC() for _ in range(n_in)],
        out_specs=_VMEM_SPEC(),
        scratch_shapes=list(scratch_shapes),
    )


# ----------------------------------------------------------------------------
# Kernel 1: stem = conv3x3(Cin->E)+BN+ReLU -> conv3x3(E->E)+BN+ReLU
# ----------------------------------------------------------------------------
def _stem_kernel(cols_ref, w_ref, b_ref, o_ref, pad_ref, im_ref):
    # cols_ref: (B*H*W, K1)        bf16  im2col of the zero-padded input (27->K1)
    # w_ref:    (K1 + 9*E, E)      bf16  [conv1 | conv2 im2col slab], BN folded
    # b_ref:    (2, E)             f32   [conv1 bias, conv2 bias]     (BN folded)
    # o_ref:    (B*H*W, E)         f32
    # pad_ref:  (B, H+2, W+2, E)   f32 scratch (zero border for conv2)
    # im_ref:   (B*H*W, 9*E)       f32 scratch (conv2 im2col)
    B, Hp2, Wp2, E = pad_ref.shape
    H, W = Hp2 - 2, Wp2 - 2
    M = B * H * W

    # conv1 (+BN+ReLU folded): single K=K1 matmul.
    h1 = jnp.dot(cols_ref[...], w_ref[0:K1, :], preferred_element_type=jnp.float32)
    h1 = jnp.maximum(h1 + b_ref[0:1, :], 0.0)

    # conv2 as ONE K=9*E matmul: build the im2col once from the padded scratch
    # (the 41 KB zero-fill is one-time; only the 1-pixel border is read as zero).
    pad_ref[...] = jnp.zeros(pad_ref.shape, jnp.float32)
    pad_ref[:, 1:H + 1, 1:W + 1, :] = h1.reshape(B, H, W, E)
    for di in range(3):
        for dj in range(3):
            k = di * 3 + dj
            im_ref[:, k * E:(k + 1) * E] = (
                pad_ref[:, di:di + H, dj:dj + W, :].reshape(M, E))

    h2 = jnp.dot(im_ref[...].astype(jnp.bfloat16), w_ref[K1:K1 + 9 * E, :],
                 preferred_element_type=jnp.float32)
    o_ref[...] = jnp.maximum(h2 + b_ref[1:2, :], 0.0)


# ----------------------------------------------------------------------------
# Kernel 2: SpatialGCN on all windows at once (window-batched attention)
# ----------------------------------------------------------------------------
def _gcn_kernel(xnc_ref, xcn_ref, w_ref, b_ref, bq_ref, o_ref):
    # xnc_ref: (NW, n, C)     f32   token-major windows (k/v projection, residual)
    # xcn_ref: (NW, C, n)     bf16  channel-major windows (node_q path)
    # w_ref:   (C + 2*ci, C)  bf16  [node_k|node_v (C rows) ; node_q (ci) ; fused post (ci)]
    # b_ref:   (2, C)         f32   [b_k|b_v ; fused post bias]
    # bq_ref:  (ci, 1)        f32
    # o_ref:   (NW, n, C)     f32
    NW, n, C = xnc_ref.shape
    ci = C // 2

    x_flat = xnc_ref[...].reshape(NW * n, C)
    xb = x_flat.astype(jnp.bfloat16)

    # node_k / node_v fused: one (NW*n, C) @ (C, 2*ci) MXU dot.
    kv = jnp.dot(xb, w_ref[0:C, :], preferred_element_type=jnp.float32) + b_ref[0:1, :]
    k_nc = kv[:, 0:ci].reshape(NW, n, ci)
    v_nc = kv[:, ci:2 * ci].reshape(NW, n, ci)

    # node_q must be channel-major (token axis on lanes) so the q@v contraction
    # over tokens stays in a Mosaic-supported batched-matmul form; the
    # (NW, ci, C) weight broadcast is ~8 KB of bf16.
    # TODO(synk): folding q into the token-major kv matmul needs a batched
    # minor-dims transpose of q; kept on the proven broadcast+einsum path.
    wq_b = jnp.broadcast_to(w_ref[C:C + ci, :], (NW, ci, C))
    q_cn = jnp.einsum('bic,bcm->bim', wq_b, xcn_ref[...],
                      preferred_element_type=jnp.float32) + bq_ref[...]

    # AV = softmax(node_q @ node_v, dim=-1)          -> (NW, ci, ci), f32 stats
    a = jnp.einsum('bin,bnj->bij', q_cn.astype(jnp.bfloat16),
                   v_nc.astype(jnp.bfloat16), preferred_element_type=jnp.float32)
    a = a - jnp.max(a, axis=-1, keepdims=True)
    e = jnp.exp(a)
    p = e * pl.reciprocal(jnp.sum(e, axis=-1, keepdims=True), approx=True)

    # node_k @ AV                                     -> (NW, n, ci)
    av = jnp.einsum('bnc,bcd->bnd', k_nc.astype(jnp.bfloat16),
                    p.astype(jnp.bfloat16), preferred_element_type=jnp.float32)
    av_flat = av.reshape(NW * n, ci)

    # conv_wg + bn_wg + out-conv + BN are all per-token affine with no
    # activation between them: fused at init into one (ci, C) map.
    o = jnp.dot(av_flat.astype(jnp.bfloat16), w_ref[C + ci:C + 2 * ci, :],
                preferred_element_type=jnp.float32) + b_ref[1:2, :]
    out = jnp.maximum(o + x_flat, 0.0)             # residual + ReLU in f32
    o_ref[...] = out.reshape(NW, n, C)


# ----------------------------------------------------------------------------
# Kernel 3: proj(conv_x)+proj(merge(local)) -> conv2 (x2) -> merge -> LayerNorm
# ----------------------------------------------------------------------------
def _head_kernel(pcols_ref, w_ref, b_ref, o_ref, pad_ref, im_ref):
    # pcols_ref: (B*Np, 2*pp*E)          bf16  [conv_x patch cols | local patch cols]
    # w_ref:     (2*pp*E + 19*E, E)      bf16  [proj (LC-merge folded into the
    #                                          local half) | conv2a | conv2b | merge]
    # b_ref:     (6, E) f32  [proj total bias, conv2a, conv2b, merge, ln_g, ln_b]
    # o_ref:     (B, Np, E) f32
    # pad_ref:   (B, Hp+2, Wp+2, E) f32 scratch
    # im_ref:    (B*Np, 9*E)        f32 scratch
    B, Hp2, Wp2, E = pad_ref.shape
    Hp, Wp = Hp2 - 2, Wp2 - 2
    M = B * Hp * Wp
    kp = pcols_ref.shape[1]                        # 2*pp*E = 256

    # proj(conv_x) + proj(merge(local)): ONE K=2*pp*E matmul; LocalContext.merge
    # and the doubled proj bias are folded into the weight slab at init.
    x = jnp.dot(pcols_ref[...], w_ref[0:kp, :],
                preferred_element_type=jnp.float32) + b_ref[0:1, :]

    pad_ref[...] = jnp.zeros(pad_ref.shape, jnp.float32)

    def conv3x3(tokens, row0, bias_row):
        # 3x3 same-pad conv (+BN folded) + ReLU as ONE K=9*E matmul.
        pad_ref[:, 1:Hp + 1, 1:Wp + 1, :] = tokens.reshape(B, Hp, Wp, E)
        for di in range(3):
            for dj in range(3):
                k = di * 3 + dj
                im_ref[:, k * E:(k + 1) * E] = (
                    pad_ref[:, di:di + Hp, dj:dj + Wp, :].reshape(M, E))
        r = jnp.dot(im_ref[...].astype(jnp.bfloat16),
                    w_ref[row0:row0 + 9 * E, :],
                    preferred_element_type=jnp.float32)
        return jnp.maximum(r + bias_row, 0.0)

    h = conv3x3(x, kp, b_ref[1:2, :])              # conv2 block 1 (BN folded)
    h = conv3x3(h, kp + 9 * E, b_ref[2:3, :])      # conv2 block 2 (BN folded)

    # final 1x1 merge + LayerNorm (f32 statistics)
    m = jnp.dot(h.astype(jnp.bfloat16), w_ref[kp + 18 * E:kp + 19 * E, :],
                preferred_element_type=jnp.float32) + b_ref[3:4, :]
    mu = jnp.mean(m, axis=-1, keepdims=True)
    var = jnp.mean((m - mu) ** 2, axis=-1, keepdims=True)
    y = (m - mu) * lax.rsqrt(var + LN_EPS) * b_ref[4:5, :] + b_ref[5:6, :]
    o_ref[...] = y.reshape(B, Hp * Wp, E)


# ----------------------------------------------------------------------------
# Forward wrapper (plain-JAX glue = pure data movement only)
# ----------------------------------------------------------------------------
def patch_embed_forward(x, params):
    """x: (B, IN_CH, IMG, IMG) NCHW, like the PyTorch module."""
    B, Cin, H, W = x.shape
    E, p, s = DIM, PATCH, STRIDE
    Hp, Wp = H // p, W // p
    M, M2 = B * H * W, B * Hp * Wp

    # ---- stem (Pallas): im2col of the raw input is wrapper glue ----
    x_nhwc = jnp.transpose(x, (0, 2, 3, 1))
    xpad = jnp.pad(x_nhwc, ((0, 0), (1, 1), (1, 1), (0, 0)))
    cols = jnp.concatenate(
        [xpad[:, di:di + H, dj:dj + W, :] for di in range(3) for dj in range(3)],
        axis=-1).reshape(M, 9 * Cin)
    cols = jnp.pad(cols, ((0, 0), (0, K1 - 9 * Cin))).astype(jnp.bfloat16)

    conv_x_flat = _call(
        _stem_kernel,
        jax.ShapeDtypeStruct((M, E), jnp.float32),
        3,
        scratch_shapes=[pltpu.VMEM((B, H + 2, W + 2, E), jnp.float32),
                        pltpu.VMEM((M, 9 * E), jnp.float32)],
    )(cols, params['stem_w'], params['stem_b'])
    conv_x = conv_x_flat.reshape(B, H, W, E)                 # NHWC
    conv_x_nchw = jnp.transpose(conv_x, (0, 3, 1, 2))

    # ---- LocalContext window partition (exact torch view/permute sequence) ----
    xv = conv_x_nchw.reshape(B, E, H // s, s, W // s, s)
    windows = jnp.transpose(xv, (0, 1, 3, 2, 4, 5)).reshape(-1, E, s, s)
    NW = windows.shape[0]
    x_cn = windows.reshape(NW, E, s * s)                     # (NW, C, n)
    x_nc = jnp.transpose(x_cn, (0, 2, 1))                    # (NW, n, C)

    local_tok = _call(
        _gcn_kernel,
        jax.ShapeDtypeStruct((NW, s * s, E), jnp.float32),
        5,
    )(x_nc, x_cn.astype(jnp.bfloat16), params['gcn_w'], params['gcn_b'],
      params['gcn_bq'])

    # reverse() (exact torch view/permute sequence)
    local_w = jnp.transpose(local_tok, (0, 2, 1)).reshape(NW, E, s, s)
    xr = local_w.reshape(B, H // s, W // s, s, s, -1)
    xr = jnp.transpose(xr, (0, 1, 3, 2, 4, 5))
    local_nhwc = jnp.transpose(xr.reshape(B, -1, H, W), (0, 2, 3, 1))

    # ---- head (Pallas): strided patch extraction is wrapper glue ----
    def patch_cols(img):                                     # NHWC -> (M2, pp*E)
        mats = [img[:, pi::p, pj::p, :].reshape(M2, E)
                for pi in range(p) for pj in range(p)]
        return jnp.concatenate(mats, axis=-1)

    pcols = jnp.concatenate(
        [patch_cols(conv_x), patch_cols(local_nhwc)], axis=-1).astype(jnp.bfloat16)

    out = _call(
        _head_kernel,
        jax.ShapeDtypeStruct((B, Hp * Wp, E), jnp.float32),
        3,
        scratch_shapes=[pltpu.VMEM((B, Hp + 2, Wp + 2, E), jnp.float32),
                        pltpu.VMEM((M2, 9 * E), jnp.float32)],
    )(pcols, params['head_w'], params['head_b'])
    return out, (Hp, Wp)


# ----------------------------------------------------------------------------
# Deterministic parameters (PyTorch-layout weights; all eval-mode folds at init)
# ----------------------------------------------------------------------------
def init_params(key):
    keys = iter(jax.random.split(key, 64))
    nk = lambda: next(keys)

    def w(shape, scale=0.08):
        return scale * jax.random.normal(nk(), shape, jnp.float32)

    def bn_params(c):
        return dict(
            g=1.0 + 0.05 * jax.random.normal(nk(), (c,), jnp.float32),
            b=0.05 * jax.random.normal(nk(), (c,), jnp.float32),
            m=0.05 * jax.random.normal(nk(), (c,), jnp.float32),
            v=1.0 + 0.05 * jax.random.uniform(nk(), (c,), jnp.float32),
        )

    def bn_fold(bnp, bias):
        sc = bnp['g'] * lax.rsqrt(bnp['v'] + BN_EPS)
        return sc, (bias - bnp['m']) * sc + bnp['b']

    E, Cin, ci, p = DIM, IN_CH, INTER, PATCH

    # ---- stem: conv1+BN, conv2+BN folded; K-concatenated weight slab ----
    w1, b1, bn1 = w((E, Cin, 3, 3)), w((E,)), bn_params(E)
    w2, b2, bn2 = w((E, E, 3, 3)), w((E,)), bn_params(E)
    s1, b1f = bn_fold(bn1, b1)
    s2, b2f = bn_fold(bn2, b2)
    w1_mat = jnp.transpose(w1, (2, 3, 1, 0)).reshape(9 * Cin, E) * s1[None, :]
    w1_mat = jnp.pad(w1_mat, ((0, K1 - 9 * Cin), (0, 0)))            # (K1, E)
    w2_mat = jnp.transpose(w2, (2, 3, 1, 0)).reshape(9 * E, E) * s2[None, :]
    stem_w = jnp.concatenate([w1_mat, w2_mat], axis=0).astype(jnp.bfloat16)
    stem_b = jnp.stack([b1f, b2f])                                   # (2, E) f32

    # ---- SpatialGCN: conv_wg/bn_wg/out-conv/BN fused into one affine ----
    wk, bk = w((ci, E)), w((ci,))      # node_k 1x1
    wq, bq = w((ci, E)), w((ci,))      # node_q 1x1
    wv, bv = w((ci, E)), w((ci,))      # node_v 1x1
    wwg = w((ci, ci))                  # conv_wg (bias=False)
    bnwg = bn_params(ci)
    wout, bout = w((E, ci)), w((E,))   # out conv 1x1
    bnout = bn_params(E)
    swg, twg = bn_fold(bnwg, jnp.zeros((ci,), jnp.float32))
    sout, tout = bn_fold(bnout, bout)
    m_wg = wwg.T * swg[None, :]                                      # (ci, ci)
    m_out = wout.T * sout[None, :]                                   # (ci, E)
    w_post = m_wg @ m_out                                            # fused affine
    b_post = twg @ m_out + tout
    w_kv = jnp.concatenate([wk.T, wv.T], axis=1)                     # (E, 2ci)
    gcn_w = jnp.concatenate([w_kv, wq, w_post], axis=0).astype(jnp.bfloat16)
    gcn_b = jnp.stack([jnp.concatenate([bk, bv]), b_post])           # (2, E) f32
    gcn_bq = bq.reshape(ci, 1)                                       # (ci, 1) f32

    # ---- head: LC-merge folded into proj, conv2 BNs folded, merge, LN ----
    w_lcm, b_lcm = w((E, E)), w((E,))          # LocalContext.merge 1x1
    wproj, bproj = w((E, E, p, p)), w((E,))    # PatchEmbed.proj
    w2a, b2a, bn2a = w((E, E, 3, 3)), w((E,)), bn_params(E)
    w2b, b2b, bn2b = w((E, E, 3, 3)), w((E,)), bn_params(E)
    wm2, bm2 = w((E, E)), w((E,))              # PatchEmbed.merge 1x1
    ln_g = 1.0 + 0.05 * jax.random.normal(nk(), (E,), jnp.float32)
    ln_b = 0.05 * jax.random.normal(nk(), (E,), jnp.float32)
    sa, b2a_f = bn_fold(bn2a, b2a)
    sb, b2b_f = bn_fold(bn2b, b2b)

    m_proj = jnp.transpose(wproj, (2, 3, 1, 0)).reshape(p * p, E, E)
    m_lcm = w_lcm.T
    proj_cx = m_proj.reshape(p * p * E, E)                           # conv_x branch
    proj_lc = jnp.matmul(m_lcm, m_proj).reshape(p * p * E, E)        # merge folded in
    b_proj = 2.0 * bproj + b_lcm @ m_proj.sum(axis=0)                # proj bias x2 + merged bias
    w2a_mat = jnp.transpose(w2a, (2, 3, 1, 0)).reshape(9 * E, E) * sa[None, :]
    w2b_mat = jnp.transpose(w2b, (2, 3, 1, 0)).reshape(9 * E, E) * sb[None, :]
    head_w = jnp.concatenate([proj_cx, proj_lc, w2a_mat, w2b_mat, wm2.T],
                             axis=0).astype(jnp.bfloat16)
    head_b = jnp.stack([b_proj, b2a_f, b2b_f, bm2, ln_g, ln_b])      # (6, E) f32

    return dict(stem_w=stem_w, stem_b=stem_b,
                gcn_w=gcn_w, gcn_b=gcn_b, gcn_bq=gcn_bq,
                head_w=head_w, head_b=head_b)


if __name__ == "__main__":
    key = jax.random.PRNGKey(0)
    kx, kp = jax.random.split(key)
    x = jax.random.normal(kx, (2, IN_CH, IMG, IMG), jnp.float32)
    params = init_params(kp)

    fwd = jax.jit(patch_embed_forward)
    tok, (Hp, Wp) = fwd(x, params)
    tok = jax.block_until_ready(tok)

    assert tok.shape == (2, NTOK, DIM) and tok.dtype == jnp.float32
    assert int(Hp) == IMG // PATCH and int(Wp) == IMG // PATCH
    assert bool(jnp.all(jnp.isfinite(tok)))
    print("KERNEL_OK")
</pallas_src>

<mosaic_0001>
module attributes {stable_mosaic.version = 11 : i64} {
  func.func @_stem_kernel(%arg0: memref<512x32xbf16, #tpu.memory_space<vmem>>, %arg1: memref<320x32xbf16, #tpu.memory_space<vmem>>, %arg2: memref<2x32xf32, #tpu.memory_space<vmem>>, %arg3: memref<512x32xf32, #tpu.memory_space<vmem>>, %arg4: memref<2x18x18x32xf32, #tpu.memory_space<vmem>>, %arg5: memref<512x288xf32, #tpu.memory_space<vmem>>) attributes {dimension_semantics = [], scalar_prefetch = 0 : i64, scratch_operands = 2 : i64, tpu.core_type = #tpu.core_type<tc>} {
    %c0 = arith.constant 0 : index
    %c0_0 = arith.constant 0 : index
    %0 = vector.load %arg0[%c0, %c0_0] : memref<512x32xbf16, #tpu.memory_space<vmem>>, vector<512x32xbf16>
    %c0_1 = arith.constant 0 : index
    %c0_2 = arith.constant 0 : index
    %1 = vector.load %arg1[%c0_1, %c0_2] : memref<320x32xbf16, #tpu.memory_space<vmem>>, vector<32x32xbf16>
    %cst = arith.constant dense<0.000000e+00> : vector<512x32xf32>
    %2 = tpu.matmul %0, %1, %cst {dimension_numbers = #tpu.dot_dimension_numbers<[1], [0], [0], [1], [0, 0, 1, 1], [], []>} : vector<512x32xbf16>, vector<32x32xbf16>, vector<512x32xf32> -> vector<512x32xf32>
    %c0_3 = arith.constant 0 : index
    %c0_4 = arith.constant 0 : index
    %3 = vector.load %arg2[%c0_3, %c0_4] : memref<2x32xf32, #tpu.memory_space<vmem>>, vector<1x32xf32>
    %4 = vector.broadcast %3 : vector<1x32xf32> to vector<512x32xf32>
    %5 = arith.addf %2, %4 : vector<512x32xf32>
    %cst_5 = arith.constant 0.000000e+00 : f32
    %6 = vector.broadcast %cst_5 : f32 to vector<512x32xf32>
    %7 = arith.maximumf %5, %6 : vector<512x32xf32>
    %cst_6 = arith.constant 0.000000e+00 : f32
    %8 = vector.broadcast %cst_6 : f32 to vector<2x18x18x32xf32>
    %c0_7 = arith.constant 0 : index
    %c0_8 = arith.constant 0 : index
    %c0_9 = arith.constant 0 : index
    %c0_10 = arith.constant 0 : index
    %9 = vector.load %arg4[%c0_7, %c0_8, %c0_9, %c0_10] : memref<2x18x18x32xf32, #tpu.memory_space<vmem>>, vector<2x18x18x32xf32>
    tpu.vector_store %arg4[%c0_7, %c0_8, %c0_9, %c0_10], %8 {strides = array<i32>} : memref<2x18x18x32xf32, #tpu.memory_space<vmem>>, vector<2x18x18x32xf32>,
    %10 = vector.shape_cast %7 : vector<512x32xf32> to vector<2x16x16x32xf32>
    %c0_11 = arith.constant 0 : index
    %c1 = arith.constant 1 : index
    %c1_12 = arith.constant 1 : index
    %c0_13 = arith.constant 0 : index
    %11 = vector.load %arg4[%c0_11, %c1, %c1_12, %c0_13] : memref<2x18x18x32xf32, #tpu.memory_space<vmem>>, vector<2x16x16x32xf32>
    tpu.vector_store %arg4[%c0_11, %c1, %c1_12, %c0_13], %10 {strides = array<i32>} : memref<2x18x18x32xf32, #tpu.memory_space<vmem>>, vector<2x16x16x32xf32>,
    %c0_14 = arith.constant 0 : index
    %c0_15 = arith.constant 0 : index
    %c0_16 = arith.constant 0 : index
    %c0_17 = arith.constant 0 : index
    %12 = vector.load %arg4[%c0_14, %c0_15, %c0_16, %c0_17] : memref<2x18x18x32xf32, #tpu.memory_space<vmem>>, vector<2x16x16x32xf32>
    %13 = vector.shape_cast %12 : vector<2x16x16x32xf32> to vector<512x32xf32>
    %c0_18 = arith.constant 0 : index
    %c0_19 = arith.constant 0 : index
    %14 = vector.load %arg5[%c0_18, %c0_19] : memref<512x288xf32, #tpu.memory_space<vmem>>, vector<512x32xf32>
    tpu.vector_store %arg5[%c0_18, %c0_19], %13 {strides = array<i32>} : memref<512x288xf32, #tpu.memory_space<vmem>>, vector<512x32xf32>,
    %c0_20 = arith.constant 0 : index
    %c0_21 = arith.constant 0 : index
    %c1_22 = arith.constant 1 : index
    %c0_23 = arith.constant 0 : index
    %15 = vector.load %arg4[%c0_20, %c0_21, %c1_22, %c0_23] : memref<2x18x18x32xf32, #tpu.memory_space<vmem>>, vector<2x16x16x32xf32>
    %16 = vector.shape_cast %15 : vector<2x16x16x32xf32> to vector<512x32xf32>
    %c0_24 = arith.constant 0 : index
    %c32 = arith.constant 32 : index
    %17 = vector.load %arg5[%c0_24, %c32] : memref<512x288xf32, #tpu.memory_space<vmem>>, vector<512x32xf32>
    tpu.vector_store %arg5[%c0_24, %c32], %16 {strides = array<i32>} : memref<512x288xf32, #tpu.memory_space<vmem>>, vector<512x32xf32>,
    %c0_25 = arith.constant 0 : index
    %c0_26 = arith.constant 0 : index
    %c2 = arith.constant 2 : index
    %c0_27 = arith.constant 0 : index
    %18 = vector.load %arg4[%c0_25, %c0_26, %c2, %c0_27] : memref<2x18x18x32xf32, #tpu.memory_space<vmem>>, vector<2x16x16x32xf32>
    %19 = vector.shape_cast %18 : vector<2x16x16x32xf32> to vector<512x32xf32>
    %c0_28 = arith.constant 0 : index
    %c64 = arith.constant 64 : index
    %20 = vector.load %arg5[%c0_28, %c64] : memref<512x288xf32, #tpu.memory_space<vmem>>, vector<512x32xf32>
    tpu.vector_store %arg5[%c0_28, %c64], %19 {strides = array<i32>} : memref<512x288xf32, #tpu.memory_space<vmem>>, vector<512x32xf32>,
    %c0_29 = arith.constant 0 : index
    %c1_30 = arith.constant 1 : index
    %c0_31 = arith.constant 0 : index
    %c0_32 = arith.constant 0 : index
    %21 = vector.load %arg4[%c0_29, %c1_30, %c0_31, %c0_32] : memref<2x18x18x32xf32, #tpu.memory_space<vmem>>, vector<2x16x16x32xf32>
    %22 = vector.shape_cast %21 : vector<2x16x16x32xf32> to vector<512x32xf32>
    %c0_33 = arith.constant 0 : index
    %c96 = arith.constant 96 : index
    %23 = vector.load %arg5[%c0_33, %c96] : memref<512x288xf32, #tpu.memory_space<vmem>>, vector<512x32xf32>
    tpu.vector_store %arg5[%c0_33, %c96], %22 {strides = array<i32>} : memref<512x288xf32, #tpu.memory_space<vmem>>, vector<512x32xf32>,
    %c0_34 = arith.constant 0 : index
    %c1_35 = arith.constant 1 : index
    %c1_36 = arith.constant 1 : index
    %c0_37 = arith.constant 0 : index
    %24 = vector.load %arg4[%c0_34, %c1_35, %c1_36, %c0_37] : memref<2x18x18x32xf32, #tpu.memory_space<vmem>>, vector<2x16x16x32xf32>
    %25 = vector.shape_cast %24 : vector<2x16x16x32xf32> to vector<512x32xf32>
    %c0_38 = arith.constant 0 : index
    %c128 = arith.constant 128 : index
    %26 = vector.load %arg5[%c0_38, %c128] : memref<512x288xf32, #tpu.memory_space<vmem>>, vector<512x32xf32>
    tpu.vector_store %arg5[%c0_38, %c128], %25 {strides = array<i32>} : memref<512x288xf32, #tpu.memory_space<vmem>>, vector<512x32xf32>,
    %c0_39 = arith.constant 0 : index
    %c1_40 = arith.constant 1 : index
    %c2_41 = arith.constant 2 : index
    %c0_42 = arith.constant 0 : index
    %27 = vector.load %arg4[%c0_39, %c1_40, %c2_41, %c0_42] : memref<2x18x18x32xf32, #tpu.memory_space<vmem>>, vector<2x16x16x32xf32>
    %28 = vector.shape_cast %27 : vector<2x16x16x32xf32> to vector<512x32xf32>
    %c0_43 = arith.constant 0 : index
    %c160 = arith.constant 160 : index
    %29 = vector.load %arg5[%c0_43, %c160] : memref<512x288xf32, #tpu.memory_space<vmem>>, vector<512x32xf32>
    tpu.vector_store %arg5[%c0_43, %c160], %28 {strides = array<i32>} : memref<512x288xf32, #tpu.memory_space<vmem>>, vector<512x32xf32>,
    %c0_44 = arith.constant 0 : index
    %c2_45 = arith.constant 2 : index
    %c0_46 = arith.constant 0 : index
    %c0_47 = arith.constant 0 : index
    %30 = vector.load %arg4[%c0_44, %c2_45, %c0_46, %c0_47] : memref<2x18x18x32xf32, #tpu.memory_space<vmem>>, vector<2x16x16x32xf32>
    %31 = vector.shape_cast %30 : vector<2x16x16x32xf32> to vector<512x32xf32>
    %c0_48 = arith.constant 0 : index
    %c192 = arith.constant 192 : index
    %32 = vector.load %arg5[%c0_48, %c192] : memref<512x288xf32, #tpu.memory_space<vmem>>, vector<512x32xf32>
    tpu.vector_store %arg5[%c0_48, %c192], %31 {strides = array<i32>} : memref<512x288xf32, #tpu.memory_space<vmem>>, vector<512x32xf32>,
    %c0_49 = arith.constant 0 : index
    %c2_50 = arith.constant 2 : index
    %c1_51 = arith.constant 1 : index
    %c0_52 = arith.constant 0 : index
    %33 = vector.load %arg4[%c0_49, %c2_50, %c1_51, %c0_52] : memref<2x18x18x32xf32, #tpu.memory_space<vmem>>, vector<2x16x16x32xf32>
    %34 = vector.shape_cast %33 : vector<2x16x16x32xf32> to vector<512x32xf32>
    %c0_53 = arith.constant 0 : index
    %c224 = arith.constant 224 : index
    %35 = vector.load %arg5[%c0_53, %c224] : memref<512x288xf32, #tpu.memory_space<vmem>>, vector<512x32xf32>
    tpu.vector_store %arg5[%c0_53, %c224], %34 {strides = array<i32>} : memref<512x288xf32, #tpu.memory_space<vmem>>, vector<512x32xf32>,
    %c0_54 = arith.constant 0 : index
    %c2_55 = arith.constant 2 : index
    %c2_56 = arith.constant 2 : index
    %c0_57 = arith.constant 0 : index
    %36 = vector.load %arg4[%c0_54, %c2_55, %c2_56, %c0_57] : memref<2x18x18x32xf32, #tpu.memory_space<vmem>>, vector<2x16x16x32xf32>
    %37 = vector.shape_cast %36 : vector<2x16x16x32xf32> to vector<512x32xf32>
    %c0_58 = arith.constant 0 : index
    %c256 = arith.constant 256 : index
    %38 = vector.load %arg5[%c0_58, %c256] : memref<512x288xf32, #tpu.memory_space<vmem>>, vector<512x32xf32>
    tpu.vector_store %arg5[%c0_58, %c256], %37 {strides = array<i32>} : memref<512x288xf32, #tpu.memory_space<vmem>>, vector<512x32xf32>,
    %c0_59 = arith.constant 0 : index
    %c0_60 = arith.constant 0 : index
    %39 = vector.load %arg5[%c0_59, %c0_60] : memref<512x288xf32, #tpu.memory_space<vmem>>, vector<512x288xf32>
    %40 = arith.truncf %39 : vector<512x288xf32> to vector<512x288xbf16>
    %c32_61 = arith.constant 32 : index
    %c0_62 = arith.constant 0 : index
    %41 = vector.load %arg1[%c32_61, %c0_62] : memref<320x32xbf16, #tpu.memory_space<vmem>>, vector<288x32xbf16>
    %cst_63 = arith.constant dense<0.000000e+00> : vector<512x32xf32>
    %42 = tpu.matmul %40, %41, %cst_63 {dimension_numbers = #tpu.dot_dimension_numbers<[1], [0], [0], [1], [0, 0, 1, 1], [], []>} : vector<512x288xbf16>, vector<288x32xbf16>, vector<512x32xf32> -> vector<512x32xf32>
    %c1_64 = arith.constant 1 : index
    %c0_65 = arith.constant 0 : index
    %43 = vector.load %arg2[%c1_64, %c0_65] : memref<2x32xf32, #tpu.memory_space<vmem>>, vector<1x32xf32>
    %44 = vector.broadcast %43 : vector<1x32xf32> to vector<512x32xf32>
    %45 = arith.addf %42, %44 : vector<512x32xf32>
    %cst_66 = arith.constant 0.000000e+00 : f32
    %46 = vector.broadcast %cst_66 : f32 to vector<512x32xf32>
    %47 = arith.maximumf %45, %46 : vector<512x32xf32>
    %c0_67 = arith.constant 0 : index
    %c0_68 = arith.constant 0 : index
    %48 = vector.load %arg3[%c0_67, %c0_68] : memref<512x32xf32, #tpu.memory_space<vmem>>, vector<512x32xf32>
    tpu.vector_store %arg3[%c0_67, %c0_68], %47 {strides = array<i32>} : memref<512x32xf32, #tpu.memory_space<vmem>>, vector<512x32xf32>,
    return
  }
}

module attributes {stable_mosaic.version = 11 : i64} {
  func.func @_gcn_kernel(%arg0: memref<8x64x32xf32, #tpu.memory_space<vmem>>, %arg1: memref<8x32x64xbf16, #tpu.memory_space<vmem>>, %arg2: memref<64x32xbf16, #tpu.memory_space<vmem>>, %arg3: memref<2x32xf32, #tpu.memory_space<vmem>>, %arg4: memref<16x1xf32, #tpu.memory_space<vmem>>, %arg5: memref<8x64x32xf32, #tpu.memory_space<vmem>>) attributes {dimension_semantics = [], scalar_prefetch = 0 : i64, scratch_operands = 0 : i64, tpu.core_type = #tpu.core_type<tc>} {
    %c0 = arith.constant 0 : index
    %c0_0 = arith.constant 0 : index
    %c0_1 = arith.constant 0 : index
    %0 = vector.load %arg0[%c0, %c0_0, %c0_1] : memref<8x64x32xf32, #tpu.memory_space<vmem>>, vector<8x64x32xf32>
    %1 = vector.shape_cast %0 : vector<8x64x32xf32> to vector<512x32xf32>
    %2 = arith.truncf %1 : vector<512x32xf32> to vector<512x32xbf16>
    %c0_2 = arith.constant 0 : index
    %c0_3 = arith.constant 0 : index
    %3 = vector.load %arg2[%c0_2, %c0_3] : memref<64x32xbf16, #tpu.memory_space<vmem>>, vector<32x32xbf16>
    %cst = arith.constant dense<0.000000e+00> : vector<512x32xf32>
    %4 = tpu.matmul %2, %3, %cst {dimension_numbers = #tpu.dot_dimension_numbers<[1], [0], [0], [1], [0, 0, 1, 1], [], []>} : vector<512x32xbf16>, vector<32x32xbf16>, vector<512x32xf32> -> vector<512x32xf32>
    %c0_4 = arith.constant 0 : index
    %c0_5 = arith.constant 0 : index
    %5 = vector.load %arg3[%c0_4, %c0_5] : memref<2x32xf32, #tpu.memory_space<vmem>>, vector<1x32xf32>
    %6 = vector.broadcast %5 : vector<1x32xf32> to vector<512x32xf32>
    %7 = arith.addf %4, %6 : vector<512x32xf32>
    %8 = vector.extract_strided_slice %7 {offsets = [0, 0], sizes = [512, 16], strides = [1, 1]} : vector<512x32xf32> to vector<512x16xf32>
    %9 = vector.shape_cast %8 : vector<512x16xf32> to vector<8x64x16xf32>
    %10 = vector.extract_strided_slice %7 {offsets = [0, 16], sizes = [512, 16], strides = [1, 1]} : vector<512x32xf32> to vector<512x16xf32>
    %11 = vector.shape_cast %10 : vector<512x16xf32> to vector<8x64x16xf32>
    %c32 = arith.constant 32 : index
    %c0_6 = arith.constant 0 : index
    %12 = vector.load %arg2[%c32, %c0_6] : memref<64x32xbf16, #tpu.memory_space<vmem>>, vector<16x32xbf16>
    %13 = vector.shape_cast %12 : vector<16x32xbf16> to vector<1x16x32xbf16>
    %14 = vector.broadcast %13 : vector<1x16x32xbf16> to vector<8x16x32xbf16>
    %c0_7 = arith.constant 0 : index
    %c0_8 = arith.constant 0 : index
    %c0_9 = arith.constant 0 : index
    %15 = vector.load %arg1[%c0_7, %c0_8, %c0_9] : memref<8x32x64xbf16, #tpu.memory_space<vmem>>, vector<8x32x64xbf16>
    "tpu.trace_start"() <{level = 10 : i32, message = "bic,bcm->bim"}> : () -> ()
    %cst_10 = arith.constant dense<0.000000e+00> : vector<8x16x64xf32>
    %16 = tpu.matmul %14, %15, %cst_10 {dimension_numbers = #tpu.dot_dimension_numbers<[2], [1], [1], [2], [0, 0, 0, 1, 1, 2], [0], [0]>} : vector<8x16x32xbf16>, vector<8x32x64xbf16>, vector<8x16x64xf32> -> vector<8x16x64xf32>
    "tpu.trace_stop"() : () -> ()
    %c0_11 = arith.constant 0 : index
    %c0_12 = arith.constant 0 : index
    %17 = vector.load %arg4[%c0_11, %c0_12] : memref<16x1xf32, #tpu.memory_space<vmem>>, vector<16x1xf32>
    %18 = vector.shape_cast %17 : vector<16x1xf32> to vector<1x16x1xf32>
    %19 = vector.broadcast %18 : vector<1x16x1xf32> to vector<8x16x64xf32>
    %20 = arith.addf %16, %19 : vector<8x16x64xf32>
    %21 = arith.truncf %20 : vector<8x16x64xf32> to vector<8x16x64xbf16>
    %22 = arith.truncf %11 : vector<8x64x16xf32> to vector<8x64x16xbf16>
    "tpu.trace_start"() <{level = 10 : i32, message = "bin,bnj->bij"}> : () -> ()
    %cst_13 = arith.constant dense<0.000000e+00> : vector<8x16x16xf32>
    %23 = tpu.matmul %21, %22, %cst_13 {dimension_numbers = #tpu.dot_dimension_numbers<[2], [1], [1], [2], [0, 0, 0, 1, 1, 2], [0], [0]>} : vector<8x16x64xbf16>, vector<8x64x16xbf16>, vector<8x16x16xf32> -> vector<8x16x16xf32>
    "tpu.trace_stop"() : () -> ()
    %cst_14 = arith.constant dense<0xFF800000> : vector<8x16xf32>
    %24 = vector.multi_reduction <maximumf>, %23, %cst_14 [2] : vector<8x16x16xf32> to vector<8x16xf32>
    %25 = vector.shape_cast %24 : vector<8x16xf32> to vector<8x16x1xf32>
    %26 = vector.broadcast %25 : vector<8x16x1xf32> to vector<8x16x16xf32>
    %27 = arith.subf %23, %26 : vector<8x16x16xf32>
    %28 = math.exp %27 : vector<8x16x16xf32>
    %cst_15 = arith.constant dense<0.000000e+00> : vector<8x16xf32>
    %29 = vector.multi_reduction <add>, %28, %cst_15 [2] : vector<8x16x16xf32> to vector<8x16xf32>
    %30 = vector.shape_cast %29 : vector<8x16xf32> to vector<8x16x1xf32>
    %31 = tpu.reciprocal %30 {approx = true} : vector<8x16x1xf32> -> vector<8x16x1xf32>
    %32 = vector.broadcast %31 : vector<8x16x1xf32> to vector<8x16x16xf32>
    %33 = arith.mulf %28, %32 : vector<8x16x16xf32>
    %34 = arith.truncf %9 : vector<8x64x16xf32> to vector<8x64x16xbf16>
    %35 = arith.truncf %33 : vector<8x16x16xf32> to vector<8x16x16xbf16>
    "tpu.trace_start"() <{level = 10 : i32, message = "bnc,bcd->bnd"}> : () -> ()
    %cst_16 = arith.constant dense<0.000000e+00> : vector<8x64x16xf32>
    %36 = tpu.matmul %34, %35, %cst_16 {dimension_numbers = #tpu.dot_dimension_numbers<[2], [1], [1], [2], [0, 0, 0, 1, 1, 2], [0], [0]>} : vector<8x64x16xbf16>, vector<8x16x16xbf16>, vector<8x64x16xf32> -> vector<8x64x16xf32>
    "tpu.trace_stop"() : () -> ()
    %37 = vector.shape_cast %36 : vector<8x64x16xf32> to vector<512x16xf32>
    %38 = arith.truncf %37 : vector<512x16xf32> to vector<512x16xbf16>
    %c48 = arith.constant 48 : index
    %c0_17 = arith.constant 0 : index
    %39 = vector.load %arg2[%c48, %c0_17] : memref<64x32xbf16, #tpu.memory_space<vmem>>, vector<16x32xbf16>
    %cst_18 = arith.constant dense<0.000000e+00> : vector<512x32xf32>
    %40 = tpu.matmul %38, %39, %cst_18 {dimension_numbers = #tpu.dot_dimension_numbers<[1], [0], [0], [1], [0, 0, 1, 1], [], []>} : vector<512x16xbf16>, vector<16x32xbf16>, vector<512x32xf32> -> vector<512x32xf32>
    %c1 = arith.constant 1 : index
    %c0_19 = arith.constant 0 : index
    %41 = vector.load %arg3[%c1, %c0_19] : memref<2x32xf32, #tpu.memory_space<vmem>>, vector<1x32xf32>
    %42 = vector.broadcast %41 : vector<1x32xf32> to vector<512x32xf32>
    %43 = arith.addf %40, %42 : vector<512x32xf32>
    %44 = arith.addf %43, %1 : vector<512x32xf32>
    %cst_20 = arith.constant 0.000000e+00 : f32
    %45 = vector.broadcast %cst_20 : f32 to vector<512x32xf32>
    %46 = arith.maximumf %44, %45 : vector<512x32xf32>
    %47 = vector.shape_cast %46 : vector<512x32xf32> to vector<8x64x32xf32>
    %c0_21 = arith.constant 0 : index
    %c0_22 = arith.constant 0 : index
    %c0_23 = arith.constant 0 : index
    %48 = vector.load %arg5[%c0_21, %c0_22, %c0_23] : memref<8x64x32xf32, #tpu.memory_space<vmem>>, vector<8x64x32xf32>
    tpu.vector_store %arg5[%c0_21, %c0_22, %c0_23], %47 {strides = array<i32>} : memref<8x64x32xf32, #tpu.memory_space<vmem>>, vector<8x64x32xf32>,
    return
  }
}

module attributes {stable_mosaic.version = 11 : i64} {
  func.func @_head_kernel(%arg0: memref<128x256xbf16, #tpu.memory_space<vmem>>, %arg1: memref<864x32xbf16, #tpu.memory_space<vmem>>, %arg2: memref<6x32xf32, #tpu.memory_space<vmem>>, %arg3: memref<2x64x32xf32, #tpu.memory_space<vmem>>, %arg4: memref<2x10x10x32xf32, #tpu.memory_space<vmem>>, %arg5: memref<128x288xf32, #tpu.memory_space<vmem>>) attributes {dimension_semantics = [], scalar_prefetch = 0 : i64, scratch_operands = 2 : i64, tpu.core_type = #tpu.core_type<tc>} {
    %c0 = arith.constant 0 : index
    %c0_0 = arith.constant 0 : index
    %0 = vector.load %arg0[%c0, %c0_0] : memref<128x256xbf16, #tpu.memory_space<vmem>>, vector<128x256xbf16>
    %c0_1 = arith.constant 0 : index
    %c0_2 = arith.constant 0 : index
    %1 = vector.load %arg1[%c0_1, %c0_2] : memref<864x32xbf16, #tpu.memory_space<vmem>>, vector<256x32xbf16>
    %cst = arith.constant dense<0.000000e+00> : vector<128x32xf32>
    %2 = tpu.matmul %0, %1, %cst {dimension_numbers = #tpu.dot_dimension_numbers<[1], [0], [0], [1], [0, 0, 1, 1], [], []>} : vector<128x256xbf16>, vector<256x32xbf16>, vector<128x32xf32> -> vector<128x32xf32>
    %c0_3 = arith.constant 0 : index
    %c0_4 = arith.constant 0 : index
    %3 = vector.load %arg2[%c0_3, %c0_4] : memref<6x32xf32, #tpu.memory_space<vmem>>, vector<1x32xf32>
    %4 = vector.broadcast %3 : vector<1x32xf32> to vector<128x32xf32>
    %5 = arith.addf %2, %4 : vector<128x32xf32>
    %cst_5 = arith.constant 0.000000e+00 : f32
    %6 = vector.broadcast %cst_5 : f32 to vector<2x10x10x32xf32>
    %c0_6 = arith.constant 0 : index
    %c0_7 = arith.constant 0 : index
    %c0_8 = arith.constant 0 : index
    %c0_9 = arith.constant 0 : index
    %7 = vector.load %arg4[%c0_6, %c0_7, %c0_8, %c0_9] : memref<2x10x10x32xf32, #tpu.memory_space<vmem>>, vector<2x10x10x32xf32>
    tpu.vector_store %arg4[%c0_6, %c0_7, %c0_8, %c0_9], %6 {strides = array<i32>} : memref<2x10x10x32xf32, #tpu.memory_space<vmem>>, vector<2x10x10x32xf32>,
    %c1 = arith.constant 1 : index
    %c0_10 = arith.constant 0 : index
    %8 = vector.load %arg2[%c1, %c0_10] : memref<6x32xf32, #tpu.memory_space<vmem>>, vector<1x32xf32>
    %9 = vector.shape_cast %5 : vector<128x32xf32> to vector<2x8x8x32xf32>
    %c0_11 = arith.constant 0 : index
    %c1_12 = arith.constant 1 : index
    %c1_13 = arith.constant 1 : index
    %c0_14 = arith.constant 0 : index
    %10 = vector.load %arg4[%c0_11, %c1_12, %c1_13, %c0_14] : memref<2x10x10x32xf32, #tpu.memory_space<vmem>>, vector<2x8x8x32xf32>
    tpu.vector_store %arg4[%c0_11, %c1_12, %c1_13, %c0_14], %9 {strides = array<i32>} : memref<2x10x10x32xf32, #tpu.memory_space<vmem>>, vector<2x8x8x32xf32>,
    %c0_15 = arith.constant 0 : index
    %c0_16 = arith.constant 0 : index
    %c0_17 = arith.constant 0 : index
    %c0_18 = arith.constant 0 : index
    %11 = vector.load %arg4[%c0_15, %c0_16, %c0_17, %c0_18] : memref<2x10x10x32xf32, #tpu.memory_space<vmem>>, vector<2x8x8x32xf32>
    %12 = vector.shape_cast %11 : vector<2x8x8x32xf32> to vector<128x32xf32>
    %c0_19 = arith.constant 0 : index
    %c0_20 = arith.constant 0 : index
    %13 = vector.load %arg5[%c0_19, %c0_20] : memref<128x288xf32, #tpu.memory_space<vmem>>, vector<128x32xf32>
    tpu.vector_store %arg5[%c0_19, %c0_20], %12 {strides = array<i32>} : memref<128x288xf32, #tpu.memory_space<vmem>>, vector<128x32xf32>,
    %c0_21 = arith.constant 0 : index
    %c0_22 = arith.constant 0 : index
    %c1_23 = arith.constant 1 : index
    %c0_24 = arith.constant 0 : index
    %14 = vector.load %arg4[%c0_21, %c0_22, %c1_23, %c0_24] : memref<2x10x10x32xf32, #tpu.memory_space<vmem>>, vector<2x8x8x32xf32>
    %15 = vector.shape_cast %14 : vector<2x8x8x32xf32> to vector<128x32xf32>
    %c0_25 = arith.constant 0 : index
    %c32 = arith.constant 32 : index
    %16 = vector.load %arg5[%c0_25, %c32] : memref<128x288xf32, #tpu.memory_space<vmem>>, vector<128x32xf32>
    tpu.vector_store %arg5[%c0_25, %c32], %15 {strides = array<i32>} : memref<128x288xf32, #tpu.memory_space<vmem>>, vector<128x32xf32>,
    %c0_26 = arith.constant 0 : index
    %c0_27 = arith.constant 0 : index
    %c2 = arith.constant 2 : index
    %c0_28 = arith.constant 0 : index
    %17 = vector.load %arg4[%c0_26, %c0_27, %c2, %c0_28] : memref<2x10x10x32xf32, #tpu.memory_space<vmem>>, vector<2x8x8x32xf32>
    %18 = vector.shape_cast %17 : vector<2x8x8x32xf32> to vector<128x32xf32>
    %c0_29 = arith.constant 0 : index
    %c64 = arith.constant 64 : index
    %19 = vector.load %arg5[%c0_29, %c64] : memref<128x288xf32, #tpu.memory_space<vmem>>, vector<128x32xf32>
    tpu.vector_store %arg5[%c0_29, %c64], %18 {strides = array<i32>} : memref<128x288xf32, #tpu.memory_space<vmem>>, vector<128x32xf32>,
    %c0_30 = arith.constant 0 : index
    %c1_31 = arith.constant 1 : index
    %c0_32 = arith.constant 0 : index
    %c0_33 = arith.constant 0 : index
    %20 = vector.load %arg4[%c0_30, %c1_31, %c0_32, %c0_33] : memref<2x10x10x32xf32, #tpu.memory_space<vmem>>, vector<2x8x8x32xf32>
    %21 = vector.shape_cast %20 : vector<2x8x8x32xf32> to vector<128x32xf32>
    %c0_34 = arith.constant 0 : index
    %c96 = arith.constant 96 : index
    %22 = vector.load %arg5[%c0_34, %c96] : memref<128x288xf32, #tpu.memory_space<vmem>>, vector<128x32xf32>
    tpu.vector_store %arg5[%c0_34, %c96], %21 {strides = array<i32>} : memref<128x288xf32, #tpu.memory_space<vmem>>, vector<128x32xf32>,
    %c0_35 = arith.constant 0 : index
    %c1_36 = arith.constant 1 : index
    %c1_37 = arith.constant 1 : index
    %c0_38 = arith.constant 0 : index
    %23 = vector.load %arg4[%c0_35, %c1_36, %c1_37, %c0_38] : memref<2x10x10x32xf32, #tpu.memory_space<vmem>>, vector<2x8x8x32xf32>
    %24 = vector.shape_cast %23 : vector<2x8x8x32xf32> to vector<128x32xf32>
    %c0_39 = arith.constant 0 : index
    %c128 = arith.constant 128 : index
    %25 = vector.load %arg5[%c0_39, %c128] : memref<128x288xf32, #tpu.memory_space<vmem>>, vector<128x32xf32>
    tpu.vector_store %arg5[%c0_39, %c128], %24 {strides = array<i32>} : memref<128x288xf32, #tpu.memory_space<vmem>>, vector<128x32xf32>,
    %c0_40 = arith.constant 0 : index
    %c1_41 = arith.constant 1 : index
    %c2_42 = arith.constant 2 : index
    %c0_43 = arith.constant 0 : index
    %26 = vector.load %arg4[%c0_40, %c1_41, %c2_42, %c0_43] : memref<2x10x10x32xf32, #tpu.memory_space<vmem>>, vector<2x8x8x32xf32>
    %27 = vector.shape_cast %26 : vector<2x8x8x32xf32> to vector<128x32xf32>
    %c0_44 = arith.constant 0 : index
    %c160 = arith.constant 160 : index
    %28 = vector.load %arg5[%c0_44, %c160] : memref<128x288xf32, #tpu.memory_space<vmem>>, vector<128x32xf32>
    tpu.vector_store %arg5[%c0_44, %c160], %27 {strides = array<i32>} : memref<128x288xf32, #tpu.memory_space<vmem>>, vector<128x32xf32>,
    %c0_45 = arith.constant 0 : index
    %c2_46 = arith.constant 2 : index
    %c0_47 = arith.constant 0 : index
    %c0_48 = arith.constant 0 : index
    %29 = vector.load %arg4[%c0_45, %c2_46, %c0_47, %c0_48] : memref<2x10x10x32xf32, #tpu.memory_space<vmem>>, vector<2x8x8x32xf32>
    %30 = vector.shape_cast %29 : vector<2x8x8x32xf32> to vector<128x32xf32>
    %c0_49 = arith.constant 0 : index
    %c192 = arith.constant 192 : index
    %31 = vector.load %arg5[%c0_49, %c192] : memref<128x288xf32, #tpu.memory_space<vmem>>, vector<128x32xf32>
    tpu.vector_store %arg5[%c0_49, %c192], %30 {strides = array<i32>} : memref<128x288xf32, #tpu.memory_space<vmem>>, vector<128x32xf32>,
    %c0_50 = arith.constant 0 : index
    %c2_51 = arith.constant 2 : index
    %c1_52 = arith.constant 1 : index
    %c0_53 = arith.constant 0 : index
    %32 = vector.load %arg4[%c0_50, %c2_51, %c1_52, %c0_53] : memref<2x10x10x32xf32, #tpu.memory_space<vmem>>, vector<2x8x8x32xf32>
    %33 = vector.shape_cast %32 : vector<2x8x8x32xf32> to vector<128x32xf32>
    %c0_54 = arith.constant 0 : index
    %c224 = arith.constant 224 : index
    %34 = vector.load %arg5[%c0_54, %c224] : memref<128x288xf32, #tpu.memory_space<vmem>>, vector<128x32xf32>
    tpu.vector_store %arg5[%c0_54, %c224], %33 {strides = array<i32>} : memref<128x288xf32, #tpu.memory_space<vmem>>, vector<128x32xf32>,
    %c0_55 = arith.constant 0 : index
    %c2_56 = arith.constant 2 : index
    %c2_57 = arith.constant 2 : index
    %c0_58 = arith.constant 0 : index
    %35 = vector.load %arg4[%c0_55, %c2_56, %c2_57, %c0_58] : memref<2x10x10x32xf32, #tpu.memory_space<vmem>>, vector<2x8x8x32xf32>
    %36 = vector.shape_cast %35 : vector<2x8x8x32xf32> to vector<128x32xf32>
    %c0_59 = arith.constant 0 : index
    %c256 = arith.constant 256 : index
    %37 = vector.load %arg5[%c0_59, %c256] : memref<128x288xf32, #tpu.memory_space<vmem>>, vector<128x32xf32>
    tpu.vector_store %arg5[%c0_59, %c256], %36 {strides = array<i32>} : memref<128x288xf32, #tpu.memory_space<vmem>>, vector<128x32xf32>,
    %c0_60 = arith.constant 0 : index
    %c0_61 = arith.constant 0 : index
    %38 = vector.load %arg5[%c0_60, %c0_61] : memref<128x288xf32, #tpu.memory_space<vmem>>, vector<128x288xf32>
    %39 = arith.truncf %38 : vector<128x288xf32> to vector<128x288xbf16>
    %c256_62 = arith.constant 256 : index
    %c0_63 = arith.constant 0 : index
    %40 = vector.load %arg1[%c256_62, %c0_63] : memref<864x32xbf16, #tpu.memory_space<vmem>>, vector<288x32xbf16>
    %cst_64 = arith.constant dense<0.000000e+00> : vector<128x32xf32>
    %41 = tpu.matmul %39, %40, %cst_64 {dimension_numbers = #tpu.dot_dimension_numbers<[1], [0], [0], [1], [0, 0, 1, 1], [], []>} : vector<128x288xbf16>, vector<288x32xbf16>, vector<128x32xf32> -> vector<128x32xf32>
    %42 = vector.broadcast %8 : vector<1x32xf32> to vector<128x32xf32>
    %43 = arith.addf %41, %42 : vector<128x32xf32>
    %cst_65 = arith.constant 0.000000e+00 : f32
    %44 = vector.broadcast %cst_65 : f32 to vector<128x32xf32>
    %45 = arith.maximumf %43, %44 : vector<128x32xf32>
    %c2_66 = arith.constant 2 : index
    %c0_67 = arith.constant 0 : index
    %46 = vector.load %arg2[%c2_66, %c0_67] : memref<6x32xf32, #tpu.memory_space<vmem>>, vector<1x32xf32>
    %47 = vector.shape_cast %45 : vector<128x32xf32> to vector<2x8x8x32xf32>
    %c0_68 = arith.constant 0 : index
    %c1_69 = arith.constant 1 : index
    %c1_70 = arith.constant 1 : index
    %c0_71 = arith.constant 0 : index
    %48 = vector.load %arg4[%c0_68, %c1_69, %c1_70, %c0_71] : memref<2x10x10x32xf32, #tpu.memory_space<vmem>>, vector<2x8x8x32xf32>
    tpu.vector_store %arg4[%c0_68, %c1_69, %c1_70, %c0_71], %47 {strides = array<i32>} : memref<2x10x10x32xf32, #tpu.memory_space<vmem>>, vector<2x8x8x32xf32>,
    %c0_72 = arith.constant 0 : index
    %c0_73 = arith.constant 0 : index
    %c0_74 = arith.constant 0 : index
    %c0_75 = arith.constant 0 : index
    %49 = vector.load %arg4[%c0_72, %c0_73, %c0_74, %c0_75] : memref<2x10x10x32xf32, #tpu.memory_space<vmem>>, vector<2x8x8x32xf32>
    %50 = vector.shape_cast %49 : vector<2x8x8x32xf32> to vector<128x32xf32>
    %c0_76 = arith.constant 0 : index
    %c0_77 = arith.constant 0 : index
    %51 = vector.load %arg5[%c0_76, %c0_77] : memref<128x288xf32, #tpu.memory_space<vmem>>, vector<128x32xf32>
    tpu.vector_store %arg5[%c0_76, %c0_77], %50 {strides = array<i32>} : memref<128x288xf32, #tpu.memory_space<vmem>>, vector<128x32xf32>,
    %c0_78 = arith.constant 0 : index
    %c0_79 = arith.constant 0 : index
    %c1_80 = arith.constant 1 : index
    %c0_81 = arith.constant 0 : index
    %52 = vector.load %arg4[%c0_78, %c0_79, %c1_80, %c0_81] : memref<2x10x10x32xf32, #tpu.memory_space<vmem>>, vector<2x8x8x32xf32>
    %53 = vector.shape_cast %52 : vector<2x8x8x32xf32> to vector<128x32xf32>
    %c0_82 = arith.constant 0 : index
    %c32_83 = arith.constant 32 : index
    %54 = vector.load %arg5[%c0_82, %c32_83] : memref<128x288xf32, #tpu.memory_space<vmem>>, vector<128x32xf32>
    tpu.vector_store %arg5[%c0_82, %c32_83], %53 {strides = array<i32>} : memref<128x288xf32, #tpu.memory_space<vmem>>, vector<128x32xf32>,
    %c0_84 = arith.constant 0 : index
    %c0_85 = arith.constant 0 : index
    %c2_86 = arith.constant 2 : index
    %c0_87 = arith.constant 0 : index
    %55 = vector.load %arg4[%c0_84, %c0_85, %c2_86, %c0_87] : memref<2x10x10x32xf32, #tpu.memory_space<vmem>>, vector<2x8x8x32xf32>
    %56 = vector.shape_cast %55 : vector<2x8x8x32xf32> to vector<128x32xf32>
    %c0_88 = arith.constant 0 : index
    %c64_89 = arith.constant 64 : index
    %57 = vector.load %arg5[%c0_88, %c64_89] : memref<128x288xf32, #tpu.memory_space<vmem>>, vector<128x32xf32>
    tpu.vector_store %arg5[%c0_88, %c64_89], %56 {strides = array<i32>} : memref<128x288xf32, #tpu.memory_space<vmem>>, vector<128x32xf32>,
    %c0_90 = arith.constant 0 : index
    %c1_91 = arith.constant 1 : index
    %c0_92 = arith.constant 0 : index
    %c0_93 = arith.constant 0 : index
    %58 = vector.load %arg4[%c0_90, %c1_91, %c0_92, %c0_93] : memref<2x10x10x32xf32, #tpu.memory_space<vmem>>, vector<2x8x8x32xf32>
    %59 = vector.shape_cast %58 : vector<2x8x8x32xf32> to vector<128x32xf32>
    %c0_94 = arith.constant 0 : index
    %c96_95 = arith.constant 96 : index
    %60 = vector.load %arg5[%c0_94, %c96_95] : memref<128x288xf32, #tpu.memory_space<vmem>>, vector<128x32xf32>
    tpu.vector_store %arg5[%c0_94, %c96_95], %59 {strides = array<i32>} : memref<128x288xf32, #tpu.memory_space<vmem>>, vector<128x32xf32>,
    %c0_96 = arith.constant 0 : index
    %c1_97 = arith.constant 1 : index
    %c1_98 = arith.constant 1 : index
    %c0_99 = arith.constant 0 : index
    %61 = vector.load %arg4[%c0_96, %c1_97, %c1_98, %c0_99] : memref<2x10x10x32xf32, #tpu.memory_space<vmem>>, vector<2x8x8x32xf32>
    %62 = vector.shape_cast %61 : vector<2x8x8x32xf32> to vector<128x32xf32>
    %c0_100 = arith.constant 0 : index
    %c128_101 = arith.constant 128 : index
    %63 = vector.load %arg5[%c0_100, %c128_101] : memref<128x288xf32, #tpu.memory_space<vmem>>, vector<128x32xf32>
    tpu.vector_store %arg5[%c0_100, %c128_101], %62 {strides = array<i32>} : memref<128x288xf32, #tpu.memory_space<vmem>>, vector<128x32xf32>,
    %c0_102 = arith.constant 0 : index
    %c1_103 = arith.constant 1 : index
    %c2_104 = arith.constant 2 : index
    %c0_105 = arith.constant 0 : index
    %64 = vector.load %arg4[%c0_102, %c1_103, %c2_104, %c0_105] : memref<2x10x10x32xf32, #tpu.memory_space<vmem>>, vector<2x8x8x32xf32>
    %65 = vector.shape_cast %64 : vector<2x8x8x32xf32> to vector<128x32xf32>
    %c0_106 = arith.constant 0 : index
    %c160_107 = arith.constant 160 : index
    %66 = vector.load %arg5[%c0_106, %c160_107] : memref<128x288xf32, #tpu.memory_space<vmem>>, vector<128x32xf32>
    tpu.vector_store %arg5[%c0_106, %c160_107], %65 {strides = array<i32>} : memref<128x288xf32, #tpu.memory_space<vmem>>, vector<128x32xf32>,
    %c0_108 = arith.constant 0 : index
    %c2_109 = arith.constant 2 : index
    %c0_110 = arith.constant 0 : index
    %c0_111 = arith.constant 0 : index
    %67 = vector.load %arg4[%c0_108, %c2_109, %c0_110, %c0_111] : memref<2x10x10x32xf32, #tpu.memory_space<vmem>>, vector<2x8x8x32xf32>
    %68 = vector.shape_cast %67 : vector<2x8x8x32xf32> to vector<128x32xf32>
    %c0_112 = arith.constant 0 : index
    %c192_113 = arith.constant 192 : index
    %69 = vector.load %arg5[%c0_112, %c192_113] : memref<128x288xf32, #tpu.memory_space<vmem>>, vector<128x32xf32>
    tpu.vector_store %arg5[%c0_112, %c192_113], %68 {strides = array<i32>} : memref<128x288xf32, #tpu.memory_space<vmem>>, vector<128x32xf32>,
    %c0_114 = arith.constant 0 : index
    %c2_115 = arith.constant 2 : index
    %c1_116 = arith.constant 1 : index
    %c0_117 = arith.constant 0 : index
    %70 = vector.load %arg4[%c0_114, %c2_115, %c1_116, %c0_117] : memref<2x10x10x32xf32, #tpu.memory_space<vmem>>, vector<2x8x8x32xf32>
    %71 = vector.shape_cast %70 : vector<2x8x8x32xf32> to vector<128x32xf32>
    %c0_118 = arith.constant 0 : index
    %c224_119 = arith.constant 224 : index
    %72 = vector.load %arg5[%c0_118, %c224_119] : memref<128x288xf32, #tpu.memory_space<vmem>>, vector<128x32xf32>
    tpu.vector_store %arg5[%c0_118, %c224_119], %71 {strides = array<i32>} : memref<128x288xf32, #tpu.memory_space<vmem>>, vector<128x32xf32>,
    %c0_120 = arith.constant 0 : index
    %c2_121 = arith.constant 2 : index
    %c2_122 = arith.constant 2 : index
    %c0_123 = arith.constant 0 : index
    %73 = vector.load %arg4[%c0_120, %c2_121, %c2_122, %c0_123] : memref<2x10x10x32xf32, #tpu.memory_space<vmem>>, vector<2x8x8x32xf32>
    %74 = vector.shape_cast %73 : vector<2x8x8x32xf32> to vector<128x32xf32>
    %c0_124 = arith.constant 0 : index
    %c256_125 = arith.constant 256 : index
    %75 = vector.load %arg5[%c0_124, %c256_125] : memref<128x288xf32, #tpu.memory_space<vmem>>, vector<128x32xf32>
    tpu.vector_store %arg5[%c0_124, %c256_125], %74 {strides = array<i32>} : memref<128x288xf32, #tpu.memory_space<vmem>>, vector<128x32xf32>,
    %c0_126 = arith.constant 0 : index
    %c0_127 = arith.constant 0 : index
    %76 = vector.load %arg5[%c0_126, %c0_127] : memref<128x288xf32, #tpu.memory_space<vmem>>, vector<128x288xf32>
    %77 = arith.truncf %76 : vector<128x288xf32> to vector<128x288xbf16>
    %c544 = arith.constant 544 : index
    %c0_128 = arith.constant 0 : index
    %78 = vector.load %arg1[%c544, %c0_128] : memref<864x32xbf16, #tpu.memory_space<vmem>>, vector<288x32xbf16>
    %cst_129 = arith.constant dense<0.000000e+00> : vector<128x32xf32>
    %79 = tpu.matmul %77, %78, %cst_129 {dimension_numbers = #tpu.dot_dimension_numbers<[1], [0], [0], [1], [0, 0, 1, 1], [], []>} : vector<128x288xbf16>, vector<288x32xbf16>, vector<128x32xf32> -> vector<128x32xf32>
    %80 = vector.broadcast %46 : vector<1x32xf32> to vector<128x32xf32>
    %81 = arith.addf %79, %80 : vector<128x32xf32>
    %cst_130 = arith.constant 0.000000e+00 : f32
    %82 = vector.broadcast %cst_130 : f32 to vector<128x32xf32>
    %83 = arith.maximumf %81, %82 : vector<128x32xf32>
    %84 = arith.truncf %83 : vector<128x32xf32> to vector<128x32xbf16>
    %c832 = arith.constant 832 : index
    %c0_131 = arith.constant 0 : index
    %85 = vector.load %arg1[%c832, %c0_131] : memref<864x32xbf16, #tpu.memory_space<vmem>>, vector<32x32xbf16>
    %cst_132 = arith.constant dense<0.000000e+00> : vector<128x32xf32>
    %86 = tpu.matmul %84, %85, %cst_132 {dimension_numbers = #tpu.dot_dimension_numbers<[1], [0], [0], [1], [0, 0, 1, 1], [], []>} : vector<128x32xbf16>, vector<32x32xbf16>, vector<128x32xf32> -> vector<128x32xf32>
    %c3 = arith.constant 3 : index
    %c0_133 = arith.constant 0 : index
    %87 = vector.load %arg2[%c3, %c0_133] : memref<6x32xf32, #tpu.memory_space<vmem>>, vector<1x32xf32>
    %88 = vector.broadcast %87 : vector<1x32xf32> to vector<128x32xf32>
    %89 = arith.addf %86, %88 : vector<128x32xf32>
    %cst_134 = arith.constant dense<0.000000e+00> : vector<128xf32>
    %90 = vector.multi_reduction <add>, %89, %cst_134 [1] : vector<128x32xf32> to vector<128xf32>
    %91 = vector.shape_cast %90 : vector<128xf32> to vector<128x1xf32>
    %cst_135 = arith.constant 3.200000e+01 : f32
    %92 = vector.broadcast %cst_135 : f32 to vector<128x1xf32>
    %93 = arith.divf %91, %92 : vector<128x1xf32>
    %94 = vector.broadcast %93 : vector<128x1xf32> to vector<128x32xf32>
    %95 = arith.subf %89, %94 : vector<128x32xf32>
    %96 = arith.mulf %95, %95 : vector<128x32xf32>
    %cst_136 = arith.constant dense<0.000000e+00> : vector<128xf32>
    %97 = vector.multi_reduction <add>, %96, %cst_136 [1] : vector<128x32xf32> to vector<128xf32>
    %98 = vector.shape_cast %97 : vector<128xf32> to vector<128x1xf32>
    %cst_137 = arith.constant 3.200000e+01 : f32
    %99 = vector.broadcast %cst_137 : f32 to vector<128x1xf32>
    %100 = arith.divf %98, %99 : vector<128x1xf32>
    %101 = vector.broadcast %93 : vector<128x1xf32> to vector<128x32xf32>
    %102 = arith.subf %89, %101 : vector<128x32xf32>
    %cst_138 = arith.constant 9.99999974E-6 : f32
    %103 = vector.broadcast %cst_138 : f32 to vector<128x1xf32>
    %104 = arith.addf %100, %103 : vector<128x1xf32>
    %105 = math.rsqrt %104 : vector<128x1xf32>
    %106 = vector.broadcast %105 : vector<128x1xf32> to vector<128x32xf32>
    %107 = arith.mulf %102, %106 : vector<128x32xf32>
    %c4 = arith.constant 4 : index
    %c0_139 = arith.constant 0 : index
    %108 = vector.load %arg2[%c4, %c0_139] : memref<6x32xf32, #tpu.memory_space<vmem>>, vector<1x32xf32>
    %109 = vector.broadcast %108 : vector<1x32xf32> to vector<128x32xf32>
    %110 = arith.mulf %107, %109 : vector<128x32xf32>
    %c5 = arith.constant 5 : index
    %c0_140 = arith.constant 0 : index
    %111 = vector.load %arg2[%c5, %c0_140] : memref<6x32xf32, #tpu.memory_space<vmem>>, vector<1x32xf32>
    %112 = vector.broadcast %111 : vector<1x32xf32> to vector<128x32xf32>
    %113 = arith.addf %110, %112 : vector<128x32xf32>
    %114 = vector.shape_cast %113 : vector<128x32xf32> to vector<2x64x32xf32>
    %c0_141 = arith.constant 0 : index
    %c0_142 = arith.constant 0 : index
    %c0_143 = arith.constant 0 : index
    %115 = vector.load %arg3[%c0_141, %c0_142, %c0_143] : memref<2x64x32xf32, #tpu.memory_space<vmem>>, vector<2x64x32xf32>
    tpu.vector_store %arg3[%c0_141, %c0_142, %c0_143], %114 {strides = array<i32>} : memref<2x64x32xf32, #tpu.memory_space<vmem>>, vector<2x64x32xf32>,
    return
  }
}

</mosaic_0001>

<llo_original>
// kernel: patch_embed_forward.4
$region0: #{patch_embed_forward.4}
  #allocation0 [shape = 'u32[]', space=smem, size = 0x4, offset = 0x4, fixed_abs, tag = 'smem constant byte address 0x4 - core index']
  #allocation1 [shape = 'u32[72,128]{1,0:T(1,128)}', space=vmem, size = 0x9000, scoped, tag = 'internal scratch']
  %s0 = inlined_call_operand.vmem [shape: f32[8,64,32], index: 0, kind: input, shape index: {}]
  %s1 = inlined_call_operand.vmem [shape: bf16[8,32,64], index: 1, kind: input, shape index: {}]
  %s2 = inlined_call_operand.vmem [shape: bf16[64,32], index: 2, kind: input, shape index: {}]
  %s3 = inlined_call_operand.vmem [shape: f32[2,32], index: 3, kind: input, shape index: {}]
  %s4 = inlined_call_operand.vmem [shape: f32[16,1], index: 4, kind: input, shape index: {}]
  %s5 = inlined_call_operand.vmem [shape: f32[8,64,32], index: 5, kind: output, shape index: {}]
  %s6 = sld [smem:[#allocation0]]
  $region30: #{patch_embed_forward.4} parent=0
    _
  %s8 = ssub.s32 1, %s6
  %s9 = scalar_select 0, %s8, %s6
  // Predicated region
  $region2: #{patch_embed_forward.4} parent=0 // pred_check
    _
  $region3: #{patch_embed_forward.4} parent=0 // pred_check_branch
    %11 = sbr.rel (0) target = $region5
  $region4: #{patch_embed_forward.4} parent=0 // pred_region
    _
  $region5: #{patch_embed_forward.4} parent=0 // pred_fallthru
    _
  // Predicated region
  $region6: #{patch_embed_forward.4} parent=0 // pred_check
    _
  $region7: #{patch_embed_forward.4} parent=0 // pred_check_branch
    %13 = sbr.rel (0) target = $region9
  $region8: #{patch_embed_forward.4} parent=0 // pred_region
    _
  $region9: #{patch_embed_forward.4} parent=0 // pred_fallthru
    _
  // Predicated region
  $region10: #{patch_embed_forward.4} parent=0 // pred_check
    _
  $region11: #{patch_embed_forward.4} parent=0 // pred_check_branch
    %15 = sbr.rel (0) target = $region13
  $region12: #{patch_embed_forward.4} parent=0 // pred_region
    _
  $region13: #{patch_embed_forward.4} parent=0 // pred_fallthru
    _
  // Predicated region
  $region14: #{patch_embed_forward.4} parent=0 // pred_check
    _
  $region15: #{patch_embed_forward.4} parent=0 // pred_check_branch
    %17 = sbr.rel (0) target = $region17
  $region16: #{patch_embed_forward.4} parent=0 // pred_region
    _
  $region17: #{patch_embed_forward.4} parent=0 // pred_fallthru
    _
  // Predicated region
  $region18: #{patch_embed_forward.4} parent=0 // pred_check
    _
  $region19: #{patch_embed_forward.4} parent=0 // pred_check_branch
    %19 = sbr.rel (0) target = $region21
  $region20: #{patch_embed_forward.4} parent=0 // pred_region
    _
  $region21: #{patch_embed_forward.4} parent=0 // pred_fallthru
    _
  %v21 = vld [vmem:[%s0] sm:$0xff]
  %v22 = vld [vmem:[%s0 + $0x8] sm:$0xff]
  %v23 = vld [vmem:[%s0 + $0x10] sm:$0xff]
  %v24 = vld [vmem:[%s0 + $0x18] sm:$0xff]
  %v25 = vld [vmem:[%s0 + $0x20] sm:$0xff]
  %v26 = vld [vmem:[%s0 + $0x28] sm:$0xff]
  %v27 = vld [vmem:[%s0 + $0x30] sm:$0xff]
  %v28 = vld [vmem:[%s0 + $0x38] sm:$0xff]
  %v29 = vld [vmem:[%s0 + $0x40] sm:$0xff]
  %v30 = vld [vmem:[%s0 + $0x48] sm:$0xff]
  %v31 = vld [vmem:[%s0 + $0x50] sm:$0xff]
  %v32 = vld [vmem:[%s0 + $0x58] sm:$0xff]
  %v33 = vld [vmem:[%s0 + $0x60] sm:$0xff]
  %v34 = vld [vmem:[%s0 + $0x68] sm:$0xff]
  %v35 = vld [vmem:[%s0 + $0x70] sm:$0xff]
  %v36 = vld [vmem:[%s0 + $0x78] sm:$0xff]
  %v37 = vld [vmem:[%s0 + $0x80] sm:$0xff]
  %v38 = vld [vmem:[%s0 + $0x88] sm:$0xff]
  %v39 = vld [vmem:[%s0 + $0x90] sm:$0xff]
  %v40 = vld [vmem:[%s0 + $0x98] sm:$0xff]
  %v41 = vld [vmem:[%s0 + $0xa0] sm:$0xff]
  %v42 = vld [vmem:[%s0 + $0xa8] sm:$0xff]
  %v43 = vld [vmem:[%s0 + $0xb0] sm:$0xff]
  %v44 = vld [vmem:[%s0 + $0xb8] sm:$0xff]
  %v45 = vld [vmem:[%s0 + $0xc0] sm:$0xff]
  %v46 = vld [vmem:[%s0 + $0xc8] sm:$0xff]
  %v47 = vld [vmem:[%s0 + $0xd0] sm:$0xff]
  %v48 = vld [vmem:[%s0 + $0xd8] sm:$0xff]
  %v49 = vld [vmem:[%s0 + $0xe0] sm:$0xff]
  %v50 = vld [vmem:[%s0 + $0xe8] sm:$0xff]
  %v51 = vld [vmem:[%s0 + $0xf0] sm:$0xff]
  %v52 = vld [vmem:[%s0 + $0xf8] sm:$0xff]
  %v53 = vld [vmem:[%s0 + $0x100] sm:$0xff]
  %v54 = vld [vmem:[%s0 + $0x108] sm:$0xff]
  %v55 = vld [vmem:[%s0 + $0x110] sm:$0xff]
  %v56 = vld [vmem:[%s0 + $0x118] sm:$0xff]
  %v57 = vld [vmem:[%s0 + $0x120] sm:$0xff]
  %v58 = vld [vmem:[%s0 + $0x128] sm:$0xff]
  %v59 = vld [vmem:[%s0 + $0x130] sm:$0xff]
  %v60 = vld [vmem:[%s0 + $0x138] sm:$0xff]
  %v61 = vld [vmem:[%s0 + $0x140] sm:$0xff]
  %v62 = vld [vmem:[%s0 + $0x148] sm:$0xff]
  %v63 = vld [vmem:[%s0 + $0x150] sm:$0xff]
  %v64 = vld [vmem:[%s0 + $0x158] sm:$0xff]
  %v65 = vld [vmem:[%s0 + $0x160] sm:$0xff]
  %v66 = vld [vmem:[%s0 + $0x168] sm:$0xff]
  %v67 = vld [vmem:[%s0 + $0x170] sm:$0xff]
  %v68 = vld [vmem:[%s0 + $0x178] sm:$0xff]
  %v69 = vld [vmem:[%s0 + $0x180] sm:$0xff]
  %v70 = vld [vmem:[%s0 + $0x188] sm:$0xff]
  %v71 = vld [vmem:[%s0 + $0x190] sm:$0xff]
  %v72 = vld [vmem:[%s0 + $0x198] sm:$0xff]
  %v73 = vld [vmem:[%s0 + $0x1a0] sm:$0xff]
  %v74 = vld [vmem:[%s0 + $0x1a8] sm:$0xff]
  %v75 = vld [vmem:[%s0 + $0x1b0] sm:$0xff]
  %v76 = vld [vmem:[%s0 + $0x1b8] sm:$0xff]
  %v77 = vld [vmem:[%s0 + $0x1c0] sm:$0xff]
  %v78 = vld [vmem:[%s0 + $0x1c8] sm:$0xff]
  %v79 = vld [vmem:[%s0 + $0x1d0] sm:$0xff]
  %v80 = vld [vmem:[%s0 + $0x1d8] sm:$0xff]
  %v81 = vld [vmem:[%s0 + $0x1e0] sm:$0xff]
  %v82 = vld [vmem:[%s0 + $0x1e8] sm:$0xff]
  %v83 = vld [vmem:[%s0 + $0x1f0] sm:$0xff]
  %v84 = vld [vmem:[%s0 + $0x1f8] sm:$0xff]
  %v85 = vpack.c.bf16 %v22, %v21
  %v86 = vpack.c.bf16 %v24, %v23
  %v87 = vpack.c.bf16 %v26, %v25
  %v88 = vpack.c.bf16 %v28, %v27
  %v89 = vpack.c.bf16 %v30, %v29
  %v90 = vpack.c.bf16 %v32, %v31
  %v91 = vpack.c.bf16 %v34, %v33
  %v92 = vpack.c.bf16 %v36, %v35
  %v93 = vpack.c.bf16 %v38, %v37
  %v94 = vpack.c.bf16 %v40, %v39
  %v95 = vpack.c.bf16 %v42, %v41
  %v96 = vpack.c.bf16 %v44, %v43
  %v97 = vpack.c.bf16 %v46, %v45
  %v98 = vpack.c.bf16 %v48, %v47
  %v99 = vpack.c.bf16 %v50, %v49
  %v100 = vpack.c.bf16 %v52, %v51
  %v101 = vpack.c.bf16 %v54, %v53
  %v102 = vpack.c.bf16 %v56, %v55
  %v103 = vpack.c.bf16 %v58, %v57
  %v104 = vpack.c.bf16 %v60, %v59
  %v105 = vpack.c.bf16 %v62, %v61
  %v106 = vpack.c.bf16 %v64, %v63
  %v107 = vpack.c.bf16 %v66, %v65
  %v108 = vpack.c.bf16 %v68, %v67
  %v109 = vpack.c.bf16 %v70, %v69
  %v110 = vpack.c.bf16 %v72, %v71
  %v111 = vpack.c.bf16 %v74, %v73
  %v112 = vpack.c.bf16 %v76, %v75
  %v113 = vpack.c.bf16 %v78, %v77
  %v114 = vpack.c.bf16 %v80, %v79
  %v115 = vpack.c.bf16 %v82, %v81
  %v116 = vpack.c.bf16 %v84, %v83
  %v117 = vld [vmem:[%s2] sm:$0xf]
  %v118 = vld [vmem:[%s2 + $0x4] sm:$0xf]
  %v119 = vld [vmem:[%s2 + $0x8] sm:$0xf]
  %v120 = vld [vmem:[%s2 + $0xc] sm:$0xf]
  %v121 = vld [vmem:[%s3] sm:$0x1]
  %v122 = vperm.slane %v121, 0
  %v127 = vunpack.c.l.b16 %v117
  %v128 = vunpack.c.l.b16 %v118
  %v129 = vunpack.c.l.b16 %v119
  %v130 = vunpack.c.l.b16 %v120
  %v131 = vpack.c.b16 %v128, %v127
  %v132 = vpack.c.b16 %v130, %v129
  %vm135 = vcmask 261120
  %v137 = vsel %vm135, %v85, 0
  %v140 = vsel %vm135, %v86, 0
  %v143 = vsel %vm135, %v87, 0
  %v146 = vsel %vm135, %v88, 0
  %v149 = vsel %vm135, %v89, 0
  %v152 = vsel %vm135, %v90, 0
  %v155 = vsel %vm135, %v91, 0
  %v158 = vsel %vm135, %v92, 0
  %v161 = vsel %vm135, %v93, 0
  %v164 = vsel %vm135, %v94, 0
  %v167 = vsel %vm135, %v95, 0
  %v170 = vsel %vm135, %v96, 0
  %v173 = vsel %vm135, %v97, 0
  %v176 = vsel %vm135, %v98, 0
  %v179 = vsel %vm135, %v99, 0
  %v182 = vsel %vm135, %v100, 0
  %v185 = vsel %vm135, %v101, 0
  %v188 = vsel %vm135, %v102, 0
  %v191 = vsel %vm135, %v103, 0
  %v194 = vsel %vm135, %v104, 0
  %v197 = vsel %vm135, %v105, 0
  %v200 = vsel %vm135, %v106, 0
  %v203 = vsel %vm135, %v107, 0
  %v206 = vsel %vm135, %v108, 0
  %v209 = vsel %vm135, %v109, 0
  %v212 = vsel %vm135, %v110, 0
  %v215 = vsel %vm135, %v111, 0
  %v218 = vsel %vm135, %v112, 0
  %v221 = vsel %vm135, %v113, 0
  %v224 = vsel %vm135, %v114, 0
  %v227 = vsel %vm135, %v115, 0
  %v230 = vsel %vm135, %v116, 0
  %232 = vmatpush.bf16.msra.mxu0 0
  %233 = vmatpush.bf16.msra.mxu0 0
  %234 = vmatpush.bf16.msra.mxu0 0
  %235 = vmatpush.bf16.msra.mxu0 0
  %236 = vmatpush.bf16.msra.mxu0 0
  %237 = vmatpush.bf16.msra.mxu0 0
  %238 = vmatpush.bf16.msra.mxu0 %v132
  %239 = vmatpush.bf16.msra.mxu0 %v131
  %240 = vmatmul.bf16.gmra.mxu0 %v137
  %v241 = vpop.f32.mrf.mxu0
  %v242 = vadd.f32 %v122, %v241
  %v243 = vpop.f32.mrf.mxu0
  %v244 = vadd.f32 %v122, %v243
  %245 = vmatmul.bf16.gmra.mxu0 %v140
  %v246 = vpop.f32.mrf.mxu0
  %v247 = vadd.f32 %v122, %v246
  %v248 = vpop.f32.mrf.mxu0
  %v249 = vadd.f32 %v122, %v248
  %250 = vmatmul.bf16.gmra.mxu0 %v143
  %v251 = vpop.f32.mrf.mxu0
  %v252 = vadd.f32 %v122, %v251
  %v253 = vpop.f32.mrf.mxu0
  %v254 = vadd.f32 %v122, %v253
  %255 = vmatmul.bf16.gmra.mxu0 %v146
  %v256 = vpop.f32.mrf.mxu0
  %v257 = vadd.f32 %v122, %v256
  %v258 = vpop.f32.mrf.mxu0
  %v259 = vadd.f32 %v122, %v258
  %260 = vmatmul.bf16.gmra.mxu0 %v149
  %v261 = vpop.f32.mrf.mxu0
  %v262 = vadd.f32 %v122, %v261
  %v263 = vpop.f32.mrf.mxu0
  %v264 = vadd.f32 %v122, %v263
  %265 = vmatmul.bf16.gmra.mxu0 %v152
  %v266 = vpop.f32.mrf.mxu0
  %v267 = vadd.f32 %v122, %v266
  %v268 = vpop.f32.mrf.mxu0
  %v269 = vadd.f32 %v122, %v268
  %270 = vmatmul.bf16.gmra.mxu0 %v155
  %v271 = vpop.f32.mrf.mxu0
  %v272 = vadd.f32 %v122, %v271
  %v273 = vpop.f32.mrf.mxu0
  %v274 = vadd.f32 %v122, %v273
  %275 = vmatmul.bf16.gmra.mxu0 %v158
  %v276 = vpop.f32.mrf.mxu0
  %v277 = vadd.f32 %v122, %v276
  %v278 = vpop.f32.mrf.mxu0
  %v279 = vadd.f32 %v122, %v278
  %280 = vmatmul.bf16.gmra.mxu0 %v161
  %v281 = vpop.f32.mrf.mxu0
  %v282 = vadd.f32 %v122, %v281
  %v283 = vpop.f32.mrf.mxu0
  %v284 = vadd.f32 %v122, %v283
  %285 = vmatmul.bf16.gmra.mxu0 %v164
  %v286 = vpop.f32.mrf.mxu0
  %v287 = vadd.f32 %v122, %v286
  %v288 = vpop.f32.mrf.mxu0
  %v289 = vadd.f32 %v122, %v288
  %290 = vmatmul.bf16.gmra.mxu0 %v167
  %v291 = vpop.f32.mrf.mxu0
  %v292 = vadd.f32 %v122, %v291
  %v293 = vpop.f32.mrf.mxu0
  %v294 = vadd.f32 %v122, %v293
  %295 = vmatmul.bf16.gmra.mxu0 %v170
  %v296 = vpop.f32.mrf.mxu0
  %v297 = vadd.f32 %v122, %v296
  %v298 = vpop.f32.mrf.mxu0
  %v299 = vadd.f32 %v122, %v298
  %300 = vmatmul.bf16.gmra.mxu0 %v173
  %v301 = vpop.f32.mrf.mxu0
  %v302 = vadd.f32 %v122, %v301
  %v303 = vpop.f32.mrf.mxu0
  %v304 = vadd.f32 %v122, %v303
  %305 = vmatmul.bf16.gmra.mxu0 %v176
  %v306 = vpop.f32.mrf.mxu0
  %v307 = vadd.f32 %v122, %v306
  %v308 = vpop.f32.mrf.mxu0
  %v309 = vadd.f32 %v122, %v308
  %310 = vmatmul.bf16.gmra.mxu0 %v179
  %v311 = vpop.f32.mrf.mxu0
  %v312 = vadd.f32 %v122, %v311
  %v313 = vpop.f32.mrf.mxu0
  %v314 = vadd.f32 %v122, %v313
  %315 = vmatmul.bf16.gmra.mxu0 %v182
  %v316 = vpop.f32.mrf.mxu0
  %v317 = vadd.f32 %v122, %v316
  %v318 = vpop.f32.mrf.mxu0
  %v319 = vadd.f32 %v122, %v318
  %320 = vmatmul.bf16.gmra.mxu0 %v185
  %v321 = vpop.f32.mrf.mxu0
  %v322 = vadd.f32 %v122, %v321
  %v323 = vpop.f32.mrf.mxu0
  %v324 = vadd.f32 %v122, %v323
  %325 = vmatmul.bf16.gmra.mxu0 %v188
  %v326 = vpop.f32.mrf.mxu0
  %v327 = vadd.f32 %v122, %v326
  %v328 = vpop.f32.mrf.mxu0
  %v329 = vadd.f32 %v122, %v328
  %330 = vmatmul.bf16.gmra.mxu0 %v191
  %v331 = vpop.f32.mrf.mxu0
  %v332 = vadd.f32 %v122, %v331
  %v333 = vpop.f32.mrf.mxu0
  %v334 = vadd.f32 %v122, %v333
  %335 = vmatmul.bf16.gmra.mxu0 %v194
  %v336 = vpop.f32.mrf.mxu0
  %v337 = vadd.f32 %v122, %v336
  %v338 = vpop.f32.mrf.mxu0
  %v339 = vadd.f32 %v122, %v338
  %340 = vmatmul.bf16.gmra.mxu0 %v197
  %v341 = vpop.f32.mrf.mxu0
  %v342 = vadd.f32 %v122, %v341
  %v343 = vpop.f32.mrf.mxu0
  %v344 = vadd.f32 %v122, %v343
  %345 = vmatmul.bf16.gmra.mxu0 %v200
  %v346 = vpop.f32.mrf.mxu0
  %v347 = vadd.f32 %v122, %v346
  %v348 = vpop.f32.mrf.mxu0
  %v349 = vadd.f32 %v122, %v348
  %350 = vmatmul.bf16.gmra.mxu0 %v203
  %v351 = vpop.f32.mrf.mxu0
  %v352 = vadd.f32 %v122, %v351
  %v353 = vpop.f32.mrf.mxu0
  %v354 = vadd.f32 %v122, %v353
  %355 = vmatmul.bf16.gmra.mxu0 %v206
  %v356 = vpop.f32.mrf.mxu0
  %v357 = vadd.f32 %v122, %v356
  %v358 = vpop.f32.mrf.mxu0
  %v359 = vadd.f32 %v122, %v358
  %360 = vmatmul.bf16.gmra.mxu0 %v209
  %v361 = vpop.f32.mrf.mxu0
  %v362 = vadd.f32 %v122, %v361
  %v363 = vpop.f32.mrf.mxu0
  %v364 = vadd.f32 %v122, %v363
  %365 = vmatmul.bf16.gmra.mxu0 %v212
  %v366 = vpop.f32.mrf.mxu0
  %v367 = vadd.f32 %v122, %v366
  %v368 = vpop.f32.mrf.mxu0
  %v369 = vadd.f32 %v122, %v368
  %370 = vmatmul.bf16.gmra.mxu0 %v215
  %v371 = vpop.f32.mrf.mxu0
  %v372 = vadd.f32 %v122, %v371
  %v373 = vpop.f32.mrf.mxu0
  %v374 = vadd.f32 %v122, %v373
  %375 = vmatmul.bf16.gmra.mxu0 %v218
  %v376 = vpop.f32.mrf.mxu0
  %v377 = vadd.f32 %v122, %v376
  %v378 = vpop.f32.mrf.mxu0
  %v379 = vadd.f32 %v122, %v378
  %380 = vmatmul.bf16.gmra.mxu0 %v221
  %v381 = vpop.f32.mrf.mxu0
  %v382 = vadd.f32 %v122, %v381
  %v383 = vpop.f32.mrf.mxu0
  %v384 = vadd.f32 %v122, %v383
  %385 = vmatmul.bf16.gmra.mxu0 %v224
  %v386 = vpop.f32.mrf.mxu0
  %v387 = vadd.f32 %v122, %v386
  %v388 = vpop.f32.mrf.mxu0
  %v389 = vadd.f32 %v122, %v388
  %390 = vmatmul.bf16.gmra.mxu0 %v227
  %v391 = vpop.f32.mrf.mxu0
  %v392 = vadd.f32 %v122, %v391
  %v393 = vpop.f32.mrf.mxu0
  %v394 = vadd.f32 %v122, %v393
  %395 = vmatmul.bf16.gmra.mxu0 %v230
  %v396 = vpop.f32.mrf.mxu0
  %v397 = vadd.f32 %v122, %v396
  %v398 = vpop.f32.mrf.mxu0
  %v399 = vadd.f32 %v122, %v398
  %400 = vdwg.mxu0
  %v401 = vld [vmem:[%s2 + $0x10] sm:$0xf]
  %v402 = vld [vmem:[%s2 + $0x14] sm:$0xf]
  %v403 = vld [vmem:[%s1] sm:$0xf]
  %v404 = vld [vmem:[%s1 + $0x4] sm:$0xf]
  %v405 = vld [vmem:[%s1 + $0x8] sm:$0xf]
  %v406 = vld [vmem:[%s1 + $0xc] sm:$0xf]
  %v407 = vld [vmem:[%s1 + $0x10] sm:$0xf]
  %v408 = vld [vmem:[%s1 + $0x14] sm:$0xf]
  %v409 = vld [vmem:[%s1 + $0x18] sm:$0xf]
  %v410 = vld [vmem:[%s1 + $0x1c] sm:$0xf]
  %v411 = vld [vmem:[%s1 + $0x20] sm:$0xf]
  %v412 = vld [vmem:[%s1 + $0x24] sm:$0xf]
  %v413 = vld [vmem:[%s1 + $0x28] sm:$0xf]
  %v414 = vld [vmem:[%s1 + $0x2c] sm:$0xf]
  %v415 = vld [vmem:[%s1 + $0x30] sm:$0xf]
  %v416 = vld [vmem:[%s1 + $0x34] sm:$0xf]
  %v417 = vld [vmem:[%s1 + $0x38] sm:$0xf]
  %v418 = vld [vmem:[%s1 + $0x3c] sm:$0xf]
  %v419 = vld [vmem:[%s1 + $0x40] sm:$0xf]
  %v420 = vld [vmem:[%s1 + $0x44] sm:$0xf]
  %v421 = vld [vmem:[%s1 + $0x48] sm:$0xf]
  %v422 = vld [vmem:[%s1 + $0x4c] sm:$0xf]
  %v423 = vld [vmem:[%s1 + $0x50] sm:$0xf]
  %v424 = vld [vmem:[%s1 + $0x54] sm:$0xf]
  %v425 = vld [vmem:[%s1 + $0x58] sm:$0xf]
  %v426 = vld [vmem:[%s1 + $0x5c] sm:$0xf]
  %v427 = vld [vmem:[%s1 + $0x60] sm:$0xf]
  %v428 = vld [vmem:[%s1 + $0x64] sm:$0xf]
  %v429 = vld [vmem:[%s1 + $0x68] sm:$0xf]
  %v430 = vld [vmem:[%s1 + $0x6c] sm:$0xf]
  %v431 = vld [vmem:[%s1 + $0x70] sm:$0xf]
  %v432 = vld [vmem:[%s1 + $0x74] sm:$0xf]
  %v433 = vld [vmem:[%s1 + $0x78] sm:$0xf]
  %v434 = vld [vmem:[%s1 + $0x7c] sm:$0xf]
  %v435 = vld [vmem:[%s4] sm:$0xff]
  %v436 = vld [vmem:[%s4 + $0x8] sm:$0xff]
  %438 = vset.pattern.permute.xlu0 0
  %439 = vperm.xlu0 %438, %v435
  %v440 = vpop.permute.xlu0 %439
  %443 = vset.pattern.permute.xlu0 0
  %444 = vperm.xlu0 %443, %v436
  %v445 = vpop.permute.xlu0 %444
  %v449 = vunpack.c.l.b16 %v401
  %v450 = vunpack.c.l.b16 %v402
  %v451 = vpack.c.b16 %v450, %v449
  %v456 = vunpack.c.l.b16 %v403
  %v457 = vunpack.c.l.b16 %v404
  %v458 = vunpack.c.l.b16 %v405
  %v459 = vunpack.c.l.b16 %v406
  %v460 = vpack.c.b16 %v457, %v456
  %v461 = vpack.c.b16 %v459, %v458
  %v465 = vsel %vm135, %v451, 0
  %467 = vmatpush.bf16.msra.mxu0 0
  %468 = vmatpush.bf16.msra.mxu0 0
  %469 = vmatpush.bf16.msra.mxu0 0
  %470 = vmatpush.bf16.msra.mxu0 0
  %471 = vmatpush.bf16.msra.mxu0 0
  %472 = vmatpush.bf16.msra.mxu0 0
  %473 = vmatpush.bf16.msra.mxu0 %v461
  %474 = vmatpush.bf16.msra.mxu0 %v460
  %475 = vmatmul.bf16.gmra.mxu0 %v465
  %v476 = vpop.f32.mrf.mxu0
  %v477 = vadd.f32 %v440, %v476
  %v478 = vpop.f32.mrf.mxu0
  %v479 = vadd.f32 %v445, %v478
  %480 = vdwg.mxu0
  %v485 = vunpack.c.l.b16 %v407
  %v486 = vunpack.c.l.b16 %v408
  %v487 = vunpack.c.l.b16 %v409
  %v488 = vunpack.c.l.b16 %v410
  %v489 = vpack.c.b16 %v486, %v485
  %v490 = vpack.c.b16 %v488, %v487
  %493 = vmatpush.bf16.msra.mxu0 0
  %494 = vmatpush.bf16.msra.mxu0 0
  %495 = vmatpush.bf16.msra.mxu0 0
  %496 = vmatpush.bf16.msra.mxu0 0
  %497 = vmatpush.bf16.msra.mxu0 0
  %498 = vmatpush.bf16.msra.mxu0 0
  %499 = vmatpush.bf16.msra.mxu0 %v490
  %500 = vmatpush.bf16.msra.mxu0 %v489
  %501 = vmatmul.bf16.gmra.mxu0 %v465
  %v502 = vpop.f32.mrf.mxu0
  %v503 = vadd.f32 %v440, %v502
  %v504 = vpop.f32.mrf.mxu0
  %v505 = vadd.f32 %v445, %v504
  %506 = vdwg.mxu0
  %v511 = vunpack.c.l.b16 %v411
  %v512 = vunpack.c.l.b16 %v412
  %v513 = vunpack.c.l.b16 %v413
  %v514 = vunpack.c.l.b16 %v414
  %v515 = vpack.c.b16 %v512, %v511
  %v516 = vpack.c.b16 %v514, %v513
  %519 = vmatpush.bf16.msra.mxu0 0
  %520 = vmatpush.bf16.msra.mxu0 0
  %521 = vmatpush.bf16.msra.mxu0 0
  %522 = vmatpush.bf16.msra.mxu0 0
  %523 = vmatpush.bf16.msra.mxu0 0
  %524 = vmatpush.bf16.msra.mxu0 0
  %525 = vmatpush.bf16.msra.mxu0 %v516
  %526 = vmatpush.bf16.msra.mxu0 %v515
  %527 = vmatmul.bf16.gmra.mxu0 %v465
  %v528 = vpop.f32.mrf.mxu0
  %v529 = vadd.f32 %v440, %v528
  %v530 = vpop.f32.mrf.mxu0
  %v531 = vadd.f32 %v445, %v530
  %532 = vdwg.mxu0
  %v537 = vunpack.c.l.b16 %v415
  %v538 = vunpack.c.l.b16 %v416
  %v539 = vunpack.c.l.b16 %v417
  %v540 = vunpack.c.l.b16 %v418
  %v541 = vpack.c.b16 %v538, %v537
  %v542 = vpack.c.b16 %v540, %v539
  %545 = vmatpush.bf16.msra.mxu0 0
  %546 = vmatpush.bf16.msra.mxu0 0
  %547 = vmatpush.bf16.msra.mxu0 0
  %548 = vmatpush.bf16.msra.mxu0 0
  %549 = vmatpush.bf16.msra.mxu0 0
  %550 = vmatpush.bf16.msra.mxu0 0
  %551 = vmatpush.bf16.msra.mxu0 %v542
  %552 = vmatpush.bf16.msra.mxu0 %v541
  %553 = vmatmul.bf16.gmra.mxu0 %v465
  %v554 = vpop.f32.mrf.mxu0
  %v555 = vadd.f32 %v440, %v554
  %v556 = vpop.f32.mrf.mxu0
  %v557 = vadd.f32 %v445, %v556
  %558 = vdwg.mxu0
  %v563 = vunpack.c.l.b16 %v419
  %v564 = vunpack.c.l.b16 %v420
  %v565 = vunpack.c.l.b16 %v421
  %v566 = vunpack.c.l.b16 %v422
  %v567 = vpack.c.b16 %v564, %v563
  %v568 = vpack.c.b16 %v566, %v565
  %571 = vmatpush.bf16.msra.mxu0 0
  %572 = vmatpush.bf16.msra.mxu0 0
  %573 = vmatpush.bf16.msra.mxu0 0
  %574 = vmatpush.bf16.msra.mxu0 0
  %575 = vmatpush.bf16.msra.mxu0 0
  %576 = vmatpush.bf16.msra.mxu0 0
  %577 = vmatpush.bf16.msra.mxu0 %v568
  %578 = vmatpush.bf16.msra.mxu0 %v567
  %579 = vmatmul.bf16.gmra.mxu0 %v465
  %v580 = vpop.f32.mrf.mxu0
  %v581 = vadd.f32 %v440, %v580
  %v582 = vpop.f32.mrf.mxu0
  %v583 = vadd.f32 %v445, %v582
  %584 = vdwg.mxu0
  %v589 = vunpack.c.l.b16 %v423
  %v590 = vunpack.c.l.b16 %v424
  %v591 = vunpack.c.l.b16 %v425
  %v592 = vunpack.c.l.b16 %v426
  %v593 = vpack.c.b16 %v590, %v589
  %v594 = vpack.c.b16 %v592, %v591
  %597 = vmatpush.bf16.msra.mxu0 0
  %598 = vmatpush.bf16.msra.mxu0 0
  %599 = vmatpush.bf16.msra.mxu0 0
  %600 = vmatpush.bf16.msra.mxu0 0
  %601 = vmatpush.bf16.msra.mxu0 0
  %602 = vmatpush.bf16.msra.mxu0 0
  %603 = vmatpush.bf16.msra.mxu0 %v594
  %604 = vmatpush.bf16.msra.mxu0 %v593
  %605 = vmatmul.bf16.gmra.mxu0 %v465
  %v606 = vpop.f32.mrf.mxu0
  %v607 = vadd.f32 %v440, %v606
  %v608 = vpop.f32.mrf.mxu0
  %v609 = vadd.f32 %v445, %v608
  %610 = vdwg.mxu0
  %v615 = vunpack.c.l.b16 %v427
  %v616 = vunpack.c.l.b16 %v428
  %v617 = vunpack.c.l.b16 %v429
  %v618 = vunpack.c.l.b16 %v430
  %v619 = vpack.c.b16 %v616, %v615
  %v620 = vpack.c.b16 %v618, %v617
  %623 = vmatpush.bf16.msra.mxu0 0
  %624 = vmatpush.bf16.msra.mxu0 0
  %625 = vmatpush.bf16.msra.mxu0 0
  %626 = vmatpush.bf16.msra.mxu0 0
  %627 = vmatpush.bf16.msra.mxu0 0
  %628 = vmatpush.bf16.msra.mxu0 0
  %629 = vmatpush.bf16.msra.mxu0 %v620
  %630 = vmatpush.bf16.msra.mxu0 %v619
  %631 = vmatmul.bf16.gmra.mxu0 %v465
  %v632 = vpop.f32.mrf.mxu0
  %v633 = vadd.f32 %v440, %v632
  %v634 = vpop.f32.mrf.mxu0
  %v635 = vadd.f32 %v445, %v634
  %636 = vdwg.mxu0
  %v641 = vunpack.c.l.b16 %v431
  %v642 = vunpack.c.l.b16 %v432
  %v643 = vunpack.c.l.b16 %v433
  %v644 = vunpack.c.l.b16 %v434
  %v645 = vpack.c.b16 %v642, %v641
  %v646 = vpack.c.b16 %v644, %v643
  %649 = vmatpush.bf16.msra.mxu0 0
  %650 = vmatpush.bf16.msra.mxu0 0
  %651 = vmatpush.bf16.msra.mxu0 0
  %652 = vmatpush.bf16.msra.mxu0 0
  %653 = vmatpush.bf16.msra.mxu0 0
  %654 = vmatpush.bf16.msra.mxu0 0
  %655 = vmatpush.bf16.msra.mxu0 %v646
  %656 = vmatpush.bf16.msra.mxu0 %v645
  %657 = vmatmul.bf16.gmra.mxu0 %v465
  %v658 = vpop.f32.mrf.mxu0
  %v659 = vadd.f32 %v440, %v658
  %v660 = vpop.f32.mrf.mxu0
  %v661 = vadd.f32 %v445, %v660
  %662 = vdwg.mxu0
  %v663 = vpack.c.bf16 %v477, %v477
  %v664 = vpack.c.bf16 %v479, %v479
  %v665 = vpack.c.bf16 %v503, %v503
  %v666 = vpack.c.bf16 %v505, %v505
  %v667 = vpack.c.bf16 %v529, %v529
  %v668 = vpack.c.bf16 %v531, %v531
  %v669 = vpack.c.bf16 %v555, %v555
  %v670 = vpack.c.bf16 %v557, %v557
  %v671 = vpack.c.bf16 %v581, %v581
  %v672 = vpack.c.bf16 %v583, %v583
  %v673 = vpack.c.bf16 %v607, %v607
  %v674 = vpack.c.bf16 %v609, %v609
  %v675 = vpack.c.bf16 %v633, %v633
  %v676 = vpack.c.bf16 %v635, %v635
  %v677 = vpack.c.bf16 %v659, %v659
  %v678 = vpack.c.bf16 %v661, %v661
  %v679 = vpack.c.bf16 %v242, %v242
  %v680 = vpack.c.bf16 %v244, %v244
  %v681 = vpack.c.bf16 %v247, %v247
  %v682 = vpack.c.bf16 %v249, %v249
  %v683 = vpack.c.bf16 %v252, %v252
  %v684 = vpack.c.bf16 %v254, %v254
  %v685 = vpack.c.bf16 %v257, %v257
  %v686 = vpack.c.bf16 %v259, %v259
  %v687 = vpack.c.bf16 %v262, %v262
  %v688 = vpack.c.bf16 %v264, %v264
  %v689 = vpack.c.bf16 %v267, %v267
  %v690 = vpack.c.bf16 %v269, %v269
  %v691 = vpack.c.bf16 %v272, %v272
  %v692 = vpack.c.bf16 %v274, %v274
  %v693 = vpack.c.bf16 %v277, %v277
  %v694 = vpack.c.bf16 %v279, %v279
  %v695 = vpack.c.bf16 %v282, %v282
  %v696 = vpack.c.bf16 %v284, %v284
  %v697 = vpack.c.bf16 %v287, %v287
  %v698 = vpack.c.bf16 %v289, %v289
  %v699 = vpack.c.bf16 %v292, %v292
  %v700 = vpack.c.bf16 %v294, %v294
  %v701 = vpack.c.bf16 %v297, %v297
  %v702 = vpack.c.bf16 %v299, %v299
  %v703 = vpack.c.bf16 %v302, %v302
  %v704 = vpack.c.bf16 %v304, %v304
  %v705 = vpack.c.bf16 %v307, %v307
  %v706 = vpack.c.bf16 %v309, %v309
  %v707 = vpack.c.bf16 %v312, %v312
  %v708 = vpack.c.bf16 %v314, %v314
  %v709 = vpack.c.bf16 %v317, %v317
  %v710 = vpack.c.bf16 %v319, %v319
  %v711 = vpack.c.bf16 %v322, %v322
  %v712 = vpack.c.bf16 %v324, %v324
  %v713 = vpack.c.bf16 %v327, %v327
  %v714 = vpack.c.bf16 %v329, %v329
  %v715 = vpack.c.bf16 %v332, %v332
  %v716 = vpack.c.bf16 %v334, %v334
  %v717 = vpack.c.bf16 %v337, %v337
  %v718 = vpack.c.bf16 %v339, %v339
  %v719 = vpack.c.bf16 %v342, %v342
  %v720 = vpack.c.bf16 %v344, %v344
  %v721 = vpack.c.bf16 %v347, %v347
  %v722 = vpack.c.bf16 %v349, %v349
  %v723 = vpack.c.bf16 %v352, %v352
  %v724 = vpack.c.bf16 %v354, %v354
  %v725 = vpack.c.bf16 %v357, %v357
  %v726 = vpack.c.bf16 %v359, %v359
  %v727 = vpack.c.bf16 %v362, %v362
  %v728 = vpack.c.bf16 %v364, %v364
  %v729 = vpack.c.bf16 %v367, %v367
  %v730 = vpack.c.bf16 %v369, %v369
  %v731 = vpack.c.bf16 %v372, %v372
  %v732 = vpack.c.bf16 %v374, %v374
  %v733 = vpack.c.bf16 %v377, %v377
  %v734 = vpack.c.bf16 %v379, %v379
  %v735 = vpack.c.bf16 %v382, %v382
  %v736 = vpack.c.bf16 %v384, %v384
  %v737 = vpack.c.bf16 %v387, %v387
  %v738 = vpack.c.bf16 %v389, %v389
  %v739 = vpack.c.bf16 %v392, %v392
  %v740 = vpack.c.bf16 %v394, %v394
  %v741 = vpack.c.bf16 %v397, %v397
  %v742 = vpack.c.bf16 %v399, %v399
  %v745 = vunpack.c.l.b16 %v663
  %v746 = vunpack.c.l.b16 %v664
  %v747 = vpack.c.b16 %v746, %v745
  %v756 = vunpack.c.l.b16 %v679
  %v757 = vunpack.c.l.b16 %v680
  %v758 = vunpack.c.l.b16 %v681
  %v759 = vunpack.c.l.b16 %v682
  %v760 = vunpack.c.l.b16 %v683
  %v761 = vunpack.c.l.b16 %v684
  %v762 = vunpack.c.l.b16 %v685
  %v763 = vunpack.c.l.b16 %v686
  %v764 = vpack.c.b16 %v757, %v756
  %v765 = vpack.c.b16 %v759, %v758
  %v766 = vpack.c.b16 %v761, %v760
  %v767 = vpack.c.b16 %v763, %v762
  %768 = vrot.lane.b32.xlu0 %v764, 112
  %v769 = vpop.permute.xlu0 %768
  %770 = vrot.lane.b32.xlu0 %v765, 112
  %v771 = vpop.permute.xlu0 %770
  %772 = vrot.lane.b32.xlu0 %v766, 112
  %v773 = vpop.permute.xlu0 %772
  %774 = vrot.lane.b32.xlu0 %v767, 112
  %v775 = vpop.permute.xlu0 %774
  %vm780 = vcmask 523264
  %v782 = vsel %vm780, %v747, 0
  %784 = vmatpush.bf16.msra.mxu0 0
  %785 = vmatpush.bf16.msra.mxu0 0
  %786 = vmatpush.bf16.msra.mxu0 0
  %787 = vmatpush.bf16.msra.mxu0 0
  %788 = vmatpush.bf16.msra.mxu0 %v775
  %789 = vmatpush.bf16.msra.mxu0 %v773
  %790 = vmatpush.bf16.msra.mxu0 %v771
  %791 = vmatpush.bf16.msra.mxu0 %v769
  %792 = vmatmul.bf16.gmra.mxu0 %v782
  %v793 = vpop.f32.mrf.mxu0
  %v794 = vadd.f32 0.0, %v793
  %v795 = vpop.f32.mrf.mxu0
  %v796 = vadd.f32 0.0, %v795
  %797 = vdwg.mxu0
  %v800 = vunpack.c.l.b16 %v665
  %v801 = vunpack.c.l.b16 %v666
  %v802 = vpack.c.b16 %v801, %v800
  %v811 = vunpack.c.l.b16 %v687
  %v812 = vunpack.c.l.b16 %v688
  %v813 = vunpack.c.l.b16 %v689
  %v814 = vunpack.c.l.b16 %v690
  %v815 = vunpack.c.l.b16 %v691
  %v816 = vunpack.c.l.b16 %v692
  %v817 = vunpack.c.l.b16 %v693
  %v818 = vunpack.c.l.b16 %v694
  %v819 = vpack.c.b16 %v812, %v811
  %v820 = vpack.c.b16 %v814, %v813
  %v821 = vpack.c.b16 %v816, %v815
  %v822 = vpack.c.b16 %v818, %v817
  %823 = vrot.lane.b32.xlu0 %v819, 112
  %v824 = vpop.permute.xlu0 %823
  %825 = vrot.lane.b32.xlu0 %v820, 112
  %v826 = vpop.permute.xlu0 %825
  %827 = vrot.lane.b32.xlu0 %v821, 112
  %v828 = vpop.permute.xlu0 %827
  %829 = vrot.lane.b32.xlu0 %v822, 112
  %v830 = vpop.permute.xlu0 %829
  %v836 = vsel %vm780, %v802, 0
  %838 = vmatpush.bf16.msra.mxu0 0
  %839 = vmatpush.bf16.msra.mxu0 0
  %840 = vmatpush.bf16.msra.mxu0 0
  %841 = vmatpush.bf16.msra.mxu0 0
  %842 = vmatpush.bf16.msra.mxu0 %v830
  %843 = vmatpush.bf16.msra.mxu0 %v828
  %844 = vmatpush.bf16.msra.mxu0 %v826
  %845 = vmatpush.bf16.msra.mxu0 %v824
  %846 = vmatmul.bf16.gmra.mxu0 %v836
  %v847 = vpop.f32.mrf.mxu0
  %v848 = vadd.f32 0.0, %v847
  %v849 = vpop.f32.mrf.mxu0
  %v850 = vadd.f32 0.0, %v849
  %851 = vdwg.mxu0
  %v854 = vunpack.c.l.b16 %v667
  %v855 = vunpack.c.l.b16 %v668
  %v856 = vpack.c.b16 %v855, %v854
  %v865 = vunpack.c.l.b16 %v695
  %v866 = vunpack.c.l.b16 %v696
  %v867 = vunpack.c.l.b16 %v697
  %v868 = vunpack.c.l.b16 %v698
  %v869 = vunpack.c.l.b16 %v699
  %v870 = vunpack.c.l.b16 %v700
  %v871 = vunpack.c.l.b16 %v701
  %v872 = vunpack.c.l.b16 %v702
  %v873 = vpack.c.b16 %v866, %v865
  %v874 = vpack.c.b16 %v868, %v867
  %v875 = vpack.c.b16 %v870, %v869
  %v876 = vpack.c.b16 %v872, %v871
  %877 = vrot.lane.b32.xlu0 %v873, 112
  %v878 = vpop.permute.xlu0 %877
  %879 = vrot.lane.b32.xlu0 %v874, 112
  %v880 = vpop.permute.xlu0 %879
  %881 = vrot.lane.b32.xlu0 %v875, 112
  %v882 = vpop.permute.xlu0 %881
  %883 = vrot.lane.b32.xlu0 %v876, 112
  %v884 = vpop.permute.xlu0 %883
  %v890 = vsel %vm780, %v856, 0
  %892 = vmatpush.bf16.msra.mxu0 0
  %893 = vmatpush.bf16.msra.mxu0 0
  %894 = vmatpush.bf16.msra.mxu0 0
  %895 = vmatpush.bf16.msra.mxu0 0
  %896 = vmatpush.bf16.msra.mxu0 %v884
  %897 = vmatpush.bf16.msra.mxu0 %v882
  %898 = vmatpush.bf16.msra.mxu0 %v880
  %899 = vmatpush.bf16.msra.mxu0 %v878
  %900 = vmatmul.bf16.gmra.mxu0 %v890
  %v901 = vpop.f32.mrf.mxu0
  %v902 = vadd.f32 0.0, %v901
  %v903 = vpop.f32.mrf.mxu0
  %v904 = vadd.f32 0.0, %v903
  %905 = vdwg.mxu0
  %v908 = vunpack.c.l.b16 %v669
  %v909 = vunpack.c.l.b16 %v670
  %v910 = vpack.c.b16 %v909, %v908
  %v919 = vunpack.c.l.b16 %v703
  %v920 = vunpack.c.l.b16 %v704
  %v921 = vunpack.c.l.b16 %v705
  %v922 = vunpack.c.l.b16 %v706
  %v923 = vunpack.c.l.b16 %v707
  %v924 = vunpack.c.l.b16 %v708
  %v925 = vunpack.c.l.b16 %v709
  %v926 = vunpack.c.l.b16 %v710
  %v927 = vpack.c.b16 %v920, %v919
  %v928 = vpack.c.b16 %v922, %v921
  %v929 = vpack.c.b16 %v924, %v923
  %v930 = vpack.c.b16 %v926, %v925
  %931 = vrot.lane.b32.xlu0 %v927, 112
  %v932 = vpop.permute.xlu0 %931
  %933 = vrot.lane.b32.xlu0 %v928, 112
  %v934 = vpop.permute.xlu0 %933
  %935 = vrot.lane.b32.xlu0 %v929, 112
  %v936 = vpop.permute.xlu0 %935
  %937 = vrot.lane.b32.xlu0 %v930, 112
  %v938 = vpop.permute.xlu0 %937
  %v944 = vsel %vm780, %v910, 0
  %946 = vmatpush.bf16.msra.mxu0 0
  %947 = vmatpush.bf16.msra.mxu0 0
  %948 = vmatpush.bf16.msra.mxu0 0
  %949 = vmatpush.bf16.msra.mxu0 0
  %950 = vmatpush.bf16.msra.mxu0 %v938
  %951 = vmatpush.bf16.msra.mxu0 %v936
  %952 = vmatpush.bf16.msra.mxu0 %v934
  %953 = vmatpush.bf16.msra.mxu0 %v932
  %954 = vmatmul.bf16.gmra.mxu0 %v944
  %v955 = vpop.f32.mrf.mxu0
  %v956 = vadd.f32 0.0, %v955
  %v957 = vpop.f32.mrf.mxu0
  %v958 = vadd.f32 0.0, %v957
  %959 = vdwg.mxu0
  %v962 = vunpack.c.l.b16 %v671
  %v963 = vunpack.c.l.b16 %v672
  %v964 = vpack.c.b16 %v963, %v962
  %v973 = vunpack.c.l.b16 %v711
  %v974 = vunpack.c.l.b16 %v712
  %v975 = vunpack.c.l.b16 %v713
  %v976 = vunpack.c.l.b16 %v714
  %v977 = vunpack.c.l.b16 %v715
  %v978 = vunpack.c.l.b16 %v716
  %v979 = vunpack.c.l.b16 %v717
  %v980 = vunpack.c.l.b16 %v718
  %v981 = vpack.c.b16 %v974, %v973
  %v982 = vpack.c.b16 %v976, %v975
  %v983 = vpack.c.b16 %v978, %v977
  %v984 = vpack.c.b16 %v980, %v979
  %985 = vrot.lane.b32.xlu0 %v981, 112
  %v986 = vpop.permute.xlu0 %985
  %987 = vrot.lane.b32.xlu0 %v982, 112
  %v988 = vpop.permute.xlu0 %987
  %989 = vrot.lane.b32.xlu0 %v983, 112
  %v990 = vpop.permute.xlu0 %989
  %991 = vrot.lane.b32.xlu0 %v984, 112
  %v992 = vpop.permute.xlu0 %991
  %v998 = vsel %vm780, %v964, 0
  %1000 = vmatpush.bf16.msra.mxu0 0
  %1001 = vmatpush.bf16.msra.mxu0 0
  %1002 = vmatpush.bf16.msra.mxu0 0
  %1003 = vmatpush.bf16.msra.mxu0 0
  %1004 = vmatpush.bf16.msra.mxu0 %v992
  %1005 = vmatpush.bf16.msra.mxu0 %v990
  %1006 = vmatpush.bf16.msra.mxu0 %v988
  %1007 = vmatpush.bf16.msra.mxu0 %v986
  %1008 = vmatmul.bf16.gmra.mxu0 %v998
  %v1009 = vpop.f32.mrf.mxu0
  %v1010 = vadd.f32 0.0, %v1009
  %v1011 = vpop.f32.mrf.mxu0
  %v1012 = vadd.f32 0.0, %v1011
  %1013 = vdwg.mxu0
  %v1016 = vunpack.c.l.b16 %v673
  %v1017 = vunpack.c.l.b16 %v674
  %v1018 = vpack.c.b16 %v1017, %v1016
  %v1027 = vunpack.c.l.b16 %v719
  %v1028 = vunpack.c.l.b16 %v720
  %v1029 = vunpack.c.l.b16 %v721
  %v1030 = vunpack.c.l.b16 %v722
  %v1031 = vunpack.c.l.b16 %v723
  %v1032 = vunpack.c.l.b16 %v724
  %v1033 = vunpack.c.l.b16 %v725
  %v1034 = vunpack.c.l.b16 %v726
  %v1035 = vpack.c.b16 %v1028, %v1027
  %v1036 = vpack.c.b16 %v1030, %v1029
  %v1037 = vpack.c.b16 %v1032, %v1031
  %v1038 = vpack.c.b16 %v1034, %v1033
  %1039 = vrot.lane.b32.xlu0 %v1035, 112
  %v1040 = vpop.permute.xlu0 %1039
  %1041 = vrot.lane.b32.xlu0 %v1036, 112
  %v1042 = vpop.permute.xlu0 %1041
  %1043 = vrot.lane.b32.xlu0 %v1037, 112
  %v1044 = vpop.permute.xlu0 %1043
  %1045 = vrot.lane.b32.xlu0 %v1038, 112
  %v1046 = vpop.permute.xlu0 %1045
  %v1052 = vsel %vm780, %v1018, 0
  %1054 = vmatpush.bf16.msra.mxu0 0
  %1055 = vmatpush.bf16.msra.mxu0 0
  %1056 = vmatpush.bf16.msra.mxu0 0
  %1057 = vmatpush.bf16.msra.mxu0 0
  %1058 = vmatpush.bf16.msra.mxu0 %v1046
  %1059 = vmatpush.bf16.msra.mxu0 %v1044
  %1060 = vmatpush.bf16.msra.mxu0 %v1042
  %1061 = vmatpush.bf16.msra.mxu0 %v1040
  %1062 = vmatmul.bf16.gmra.mxu0 %v1052
  %v1063 = vpop.f32.mrf.mxu0
  %v1064 = vadd.f32 0.0, %v1063
  %v1065 = vpop.f32.mrf.mxu0
  %v1066 = vadd.f32 0.0, %v1065
  %1067 = vdwg.mxu0
  %v1070 = vunpack.c.l.b16 %v675
  %v1071 = vunpack.c.l.b16 %v676
  %v1072 = vpack.c.b16 %v1071, %v1070
  %v1081 = vunpack.c.l.b16 %v727
  %v1082 = vunpack.c.l.b16 %v728
  %v1083 = vunpack.c.l.b16 %v729
  %v1084 = vunpack.c.l.b16 %v730
  %v1085 = vunpack.c.l.b16 %v731
  %v1086 = vunpack.c.l.b16 %v732
  %v1087 = vunpack.c.l.b16 %v733
  %v1088 = vunpack.c.l.b16 %v734
  %v1089 = vpack.c.b16 %v1082, %v1081
  %v1090 = vpack.c.b16 %v1084, %v1083
  %v1091 = vpack.c.b16 %v1086, %v1085
  %v1092 = vpack.c.b16 %v1088, %v1087
  %1093 = vrot.lane.b32.xlu0 %v1089, 112
  %v1094 = vpop.permute.xlu0 %1093
  %1095 = vrot.lane.b32.xlu0 %v1090, 112
  %v1096 = vpop.permute.xlu0 %1095
  %1097 = vrot.lane.b32.xlu0 %v1091, 112
  %v1098 = vpop.permute.xlu0 %1097
  %1099 = vrot.lane.b32.xlu0 %v1092, 112
  %v1100 = vpop.permute.xlu0 %1099
  %v1106 = vsel %vm780, %v1072, 0
  %1108 = vmatpush.bf16.msra.mxu0 0
  %1109 = vmatpush.bf16.msra.mxu0 0
  %1110 = vmatpush.bf16.msra.mxu0 0
  %1111 = vmatpush.bf16.msra.mxu0 0
  %1112 = vmatpush.bf16.msra.mxu0 %v1100
  %1113 = vmatpush.bf16.msra.mxu0 %v1098
  %1114 = vmatpush.bf16.msra.mxu0 %v1096
  %1115 = vmatpush.bf16.msra.mxu0 %v1094
  %1116 = vmatmul.bf16.gmra.mxu0 %v1106
  %v1117 = vpop.f32.mrf.mxu0
  %v1118 = vadd.f32 0.0, %v1117
  %v1119 = vpop.f32.mrf.mxu0
  %v1120 = vadd.f32 0.0, %v1119
  %1121 = vdwg.mxu0
  %v1124 = vunpack.c.l.b16 %v677
  %v1125 = vunpack.c.l.b16 %v678
  %v1126 = vpack.c.b16 %v1125, %v1124
  %v1135 = vunpack.c.l.b16 %v735
  %v1136 = vunpack.c.l.b16 %v736
  %v1137 = vunpack.c.l.b16 %v737
  %v1138 = vunpack.c.l.b16 %v738
  %v1139 = vunpack.c.l.b16 %v739
  %v1140 = vunpack.c.l.b16 %v740
  %v1141 = vunpack.c.l.b16 %v741
  %v1142 = vunpack.c.l.b16 %v742
  %v1143 = vpack.c.b16 %v1136, %v1135
  %v1144 = vpack.c.b16 %v1138, %v1137
  %v1145 = vpack.c.b16 %v1140, %v1139
  %v1146 = vpack.c.b16 %v1142, %v1141
  %1147 = vrot.lane.b32.xlu0 %v1143, 112
  %v1148 = vpop.permute.xlu0 %1147
  %1149 = vrot.lane.b32.xlu0 %v1144, 112
  %v1150 = vpop.permute.xlu0 %1149
  %1151 = vrot.lane.b32.xlu0 %v1145, 112
  %v1152 = vpop.permute.xlu0 %1151
  %1153 = vrot.lane.b32.xlu0 %v1146, 112
  %v1154 = vpop.permute.xlu0 %1153
  %v1160 = vsel %vm780, %v1126, 0
  %1162 = vmatpush.bf16.msra.mxu0 0
  %1163 = vmatpush.bf16.msra.mxu0 0
  %1164 = vmatpush.bf16.msra.mxu0 0
  %1165 = vmatpush.bf16.msra.mxu0 0
  %1166 = vmatpush.bf16.msra.mxu0 %v1154
  %1167 = vmatpush.bf16.msra.mxu0 %v1152
  %1168 = vmatpush.bf16.msra.mxu0 %v1150
  %1169 = vmatpush.bf16.msra.mxu0 %v1148
  %1170 = vmatmul.bf16.gmra.mxu0 %v1160
  %v1171 = vpop.f32.mrf.mxu0
  %v1172 = vadd.f32 0.0, %v1171
  %v1173 = vpop.f32.mrf.mxu0
  %v1174 = vadd.f32 0.0, %v1173
  %1175 = vdwg.mxu0
  %vm1176 = vcmask 130048
  %v1177 = vsel %vm1176, %v794, -inf
  %1178 = vmax.xlane.f32.xlu0 %v1177
  %v1179 = vpop.xlane.xlu0 %1178
  %v1180 = vsel %vm1176, %v796, -inf
  %1181 = vmax.xlane.f32.xlu0 %v1180
  %v1182 = vpop.xlane.xlu0 %1181
  %v1183 = vsel %vm1176, %v848, -inf
  %1184 = vmax.xlane.f32.xlu0 %v1183
  %v1185 = vpop.xlane.xlu0 %1184
  %v1186 = vsel %vm1176, %v850, -inf
  %1187 = vmax.xlane.f32.xlu0 %v1186
  %v1188 = vpop.xlane.xlu0 %1187
  %v1189 = vsel %vm1176, %v902, -inf
  %1190 = vmax.xlane.f32.xlu0 %v1189
  %v1191 = vpop.xlane.xlu0 %1190
  %v1192 = vsel %vm1176, %v904, -inf
  %1193 = vmax.xlane.f32.xlu0 %v1192
  %v1194 = vpop.xlane.xlu0 %1193
  %v1195 = vsel %vm1176, %v956, -inf
  %1196 = vmax.xlane.f32.xlu0 %v1195
  %v1197 = vpop.xlane.xlu0 %1196
  %v1198 = vsel %vm1176, %v958, -inf
  %1199 = vmax.xlane.f32.xlu0 %v1198
  %v1200 = vpop.xlane.xlu0 %1199
  %v1201 = vsel %vm1176, %v1010, -inf
  %1202 = vmax.xlane.f32.xlu0 %v1201
  %v1203 = vpop.xlane.xlu0 %1202
  %v1204 = vsel %vm1176, %v1012, -inf
  %1205 = vmax.xlane.f32.xlu0 %v1204
  %v1206 = vpop.xlane.xlu0 %1205
  %v1207 = vsel %vm1176, %v1064, -inf
  %1208 = vmax.xlane.f32.xlu0 %v1207
  %v1209 = vpop.xlane.xlu0 %1208
  %v1210 = vsel %vm1176, %v1066, -inf
  %1211 = vmax.xlane.f32.xlu0 %v1210
  %v1212 = vpop.xlane.xlu0 %1211
  %v1213 = vsel %vm1176, %v1118, -inf
  %1214 = vmax.xlane.f32.xlu0 %v1213
  %v1215 = vpop.xlane.xlu0 %1214
  %v1216 = vsel %vm1176, %v1120, -inf
  %1217 = vmax.xlane.f32.xlu0 %v1216
  %v1218 = vpop.xlane.xlu0 %1217
  %v1219 = vsel %vm1176, %v1172, -inf
  %1220 = vmax.xlane.f32.xlu0 %v1219
  %v1221 = vpop.xlane.xlu0 %1220
  %v1222 = vsel %vm1176, %v1174, -inf
  %1223 = vmax.xlane.f32.xlu0 %v1222
  %v1224 = vpop.xlane.xlu0 %1223
  %v1225 = vsub.f32 %v794, %v1179
  %v1226 = vsub.f32 %v796, %v1182
  %v1227 = vsub.f32 %v848, %v1185
  %v1228 = vsub.f32 %v850, %v1188
  %v1229 = vsub.f32 %v902, %v1191
  %v1230 = vsub.f32 %v904, %v1194
  %v1231 = vsub.f32 %v956, %v1197
  %v1232 = vsub.f32 %v958, %v1200
  %v1233 = vsub.f32 %v1010, %v1203
  %v1234 = vsub.f32 %v1012, %v1206
  %v1235 = vsub.f32 %v1064, %v1209
  %v1236 = vsub.f32 %v1066, %v1212
  %v1237 = vsub.f32 %v1118, %v1215
  %v1238 = vsub.f32 %v1120, %v1218
  %v1239 = vsub.f32 %v1172, %v1221
  %v1240 = vsub.f32 %v1174, %v1224
  %v1241 = vmul.f32 %v1225, 1.442695
  %v1242 = vpow.pop %v1241
  %v1243 = vmul.f32 %v1226, 1.442695
  %v1244 = vpow.pop %v1243
  %v1245 = vmul.f32 %v1227, 1.442695
  %v1246 = vpow.pop %v1245
  %v1247 = vmul.f32 %v1228, 1.442695
  %v1248 = vpow.pop %v1247
  %v1249 = vmul.f32 %v1229, 1.442695
  %v1250 = vpow.pop %v1249
  %v1251 = vmul.f32 %v1230, 1.442695
  %v1252 = vpow.pop %v1251
  %v1253 = vmul.f32 %v1231, 1.442695
  %v1254 = vpow.pop %v1253
  %v1255 = vmul.f32 %v1232, 1.442695
  %v1256 = vpow.pop %v1255
  %v1257 = vmul.f32 %v1233, 1.442695
  %v1258 = vpow.pop %v1257
  %v1259 = vmul.f32 %v1234, 1.442695
  %v1260 = vpow.pop %v1259
  %v1261 = vmul.f32 %v1235, 1.442695
  %v1262 = vpow.pop %v1261
  %v1263 = vmul.f32 %v1236, 1.442695
  %v1264 = vpow.pop %v1263
  %v1265 = vmul.f32 %v1237, 1.442695
  %v1266 = vpow.pop %v1265
  %v1267 = vmul.f32 %v1238, 1.442695
  %v1268 = vpow.pop %v1267
  %v1269 = vmul.f32 %v1239, 1.442695
  %v1270 = vpow.pop %v1269
  %v1271 = vmul.f32 %v1240, 1.442695
  %v1272 = vpow.pop %v1271
  %v1273 = vsel %vm1176, %v1242, 0.0
  %1274 = vadd.xlane.f32.xlu0 %v1273
  %v1275 = vpop.xlane.xlu0 %1274
  %v1276 = vsel %vm1176, %v1244, 0.0
  %1277 = vadd.xlane.f32.xlu0 %v1276
  %v1278 = vpop.xlane.xlu0 %1277
  %v1279 = vsel %vm1176, %v1246, 0.0
  %1280 = vadd.xlane.f32.xlu0 %v1279
  %v1281 = vpop.xlane.xlu0 %1280
  %v1282 = vsel %vm1176, %v1248, 0.0
  %1283 = vadd.xlane.f32.xlu0 %v1282
  %v1284 = vpop.xlane.xlu0 %1283
  %v1285 = vsel %vm1176, %v1250, 0.0
  %1286 = vadd.xlane.f32.xlu0 %v1285
  %v1287 = vpop.xlane.xlu0 %1286
  %v1288 = vsel %vm1176, %v1252, 0.0
  %1289 = vadd.xlane.f32.xlu0 %v1288
  %v1290 = vpop.xlane.xlu0 %1289
  %v1291 = vsel %vm1176, %v1254, 0.0
  %1292 = vadd.xlane.f32.xlu0 %v1291
  %v1293 = vpop.xlane.xlu0 %1292
  %v1294 = vsel %vm1176, %v1256, 0.0
  %1295 = vadd.xlane.f32.xlu0 %v1294
  %v1296 = vpop.xlane.xlu0 %1295
  %v1297 = vsel %vm1176, %v1258, 0.0
  %1298 = vadd.xlane.f32.xlu0 %v1297
  %v1299 = vpop.xlane.xlu0 %1298
  %v1300 = vsel %vm1176, %v1260, 0.0
  %1301 = vadd.xlane.f32.xlu0 %v1300
  %v1302 = vpop.xlane.xlu0 %1301
  %v1303 = vsel %vm1176, %v1262, 0.0
  %1304 = vadd.xlane.f32.xlu0 %v1303
  %v1305 = vpop.xlane.xlu0 %1304
  %v1306 = vsel %vm1176, %v1264, 0.0
  %1307 = vadd.xlane.f32.xlu0 %v1306
  %v1308 = vpop.xlane.xlu0 %1307
  %v1309 = vsel %vm1176, %v1266, 0.0
  %1310 = vadd.xlane.f32.xlu0 %v1309
  %v1311 = vpop.xlane.xlu0 %1310
  %v1312 = vsel %vm1176, %v1268, 0.0
  %1313 = vadd.xlane.f32.xlu0 %v1312
  %v1314 = vpop.xlane.xlu0 %1313
  %v1315 = vsel %vm1176, %v1270, 0.0
  %1316 = vadd.xlane.f32.xlu0 %v1315
  %v1317 = vpop.xlane.xlu0 %1316
  %v1318 = vsel %vm1176, %v1272, 0.0
  %1319 = vadd.xlane.f32.xlu0 %v1318
  %v1320 = vpop.xlane.xlu0 %1319
  %v1321 = vrcp.pop %v1275
  %v1322 = vrcp.pop %v1278
  %v1323 = vrcp.pop %v1281
  %v1324 = vrcp.pop %v1284
  %v1325 = vrcp.pop %v1287
  %v1326 = vrcp.pop %v1290
  %v1327 = vrcp.pop %v1293
  %v1328 = vrcp.pop %v1296
  %v1329 = vrcp.pop %v1299
  %v1330 = vrcp.pop %v1302
  %v1331 = vrcp.pop %v1305
  %v1332 = vrcp.pop %v1308
  %v1333 = vrcp.pop %v1311
  %v1334 = vrcp.pop %v1314
  %v1335 = vrcp.pop %v1317
  %v1336 = vrcp.pop %v1320
  %v1337 = vmul.f32 %v1242, %v1321
  %v1338 = vmul.f32 %v1244, %v1322
  %v1339 = vmul.f32 %v1246, %v1323
  %v1340 = vmul.f32 %v1248, %v1324
  %v1341 = vmul.f32 %v1250, %v1325
  %v1342 = vmul.f32 %v1252, %v1326
  %v1343 = vmul.f32 %v1254, %v1327
  %v1344 = vmul.f32 %v1256, %v1328
  %v1345 = vmul.f32 %v1258, %v1329
  %v1346 = vmul.f32 %v1260, %v1330
  %v1347 = vmul.f32 %v1262, %v1331
  %v1348 = vmul.f32 %v1264, %v1332
  %v1349 = vmul.f32 %v1266, %v1333
  %v1350 = vmul.f32 %v1268, %v1334
  %v1351 = vmul.f32 %v1270, %v1335
  %v1352 = vmul.f32 %v1272, %v1336
  %v1353 = vpack.c.bf16 %v1337, %v1337
  %v1354 = vpack.c.bf16 %v1338, %v1338
  %v1355 = vpack.c.bf16 %v1339, %v1339
  %v1356 = vpack.c.bf16 %v1340, %v1340
  %v1357 = vpack.c.bf16 %v1341, %v1341
  %v1358 = vpack.c.bf16 %v1342, %v1342
  %v1359 = vpack.c.bf16 %v1343, %v1343
  %v1360 = vpack.c.bf16 %v1344, %v1344
  %v1361 = vpack.c.bf16 %v1345, %v1345
  %v1362 = vpack.c.bf16 %v1346, %v1346
  %v1363 = vpack.c.bf16 %v1347, %v1347
  %v1364 = vpack.c.bf16 %v1348, %v1348
  %v1365 = vpack.c.bf16 %v1349, %v1349
  %v1366 = vpack.c.bf16 %v1350, %v1350
  %v1367 = vpack.c.bf16 %v1351, %v1351
  %v1368 = vpack.c.bf16 %v1352, %v1352
  %v1371 = vunpack.c.l.b16 %v1353
  %v1372 = vunpack.c.l.b16 %v1354
  %v1373 = vpack.c.b16 %v1372, %v1371
  %v1376 = vsel %vm1176, %v764, 0
  %v1379 = vsel %vm1176, %v765, 0
  %v1382 = vsel %vm1176, %v766, 0
  %v1385 = vsel %vm1176, %v767, 0
  %1387 = vmatpush.bf16.msra.mxu0 0
  %1388 = vmatpush.bf16.msra.mxu0 0
  %1389 = vmatpush.bf16.msra.mxu0 0
  %1390 = vmatpush.bf16.msra.mxu0 0
  %1391 = vmatpush.bf16.msra.mxu0 0
  %1392 = vmatpush.bf16.msra.mxu0 0
  %1393 = vmatpush.bf16.msra.mxu0 0
  %1394 = vmatpush.bf16.msra.mxu0 %v1373
  %1395 = vmatmul.bf16.gmra.mxu0 %v1376
  %v1396 = vpop.f32.mrf.mxu0
  %v1397 = vadd.f32 0.0, %v1396
  %v1398 = vpop.f32.mrf.mxu0
  %v1399 = vadd.f32 0.0, %v1398
  %1400 = vmatmul.bf16.gmra.mxu0 %v1379
  %v1401 = vpop.f32.mrf.mxu0
  %v1402 = vadd.f32 0.0, %v1401
  %v1403 = vpop.f32.mrf.mxu0
  %v1404 = vadd.f32 0.0, %v1403
  %1405 = vmatmul.bf16.gmra.mxu0 %v1382
  %v1406 = vpop.f32.mrf.mxu0
  %v1407 = vadd.f32 0.0, %v1406
  %v1408 = vpop.f32.mrf.mxu0
  %v1409 = vadd.f32 0.0, %v1408
  %1410 = vmatmul.bf16.gmra.mxu0 %v1385
  %v1411 = vpop.f32.mrf.mxu0
  %v1412 = vadd.f32 0.0, %v1411
  %v1413 = vpop.f32.mrf.mxu0
  %v1414 = vadd.f32 0.0, %v1413
  %1415 = vdwg.mxu0
  %v1418 = vunpack.c.l.b16 %v1355
  %v1419 = vunpack.c.l.b16 %v1356
  %v1420 = vpack.c.b16 %v1419, %v1418
  %v1423 = vsel %vm1176, %v819, 0
  %v1426 = vsel %vm1176, %v820, 0
  %v1429 = vsel %vm1176, %v821, 0
  %v1432 = vsel %vm1176, %v822, 0
  %1434 = vmatpush.bf16.msra.mxu0 0
  %1435 = vmatpush.bf16.msra.mxu0 0
  %1436 = vmatpush.bf16.msra.mxu0 0
  %1437 = vmatpush.bf16.msra.mxu0 0
  %1438 = vmatpush.bf16.msra.mxu0 0
  %1439 = vmatpush.bf16.msra.mxu0 0
  %1440 = vmatpush.bf16.msra.mxu0 0
  %1441 = vmatpush.bf16.msra.mxu0 %v1420
  %1442 = vmatmul.bf16.gmra.mxu0 %v1423
  %v1443 = vpop.f32.mrf.mxu0
  %v1444 = vadd.f32 0.0, %v1443
  %v1445 = vpop.f32.mrf.mxu0
  %v1446 = vadd.f32 0.0, %v1445
  %1447 = vmatmul.bf16.gmra.mxu0 %v1426
  %v1448 = vpop.f32.mrf.mxu0
  %v1449 = vadd.f32 0.0, %v1448
  %v1450 = vpop.f32.mrf.mxu0
  %v1451 = vadd.f32 0.0, %v1450
  %1452 = vmatmul.bf16.gmra.mxu0 %v1429
  %v1453 = vpop.f32.mrf.mxu0
  %v1454 = vadd.f32 0.0, %v1453
  %v1455 = vpop.f32.mrf.mxu0
  %v1456 = vadd.f32 0.0, %v1455
  %1457 = vmatmul.bf16.gmra.mxu0 %v1432
  %v1458 = vpop.f32.mrf.mxu0
  %v1459 = vadd.f32 0.0, %v1458
  %v1460 = vpop.f32.mrf.mxu0
  %v1461 = vadd.f32 0.0, %v1460
  %1462 = vdwg.mxu0
  %v1465 = vunpack.c.l.b16 %v1357
  %v1466 = vunpack.c.l.b16 %v1358
  %v1467 = vpack.c.b16 %v1466, %v1465
  %v1470 = vsel %vm1176, %v873, 0
  %v1473 = vsel %vm1176, %v874, 0
  %v1476 = vsel %vm1176, %v875, 0
  %v1479 = vsel %vm1176, %v876, 0
  %1481 = vmatpush.bf16.msra.mxu0 0
  %1482 = vmatpush.bf16.msra.mxu0 0
  %1483 = vmatpush.bf16.msra.mxu0 0
  %1484 = vmatpush.bf16.msra.mxu0 0
  %1485 = vmatpush.bf16.msra.mxu0 0
  %1486 = vmatpush.bf16.msra.mxu0 0
  %1487 = vmatpush.bf16.msra.mxu0 0
  %1488 = vmatpush.bf16.msra.mxu0 %v1467
  %1489 = vmatmul.bf16.gmra.mxu0 %v1470
  %v1490 = vpop.f32.mrf.mxu0
  %v1491 = vadd.f32 0.0, %v1490
  %v1492 = vpop.f32.mrf.mxu0
  %v1493 = vadd.f32 0.0, %v1492
  %1494 = vmatmul.bf16.gmra.mxu0 %v1473
  %v1495 = vpop.f32.mrf.mxu0
  %v1496 = vadd.f32 0.0, %v1495
  %v1497 = vpop.f32.mrf.mxu0
  %v1498 = vadd.f32 0.0, %v1497
  %1499 = vmatmul.bf16.gmra.mxu0 %v1476
  %v1500 = vpop.f32.mrf.mxu0
  %v1501 = vadd.f32 0.0, %v1500
  %v1502 = vpop.f32.mrf.mxu0
  %v1503 = vadd.f32 0.0, %v1502
  %1504 = vmatmul.bf16.gmra.mxu0 %v1479
  %v1505 = vpop.f32.mrf.mxu0
  %v1506 = vadd.f32 0.0, %v1505
  %v1507 = vpop.f32.mrf.mxu0
  %v1508 = vadd.f32 0.0, %v1507
  %1509 = vdwg.mxu0
  %v1512 = vunpack.c.l.b16 %v1359
  %v1513 = vunpack.c.l.b16 %v1360
  %v1514 = vpack.c.b16 %v1513, %v1512
  %v1517 = vsel %vm1176, %v927, 0
  %v1520 = vsel %vm1176, %v928, 0
  %v1523 = vsel %vm1176, %v929, 0
  %v1526 = vsel %vm1176, %v930, 0
  %1528 = vmatpush.bf16.msra.mxu0 0
  %1529 = vmatpush.bf16.msra.mxu0 0
  %1530 = vmatpush.bf16.msra.mxu0 0
  %1531 = vmatpush.bf16.msra.mxu0 0
  %1532 = vmatpush.bf16.msra.mxu0 0
  %1533 = vmatpush.bf16.msra.mxu0 0
  %1534 = vmatpush.bf16.msra.mxu0 0
  %1535 = vmatpush.bf16.msra.mxu0 %v1514
  %1536 = vmatmul.bf16.gmra.mxu0 %v1517
  %v1537 = vpop.f32.mrf.mxu0
  %v1538 = vadd.f32 0.0, %v1537
  %v1539 = vpop.f32.mrf.mxu0
  %v1540 = vadd.f32 0.0, %v1539
  %1541 = vmatmul.bf16.gmra.mxu0 %v1520
  %v1542 = vpop.f32.mrf.mxu0
  %v1543 = vadd.f32 0.0, %v1542
  %v1544 = vpop.f32.mrf.mxu0
  %v1545 = vadd.f32 0.0, %v1544
  %1546 = vmatmul.bf16.gmra.mxu0 %v1523
  %v1547 = vpop.f32.mrf.mxu0
  %v1548 = vadd.f32 0.0, %v1547
  %v1549 = vpop.f32.mrf.mxu0
  %v1550 = vadd.f32 0.0, %v1549
  %1551 = vmatmul.bf16.gmra.mxu0 %v1526
  %v1552 = vpop.f32.mrf.mxu0
  %v1553 = vadd.f32 0.0, %v1552
  %v1554 = vpop.f32.mrf.mxu0
  %v1555 = vadd.f32 0.0, %v1554
  %1556 = vdwg.mxu0
  %v1559 = vunpack.c.l.b16 %v1361
  %v1560 = vunpack.c.l.b16 %v1362
  %v1561 = vpack.c.b16 %v1560, %v1559
  %v1564 = vsel %vm1176, %v981, 0
  %v1567 = vsel %vm1176, %v982, 0
  %v1570 = vsel %vm1176, %v983, 0
  %v1573 = vsel %vm1176, %v984, 0
  %1575 = vmatpush.bf16.msra.mxu0 0
  %1576 = vmatpush.bf16.msra.mxu0 0
  %1577 = vmatpush.bf16.msra.mxu0 0
  %1578 = vmatpush.bf16.msra.mxu0 0
  %1579 = vmatpush.bf16.msra.mxu0 0
  %1580 = vmatpush.bf16.msra.mxu0 0
  %1581 = vmatpush.bf16.msra.mxu0 0
  %1582 = vmatpush.bf16.msra.mxu0 %v1561
  %1583 = vmatmul.bf16.gmra.mxu0 %v1564
  %v1584 = vpop.f32.mrf.mxu0
  %v1585 = vadd.f32 0.0, %v1584
  %v1586 = vpop.f32.mrf.mxu0
  %v1587 = vadd.f32 0.0, %v1586
  %1588 = vmatmul.bf16.gmra.mxu0 %v1567
  %v1589 = vpop.f32.mrf.mxu0
  %v1590 = vadd.f32 0.0, %v1589
  %v1591 = vpop.f32.mrf.mxu0
  %v1592 = vadd.f32 0.0, %v1591
  %1593 = vmatmul.bf16.gmra.mxu0 %v1570
  %v1594 = vpop.f32.mrf.mxu0
  %v1595 = vadd.f32 0.0, %v1594
  %v1596 = vpop.f32.mrf.mxu0
  %v1597 = vadd.f32 0.0, %v1596
  %1598 = vmatmul.bf16.gmra.mxu0 %v1573
  %v1599 = vpop.f32.mrf.mxu0
  %v1600 = vadd.f32 0.0, %v1599
  %v1601 = vpop.f32.mrf.mxu0
  %v1602 = vadd.f32 0.0, %v1601
  %1603 = vdwg.mxu0
  %v1606 = vunpack.c.l.b16 %v1363
  %v1607 = vunpack.c.l.b16 %v1364
  %v1608 = vpack.c.b16 %v1607, %v1606
  %v1611 = vsel %vm1176, %v1035, 0
  %v1614 = vsel %vm1176, %v1036, 0
  %v1617 = vsel %vm1176, %v1037, 0
  %v1620 = vsel %vm1176, %v1038, 0
  %1622 = vmatpush.bf16.msra.mxu0 0
  %1623 = vmatpush.bf16.msra.mxu0 0
  %1624 = vmatpush.bf16.msra.mxu0 0
  %1625 = vmatpush.bf16.msra.mxu0 0
  %1626 = vmatpush.bf16.msra.mxu0 0
  %1627 = vmatpush.bf16.msra.mxu0 0
  %1628 = vmatpush.bf16.msra.mxu0 0
  %1629 = vmatpush.bf16.msra.mxu0 %v1608
  %1630 = vmatmul.bf16.gmra.mxu0 %v1611
  %v1631 = vpop.f32.mrf.mxu0
  %v1632 = vadd.f32 0.0, %v1631
  %v1633 = vpop.f32.mrf.mxu0
  %v1634 = vadd.f32 0.0, %v1633
  %1635 = vmatmul.bf16.gmra.mxu0 %v1614
  %v1636 = vpop.f32.mrf.mxu0
  %v1637 = vadd.f32 0.0, %v1636
  %v1638 = vpop.f32.mrf.mxu0
  %v1639 = vadd.f32 0.0, %v1638
  %1640 = vmatmul.bf16.gmra.mxu0 %v1617
  %v1641 = vpop.f32.mrf.mxu0
  %v1642 = vadd.f32 0.0, %v1641
  %v1643 = vpop.f32.mrf.mxu0
  %v1644 = vadd.f32 0.0, %v1643
  %1645 = vmatmul.bf16.gmra.mxu0 %v1620
  %v1646 = vpop.f32.mrf.mxu0
  %v1647 = vadd.f32 0.0, %v1646
  %v1648 = vpop.f32.mrf.mxu0
  %v1649 = vadd.f32 0.0, %v1648
  %1650 = vdwg.mxu0
  %v1653 = vunpack.c.l.b16 %v1365
  %v1654 = vunpack.c.l.b16 %v1366
  %v1655 = vpack.c.b16 %v1654, %v1653
  %v1658 = vsel %vm1176, %v1089, 0
  %v1661 = vsel %vm1176, %v1090, 0
  %v1664 = vsel %vm1176, %v1091, 0
  %v1667 = vsel %vm1176, %v1092, 0
  %1669 = vmatpush.bf16.msra.mxu0 0
  %1670 = vmatpush.bf16.msra.mxu0 0
  %1671 = vmatpush.bf16.msra.mxu0 0
  %1672 = vmatpush.bf16.msra.mxu0 0
  %1673 = vmatpush.bf16.msra.mxu0 0
  %1674 = vmatpush.bf16.msra.mxu0 0
  %1675 = vmatpush.bf16.msra.mxu0 0
  %1676 = vmatpush.bf16.msra.mxu0 %v1655
  %1677 = vmatmul.bf16.gmra.mxu0 %v1658
  %v1678 = vpop.f32.mrf.mxu0
  %v1679 = vadd.f32 0.0, %v1678
  %v1680 = vpop.f32.mrf.mxu0
  %v1681 = vadd.f32 0.0, %v1680
  %1682 = vmatmul.bf16.gmra.mxu0 %v1661
  %v1683 = vpop.f32.mrf.mxu0
  %v1684 = vadd.f32 0.0, %v1683
  %v1685 = vpop.f32.mrf.mxu0
  %v1686 = vadd.f32 0.0, %v1685
  %1687 = vmatmul.bf16.gmra.mxu0 %v1664
  %v1688 = vpop.f32.mrf.mxu0
  %v1689 = vadd.f32 0.0, %v1688
  %v1690 = vpop.f32.mrf.mxu0
  %v1691 = vadd.f32 0.0, %v1690
  %1692 = vmatmul.bf16.gmra.mxu0 %v1667
  %v1693 = vpop.f32.mrf.mxu0
  %v1694 = vadd.f32 0.0, %v1693
  %v1695 = vpop.f32.mrf.mxu0
  %v1696 = vadd.f32 0.0, %v1695
  %1697 = vdwg.mxu0
  %v1700 = vunpack.c.l.b16 %v1367
  %v1701 = vunpack.c.l.b16 %v1368
  %v1702 = vpack.c.b16 %v1701, %v1700
  %v1705 = vsel %vm1176, %v1143, 0
  %v1708 = vsel %vm1176, %v1144, 0
  %v1711 = vsel %vm1176, %v1145, 0
  %v1714 = vsel %vm1176, %v1146, 0
  %1716 = vmatpush.bf16.msra.mxu0 0
  %1717 = vmatpush.bf16.msra.mxu0 0
  %1718 = vmatpush.bf16.msra.mxu0 0
  %1719 = vmatpush.bf16.msra.mxu0 0
  %1720 = vmatpush.bf16.msra.mxu0 0
  %1721 = vmatpush.bf16.msra.mxu0 0
  %1722 = vmatpush.bf16.msra.mxu0 0
  %1723 = vmatpush.bf16.msra.mxu0 %v1702
  %1724 = vmatmul.bf16.gmra.mxu0 %v1705
  %v1725 = vpop.f32.mrf.mxu0
  %v1726 = vadd.f32 0.0, %v1725
  %v1727 = vpop.f32.mrf.mxu0
  %v1728 = vadd.f32 0.0, %v1727
  %1729 = vmatmul.bf16.gmra.mxu0 %v1708
  %v1730 = vpop.f32.mrf.mxu0
  %v1731 = vadd.f32 0.0, %v1730
  %v1732 = vpop.f32.mrf.mxu0
  %v1733 = vadd.f32 0.0, %v1732
  %1734 = vmatmul.bf16.gmra.mxu0 %v1711
  %v1735 = vpop.f32.mrf.mxu0
  %v1736 = vadd.f32 0.0, %v1735
  %v1737 = vpop.f32.mrf.mxu0
  %v1738 = vadd.f32 0.0, %v1737
  %1739 = vmatmul.bf16.gmra.mxu0 %v1714
  %v1740 = vpop.f32.mrf.mxu0
  %v1741 = vadd.f32 0.0, %v1740
  %v1742 = vpop.f32.mrf.mxu0
  %v1743 = vadd.f32 0.0, %v1742
  %1744 = vdwg.mxu0
  %v1745 = vpack.c.bf16 %v1399, %v1397
  %v1746 = vpack.c.bf16 %v1404, %v1402
  %v1747 = vpack.c.bf16 %v1409, %v1407
  %v1748 = vpack.c.bf16 %v1414, %v1412
  %v1749 = vpack.c.bf16 %v1446, %v1444
  %v1750 = vpack.c.bf16 %v1451, %v1449
  %v1751 = vpack.c.bf16 %v1456, %v1454
  %v1752 = vpack.c.bf16 %v1461, %v1459
  %v1753 = vpack.c.bf16 %v1493, %v1491
  %v1754 = vpack.c.bf16 %v1498, %v1496
  %v1755 = vpack.c.bf16 %v1503, %v1501
  %v1756 = vpack.c.bf16 %v1508, %v1506
  %v1757 = vpack.c.bf16 %v1540, %v1538
  %v1758 = vpack.c.bf16 %v1545, %v1543
  %v1759 = vpack.c.bf16 %v1550, %v1548
  %v1760 = vpack.c.bf16 %v1555, %v1553
  %v1761 = vpack.c.bf16 %v1587, %v1585
  %v1762 = vpack.c.bf16 %v1592, %v1590
  %v1763 = vpack.c.bf16 %v1597, %v1595
  %v1764 = vpack.c.bf16 %v1602, %v1600
  %v1765 = vpack.c.bf16 %v1634, %v1632
  %v1766 = vpack.c.bf16 %v1639, %v1637
  %v1767 = vpack.c.bf16 %v1644, %v1642
  %v1768 = vpack.c.bf16 %v1649, %v1647
  %v1769 = vpack.c.bf16 %v1681, %v1679
  %v1770 = vpack.c.bf16 %v1686, %v1684
  %v1771 = vpack.c.bf16 %v1691, %v1689
  %v1772 = vpack.c.bf16 %v1696, %v1694
  %v1773 = vpack.c.bf16 %v1728, %v1726
  %v1774 = vpack.c.bf16 %v1733, %v1731
  %v1775 = vpack.c.bf16 %v1738, %v1736
  %v1776 = vpack.c.bf16 %v1743, %v1741
  %v1777 = vld [vmem:[%s2 + $0x18] sm:$0xf]
  %v1778 = vld [vmem:[%s2 + $0x1c] sm:$0xf]
  %v1779 = vld [vmem:[%s3 + $0x1] sm:$0x1]
  %v1780 = vperm.slane %v1779, 0
  %v1783 = vunpack.c.l.b16 %v1777
  %v1784 = vunpack.c.l.b16 %v1778
  %v1785 = vpack.c.b16 %v1784, %v1783
  %v1788 = vsel %vm1176, %v1745, 0
  %v1791 = vsel %vm1176, %v1746, 0
  %v1794 = vsel %vm1176, %v1747, 0
  %v1797 = vsel %vm1176, %v1748, 0
  %v1800 = vsel %vm1176, %v1749, 0
  %v1803 = vsel %vm1176, %v1750, 0
  %v1806 = vsel %vm1176, %v1751, 0
  %v1809 = vsel %vm1176, %v1752, 0
  %v1812 = vsel %vm1176, %v1753, 0
  %v1815 = vsel %vm1176, %v1754, 0
  %v1818 = vsel %vm1176, %v1755, 0
  %v1821 = vsel %vm1176, %v1756, 0
  %v1824 = vsel %vm1176, %v1757, 0
  %v1827 = vsel %vm1176, %v1758, 0
  %v1830 = vsel %vm1176, %v1759, 0
  %v1833 = vsel %vm1176, %v1760, 0
  %v1836 = vsel %vm1176, %v1761, 0
  %v1839 = vsel %vm1176, %v1762, 0
  %v1842 = vsel %vm1176, %v1763, 0
  %v1845 = vsel %vm1176, %v1764, 0
  %v1848 = vsel %vm1176, %v1765, 0
  %v1851 = vsel %vm1176, %v1766, 0
  %v1854 = vsel %vm1176, %v1767, 0
  %v1857 = vsel %vm1176, %v1768, 0
  %v1860 = vsel %vm1176, %v1769, 0
  %v1863 = vsel %vm1176, %v1770, 0
  %v1866 = vsel %vm1176, %v1771, 0
  %v1869 = vsel %vm1176, %v1772, 0
  %v1872 = vsel %vm1176, %v1773, 0
  %v1875 = vsel %vm1176, %v1774, 0
  %v1878 = vsel %vm1176, %v1775, 0
  %v1881 = vsel %vm1176, %v1776, 0
  %1883 = vmatpush.bf16.msra.mxu0 0
  %1884 = vmatpush.bf16.msra.mxu0 0
  %1885 = vmatpush.bf16.msra.mxu0 0
  %1886 = vmatpush.bf16.msra.mxu0 0
  %1887 = vmatpush.bf16.msra.mxu0 0
  %1888 = vmatpush.bf16.msra.mxu0 0
  %1889 = vmatpush.bf16.msra.mxu0 0
  %1890 = vmatpush.bf16.msra.mxu0 %v1785
  %1891 = vmatmul.bf16.gmra.mxu0 %v1788
  %v1892 = vpop.f32.mrf.mxu0
  %v1893 = vadd.f32 %v1780, %v1892
  %v1894 = vpop.f32.mrf.mxu0
  %v1895 = vadd.f32 %v1780, %v1894
  %1896 = vmatmul.bf16.gmra.mxu0 %v1791
  %v1897 = vpop.f32.mrf.mxu0
  %v1898 = vadd.f32 %v1780, %v1897
  %v1899 = vpop.f32.mrf.mxu0
  %v1900 = vadd.f32 %v1780, %v1899
  %1901 = vmatmul.bf16.gmra.mxu0 %v1794
  %v1902 = vpop.f32.mrf.mxu0
  %v1903 = vadd.f32 %v1780, %v1902
  %v1904 = vpop.f32.mrf.mxu0
  %v1905 = vadd.f32 %v1780, %v1904
  %1906 = vmatmul.bf16.gmra.mxu0 %v1797
  %v1907 = vpop.f32.mrf.mxu0
  %v1908 = vadd.f32 %v1780, %v1907
  %v1909 = vpop.f32.mrf.mxu0
  %v1910 = vadd.f32 %v1780, %v1909
  %1911 = vmatmul.bf16.gmra.mxu0 %v1800
  %v1912 = vpop.f32.mrf.mxu0
  %v1913 = vadd.f32 %v1780, %v1912
  %v1914 = vpop.f32.mrf.mxu0
  %v1915 = vadd.f32 %v1780, %v1914
  %1916 = vmatmul.bf16.gmra.mxu0 %v1803
  %v1917 = vpop.f32.mrf.mxu0
  %v1918 = vadd.f32 %v1780, %v1917
  %v1919 = vpop.f32.mrf.mxu0
  %v1920 = vadd.f32 %v1780, %v1919
  %1921 = vmatmul.bf16.gmra.mxu0 %v1806
  %v1922 = vpop.f32.mrf.mxu0
  %v1923 = vadd.f32 %v1780, %v1922
  %v1924 = vpop.f32.mrf.mxu0
  %v1925 = vadd.f32 %v1780, %v1924
  %1926 = vmatmul.bf16.gmra.mxu0 %v1809
  %v1927 = vpop.f32.mrf.mxu0
  %v1928 = vadd.f32 %v1780, %v1927
  %v1929 = vpop.f32.mrf.mxu0
  %v1930 = vadd.f32 %v1780, %v1929
  %1931 = vmatmul.bf16.gmra.mxu0 %v1812
  %v1932 = vpop.f32.mrf.mxu0
  %v1933 = vadd.f32 %v1780, %v1932
  %v1934 = vpop.f32.mrf.mxu0
  %v1935 = vadd.f32 %v1780, %v1934
  %1936 = vmatmul.bf16.gmra.mxu0 %v1815
  %v1937 = vpop.f32.mrf.mxu0
  %v1938 = vadd.f32 %v1780, %v1937
  %v1939 = vpop.f32.mrf.mxu0
  %v1940 = vadd.f32 %v1780, %v1939
  %1941 = vmatmul.bf16.gmra.mxu0 %v1818
  %v1942 = vpop.f32.mrf.mxu0
  %v1943 = vadd.f32 %v1780, %v1942
  %v1944 = vpop.f32.mrf.mxu0
  %v1945 = vadd.f32 %v1780, %v1944
  %1946 = vmatmul.bf16.gmra.mxu0 %v1821
  %v1947 = vpop.f32.mrf.mxu0
  %v1948 = vadd.f32 %v1780, %v1947
  %v1949 = vpop.f32.mrf.mxu0
  %v1950 = vadd.f32 %v1780, %v1949
  %1951 = vmatmul.bf16.gmra.mxu0 %v1824
  %v1952 = vpop.f32.mrf.mxu0
  %v1953 = vadd.f32 %v1780, %v1952
  %v1954 = vpop.f32.mrf.mxu0
  %v1955 = vadd.f32 %v1780, %v1954
  %1956 = vmatmul.bf16.gmra.mxu0 %v1827
  %v1957 = vpop.f32.mrf.mxu0
  %v1958 = vadd.f32 %v1780, %v1957
  %v1959 = vpop.f32.mrf.mxu0
  %v1960 = vadd.f32 %v1780, %v1959
  %1961 = vmatmul.bf16.gmra.mxu0 %v1830
  %v1962 = vpop.f32.mrf.mxu0
  %v1963 = vadd.f32 %v1780, %v1962
  %v1964 = vpop.f32.mrf.mxu0
  %v1965 = vadd.f32 %v1780, %v1964
  %1966 = vmatmul.bf16.gmra.mxu0 %v1833
  %v1967 = vpop.f32.mrf.mxu0
  %v1968 = vadd.f32 %v1780, %v1967
  %v1969 = vpop.f32.mrf.mxu0
  %v1970 = vadd.f32 %v1780, %v1969
  %1971 = vmatmul.bf16.gmra.mxu0 %v1836
  %v1972 = vpop.f32.mrf.mxu0
  %v1973 = vadd.f32 %v1780, %v1972
  %v1974 = vpop.f32.mrf.mxu0
  %v1975 = vadd.f32 %v1780, %v1974
  %1976 = vmatmul.bf16.gmra.mxu0 %v1839
  %v1977 = vpop.f32.mrf.mxu0
  %v1978 = vadd.f32 %v1780, %v1977
  %v1979 = vpop.f32.mrf.mxu0
  %v1980 = vadd.f32 %v1780, %v1979
  %1981 = vmatmul.bf16.gmra.mxu0 %v1842
  %v1982 = vpop.f32.mrf.mxu0
  %v1983 = vadd.f32 %v1780, %v1982
  %v1984 = vpop.f32.mrf.mxu0
  %v1985 = vadd.f32 %v1780, %v1984
  %1986 = vmatmul.bf16.gmra.mxu0 %v1845
  %v1987 = vpop.f32.mrf.mxu0
  %v1988 = vadd.f32 %v1780, %v1987
  %v1989 = vpop.f32.mrf.mxu0
  %v1990 = vadd.f32 %v1780, %v1989
  %1991 = vmatmul.bf16.gmra.mxu0 %v1848
  %v1992 = vpop.f32.mrf.mxu0
  %v1993 = vadd.f32 %v1780, %v1992
  %v1994 = vpop.f32.mrf.mxu0
  %v1995 = vadd.f32 %v1780, %v1994
  %1996 = vmatmul.bf16.gmra.mxu0 %v1851
  %v1997 = vpop.f32.mrf.mxu0
  %v1998 = vadd.f32 %v1780, %v1997
  %v1999 = vpop.f32.mrf.mxu0
  %v2000 = vadd.f32 %v1780, %v1999
  %2001 = vmatmul.bf16.gmra.mxu0 %v1854
  %v2002 = vpop.f32.mrf.mxu0
  %v2003 = vadd.f32 %v1780, %v2002
  %v2004 = vpop.f32.mrf.mxu0
  %v2005 = vadd.f32 %v1780, %v2004
  %2006 = vmatmul.bf16.gmra.mxu0 %v1857
  %v2007 = vpop.f32.mrf.mxu0
  %v2008 = vadd.f32 %v1780, %v2007
  %v2009 = vpop.f32.mrf.mxu0
  %v2010 = vadd.f32 %v1780, %v2009
  %2011 = vmatmul.bf16.gmra.mxu0 %v1860
  %v2012 = vpop.f32.mrf.mxu0
  %v2013 = vadd.f32 %v1780, %v2012
  %v2014 = vpop.f32.mrf.mxu0
  %v2015 = vadd.f32 %v1780, %v2014
  %2016 = vmatmul.bf16.gmra.mxu0 %v1863
  %v2017 = vpop.f32.mrf.mxu0
  %v2018 = vadd.f32 %v1780, %v2017
  %v2019 = vpop.f32.mrf.mxu0
  %v2020 = vadd.f32 %v1780, %v2019
  %2021 = vmatmul.bf16.gmra.mxu0 %v1866
  %v2022 = vpop.f32.mrf.mxu0
  %v2023 = vadd.f32 %v1780, %v2022
  %v2024 = vpop.f32.mrf.mxu0
  %v2025 = vadd.f32 %v1780, %v2024
  %2026 = vmatmul.bf16.gmra.mxu0 %v1869
  %v2027 = vpop.f32.mrf.mxu0
  %v2028 = vadd.f32 %v1780, %v2027
  %v2029 = vpop.f32.mrf.mxu0
  %v2030 = vadd.f32 %v1780, %v2029
  %2031 = vmatmul.bf16.gmra.mxu0 %v1872
  %v2032 = vpop.f32.mrf.mxu0
  %v2033 = vadd.f32 %v1780, %v2032
  %v2034 = vpop.f32.mrf.mxu0
  %v2035 = vadd.f32 %v1780, %v2034
  %2036 = vmatmul.bf16.gmra.mxu0 %v1875
  %v2037 = vpop.f32.mrf.mxu0
  %v2038 = vadd.f32 %v1780, %v2037
  %v2039 = vpop.f32.mrf.mxu0
  %v2040 = vadd.f32 %v1780, %v2039
  %2041 = vmatmul.bf16.gmra.mxu0 %v1878
  %v2042 = vpop.f32.mrf.mxu0
  %v2043 = vadd.f32 %v1780, %v2042
  %v2044 = vpop.f32.mrf.mxu0
  %v2045 = vadd.f32 %v1780, %v2044
  %2046 = vmatmul.bf16.gmra.mxu0 %v1881
  %v2047 = vpop.f32.mrf.mxu0
  %v2048 = vadd.f32 %v1780, %v2047
  %v2049 = vpop.f32.mrf.mxu0
  %v2050 = vadd.f32 %v1780, %v2049
  %2051 = vdwg.mxu0
  %v2052 = vadd.f32 %v1893, %v21
  %v2053 = vadd.f32 %v1895, %v22
  %v2054 = vadd.f32 %v1898, %v23
  %v2055 = vadd.f32 %v1900, %v24
  %v2056 = vadd.f32 %v1903, %v25
  %v2057 = vadd.f32 %v1905, %v26
  %v2058 = vadd.f32 %v1908, %v27
  %v2059 = vadd.f32 %v1910, %v28
  %v2060 = vadd.f32 %v1913, %v29
  %v2061 = vadd.f32 %v1915, %v30
  %v2062 = vadd.f32 %v1918, %v31
  %v2063 = vadd.f32 %v1920, %v32
  %v2064 = vadd.f32 %v1923, %v33
  %v2065 = vadd.f32 %v1925, %v34
  %v2066 = vadd.f32 %v1928, %v35
  %v2067 = vadd.f32 %v1930, %v36
  %v2068 = vadd.f32 %v1933, %v37
  %v2069 = vadd.f32 %v1935, %v38
  %v2070 = vadd.f32 %v1938, %v39
  %v2071 = vadd.f32 %v1940, %v40
  %v2072 = vadd.f32 %v1943, %v41
  %v2073 = vadd.f32 %v1945, %v42
  %v2074 = vadd.f32 %v1948, %v43
  %v2075 = vadd.f32 %v1950, %v44
  %v2076 = vadd.f32 %v1953, %v45
  %v2077 = vadd.f32 %v1955, %v46
  %v2078 = vadd.f32 %v1958, %v47
  %v2079 = vadd.f32 %v1960, %v48
  %v2080 = vadd.f32 %v1963, %v49
  %v2081 = vadd.f32 %v1965, %v50
  %v2082 = vadd.f32 %v1968, %v51
  %v2083 = vadd.f32 %v1970, %v52
  %v2084 = vadd.f32 %v1973, %v53
  %v2085 = vadd.f32 %v1975, %v54
  %v2086 = vadd.f32 %v1978, %v55
  %v2087 = vadd.f32 %v1980, %v56
  %v2088 = vadd.f32 %v1983, %v57
  %v2089 = vadd.f32 %v1985, %v58
  %v2090 = vadd.f32 %v1988, %v59
  %v2091 = vadd.f32 %v1990, %v60
  %v2092 = vadd.f32 %v1993, %v61
  %v2093 = vadd.f32 %v1995, %v62
  %v2094 = vadd.f32 %v1998, %v63
  %v2095 = vadd.f32 %v2000, %v64
  %v2096 = vadd.f32 %v2003, %v65
  %v2097 = vadd.f32 %v2005, %v66
  %v2098 = vadd.f32 %v2008, %v67
  %v2099 = vadd.f32 %v2010, %v68
  %v2100 = vadd.f32 %v2013, %v69
  %v2101 = vadd.f32 %v2015, %v70
  %v2102 = vadd.f32 %v2018, %v71
  %v2103 = vadd.f32 %v2020, %v72
  %v2104 = vadd.f32 %v2023, %v73
  %v2105 = vadd.f32 %v2025, %v74
  %v2106 = vadd.f32 %v2028, %v75
  %v2107 = vadd.f32 %v2030, %v76
  %v2108 = vadd.f32 %v2033, %v77
  %v2109 = vadd.f32 %v2035, %v78
  %v2110 = vadd.f32 %v2038, %v79
  %v2111 = vadd.f32 %v2040, %v80
  %v2112 = vadd.f32 %v2043, %v81
  %v2113 = vadd.f32 %v2045, %v82
  %v2114 = vadd.f32 %v2048, %v83
  %v2115 = vadd.f32 %v2050, %v84
  %v2116 = vmax.f32 %v2052, 0.0
  %v2117 = vmax.f32 %v2053, 0.0
  %v2118 = vmax.f32 %v2054, 0.0
  %v2119 = vmax.f32 %v2055, 0.0
  %v2120 = vmax.f32 %v2056, 0.0
  %v2121 = vmax.f32 %v2057, 0.0
  %v2122 = vmax.f32 %v2058, 0.0
  %v2123 = vmax.f32 %v2059, 0.0
  %v2124 = vmax.f32 %v2060, 0.0
  %v2125 = vmax.f32 %v2061, 0.0
  %v2126 = vmax.f32 %v2062, 0.0
  %v2127 = vmax.f32 %v2063, 0.0
  %v2128 = vmax.f32 %v2064, 0.0
  %v2129 = vmax.f32 %v2065, 0.0
  %v2130 = vmax.f32 %v2066, 0.0
  %v2131 = vmax.f32 %v2067, 0.0
  %v2132 = vmax.f32 %v2068, 0.0
  %v2133 = vmax.f32 %v2069, 0.0
  %v2134 = vmax.f32 %v2070, 0.0
  %v2135 = vmax.f32 %v2071, 0.0
  %v2136 = vmax.f32 %v2072, 0.0
  %v2137 = vmax.f32 %v2073, 0.0
  %v2138 = vmax.f32 %v2074, 0.0
  %v2139 = vmax.f32 %v2075, 0.0
  %v2140 = vmax.f32 %v2076, 0.0
  %v2141 = vmax.f32 %v2077, 0.0
  %v2142 = vmax.f32 %v2078, 0.0
  %v2143 = vmax.f32 %v2079, 0.0
  %v2144 = vmax.f32 %v2080, 0.0
  %v2145 = vmax.f32 %v2081, 0.0
  %v2146 = vmax.f32 %v2082, 0.0
  %v2147 = vmax.f32 %v2083, 0.0
  %v2148 = vmax.f32 %v2084, 0.0
  %v2149 = vmax.f32 %v2085, 0.0
  %v2150 = vmax.f32 %v2086, 0.0
  %v2151 = vmax.f32 %v2087, 0.0
  %v2152 = vmax.f32 %v2088, 0.0
  %v2153 = vmax.f32 %v2089, 0.0
  %v2154 = vmax.f32 %v2090, 0.0
  %v2155 = vmax.f32 %v2091, 0.0
  %v2156 = vmax.f32 %v2092, 0.0
  %v2157 = vmax.f32 %v2093, 0.0
  %v2158 = vmax.f32 %v2094, 0.0
  %v2159 = vmax.f32 %v2095, 0.0
  %v2160 = vmax.f32 %v2096, 0.0
  %v2161 = vmax.f32 %v2097, 0.0
  %v2162 = vmax.f32 %v2098, 0.0
  %v2163 = vmax.f32 %v2099, 0.0
  %v2164 = vmax.f32 %v2100, 0.0
  %v2165 = vmax.f32 %v2101, 0.0
  %v2166 = vmax.f32 %v2102, 0.0
  %v2167 = vmax.f32 %v2103, 0.0
  %v2168 = vmax.f32 %v2104, 0.0
  %v2169 = vmax.f32 %v2105, 0.0
  %v2170 = vmax.f32 %v2106, 0.0
  %v2171 = vmax.f32 %v2107, 0.0
  %v2172 = vmax.f32 %v2108, 0.0
  %v2173 = vmax.f32 %v2109, 0.0
  %v2174 = vmax.f32 %v2110, 0.0
  %v2175 = vmax.f32 %v2111, 0.0
  %v2176 = vmax.f32 %v2112, 0.0
  %v2177 = vmax.f32 %v2113, 0.0
  %v2178 = vmax.f32 %v2114, 0.0
  %v2179 = vmax.f32 %v2115, 0.0
  %2180 = vst.msk [vmem:[%s5] sm:$0xff] %vm135, %v2116
  %2181 = vst.msk [vmem:[%s5 + $0x8] sm:$0xff] %vm135, %v2117
  %2182 = vst.msk [vmem:[%s5 + $0x10] sm:$0xff] %vm135, %v2118
  %2183 = vst.msk [vmem:[%s5 + $0x18] sm:$0xff] %vm135, %v2119
  %2184 = vst.msk [vmem:[%s5 + $0x20] sm:$0xff] %vm135, %v2120
  %2185 = vst.msk [vmem:[%s5 + $0x28] sm:$0xff] %vm135, %v2121
  %2186 = vst.msk [vmem:[%s5 + $0x30] sm:$0xff] %vm135, %v2122
  %2187 = vst.msk [vmem:[%s5 + $0x38] sm:$0xff] %vm135, %v2123
  %2188 = vst.msk [vmem:[%s5 + $0x40] sm:$0xff] %vm135, %v2124
  %2189 = vst.msk [vmem:[%s5 + $0x48] sm:$0xff] %vm135, %v2125
  %2190 = vst.msk [vmem:[%s5 + $0x50] sm:$0xff] %vm135, %v2126
  %2191 = vst.msk [vmem:[%s5 + $0x58] sm:$0xff] %vm135, %v2127
  %2192 = vst.msk [vmem:[%s5 + $0x60] sm:$0xff] %vm135, %v2128
  %2193 = vst.msk [vmem:[%s5 + $0x68] sm:$0xff] %vm135, %v2129
  %2194 = vst.msk [vmem:[%s5 + $0x70] sm:$0xff] %vm135, %v2130
  %2195 = vst.msk [vmem:[%s5 + $0x78] sm:$0xff] %vm135, %v2131
  %2196 = vst.msk [vmem:[%s5 + $0x80] sm:$0xff] %vm135, %v2132
  %2197 = vst.msk [vmem:[%s5 + $0x88] sm:$0xff] %vm135, %v2133
  %2198 = vst.msk [vmem:[%s5 + $0x90] sm:$0xff] %vm135, %v2134
  %2199 = vst.msk [vmem:[%s5 + $0x98] sm:$0xff] %vm135, %v2135
  %2200 = vst.msk [vmem:[%s5 + $0xa0] sm:$0xff] %vm135, %v2136
  %2201 = vst.msk [vmem:[%s5 + $0xa8] sm:$0xff] %vm135, %v2137
  %2202 = vst.msk [vmem:[%s5 + $0xb0] sm:$0xff] %vm135, %v2138
  %2203 = vst.msk [vmem:[%s5 + $0xb8] sm:$0xff] %vm135, %v2139
  %2204 = vst.msk [vmem:[%s5 + $0xc0] sm:$0xff] %vm135, %v2140
  %2205 = vst.msk [vmem:[%s5 + $0xc8] sm:$0xff] %vm135, %v2141
  %2206 = vst.msk [vmem:[%s5 + $0xd0] sm:$0xff] %vm135, %v2142
  %2207 = vst.msk [vmem:[%s5 + $0xd8] sm:$0xff] %vm135, %v2143
  %2208 = vst.msk [vmem:[%s5 + $0xe0] sm:$0xff] %vm135, %v2144
  %2209 = vst.msk [vmem:[%s5 + $0xe8] sm:$0xff] %vm135, %v2145
  %2210 = vst.msk [vmem:[%s5 + $0xf0] sm:$0xff] %vm135, %v2146
  %2211 = vst.msk [vmem:[%s5 + $0xf8] sm:$0xff] %vm135, %v2147
  %2212 = vst.msk [vmem:[%s5 + $0x100] sm:$0xff] %vm135, %v2148
  %2213 = vst.msk [vmem:[%s5 + $0x108] sm:$0xff] %vm135, %v2149
  %2214 = vst.msk [vmem:[%s5 + $0x110] sm:$0xff] %vm135, %v2150
  %2215 = vst.msk [vmem:[%s5 + $0x118] sm:$0xff] %vm135, %v2151
  %2216 = vst.msk [vmem:[%s5 + $0x120] sm:$0xff] %vm135, %v2152
  %2217 = vst.msk [vmem:[%s5 + $0x128] sm:$0xff] %vm135, %v2153
  %2218 = vst.msk [vmem:[%s5 + $0x130] sm:$0xff] %vm135, %v2154
  %2219 = vst.msk [vmem:[%s5 + $0x138] sm:$0xff] %vm135, %v2155
  %2220 = vst.msk [vmem:[%s5 + $0x140] sm:$0xff] %vm135, %v2156
  %2221 = vst.msk [vmem:[%s5 + $0x148] sm:$0xff] %vm135, %v2157
  %2222 = vst.msk [vmem:[%s5 + $0x150] sm:$0xff] %vm135, %v2158
  %2223 = vst.msk [vmem:[%s5 + $0x158] sm:$0xff] %vm135, %v2159
  %2224 = vst.msk [vmem:[%s5 + $0x160] sm:$0xff] %vm135, %v2160
  %2225 = vst.msk [vmem:[%s5 + $0x168] sm:$0xff] %vm135, %v2161
  %2226 = vst.msk [vmem:[%s5 + $0x170] sm:$0xff] %vm135, %v2162
  %2227 = vst.msk [vmem:[%s5 + $0x178] sm:$0xff] %vm135, %v2163
  %2228 = vst.msk [vmem:[%s5 + $0x180] sm:$0xff] %vm135, %v2164
  %2229 = vst.msk [vmem:[%s5 + $0x188] sm:$0xff] %vm135, %v2165
  %2230 = vst.msk [vmem:[%s5 + $0x190] sm:$0xff] %vm135, %v2166
  %2231 = vst.msk [vmem:[%s5 + $0x198] sm:$0xff] %vm135, %v2167
  %2232 = vst.msk [vmem:[%s5 + $0x1a0] sm:$0xff] %vm135, %v2168
  %2233 = vst.msk [vmem:[%s5 + $0x1a8] sm:$0xff] %vm135, %v2169
  %2234 = vst.msk [vmem:[%s5 + $0x1b0] sm:$0xff] %vm135, %v2170
  %2235 = vst.msk [vmem:[%s5 + $0x1b8] sm:$0xff] %vm135, %v2171
  %2236 = vst.msk [vmem:[%s5 + $0x1c0] sm:$0xff] %vm135, %v2172
  %2237 = vst.msk [vmem:[%s5 + $0x1c8] sm:$0xff] %vm135, %v2173
  %2238 = vst.msk [vmem:[%s5 + $0x1d0] sm:$0xff] %vm135, %v2174
  %2239 = vst.msk [vmem:[%s5 + $0x1d8] sm:$0xff] %vm135, %v2175
  %2240 = vst.msk [vmem:[%s5 + $0x1e0] sm:$0xff] %vm135, %v2176
  %2241 = vst.msk [vmem:[%s5 + $0x1e8] sm:$0xff] %vm135, %v2177
  %2242 = vst.msk [vmem:[%s5 + $0x1f0] sm:$0xff] %vm135, %v2178
  %2243 = vst.msk [vmem:[%s5 + $0x1f8] sm:$0xff] %vm135, %v2179
  // Predicated region
  $region22: #{patch_embed_forward.4} parent=0 // pred_check
    _
  $region23: #{patch_embed_forward.4} parent=0 // pred_check_branch
    %2245 = sbr.rel (0) target = $region25
  $region24: #{patch_embed_forward.4} parent=0 // pred_region
    _
  $region25: #{patch_embed_forward.4} parent=0 // pred_fallthru
    _
  // Predicated region
  $region26: #{patch_embed_forward.4} parent=0 // pred_check
    _
  $region27: #{patch_embed_forward.4} parent=0 // pred_check_branch
    %2247 = sbr.rel (0) target = $region29
  $region28: #{patch_embed_forward.4} parent=0 // pred_region
    _
  $region29: #{patch_embed_forward.4} parent=0 // pred_fallthru
    _

// kernel: patch_embed_forward.3
$region0: #{patch_embed_forward.3}
  #allocation0 [shape = 'u32[]', space=smem, size = 0x4, offset = 0x4, fixed_abs, tag = 'smem constant byte address 0x4 - core index']
  #allocation1 [shape = 'u32[72,128]{1,0:T(1,128)}', space=vmem, size = 0x9000, scoped, tag = 'internal scratch']
  #allocation2 [shape = 'f32[2,18,18,32]{3,2,1,0:T(8,128)}', space=vmem, size = 0x6c000, scoped, tag = 'scratch operand']
  #allocation3 [shape = 'f32[512,288]{1,0:T(8,128)}', space=vmem, size = 0xc0000, scoped, tag = 'scratch operand']
  %s0 = inlined_call_operand.vmem [shape: bf16[512,32], index: 0, kind: input, shape index: {}]
  %s1 = inlined_call_operand.vmem [shape: bf16[320,32], index: 1, kind: input, shape index: {}]
  %s2 = inlined_call_operand.vmem [shape: f32[2,32], index: 2, kind: input, shape index: {}]
  %s3 = inlined_call_operand.vmem [shape: f32[512,32], index: 3, kind: output, shape index: {}]
  %s4 = sld [smem:[#allocation0]]
  $region22: #{patch_embed_forward.3} parent=0
    _
  %s6 = ssub.s32 1, %s4
  %s7 = scalar_select 0, %s6, %s4
  // Predicated region
  $region2: #{patch_embed_forward.3} parent=0 // pred_check
    _
  $region3: #{patch_embed_forward.3} parent=0 // pred_check_branch
    %9 = sbr.rel (0) target = $region5
  $region4: #{patch_embed_forward.3} parent=0 // pred_region
    _
  $region5: #{patch_embed_forward.3} parent=0 // pred_fallthru
    _
  // Predicated region
  $region6: #{patch_embed_forward.3} parent=0 // pred_check
    _
  $region7: #{patch_embed_forward.3} parent=0 // pred_check_branch
    %11 = sbr.rel (0) target = $region9
  $region8: #{patch_embed_forward.3} parent=0 // pred_region
    _
  $region9: #{patch_embed_forward.3} parent=0 // pred_fallthru
    _
  // Predicated region
  $region10: #{patch_embed_forward.3} parent=0 // pred_check
    _
  $region11: #{patch_embed_forward.3} parent=0 // pred_check_branch
    %13 = sbr.rel (0) target = $region13
  $region12: #{patch_embed_forward.3} parent=0 // pred_region
    _
  $region13: #{patch_embed_forward.3} parent=0 // pred_fallthru
    _
  %v15 = vld [vmem:[%s0] sm:$0xf]
  %v16 = vld [vmem:[%s0 + $0x4] sm:$0xf]
  %v17 = vld [vmem:[%s0 + $0x8] sm:$0xf]
  %v18 = vld [vmem:[%s0 + $0xc] sm:$0xf]
  %v19 = vld [vmem:[%s0 + $0x10] sm:$0xf]
  %v20 = vld [vmem:[%s0 + $0x14] sm:$0xf]
  %v21 = vld [vmem:[%s0 + $0x18] sm:$0xf]
  %v22 = vld [vmem:[%s0 + $0x1c] sm:$0xf]
  %v23 = vld [vmem:[%s0 + $0x20] sm:$0xf]
  %v24 = vld [vmem:[%s0 + $0x24] sm:$0xf]
  %v25 = vld [vmem:[%s0 + $0x28] sm:$0xf]
  %v26 = vld [vmem:[%s0 + $0x2c] sm:$0xf]
  %v27 = vld [vmem:[%s0 + $0x30] sm:$0xf]
  %v28 = vld [vmem:[%s0 + $0x34] sm:$0xf]
  %v29 = vld [vmem:[%s0 + $0x38] sm:$0xf]
  %v30 = vld [vmem:[%s0 + $0x3c] sm:$0xf]
  %v31 = vld [vmem:[%s0 + $0x40] sm:$0xf]
  %v32 = vld [vmem:[%s0 + $0x44] sm:$0xf]
  %v33 = vld [vmem:[%s0 + $0x48] sm:$0xf]
  %v34 = vld [vmem:[%s0 + $0x4c] sm:$0xf]
  %v35 = vld [vmem:[%s0 + $0x50] sm:$0xf]
  %v36 = vld [vmem:[%s0 + $0x54] sm:$0xf]
  %v37 = vld [vmem:[%s0 + $0x58] sm:$0xf]
  %v38 = vld [vmem:[%s0 + $0x5c] sm:$0xf]
  %v39 = vld [vmem:[%s0 + $0x60] sm:$0xf]
  %v40 = vld [vmem:[%s0 + $0x64] sm:$0xf]
  %v41 = vld [vmem:[%s0 + $0x68] sm:$0xf]
  %v42 = vld [vmem:[%s0 + $0x6c] sm:$0xf]
  %v43 = vld [vmem:[%s0 + $0x70] sm:$0xf]
  %v44 = vld [vmem:[%s0 + $0x74] sm:$0xf]
  %v45 = vld [vmem:[%s0 + $0x78] sm:$0xf]
  %v46 = vld [vmem:[%s0 + $0x7c] sm:$0xf]
  %v47 = vld [vmem:[%s0 + $0x80] sm:$0xf]
  %v48 = vld [vmem:[%s0 + $0x84] sm:$0xf]
  %v49 = vld [vmem:[%s0 + $0x88] sm:$0xf]
  %v50 = vld [vmem:[%s0 + $0x8c] sm:$0xf]
  %v51 = vld [vmem:[%s0 + $0x90] sm:$0xf]
  %v52 = vld [vmem:[%s0 + $0x94] sm:$0xf]
  %v53 = vld [vmem:[%s0 + $0x98] sm:$0xf]
  %v54 = vld [vmem:[%s0 + $0x9c] sm:$0xf]
  %v55 = vld [vmem:[%s0 + $0xa0] sm:$0xf]
  %v56 = vld [vmem:[%s0 + $0xa4] sm:$0xf]
  %v57 = vld [vmem:[%s0 + $0xa8] sm:$0xf]
  %v58 = vld [vmem:[%s0 + $0xac] sm:$0xf]
  %v59 = vld [vmem:[%s0 + $0xb0] sm:$0xf]
  %v60 = vld [vmem:[%s0 + $0xb4] sm:$0xf]
  %v61 = vld [vmem:[%s0 + $0xb8] sm:$0xf]
  %v62 = vld [vmem:[%s0 + $0xbc] sm:$0xf]
  %v63 = vld [vmem:[%s0 + $0xc0] sm:$0xf]
  %v64 = vld [vmem:[%s0 + $0xc4] sm:$0xf]
  %v65 = vld [vmem:[%s0 + $0xc8] sm:$0xf]
  %v66 = vld [vmem:[%s0 + $0xcc] sm:$0xf]
  %v67 = vld [vmem:[%s0 + $0xd0] sm:$0xf]
  %v68 = vld [vmem:[%s0 + $0xd4] sm:$0xf]
  %v69 = vld [vmem:[%s0 + $0xd8] sm:$0xf]
  %v70 = vld [vmem:[%s0 + $0xdc] sm:$0xf]
  %v71 = vld [vmem:[%s0 + $0xe0] sm:$0xf]
  %v72 = vld [vmem:[%s0 + $0xe4] sm:$0xf]
  %v73 = vld [vmem:[%s0 + $0xe8] sm:$0xf]
  %v74 = vld [vmem:[%s0 + $0xec] sm:$0xf]
  %v75 = vld [vmem:[%s0 + $0xf0] sm:$0xf]
  %v76 = vld [vmem:[%s0 + $0xf4] sm:$0xf]
  %v77 = vld [vmem:[%s0 + $0xf8] sm:$0xf]
  %v78 = vld [vmem:[%s0 + $0xfc] sm:$0xf]
  %v79 = vld [vmem:[%s1] sm:$0xf]
  %v80 = vld [vmem:[%s1 + $0x4] sm:$0xf]
  %v81 = vld [vmem:[%s1 + $0x8] sm:$0xf]
  %v82 = vld [vmem:[%s1 + $0xc] sm:$0xf]
  %v83 = vld [vmem:[%s2] sm:$0x1]
  %v84 = vperm.slane %v83, 0
  %v149 = vunpack.c.l.b16 %v15
  %v150 = vunpack.c.l.b16 %v16
  %v151 = vunpack.c.l.b16 %v17
  %v152 = vunpack.c.l.b16 %v18
  %v153 = vunpack.c.l.b16 %v19
  %v154 = vunpack.c.l.b16 %v20
  %v155 = vunpack.c.l.b16 %v21
  %v156 = vunpack.c.l.b16 %v22
  %v157 = vunpack.c.l.b16 %v23
  %v158 = vunpack.c.l.b16 %v24
  %v159 = vunpack.c.l.b16 %v25
  %v160 = vunpack.c.l.b16 %v26
  %v161 = vunpack.c.l.b16 %v27
  %v162 = vunpack.c.l.b16 %v28
  %v163 = vunpack.c.l.b16 %v29
  %v164 = vunpack.c.l.b16 %v30
  %v165 = vunpack.c.l.b16 %v31
  %v166 = vunpack.c.l.b16 %v32
  %v167 = vunpack.c.l.b16 %v33
  %v168 = vunpack.c.l.b16 %v34
  %v169 = vunpack.c.l.b16 %v35
  %v170 = vunpack.c.l.b16 %v36
  %v171 = vunpack.c.l.b16 %v37
  %v172 = vunpack.c.l.b16 %v38
  %v173 = vunpack.c.l.b16 %v39
  %v174 = vunpack.c.l.b16 %v40
  %v175 = vunpack.c.l.b16 %v41
  %v176 = vunpack.c.l.b16 %v42
  %v177 = vunpack.c.l.b16 %v43
  %v178 = vunpack.c.l.b16 %v44
  %v179 = vunpack.c.l.b16 %v45
  %v180 = vunpack.c.l.b16 %v46
  %v181 = vunpack.c.l.b16 %v47
  %v182 = vunpack.c.l.b16 %v48
  %v183 = vunpack.c.l.b16 %v49
  %v184 = vunpack.c.l.b16 %v50
  %v185 = vunpack.c.l.b16 %v51
  %v186 = vunpack.c.l.b16 %v52
  %v187 = vunpack.c.l.b16 %v53
  %v188 = vunpack.c.l.b16 %v54
  %v189 = vunpack.c.l.b16 %v55
  %v190 = vunpack.c.l.b16 %v56
  %v191 = vunpack.c.l.b16 %v57
  %v192 = vunpack.c.l.b16 %v58
  %v193 = vunpack.c.l.b16 %v59
  %v194 = vunpack.c.l.b16 %v60
  %v195 = vunpack.c.l.b16 %v61
  %v196 = vunpack.c.l.b16 %v62
  %v197 = vunpack.c.l.b16 %v63
  %v198 = vunpack.c.l.b16 %v64
  %v199 = vunpack.c.l.b16 %v65
  %v200 = vunpack.c.l.b16 %v66
  %v201 = vunpack.c.l.b16 %v67
  %v202 = vunpack.c.l.b16 %v68
  %v203 = vunpack.c.l.b16 %v69
  %v204 = vunpack.c.l.b16 %v70
  %v205 = vunpack.c.l.b16 %v71
  %v206 = vunpack.c.l.b16 %v72
  %v207 = vunpack.c.l.b16 %v73
  %v208 = vunpack.c.l.b16 %v74
  %v209 = vunpack.c.l.b16 %v75
  %v210 = vunpack.c.l.b16 %v76
  %v211 = vunpack.c.l.b16 %v77
  %v212 = vunpack.c.l.b16 %v78
  %v213 = vpack.c.b16 %v150, %v149
  %v214 = vpack.c.b16 %v152, %v151
  %v215 = vpack.c.b16 %v154, %v153
  %v216 = vpack.c.b16 %v156, %v155
  %v217 = vpack.c.b16 %v158, %v157
  %v218 = vpack.c.b16 %v160, %v159
  %v219 = vpack.c.b16 %v162, %v161
  %v220 = vpack.c.b16 %v164, %v163
  %v221 = vpack.c.b16 %v166, %v165
  %v222 = vpack.c.b16 %v168, %v167
  %v223 = vpack.c.b16 %v170, %v169
  %v224 = vpack.c.b16 %v172, %v171
  %v225 = vpack.c.b16 %v174, %v173
  %v226 = vpack.c.b16 %v176, %v175
  %v227 = vpack.c.b16 %v178, %v177
  %v228 = vpack.c.b16 %v180, %v179
  %v229 = vpack.c.b16 %v182, %v181
  %v230 = vpack.c.b16 %v184, %v183
  %v231 = vpack.c.b16 %v186, %v185
  %v232 = vpack.c.b16 %v188, %v187
  %v233 = vpack.c.b16 %v190, %v189
  %v234 = vpack.c.b16 %v192, %v191
  %v235 = vpack.c.b16 %v194, %v193
  %v236 = vpack.c.b16 %v196, %v195
  %v237 = vpack.c.b16 %v198, %v197
  %v238 = vpack.c.b16 %v200, %v199
  %v239 = vpack.c.b16 %v202, %v201
  %v240 = vpack.c.b16 %v204, %v203
  %v241 = vpack.c.b16 %v206, %v205
  %v242 = vpack.c.b16 %v208, %v207
  %v243 = vpack.c.b16 %v210, %v209
  %v244 = vpack.c.b16 %v212, %v211
  %v249 = vunpack.c.l.b16 %v79
  %v250 = vunpack.c.l.b16 %v80
  %v251 = vunpack.c.l.b16 %v81
  %v252 = vunpack.c.l.b16 %v82
  %v253 = vpack.c.b16 %v250, %v249
  %v254 = vpack.c.b16 %v252, %v251
  %vm257 = vcmask 261120
  %v259 = vsel %vm257, %v213, 0
  %v262 = vsel %vm257, %v214, 0
  %v265 = vsel %vm257, %v215, 0
  %v268 = vsel %vm257, %v216, 0
  %v271 = vsel %vm257, %v217, 0
  %v274 = vsel %vm257, %v218, 0
  %v277 = vsel %vm257, %v219, 0
  %v280 = vsel %vm257, %v220, 0
  %v283 = vsel %vm257, %v221, 0
  %v286 = vsel %vm257, %v222, 0
  %v289 = vsel %vm257, %v223, 0
  %v292 = vsel %vm257, %v224, 0
  %v295 = vsel %vm257, %v225, 0
  %v298 = vsel %vm257, %v226, 0
  %v301 = vsel %vm257, %v227, 0
  %v304 = vsel %vm257, %v228, 0
  %v307 = vsel %vm257, %v229, 0
  %v310 = vsel %vm257, %v230, 0
  %v313 = vsel %vm257, %v231, 0
  %v316 = vsel %vm257, %v232, 0
  %v319 = vsel %vm257, %v233, 0
  %v322 = vsel %vm257, %v234, 0
  %v325 = vsel %vm257, %v235, 0
  %v328 = vsel %vm257, %v236, 0
  %v331 = vsel %vm257, %v237, 0
  %v334 = vsel %vm257, %v238, 0
  %v337 = vsel %vm257, %v239, 0
  %v340 = vsel %vm257, %v240, 0
  %v343 = vsel %vm257, %v241, 0
  %v346 = vsel %vm257, %v242, 0
  %v349 = vsel %vm257, %v243, 0
  %v352 = vsel %vm257, %v244, 0
  %354 = vmatpush.bf16.msra.mxu0 0
  %355 = vmatpush.bf16.msra.mxu0 0
  %356 = vmatpush.bf16.msra.mxu0 0
  %357 = vmatpush.bf16.msra.mxu0 0
  %358 = vmatpush.bf16.msra.mxu0 0
  %359 = vmatpush.bf16.msra.mxu0 0
  %360 = vmatpush.bf16.msra.mxu0 %v254
  %361 = vmatpush.bf16.msra.mxu0 %v253
  %362 = vmatmul.bf16.gmra.mxu0 %v259
  %v363 = vpop.f32.mrf.mxu0
  %v364 = vadd.f32 %v84, %v363
  %v365 = vpop.f32.mrf.mxu0
  %v366 = vadd.f32 %v84, %v365
  %367 = vmatmul.bf16.gmra.mxu0 %v262
  %v368 = vpop.f32.mrf.mxu0
  %v369 = vadd.f32 %v84, %v368
  %v370 = vpop.f32.mrf.mxu0
  %v371 = vadd.f32 %v84, %v370
  %372 = vmatmul.bf16.gmra.mxu0 %v265
  %v373 = vpop.f32.mrf.mxu0
  %v374 = vadd.f32 %v84, %v373
  %v375 = vpop.f32.mrf.mxu0
  %v376 = vadd.f32 %v84, %v375
  %377 = vmatmul.bf16.gmra.mxu0 %v268
  %v378 = vpop.f32.mrf.mxu0
  %v379 = vadd.f32 %v84, %v378
  %v380 = vpop.f32.mrf.mxu0
  %v381 = vadd.f32 %v84, %v380
  %382 = vmatmul.bf16.gmra.mxu0 %v271
  %v383 = vpop.f32.mrf.mxu0
  %v384 = vadd.f32 %v84, %v383
  %v385 = vpop.f32.mrf.mxu0
  %v386 = vadd.f32 %v84, %v385
  %387 = vmatmul.bf16.gmra.mxu0 %v274
  %v388 = vpop.f32.mrf.mxu0
  %v389 = vadd.f32 %v84, %v388
  %v390 = vpop.f32.mrf.mxu0
  %v391 = vadd.f32 %v84, %v390
  %392 = vmatmul.bf16.gmra.mxu0 %v277
  %v393 = vpop.f32.mrf.mxu0
  %v394 = vadd.f32 %v84, %v393
  %v395 = vpop.f32.mrf.mxu0
  %v396 = vadd.f32 %v84, %v395
  %397 = vmatmul.bf16.gmra.mxu0 %v280
  %v398 = vpop.f32.mrf.mxu0
  %v399 = vadd.f32 %v84, %v398
  %v400 = vpop.f32.mrf.mxu0
  %v401 = vadd.f32 %v84, %v400
  %402 = vmatmul.bf16.gmra.mxu0 %v283
  %v403 = vpop.f32.mrf.mxu0
  %v404 = vadd.f32 %v84, %v403
  %v405 = vpop.f32.mrf.mxu0
  %v406 = vadd.f32 %v84, %v405
  %407 = vmatmul.bf16.gmra.mxu0 %v286
  %v408 = vpop.f32.mrf.mxu0
  %v409 = vadd.f32 %v84, %v408
  %v410 = vpop.f32.mrf.mxu0
  %v411 = vadd.f32 %v84, %v410
  %412 = vmatmul.bf16.gmra.mxu0 %v289
  %v413 = vpop.f32.mrf.mxu0
  %v414 = vadd.f32 %v84, %v413
  %v415 = vpop.f32.mrf.mxu0
  %v416 = vadd.f32 %v84, %v415
  %417 = vmatmul.bf16.gmra.mxu0 %v292
  %v418 = vpop.f32.mrf.mxu0
  %v419 = vadd.f32 %v84, %v418
  %v420 = vpop.f32.mrf.mxu0
  %v421 = vadd.f32 %v84, %v420
  %422 = vmatmul.bf16.gmra.mxu0 %v295
  %v423 = vpop.f32.mrf.mxu0
  %v424 = vadd.f32 %v84, %v423
  %v425 = vpop.f32.mrf.mxu0
  %v426 = vadd.f32 %v84, %v425
  %427 = vmatmul.bf16.gmra.mxu0 %v298
  %v428 = vpop.f32.mrf.mxu0
  %v429 = vadd.f32 %v84, %v428
  %v430 = vpop.f32.mrf.mxu0
  %v431 = vadd.f32 %v84, %v430
  %432 = vmatmul.bf16.gmra.mxu0 %v301
  %v433 = vpop.f32.mrf.mxu0
  %v434 = vadd.f32 %v84, %v433
  %v435 = vpop.f32.mrf.mxu0
  %v436 = vadd.f32 %v84, %v435
  %437 = vmatmul.bf16.gmra.mxu0 %v304
  %v438 = vpop.f32.mrf.mxu0
  %v439 = vadd.f32 %v84, %v438
  %v440 = vpop.f32.mrf.mxu0
  %v441 = vadd.f32 %v84, %v440
  %442 = vmatmul.bf16.gmra.mxu0 %v307
  %v443 = vpop.f32.mrf.mxu0
  %v444 = vadd.f32 %v84, %v443
  %v445 = vpop.f32.mrf.mxu0
  %v446 = vadd.f32 %v84, %v445
  %447 = vmatmul.bf16.gmra.mxu0 %v310
  %v448 = vpop.f32.mrf.mxu0
  %v449 = vadd.f32 %v84, %v448
  %v450 = vpop.f32.mrf.mxu0
  %v451 = vadd.f32 %v84, %v450
  %452 = vmatmul.bf16.gmra.mxu0 %v313
  %v453 = vpop.f32.mrf.mxu0
  %v454 = vadd.f32 %v84, %v453
  %v455 = vpop.f32.mrf.mxu0
  %v456 = vadd.f32 %v84, %v455
  %457 = vmatmul.bf16.gmra.mxu0 %v316
  %v458 = vpop.f32.mrf.mxu0
  %v459 = vadd.f32 %v84, %v458
  %v460 = vpop.f32.mrf.mxu0
  %v461 = vadd.f32 %v84, %v460
  %462 = vmatmul.bf16.gmra.mxu0 %v319
  %v463 = vpop.f32.mrf.mxu0
  %v464 = vadd.f32 %v84, %v463
  %v465 = vpop.f32.mrf.mxu0
  %v466 = vadd.f32 %v84, %v465
  %467 = vmatmul.bf16.gmra.mxu0 %v322
  %v468 = vpop.f32.mrf.mxu0
  %v469 = vadd.f32 %v84, %v468
  %v470 = vpop.f32.mrf.mxu0
  %v471 = vadd.f32 %v84, %v470
  %472 = vmatmul.bf16.gmra.mxu0 %v325
  %v473 = vpop.f32.mrf.mxu0
  %v474 = vadd.f32 %v84, %v473
  %v475 = vpop.f32.mrf.mxu0
  %v476 = vadd.f32 %v84, %v475
  %477 = vmatmul.bf16.gmra.mxu0 %v328
  %v478 = vpop.f32.mrf.mxu0
  %v479 = vadd.f32 %v84, %v478
  %v480 = vpop.f32.mrf.mxu0
  %v481 = vadd.f32 %v84, %v480
  %482 = vmatmul.bf16.gmra.mxu0 %v331
  %v483 = vpop.f32.mrf.mxu0
  %v484 = vadd.f32 %v84, %v483
  %v485 = vpop.f32.mrf.mxu0
  %v486 = vadd.f32 %v84, %v485
  %487 = vmatmul.bf16.gmra.mxu0 %v334
  %v488 = vpop.f32.mrf.mxu0
  %v489 = vadd.f32 %v84, %v488
  %v490 = vpop.f32.mrf.mxu0
  %v491 = vadd.f32 %v84, %v490
  %492 = vmatmul.bf16.gmra.mxu0 %v337
  %v493 = vpop.f32.mrf.mxu0
  %v494 = vadd.f32 %v84, %v493
  %v495 = vpop.f32.mrf.mxu0
  %v496 = vadd.f32 %v84, %v495
  %497 = vmatmul.bf16.gmra.mxu0 %v340
  %v498 = vpop.f32.mrf.mxu0
  %v499 = vadd.f32 %v84, %v498
  %v500 = vpop.f32.mrf.mxu0
  %v501 = vadd.f32 %v84, %v500
  %502 = vmatmul.bf16.gmra.mxu0 %v343
  %v503 = vpop.f32.mrf.mxu0
  %v504 = vadd.f32 %v84, %v503
  %v505 = vpop.f32.mrf.mxu0
  %v506 = vadd.f32 %v84, %v505
  %507 = vmatmul.bf16.gmra.mxu0 %v346
  %v508 = vpop.f32.mrf.mxu0
  %v509 = vadd.f32 %v84, %v508
  %v510 = vpop.f32.mrf.mxu0
  %v511 = vadd.f32 %v84, %v510
  %512 = vmatmul.bf16.gmra.mxu0 %v349
  %v513 = vpop.f32.mrf.mxu0
  %v514 = vadd.f32 %v84, %v513
  %v515 = vpop.f32.mrf.mxu0
  %v516 = vadd.f32 %v84, %v515
  %517 = vmatmul.bf16.gmra.mxu0 %v352
  %v518 = vpop.f32.mrf.mxu0
  %v519 = vadd.f32 %v84, %v518
  %v520 = vpop.f32.mrf.mxu0
  %v521 = vadd.f32 %v84, %v520
  %522 = vdwg.mxu0
  %v523 = vmax.f32 %v364, 0.0
  %v524 = vmax.f32 %v366, 0.0
  %v525 = vmax.f32 %v369, 0.0
  %v526 = vmax.f32 %v371, 0.0
  %v527 = vmax.f32 %v374, 0.0
  %v528 = vmax.f32 %v376, 0.0
  %v529 = vmax.f32 %v379, 0.0
  %v530 = vmax.f32 %v381, 0.0
  %v531 = vmax.f32 %v384, 0.0
  %v532 = vmax.f32 %v386, 0.0
  %v533 = vmax.f32 %v389, 0.0
  %v534 = vmax.f32 %v391, 0.0
  %v535 = vmax.f32 %v394, 0.0
  %v536 = vmax.f32 %v396, 0.0
  %v537 = vmax.f32 %v399, 0.0
  %v538 = vmax.f32 %v401, 0.0
  %v539 = vmax.f32 %v404, 0.0
  %v540 = vmax.f32 %v406, 0.0
  %v541 = vmax.f32 %v409, 0.0
  %v542 = vmax.f32 %v411, 0.0
  %v543 = vmax.f32 %v414, 0.0
  %v544 = vmax.f32 %v416, 0.0
  %v545 = vmax.f32 %v419, 0.0
  %v546 = vmax.f32 %v421, 0.0
  %v547 = vmax.f32 %v424, 0.0
  %v548 = vmax.f32 %v426, 0.0
  %v549 = vmax.f32 %v429, 0.0
  %v550 = vmax.f32 %v431, 0.0
  %v551 = vmax.f32 %v434, 0.0
  %v552 = vmax.f32 %v436, 0.0
  %v553 = vmax.f32 %v439, 0.0
  %v554 = vmax.f32 %v441, 0.0
  %v555 = vmax.f32 %v444, 0.0
  %v556 = vmax.f32 %v446, 0.0
  %v557 = vmax.f32 %v449, 0.0
  %v558 = vmax.f32 %v451, 0.0
  %v559 = vmax.f32 %v454, 0.0
  %v560 = vmax.f32 %v456, 0.0
  %v561 = vmax.f32 %v459, 0.0
  %v562 = vmax.f32 %v461, 0.0
  %v563 = vmax.f32 %v464, 0.0
  %v564 = vmax.f32 %v466, 0.0
  %v565 = vmax.f32 %v469, 0.0
  %v566 = vmax.f32 %v471, 0.0
  %v567 = vmax.f32 %v474, 0.0
  %v568 = vmax.f32 %v476, 0.0
  %v569 = vmax.f32 %v479, 0.0
  %v570 = vmax.f32 %v481, 0.0
  %v571 = vmax.f32 %v484, 0.0
  %v572 = vmax.f32 %v486, 0.0
  %v573 = vmax.f32 %v489, 0.0
  %v574 = vmax.f32 %v491, 0.0
  %v575 = vmax.f32 %v494, 0.0
  %v576 = vmax.f32 %v496, 0.0
  %v577 = vmax.f32 %v499, 0.0
  %v578 = vmax.f32 %v501, 0.0
  %v579 = vmax.f32 %v504, 0.0
  %v580 = vmax.f32 %v506, 0.0
  %v581 = vmax.f32 %v509, 0.0
  %v582 = vmax.f32 %v511, 0.0
  %v583 = vmax.f32 %v514, 0.0
  %v584 = vmax.f32 %v516, 0.0
  %v585 = vmax.f32 %v519, 0.0
  %v586 = vmax.f32 %v521, 0.0
  %587 = vst.msk [vmem:[#allocation2] sm:$0xff] %vm257, 0.0
  %588 = vst.msk [vmem:[#allocation2 + $0x8] sm:$0xff] %vm257, 0.0
  %vm589 = vcmask 254976
  %590 = vst.msk [vmem:[#allocation2 + $0x10] sm:$0x3] %vm589, 0.0
  %591 = vst.msk [vmem:[#allocation2 + $0x18] sm:$0xff] %vm257, 0.0
  %592 = vst.msk [vmem:[#allocation2 + $0x20] sm:$0xff] %vm257, 0.0
  %593 = vst.msk [vmem:[#allocation2 + $0x28] sm:$0x3] %vm589, 0.0
  %594 = vst.msk [vmem:[#allocation2 + $0x30] sm:$0xff] %vm257, 0.0
  %595 = vst.msk [vmem:[#allocation2 + $0x38] sm:$0xff] %vm257, 0.0
  %596 = vst.msk [vmem:[#allocation2 + $0x40] sm:$0x3] %vm589, 0.0
  %597 = vst.msk [vmem:[#allocation2 + $0x48] sm:$0xff] %vm257, 0.0
  %598 = vst.msk [vmem:[#allocation2 + $0x50] sm:$0xff] %vm257, 0.0
  %599 = vst.msk [vmem:[#allocation2 + $0x58] sm:$0x3] %vm589, 0.0
  %600 = vst.msk [vmem:[#allocation2 + $0x60] sm:$0xff] %vm257, 0.0
  %601 = vst.msk [vmem:[#allocation2 + $0x68] sm:$0xff] %vm257, 0.0
  %602 = vst.msk [vmem:[#allocation2 + $0x70] sm:$0x3] %vm589, 0.0
  %603 = vst.msk [vmem:[#allocation2 + $0x78] sm:$0xff] %vm257, 0.0
  %604 = vst.msk [vmem:[#allocation2 + $0x80] sm:$0xff] %vm257, 0.0
  %605 = vst.msk [vmem:[#allocation2 + $0x88] sm:$0x3] %vm589, 0.0
  %606 = vst.msk [vmem:[#allocation2 + $0x90] sm:$0xff] %vm257, 0.0
  %607 = vst.msk [vmem:[#allocation2 + $0x98] sm:$0xff] %vm257, 0.0
  %608 = vst.msk [vmem:[#allocation2 + $0xa0] sm:$0x3] %vm589, 0.0
  %609 = vst.msk [vmem:[#allocation2 + $0xa8] sm:$0xff] %vm257, 0.0
  %610 = vst.msk [vmem:[#allocation2 + $0xb0] sm:$0xff] %vm257, 0.0
  %611 = vst.msk [vmem:[#allocation2 + $0xb8] sm:$0x3] %vm589, 0.0
  %612 = vst.msk [vmem:[#allocation2 + $0xc0] sm:$0xff] %vm257, 0.0
  %613 = vst.msk [vmem:[#allocation2 + $0xc8] sm:$0xff] %vm257, 0.0
  %614 = vst.msk [vmem:[#allocation2 + $0xd0] sm:$0x3] %vm589, 0.0
  %615 = vst.msk [vmem:[#allocation2 + $0xd8] sm:$0xff] %vm257, 0.0
  %616 = vst.msk [vmem:[#allocation2 + $0xe0] sm:$0xff] %vm257, 0.0
  %617 = vst.msk [vmem:[#allocation2 + $0xe8] sm:$0x3] %vm589, 0.0
  %618 = vst.msk [vmem:[#allocation2 + $0xf0] sm:$0xff] %vm257, 0.0
  %619 = vst.msk [vmem:[#allocation2 + $0xf8] sm:$0xff] %vm257, 0.0
  %620 = vst.msk [vmem:[#allocation2 + $0x100] sm:$0x3] %vm589, 0.0
  %621 = vst.msk [vmem:[#allocation2 + $0x108] sm:$0xff] %vm257, 0.0
  %622 = vst.msk [vmem:[#allocation2 + $0x110] sm:$0xff] %vm257, 0.0
  %623 = vst.msk [vmem:[#allocation2 + $0x118] sm:$0x3] %vm589, 0.0
  %624 = vst.msk [vmem:[#allocation2 + $0x120] sm:$0xff] %vm257, 0.0
  %625 = vst.msk [vmem:[#allocation2 + $0x128] sm:$0xff] %vm257, 0.0
  %626 = vst.msk [vmem:[#allocation2 + $0x130] sm:$0x3] %vm589, 0.0
  %627 = vst.msk [vmem:[#allocation2 + $0x138] sm:$0xff] %vm257, 0.0
  %628 = vst.msk [vmem:[#allocation2 + $0x140] sm:$0xff] %vm257, 0.0
  %629 = vst.msk [vmem:[#allocation2 + $0x148] sm:$0x3] %vm589, 0.0
  %630 = vst.msk [vmem:[#allocation2 + $0x150] sm:$0xff] %vm257, 0.0
  %631 = vst.msk [vmem:[#allocation2 + $0x158] sm:$0xff] %vm257, 0.0
  %632 = vst.msk [vmem:[#allocation2 + $0x160] sm:$0x3] %vm589, 0.0
  %633 = vst.msk [vmem:[#allocation2 + $0x168] sm:$0xff] %vm257, 0.0
  %634 = vst.msk [vmem:[#allocation2 + $0x170] sm:$0xff] %vm257, 0.0
  %635 = vst.msk [vmem:[#allocation2 + $0x178] sm:$0x3] %vm589, 0.0
  %636 = vst.msk [vmem:[#allocation2 + $0x180] sm:$0xff] %vm257, 0.0
  %637 = vst.msk [vmem:[#allocation2 + $0x188] sm:$0xff] %vm257, 0.0
  %638 = vst.msk [vmem:[#allocation2 + $0x190] sm:$0x3] %vm589, 0.0
  %639 = vst.msk [vmem:[#allocation2 + $0x198] sm:$0xff] %vm257, 0.0
  %640 = vst.msk [vmem:[#allocation2 + $0x1a0] sm:$0xff] %vm257, 0.0
  %641 = vst.msk [vmem:[#allocation2 + $0x1a8] sm:$0x3] %vm589, 0.0
  %642 = vst.msk [vmem:[#allocation2 + $0x1b0] sm:$0xff] %vm257, 0.0
  %643 = vst.msk [vmem:[#allocation2 + $0x1b8] sm:$0xff] %vm257, 0.0
  %644 = vst.msk [vmem:[#allocation2 + $0x1c0] sm:$0x3] %vm589, 0.0
  %645 = vst.msk [vmem:[#allocation2 + $0x1c8] sm:$0xff] %vm257, 0.0
  %646 = vst.msk [vmem:[#allocation2 + $0x1d0] sm:$0xff] %vm257, 0.0
  %647 = vst.msk [vmem:[#allocation2 + $0x1d8] sm:$0x3] %vm589, 0.0
  %648 = vst.msk [vmem:[#allocation2 + $0x1e0] sm:$0xff] %vm257, 0.0
  %649 = vst.msk [vmem:[#allocation2 + $0x1e8] sm:$0xff] %vm257, 0.0
  %650 = vst.msk [vmem:[#allocation2 + $0x1f0] sm:$0x3] %vm589, 0.0
  %651 = vst.msk [vmem:[#allocation2 + $0x1f8] sm:$0xff] %vm257, 0.0
  %652 = vst.msk [vmem:[#allocation2 + $0x200] sm:$0xff] %vm257, 0.0
  %653 = vst.msk [vmem:[#allocation2 + $0x208] sm:$0x3] %vm589, 0.0
  %654 = vst.msk [vmem:[#allocation2 + $0x210] sm:$0xff] %vm257, 0.0
  %655 = vst.msk [vmem:[#allocation2 + $0x218] sm:$0xff] %vm257, 0.0
  %656 = vst.msk [vmem:[#allocation2 + $0x220] sm:$0x3] %vm589, 0.0
  %657 = vst.msk [vmem:[#allocation2 + $0x228] sm:$0xff] %vm257, 0.0
  %658 = vst.msk [vmem:[#allocation2 + $0x230] sm:$0xff] %vm257, 0.0
  %659 = vst.msk [vmem:[#allocation2 + $0x238] sm:$0x3] %vm589, 0.0
  %660 = vst.msk [vmem:[#allocation2 + $0x240] sm:$0xff] %vm257, 0.0
  %661 = vst.msk [vmem:[#allocation2 + $0x248] sm:$0xff] %vm257, 0.0
  %662 = vst.msk [vmem:[#allocation2 + $0x250] sm:$0x3] %vm589, 0.0
  %663 = vst.msk [vmem:[#allocation2 + $0x258] sm:$0xff] %vm257, 0.0
  %664 = vst.msk [vmem:[#allocation2 + $0x260] sm:$0xff] %vm257, 0.0
  %665 = vst.msk [vmem:[#allocation2 + $0x268] sm:$0x3] %vm589, 0.0
  %666 = vst.msk [vmem:[#allocation2 + $0x270] sm:$0xff] %vm257, 0.0
  %667 = vst.msk [vmem:[#allocation2 + $0x278] sm:$0xff] %vm257, 0.0
  %668 = vst.msk [vmem:[#allocation2 + $0x280] sm:$0x3] %vm589, 0.0
  %669 = vst.msk [vmem:[#allocation2 + $0x288] sm:$0xff] %vm257, 0.0
  %670 = vst.msk [vmem:[#allocation2 + $0x290] sm:$0xff] %vm257, 0.0
  %671 = vst.msk [vmem:[#allocation2 + $0x298] sm:$0x3] %vm589, 0.0
  %672 = vst.msk [vmem:[#allocation2 + $0x2a0] sm:$0xff] %vm257, 0.0
  %673 = vst.msk [vmem:[#allocation2 + $0x2a8] sm:$0xff] %vm257, 0.0
  %674 = vst.msk [vmem:[#allocation2 + $0x2b0] sm:$0x3] %vm589, 0.0
  %675 = vst.msk [vmem:[#allocation2 + $0x2b8] sm:$0xff] %vm257, 0.0
  %676 = vst.msk [vmem:[#allocation2 + $0x2c0] sm:$0xff] %vm257, 0.0
  %677 = vst.msk [vmem:[#allocation2 + $0x2c8] sm:$0x3] %vm589, 0.0
  %678 = vst.msk [vmem:[#allocation2 + $0x2d0] sm:$0xff] %vm257, 0.0
  %679 = vst.msk [vmem:[#allocation2 + $0x2d8] sm:$0xff] %vm257, 0.0
  %680 = vst.msk [vmem:[#allocation2 + $0x2e0] sm:$0x3] %vm589, 0.0
  %681 = vst.msk [vmem:[#allocation2 + $0x2e8] sm:$0xff] %vm257, 0.0
  %682 = vst.msk [vmem:[#allocation2 + $0x2f0] sm:$0xff] %vm257, 0.0
  %683 = vst.msk [vmem:[#allocation2 + $0x2f8] sm:$0x3] %vm589, 0.0
  %684 = vst.msk [vmem:[#allocation2 + $0x300] sm:$0xff] %vm257, 0.0
  %685 = vst.msk [vmem:[#allocation2 + $0x308] sm:$0xff] %vm257, 0.0
  %686 = vst.msk [vmem:[#allocation2 + $0x310] sm:$0x3] %vm589, 0.0
  %687 = vst.msk [vmem:[#allocation2 + $0x318] sm:$0xff] %vm257, 0.0
  %688 = vst.msk [vmem:[#allocation2 + $0x320] sm:$0xff] %vm257, 0.0
  %689 = vst.msk [vmem:[#allocation2 + $0x328] sm:$0x3] %vm589, 0.0
  %690 = vst.msk [vmem:[#allocation2 + $0x330] sm:$0xff] %vm257, 0.0
  %691 = vst.msk [vmem:[#allocation2 + $0x338] sm:$0xff] %vm257, 0.0
  %692 = vst.msk [vmem:[#allocation2 + $0x340] sm:$0x3] %vm589, 0.0
  %693 = vst.msk [vmem:[#allocation2 + $0x348] sm:$0xff] %vm257, 0.0
  %694 = vst.msk [vmem:[#allocation2 + $0x350] sm:$0xff] %vm257, 0.0
  %695 = vst.msk [vmem:[#allocation2 + $0x358] sm:$0x3] %vm589, 0.0
  %s696 = scalar_lea.vmem [#allocation2], 24
  %697 = vst.msk [vmem:[%s696 + $0x1] sm:$0xff] %vm257, %v523
  %698 = vst.msk [vmem:[%s696 + $0x9] sm:$0xff] %vm257, %v524
  %699 = vst.msk [vmem:[%s696 + $0x19] sm:$0xff] %vm257, %v525
  %700 = vst.msk [vmem:[%s696 + $0x21] sm:$0xff] %vm257, %v526
  %701 = vst.msk [vmem:[%s696 + $0x31] sm:$0xff] %vm257, %v527
  %702 = vst.msk [vmem:[%s696 + $0x39] sm:$0xff] %vm257, %v528
  %703 = vst.msk [vmem:[%s696 + $0x49] sm:$0xff] %vm257, %v529
  %704 = vst.msk [vmem:[%s696 + $0x51] sm:$0xff] %vm257, %v530
  %705 = vst.msk [vmem:[%s696 + $0x61] sm:$0xff] %vm257, %v531
  %706 = vst.msk [vmem:[%s696 + $0x69] sm:$0xff] %vm257, %v532
  %707 = vst.msk [vmem:[%s696 + $0x79] sm:$0xff] %vm257, %v533
  %708 = vst.msk [vmem:[%s696 + $0x81] sm:$0xff] %vm257, %v534
  %709 = vst.msk [vmem:[%s696 + $0x91] sm:$0xff] %vm257, %v535
  %710 = vst.msk [vmem:[%s696 + $0x99] sm:$0xff] %vm257, %v536
  %711 = vst.msk [vmem:[%s696 + $0xa9] sm:$0xff] %vm257, %v537
  %712 = vst.msk [vmem:[%s696 + $0xb1] sm:$0xff] %vm257, %v538
  %713 = vst.msk [vmem:[%s696 + $0xc1] sm:$0xff] %vm257, %v539
  %714 = vst.msk [vmem:[%s696 + $0xc9] sm:$0xff] %vm257, %v540
  %715 = vst.msk [vmem:[%s696 + $0xd9] sm:$0xff] %vm257, %v541
  %716 = vst.msk [vmem:[%s696 + $0xe1] sm:$0xff] %vm257, %v542
  %717 = vst.msk [vmem:[%s696 + $0xf1] sm:$0xff] %vm257, %v543
  %718 = vst.msk [vmem:[%s696 + $0xf9] sm:$0xff] %vm257, %v544
  %719 = vst.msk [vmem:[%s696 + $0x109] sm:$0xff] %vm257, %v545
  %720 = vst.msk [vmem:[%s696 + $0x111] sm:$0xff] %vm257, %v546
  %721 = vst.msk [vmem:[%s696 + $0x121] sm:$0xff] %vm257, %v547
  %722 = vst.msk [vmem:[%s696 + $0x129] sm:$0xff] %vm257, %v548
  %723 = vst.msk [vmem:[%s696 + $0x139] sm:$0xff] %vm257, %v549
  %724 = vst.msk [vmem:[%s696 + $0x141] sm:$0xff] %vm257, %v550
  %725 = vst.msk [vmem:[%s696 + $0x151] sm:$0xff] %vm257, %v551
  %726 = vst.msk [vmem:[%s696 + $0x159] sm:$0xff] %vm257, %v552
  %727 = vst.msk [vmem:[%s696 + $0x169] sm:$0xff] %vm257, %v553
  %728 = vst.msk [vmem:[%s696 + $0x171] sm:$0xff] %vm257, %v554
  %729 = vst.msk [vmem:[%s696 + $0x1b1] sm:$0xff] %vm257, %v555
  %730 = vst.msk [vmem:[%s696 + $0x1b9] sm:$0xff] %vm257, %v556
  %731 = vst.msk [vmem:[%s696 + $0x1c9] sm:$0xff] %vm257, %v557
  %732 = vst.msk [vmem:[%s696 + $0x1d1] sm:$0xff] %vm257, %v558
  %733 = vst.msk [vmem:[%s696 + $0x1e1] sm:$0xff] %vm257, %v559
  %734 = vst.msk [vmem:[%s696 + $0x1e9] sm:$0xff] %vm257, %v560
  %735 = vst.msk [vmem:[%s696 + $0x1f9] sm:$0xff] %vm257, %v561
  %736 = vst.msk [vmem:[%s696 + $0x201] sm:$0xff] %vm257, %v562
  %737 = vst.msk [vmem:[%s696 + $0x211] sm:$0xff] %vm257, %v563
  %738 = vst.msk [vmem:[%s696 + $0x219] sm:$0xff] %vm257, %v564
  %739 = vst.msk [vmem:[%s696 + $0x229] sm:$0xff] %vm257, %v565
  %740 = vst.msk [vmem:[%s696 + $0x231] sm:$0xff] %vm257, %v566
  %741 = vst.msk [vmem:[%s696 + $0x241] sm:$0xff] %vm257, %v567
  %742 = vst.msk [vmem:[%s696 + $0x249] sm:$0xff] %vm257, %v568
  %743 = vst.msk [vmem:[%s696 + $0x259] sm:$0xff] %vm257, %v569
  %744 = vst.msk [vmem:[%s696 + $0x261] sm:$0xff] %vm257, %v570
  %745 = vst.msk [vmem:[%s696 + $0x271] sm:$0xff] %vm257, %v571
  %746 = vst.msk [vmem:[%s696 + $0x279] sm:$0xff] %vm257, %v572
  %747 = vst.msk [vmem:[%s696 + $0x289] sm:$0xff] %vm257, %v573
  %748 = vst.msk [vmem:[%s696 + $0x291] sm:$0xff] %vm257, %v574
  %749 = vst.msk [vmem:[%s696 + $0x2a1] sm:$0xff] %vm257, %v575
  %750 = vst.msk [vmem:[%s696 + $0x2a9] sm:$0xff] %vm257, %v576
  %751 = vst.msk [vmem:[%s696 + $0x2b9] sm:$0xff] %vm257, %v577
  %752 = vst.msk [vmem:[%s696 + $0x2c1] sm:$0xff] %vm257, %v578
  %753 = vst.msk [vmem:[%s696 + $0x2d1] sm:$0xff] %vm257, %v579
  %754 = vst.msk [vmem:[%s696 + $0x2d9] sm:$0xff] %vm257, %v580
  %755 = vst.msk [vmem:[%s696 + $0x2e9] sm:$0xff] %vm257, %v581
  %756 = vst.msk [vmem:[%s696 + $0x2f1] sm:$0xff] %vm257, %v582
  %757 = vst.msk [vmem:[%s696 + $0x301] sm:$0xff] %vm257, %v583
  %758 = vst.msk [vmem:[%s696 + $0x309] sm:$0xff] %vm257, %v584
  %759 = vst.msk [vmem:[%s696 + $0x319] sm:$0xff] %vm257, %v585
  %760 = vst.msk [vmem:[%s696 + $0x321] sm:$0xff] %vm257, %v586
  %v761 = vld [vmem:[#allocation2] sm:$0xff]
  %v762 = vld [vmem:[#allocation2 + $0x8] sm:$0xff]
  %v763 = vld [vmem:[#allocation2 + $0x18] sm:$0xff]
  %v764 = vld [vmem:[#allocation2 + $0x20] sm:$0xff]
  %v765 = vld [vmem:[#allocation2 + $0x30] sm:$0xff]
  %v766 = vld [vmem:[#allocation2 + $0x38] sm:$0xff]
  %v767 = vld [vmem:[#allocation2 + $0x48] sm:$0xff]
  %v768 = vld [vmem:[#allocation2 + $0x50] sm:$0xff]
  %v769 = vld [vmem:[#allocation2 + $0x60] sm:$0xff]
  %v770 = vld [vmem:[#allocation2 + $0x68] sm:$0xff]
  %v771 = vld [vmem:[#allocation2 + $0x78] sm:$0xff]
  %v772 = vld [vmem:[#allocation2 + $0x80] sm:$0xff]
  %v773 = vld [vmem:[#allocation2 + $0x90] sm:$0xff]
  %v774 = vld [vmem:[#allocation2 + $0x98] sm:$0xff]
  %v775 = vld [vmem:[#allocation2 + $0xa8] sm:$0xff]
  %v776 = vld [vmem:[#allocation2 + $0xb0] sm:$0xff]
  %v777 = vld [vmem:[#allocation2 + $0xc0] sm:$0xff]
  %v778 = vld [vmem:[#allocation2 + $0xc8] sm:$0xff]
  %v779 = vld [vmem:[#allocation2 + $0xd8] sm:$0xff]
  %v780 = vld [vmem:[#allocation2 + $0xe0] sm:$0xff]
  %v781 = vld [vmem:[#allocation2 + $0xf0] sm:$0xff]
  %v782 = vld [vmem:[#allocation2 + $0xf8] sm:$0xff]
  %v783 = vld [vmem:[#allocation2 + $0x108] sm:$0xff]
  %v784 = vld [vmem:[#allocation2 + $0x110] sm:$0xff]
  %v785 = vld [vmem:[#allocation2 + $0x120] sm:$0xff]
  %v786 = vld [vmem:[#allocation2 + $0x128] sm:$0xff]
  %v787 = vld [vmem:[#allocation2 + $0x138] sm:$0xff]
  %v788 = vld [vmem:[#allocation2 + $0x140] sm:$0xff]
  %v789 = vld [vmem:[#allocation2 + $0x150] sm:$0xff]
  %v790 = vld [vmem:[#allocation2 + $0x158] sm:$0xff]
  %v791 = vld [vmem:[#allocation2 + $0x168] sm:$0xff]
  %v792 = vld [vmem:[#allocation2 + $0x170] sm:$0xff]
  %v793 = vld [vmem:[#allocation2 + $0x1b0] sm:$0xff]
  %v794 = vld [vmem:[#allocation2 + $0x1b8] sm:$0xff]
  %v795 = vld [vmem:[#allocation2 + $0x1c8] sm:$0xff]
  %v796 = vld [vmem:[#allocation2 + $0x1d0] sm:$0xff]
  %v797 = vld [vmem:[#allocation2 + $0x1e0] sm:$0xff]
  %v798 = vld [vmem:[#allocation2 + $0x1e8] sm:$0xff]
  %v799 = vld [vmem:[#allocation2 + $0x1f8] sm:$0xff]
  %v800 = vld [vmem:[#allocation2 + $0x200] sm:$0xff]
  %v801 = vld [vmem:[#allocation2 + $0x210] sm:$0xff]
  %v802 = vld [vmem:[#allocation2 + $0x218] sm:$0xff]
  %v803 = vld [vmem:[#allocation2 + $0x228] sm:$0xff]
  %v804 = vld [vmem:[#allocation2 + $0x230] sm:$0xff]
  %v805 = vld [vmem:[#allocation2 + $0x240] sm:$0xff]
  %v806 = vld [vmem:[#allocation2 + $0x248] sm:$0xff]
  %v807 = vld [vmem:[#allocation2 + $0x258] sm:$0xff]
  %v808 = vld [vmem:[#allocation2 + $0x260] sm:$0xff]
  %v809 = vld [vmem:[#allocation2 + $0x270] sm:$0xff]
  %v810 = vld [vmem:[#allocation2 + $0x278] sm:$0xff]
  %v811 = vld [vmem:[#allocation2 + $0x288] sm:$0xff]
  %v812 = vld [vmem:[#allocation2 + $0x290] sm:$0xff]
  %v813 = vld [vmem:[#allocation2 + $0x2a0] sm:$0xff]
  %v814 = vld [vmem:[#allocation2 + $0x2a8] sm:$0xff]
  %v815 = vld [vmem:[#allocation2 + $0x2b8] sm:$0xff]
  %v816 = vld [vmem:[#allocation2 + $0x2c0] sm:$0xff]
  %v817 = vld [vmem:[#allocation2 + $0x2d0] sm:$0xff]
  %v818 = vld [vmem:[#allocation2 + $0x2d8] sm:$0xff]
  %v819 = vld [vmem:[#allocation2 + $0x2e8] sm:$0xff]
  %v820 = vld [vmem:[#allocation2 + $0x2f0] sm:$0xff]
  %v821 = vld [vmem:[#allocation2 + $0x300] sm:$0xff]
  %v822 = vld [vmem:[#allocation2 + $0x308] sm:$0xff]
  %v823 = vld [vmem:[#allocation2 + $0x318] sm:$0xff]
  %v824 = vld [vmem:[#allocation2 + $0x320] sm:$0xff]
  %825 = vst.msk [vmem:[#allocation3] sm:$0xff] %vm257, %v761
  %826 = vst.msk [vmem:[#allocation3 + $0x18] sm:$0xff] %vm257, %v762
  %827 = vst.msk [vmem:[#allocation3 + $0x30] sm:$0xff] %vm257, %v763
  %828 = vst.msk [vmem:[#allocation3 + $0x48] sm:$0xff] %vm257, %v764
  %829 = vst.msk [vmem:[#allocation3 + $0x60] sm:$0xff] %vm257, %v765
  %830 = vst.msk [vmem:[#allocation3 + $0x78] sm:$0xff] %vm257, %v766
  %831 = vst.msk [vmem:[#allocation3 + $0x90] sm:$0xff] %vm257, %v767
  %832 = vst.msk [vmem:[#allocation3 + $0xa8] sm:$0xff] %vm257, %v768
  %833 = vst.msk [vmem:[#allocation3 + $0xc0] sm:$0xff] %vm257, %v769
  %834 = vst.msk [vmem:[#allocation3 + $0xd8] sm:$0xff] %vm257, %v770
  %835 = vst.msk [vmem:[#allocation3 + $0xf0] sm:$0xff] %vm257, %v771
  %836 = vst.msk [vmem:[#allocation3 + $0x108] sm:$0xff] %vm257, %v772
  %837 = vst.msk [vmem:[#allocation3 + $0x120] sm:$0xff] %vm257, %v773
  %838 = vst.msk [vmem:[#allocation3 + $0x138] sm:$0xff] %vm257, %v774
  %839 = vst.msk [vmem:[#allocation3 + $0x150] sm:$0xff] %vm257, %v775
  %840 = vst.msk [vmem:[#allocation3 + $0x168] sm:$0xff] %vm257, %v776
  %841 = vst.msk [vmem:[#allocation3 + $0x180] sm:$0xff] %vm257, %v777
  %842 = vst.msk [vmem:[#allocation3 + $0x198] sm:$0xff] %vm257, %v778
  %843 = vst.msk [vmem:[#allocation3 + $0x1b0] sm:$0xff] %vm257, %v779
  %844 = vst.msk [vmem:[#allocation3 + $0x1c8] sm:$0xff] %vm257, %v780
  %845 = vst.msk [vmem:[#allocation3 + $0x1e0] sm:$0xff] %vm257, %v781
  %846 = vst.msk [vmem:[#allocation3 + $0x1f8] sm:$0xff] %vm257, %v782
  %847 = vst.msk [vmem:[#allocation3 + $0x210] sm:$0xff] %vm257, %v783
  %848 = vst.msk [vmem:[#allocation3 + $0x228] sm:$0xff] %vm257, %v784
  %849 = vst.msk [vmem:[#allocation3 + $0x240] sm:$0xff] %vm257, %v785
  %850 = vst.msk [vmem:[#allocation3 + $0x258] sm:$0xff] %vm257, %v786
  %851 = vst.msk [vmem:[#allocation3 + $0x270] sm:$0xff] %vm257, %v787
  %852 = vst.msk [vmem:[#allocation3 + $0x288] sm:$0xff] %vm257, %v788
  %853 = vst.msk [vmem:[#allocation3 + $0x2a0] sm:$0xff] %vm257, %v789
  %854 = vst.msk [vmem:[#allocation3 + $0x2b8] sm:$0xff] %vm257, %v790
  %855 = vst.msk [vmem:[#allocation3 + $0x2d0] sm:$0xff] %vm257, %v791
  %856 = vst.msk [vmem:[#allocation3 + $0x2e8] sm:$0xff] %vm257, %v792
  %857 = vst.msk [vmem:[#allocation3 + $0x300] sm:$0xff] %vm257, %v793
  %858 = vst.msk [vmem:[#allocation3 + $0x318] sm:$0xff] %vm257, %v794
  %859 = vst.msk [vmem:[#allocation3 + $0x330] sm:$0xff] %vm257, %v795
  %860 = vst.msk [vmem:[#allocation3 + $0x348] sm:$0xff] %vm257, %v796
  %861 = vst.msk [vmem:[#allocation3 + $0x360] sm:$0xff] %vm257, %v797
  %862 = vst.msk [vmem:[#allocation3 + $0x378] sm:$0xff] %vm257, %v798
  %863 = vst.msk [vmem:[#allocation3 + $0x390] sm:$0xff] %vm257, %v799
  %864 = vst.msk [vmem:[#allocation3 + $0x3a8] sm:$0xff] %vm257, %v800
  %865 = vst.msk [vmem:[#allocation3 + $0x3c0] sm:$0xff] %vm257, %v801
  %866 = vst.msk [vmem:[#allocation3 + $0x3d8] sm:$0xff] %vm257, %v802
  %867 = vst.msk [vmem:[#allocation3 + $0x3f0] sm:$0xff] %vm257, %v803
  %868 = vst.msk [vmem:[#allocation3 + $0x408] sm:$0xff] %vm257, %v804
  %869 = vst.msk [vmem:[#allocation3 + $0x420] sm:$0xff] %vm257, %v805
  %870 = vst.msk [vmem:[#allocation3 + $0x438] sm:$0xff] %vm257, %v806
  %871 = vst.msk [vmem:[#allocation3 + $0x450] sm:$0xff] %vm257, %v807
  %872 = vst.msk [vmem:[#allocation3 + $0x468] sm:$0xff] %vm257, %v808
  %873 = vst.msk [vmem:[#allocation3 + $0x480] sm:$0xff] %vm257, %v809
  %874 = vst.msk [vmem:[#allocation3 + $0x498] sm:$0xff] %vm257, %v810
  %875 = vst.msk [vmem:[#allocation3 + $0x4b0] sm:$0xff] %vm257, %v811
  %876 = vst.msk [vmem:[#allocation3 + $0x4c8] sm:$0xff] %vm257, %v812
  %877 = vst.msk [vmem:[#allocation3 + $0x4e0] sm:$0xff] %vm257, %v813
  %878 = vst.msk [vmem:[#allocation3 + $0x4f8] sm:$0xff] %vm257, %v814
  %879 = vst.msk [vmem:[#allocation3 + $0x510] sm:$0xff] %vm257, %v815
  %880 = vst.msk [vmem:[#allocation3 + $0x528] sm:$0xff] %vm257, %v816
  %881 = vst.msk [vmem:[#allocation3 + $0x540] sm:$0xff] %vm257, %v817
  %882 = vst.msk [vmem:[#allocation3 + $0x558] sm:$0xff] %vm257, %v818
  %883 = vst.msk [vmem:[#allocation3 + $0x570] sm:$0xff] %vm257, %v819
  %884 = vst.msk [vmem:[#allocation3 + $0x588] sm:$0xff] %vm257, %v820
  %885 = vst.msk [vmem:[#allocation3 + $0x5a0] sm:$0xff] %vm257, %v821
  %886 = vst.msk [vmem:[#allocation3 + $0x5b8] sm:$0xff] %vm257, %v822
  %887 = vst.msk [vmem:[#allocation3 + $0x5d0] sm:$0xff] %vm257, %v823
  %888 = vst.msk [vmem:[#allocation3 + $0x5e8] sm:$0xff] %vm257, %v824
  %v889 = vld [vmem:[#allocation2 + $0x1] sm:$0xff]
  %v890 = vld [vmem:[#allocation2 + $0x9] sm:$0xff]
  %v891 = vld [vmem:[#allocation2 + $0x19] sm:$0xff]
  %v892 = vld [vmem:[#allocation2 + $0x21] sm:$0xff]
  %v893 = vld [vmem:[#allocation2 + $0x31] sm:$0xff]
  %v894 = vld [vmem:[#allocation2 + $0x39] sm:$0xff]
  %v895 = vld [vmem:[#allocation2 + $0x49] sm:$0xff]
  %v896 = vld [vmem:[#allocation2 + $0x51] sm:$0xff]
  %v897 = vld [vmem:[#allocation2 + $0x61] sm:$0xff]
  %v898 = vld [vmem:[#allocation2 + $0x69] sm:$0xff]
  %v899 = vld [vmem:[#allocation2 + $0x79] sm:$0xff]
  %v900 = vld [vmem:[#allocation2 + $0x81] sm:$0xff]
  %v901 = vld [vmem:[#allocation2 + $0x91] sm:$0xff]
  %v902 = vld [vmem:[#allocation2 + $0x99] sm:$0xff]
  %v903 = vld [vmem:[#allocation2 + $0xa9] sm:$0xff]
  %v904 = vld [vmem:[#allocation2 + $0xb1] sm:$0xff]
  %v905 = vld [vmem:[#allocation2 + $0xc1] sm:$0xff]
  %v906 = vld [vmem:[#allocation2 + $0xc9] sm:$0xff]
  %v907 = vld [vmem:[#allocation2 + $0xd9] sm:$0xff]
  %v908 = vld [vmem:[#allocation2 + $0xe1] sm:$0xff]
  %v909 = vld [vmem:[#allocation2 + $0xf1] sm:$0xff]
  %v910 = vld [vmem:[#allocation2 + $0xf9] sm:$0xff]
  %v911 = vld [vmem:[#allocation2 + $0x109] sm:$0xff]
  %v912 = vld [vmem:[#allocation2 + $0x111] sm:$0xff]
  %v913 = vld [vmem:[#allocation2 + $0x121] sm:$0xff]
  %v914 = vld [vmem:[#allocation2 + $0x129] sm:$0xff]
  %v915 = vld [vmem:[#allocation2 + $0x139] sm:$0xff]
  %v916 = vld [vmem:[#allocation2 + $0x141] sm:$0xff]
  %v917 = vld [vmem:[#allocation2 + $0x151] sm:$0xff]
  %v918 = vld [vmem:[#allocation2 + $0x159] sm:$0xff]
  %v919 = vld [vmem:[#allocation2 + $0x169] sm:$0xff]
  %v920 = vld [vmem:[#allocation2 + $0x171] sm:$0xff]
  %v921 = vld [vmem:[#allocation2 + $0x1b1] sm:$0xff]
  %v922 = vld [vmem:[#allocation2 + $0x1b9] sm:$0xff]
  %v923 = vld [vmem:[#allocation2 + $0x1c9] sm:$0xff]
  %v924 = vld [vmem:[#allocation2 + $0x1d1] sm:$0xff]
  %v925 = vld [vmem:[#allocation2 + $0x1e1] sm:$0xff]
  %v926 = vld [vmem:[#allocation2 + $0x1e9] sm:$0xff]
  %v927 = vld [vmem:[#allocation2 + $0x1f9] sm:$0xff]
  %v928 = vld [vmem:[#allocation2 + $0x201] sm:$0xff]
  %v929 = vld [vmem:[#allocation2 + $0x211] sm:$0xff]
  %v930 = vld [vmem:[#allocation2 + $0x219] sm:$0xff]
  %v931 = vld [vmem:[#allocation2 + $0x229] sm:$0xff]
  %v932 = vld [vmem:[#allocation2 + $0x231] sm:$0xff]
  %v933 = vld [vmem:[#allocation2 + $0x241] sm:$0xff]
  %v934 = vld [vmem:[#allocation2 + $0x249] sm:$0xff]
  %v935 = vld [vmem:[#allocation2 + $0x259] sm:$0xff]
  %v936 = vld [vmem:[#allocation2 + $0x261] sm:$0xff]
  %v937 = vld [vmem:[#allocation2 + $0x271] sm:$0xff]
  %v938 = vld [vmem:[#allocation2 + $0x279] sm:$0xff]
  %v939 = vld [vmem:[#allocation2 + $0x289] sm:$0xff]
  %v940 = vld [vmem:[#allocation2 + $0x291] sm:$0xff]
  %v941 = vld [vmem:[#allocation2 + $0x2a1] sm:$0xff]
  %v942 = vld [vmem:[#allocation2 + $0x2a9] sm:$0xff]
  %v943 = vld [vmem:[#allocation2 + $0x2b9] sm:$0xff]
  %v944 = vld [vmem:[#allocation2 + $0x2c1] sm:$0xff]
  %v945 = vld [vmem:[#allocation2 + $0x2d1] sm:$0xff]
  %v946 = vld [vmem:[#allocation2 + $0x2d9] sm:$0xff]
  %v947 = vld [vmem:[#allocation2 + $0x2e9] sm:$0xff]
  %v948 = vld [vmem:[#allocation2 + $0x2f1] sm:$0xff]
  %v949 = vld [vmem:[#allocation2 + $0x301] sm:$0xff]
  %v950 = vld [vmem:[#allocation2 + $0x309] sm:$0xff]
  %v951 = vld [vmem:[#allocation2 + $0x319] sm:$0xff]
  %v952 = vld [vmem:[#allocation2 + $0x321] sm:$0xff]
  %1017 = vrot.lane.b32.xlu0 %v889, 32
  %v1018 = vpop.permute.xlu0 %1017
  %1019 = vrot.lane.b32.xlu0 %v890, 32
  %v1020 = vpop.permute.xlu0 %1019
  %1021 = vrot.lane.b32.xlu0 %v891, 32
  %v1022 = vpop.permute.xlu0 %1021
  %1023 = vrot.lane.b32.xlu0 %v892, 32
  %v1024 = vpop.permute.xlu0 %1023
  %1025 = vrot.lane.b32.xlu0 %v893, 32
  %v1026 = vpop.permute.xlu0 %1025
  %1027 = vrot.lane.b32.xlu0 %v894, 32
  %v1028 = vpop.permute.xlu0 %1027
  %1029 = vrot.lane.b32.xlu0 %v895, 32
  %v1030 = vpop.permute.xlu0 %1029
  %1031 = vrot.lane.b32.xlu0 %v896, 32
  %v1032 = vpop.permute.xlu0 %1031
  %1033 = vrot.lane.b32.xlu0 %v897, 32
  %v1034 = vpop.permute.xlu0 %1033
  %1035 = vrot.lane.b32.xlu0 %v898, 32
  %v1036 = vpop.permute.xlu0 %1035
  %1037 = vrot.lane.b32.xlu0 %v899, 32
  %v1038 = vpop.permute.xlu0 %1037
  %1039 = vrot.lane.b32.xlu0 %v900, 32
  %v1040 = vpop.permute.xlu0 %1039
  %1041 = vrot.lane.b32.xlu0 %v901, 32
  %v1042 = vpop.permute.xlu0 %1041
  %1043 = vrot.lane.b32.xlu0 %v902, 32
  %v1044 = vpop.permute.xlu0 %1043
  %1045 = vrot.lane.b32.xlu0 %v903, 32
  %v1046 = vpop.permute.xlu0 %1045
  %1047 = vrot.lane.b32.xlu0 %v904, 32
  %v1048 = vpop.permute.xlu0 %1047
  %1049 = vrot.lane.b32.xlu0 %v905, 32
  %v1050 = vpop.permute.xlu0 %1049
  %1051 = vrot.lane.b32.xlu0 %v906, 32
  %v1052 = vpop.permute.xlu0 %1051
  %1053 = vrot.lane.b32.xlu0 %v907, 32
  %v1054 = vpop.permute.xlu0 %1053
  %1055 = vrot.lane.b32.xlu0 %v908, 32
  %v1056 = vpop.permute.xlu0 %1055
  %1057 = vrot.lane.b32.xlu0 %v909, 32
  %v1058 = vpop.permute.xlu0 %1057
  %1059 = vrot.lane.b32.xlu0 %v910, 32
  %v1060 = vpop.permute.xlu0 %1059
  %1061 = vrot.lane.b32.xlu0 %v911, 32
  %v1062 = vpop.permute.xlu0 %1061
  %1063 = vrot.lane.b32.xlu0 %v912, 32
  %v1064 = vpop.permute.xlu0 %1063
  %1065 = vrot.lane.b32.xlu0 %v913, 32
  %v1066 = vpop.permute.xlu0 %1065
  %1067 = vrot.lane.b32.xlu0 %v914, 32
  %v1068 = vpop.permute.xlu0 %1067
  %1069 = vrot.lane.b32.xlu0 %v915, 32
  %v1070 = vpop.permute.xlu0 %1069
  %1071 = vrot.lane.b32.xlu0 %v916, 32
  %v1072 = vpop.permute.xlu0 %1071
  %1073 = vrot.lane.b32.xlu0 %v917, 32
  %v1074 = vpop.permute.xlu0 %1073
  %1075 = vrot.lane.b32.xlu0 %v918, 32
  %v1076 = vpop.permute.xlu0 %1075
  %1077 = vrot.lane.b32.xlu0 %v919, 32
  %v1078 = vpop.permute.xlu0 %1077
  %1079 = vrot.lane.b32.xlu0 %v920, 32
  %v1080 = vpop.permute.xlu0 %1079
  %1081 = vrot.lane.b32.xlu0 %v921, 32
  %v1082 = vpop.permute.xlu0 %1081
  %1083 = vrot.lane.b32.xlu0 %v922, 32
  %v1084 = vpop.permute.xlu0 %1083
  %1085 = vrot.lane.b32.xlu0 %v923, 32
  %v1086 = vpop.permute.xlu0 %1085
  %1087 = vrot.lane.b32.xlu0 %v924, 32
  %v1088 = vpop.permute.xlu0 %1087
  %1089 = vrot.lane.b32.xlu0 %v925, 32
  %v1090 = vpop.permute.xlu0 %1089
  %1091 = vrot.lane.b32.xlu0 %v926, 32
  %v1092 = vpop.permute.xlu0 %1091
  %1093 = vrot.lane.b32.xlu0 %v927, 32
  %v1094 = vpop.permute.xlu0 %1093
  %1095 = vrot.lane.b32.xlu0 %v928, 32
  %v1096 = vpop.permute.xlu0 %1095
  %1097 = vrot.lane.b32.xlu0 %v929, 32
  %v1098 = vpop.permute.xlu0 %1097
  %1099 = vrot.lane.b32.xlu0 %v930, 32
  %v1100 = vpop.permute.xlu0 %1099
  %1101 = vrot.lane.b32.xlu0 %v931, 32
  %v1102 = vpop.permute.xlu0 %1101
  %1103 = vrot.lane.b32.xlu0 %v932, 32
  %v1104 = vpop.permute.xlu0 %1103
  %1105 = vrot.lane.b32.xlu0 %v933, 32
  %v1106 = vpop.permute.xlu0 %1105
  %1107 = vrot.lane.b32.xlu0 %v934, 32
  %v1108 = vpop.permute.xlu0 %1107
  %1109 = vrot.lane.b32.xlu0 %v935, 32
  %v1110 = vpop.permute.xlu0 %1109
  %1111 = vrot.lane.b32.xlu0 %v936, 32
  %v1112 = vpop.permute.xlu0 %1111
  %1113 = vrot.lane.b32.xlu0 %v937, 32
  %v1114 = vpop.permute.xlu0 %1113
  %1115 = vrot.lane.b32.xlu0 %v938, 32
  %v1116 = vpop.permute.xlu0 %1115
  %1117 = vrot.lane.b32.xlu0 %v939, 32
  %v1118 = vpop.permute.xlu0 %1117
  %1119 = vrot.lane.b32.xlu0 %v940, 32
  %v1120 = vpop.permute.xlu0 %1119
  %1121 = vrot.lane.b32.xlu0 %v941, 32
  %v1122 = vpop.permute.xlu0 %1121
  %1123 = vrot.lane.b32.xlu0 %v942, 32
  %v1124 = vpop.permute.xlu0 %1123
  %1125 = vrot.lane.b32.xlu0 %v943, 32
  %v1126 = vpop.permute.xlu0 %1125
  %1127 = vrot.lane.b32.xlu0 %v944, 32
  %v1128 = vpop.permute.xlu0 %1127
  %1129 = vrot.lane.b32.xlu0 %v945, 32
  %v1130 = vpop.permute.xlu0 %1129
  %1131 = vrot.lane.b32.xlu0 %v946, 32
  %v1132 = vpop.permute.xlu0 %1131
  %1133 = vrot.lane.b32.xlu0 %v947, 32
  %v1134 = vpop.permute.xlu0 %1133
  %1135 = vrot.lane.b32.xlu0 %v948, 32
  %v1136 = vpop.permute.xlu0 %1135
  %1137 = vrot.lane.b32.xlu0 %v949, 32
  %v1138 = vpop.permute.xlu0 %1137
  %1139 = vrot.lane.b32.xlu0 %v950, 32
  %v1140 = vpop.permute.xlu0 %1139
  %1141 = vrot.lane.b32.xlu0 %v951, 32
  %v1142 = vpop.permute.xlu0 %1141
  %1143 = vrot.lane.b32.xlu0 %v952, 32
  %v1144 = vpop.permute.xlu0 %1143
  %vm1209 = vcmask 523520
  %1210 = vst.msk [vmem:[#allocation3] sm:$0xff] %vm1209, %v1018
  %1211 = vst.msk [vmem:[#allocation3 + $0x18] sm:$0xff] %vm1209, %v1020
  %1212 = vst.msk [vmem:[#allocation3 + $0x30] sm:$0xff] %vm1209, %v1022
  %1213 = vst.msk [vmem:[#allocation3 + $0x48] sm:$0xff] %vm1209, %v1024
  %1214 = vst.msk [vmem:[#allocation3 + $0x60] sm:$0xff] %vm1209, %v1026
  %1215 = vst.msk [vmem:[#allocation3 + $0x78] sm:$0xff] %vm1209, %v1028
  %1216 = vst.msk [vmem:[#allocation3 + $0x90] sm:$0xff] %vm1209, %v1030
  %1217 = vst.msk [vmem:[#allocation3 + $0xa8] sm:$0xff] %vm1209, %v1032
  %1218 = vst.msk [vmem:[#allocation3 + $0xc0] sm:$0xff] %vm1209, %v1034
  %1219 = vst.msk [vmem:[#allocation3 + $0xd8] sm:$0xff] %vm1209, %v1036
  %1220 = vst.msk [vmem:[#allocation3 + $0xf0] sm:$0xff] %vm1209, %v1038
  %1221 = vst.msk [vmem:[#allocation3 + $0x108] sm:$0xff] %vm1209, %v1040
  %1222 = vst.msk [vmem:[#allocation3 + $0x120] sm:$0xff] %vm1209, %v1042
  %1223 = vst.msk [vmem:[#allocation3 + $0x138] sm:$0xff] %vm1209, %v1044
  %1224 = vst.msk [vmem:[#allocation3 + $0x150] sm:$0xff] %vm1209, %v1046
  %1225 = vst.msk [vmem:[#allocation3 + $0x168] sm:$0xff] %vm1209, %v1048
  %1226 = vst.msk [vmem:[#allocation3 + $0x180] sm:$0xff] %vm1209, %v1050
  %1227 = vst.msk [vmem:[#allocation3 + $0x198] sm:$0xff] %vm1209, %v1052
  %1228 = vst.msk [vmem:[#allocation3 + $0x1b0] sm:$0xff] %vm1209, %v1054
  %1229 = vst.msk [vmem:[#allocation3 + $0x1c8] sm:$0xff] %vm1209, %v1056
  %1230 = vst.msk [vmem:[#allocation3 + $0x1e0] sm:$0xff] %vm1209, %v1058
  %1231 = vst.msk [vmem:[#allocation3 + $0x1f8] sm:$0xff] %vm1209, %v1060
  %1232 = vst.msk [vmem:[#allocation3 + $0x210] sm:$0xff] %vm1209, %v1062
  %1233 = vst.msk [vmem:[#allocation3 + $0x228] sm:$0xff] %vm1209, %v1064
  %1234 = vst.msk [vmem:[#allocation3 + $0x240] sm:$0xff] %vm1209, %v1066
  %1235 = vst.msk [vmem:[#allocation3 + $0x258] sm:$0xff] %vm1209, %v1068
  %1236 = vst.msk [vmem:[#allocation3 + $0x270] sm:$0xff] %vm1209, %v1070
  %1237 = vst.msk [vmem:[#allocation3 + $0x288] sm:$0xff] %vm1209, %v1072
  %1238 = vst.msk [vmem:[#allocation3 + $0x2a0] sm:$0xff] %vm1209, %v1074
  %1239 = vst.msk [vmem:[#allocation3 + $0x2b8] sm:$0xff] %vm1209, %v1076
  %1240 = vst.msk [vmem:[#allocation3 + $0x2d0] sm:$0xff] %vm1209, %v1078
  %1241 = vst.msk [vmem:[#allocation3 + $0x2e8] sm:$0xff] %vm1209, %v1080
  %1242 = vst.msk [vmem:[#allocation3 + $0x300] sm:$0xff] %vm1209, %v1082
  %1243 = vst.msk [vmem:[#allocation3 + $0x318] sm:$0xff] %vm1209, %v1084
  %1244 = vst.msk [vmem:[#allocation3 + $0x330] sm:$0xff] %vm1209, %v1086
  %1245 = vst.msk [vmem:[#allocation3 + $0x348] sm:$0xff] %vm1209, %v1088
  %1246 = vst.msk [vmem:[#allocation3 + $0x360] sm:$0xff] %vm1209, %v1090
  %1247 = vst.msk [vmem:[#allocation3 + $0x378] sm:$0xff] %vm1209, %v1092
  %1248 = vst.msk [vmem:[#allocation3 + $0x390] sm:$0xff] %vm1209, %v1094
  %1249 = vst.msk [vmem:[#allocation3 + $0x3a8] sm:$0xff] %vm1209, %v1096
  %1250 = vst.msk [vmem:[#allocation3 + $0x3c0] sm:$0xff] %vm1209, %v1098
  %1251 = vst.msk [vmem:[#allocation3 + $0x3d8] sm:$0xff] %vm1209, %v1100
  %1252 = vst.msk [vmem:[#allocation3 + $0x3f0] sm:$0xff] %vm1209, %v1102
  %1253 = vst.msk [vmem:[#allocation3 + $0x408] sm:$0xff] %vm1209, %v1104
  %1254 = vst.msk [vmem:[#allocation3 + $0x420] sm:$0xff] %vm1209, %v1106
  %1255 = vst.msk [vmem:[#allocation3 + $0x438] sm:$0xff] %vm1209, %v1108
  %1256 = vst.msk [vmem:[#allocation3 + $0x450] sm:$0xff] %vm1209, %v1110
  %1257 = vst.msk [vmem:[#allocation3 + $0x468] sm:$0xff] %vm1209, %v1112
  %1258 = vst.msk [vmem:[#allocation3 + $0x480] sm:$0xff] %vm1209, %v1114
  %1259 = vst.msk [vmem:[#allocation3 + $0x498] sm:$0xff] %vm1209, %v1116
  %1260 = vst.msk [vmem:[#allocation3 + $0x4b0] sm:$0xff] %vm1209, %v1118
  %1261 = vst.msk [vmem:[#allocation3 + $0x4c8] sm:$0xff] %vm1209, %v1120
  %1262 = vst.msk [vmem:[#allocation3 + $0x4e0] sm:$0xff] %vm1209, %v1122
  %1263 = vst.msk [vmem:[#allocation3 + $0x4f8] sm:$0xff] %vm1209, %v1124
  %1264 = vst.msk [vmem:[#allocation3 + $0x510] sm:$0xff] %vm1209, %v1126
  %1265 = vst.msk [vmem:[#allocation3 + $0x528] sm:$0xff] %vm1209, %v1128
  %1266 = vst.msk [vmem:[#allocation3 + $0x540] sm:$0xff] %vm1209, %v1130
  %1267 = vst.msk [vmem:[#allocation3 + $0x558] sm:$0xff] %vm1209, %v1132
  %1268 = vst.msk [vmem:[#allocation3 + $0x570] sm:$0xff] %vm1209, %v1134
  %1269 = vst.msk [vmem:[#allocation3 + $0x588] sm:$0xff] %vm1209, %v1136
  %1270 = vst.msk [vmem:[#allocation3 + $0x5a0] sm:$0xff] %vm1209, %v1138
  %1271 = vst.msk [vmem:[#allocation3 + $0x5b8] sm:$0xff] %vm1209, %v1140
  %1272 = vst.msk [vmem:[#allocation3 + $0x5d0] sm:$0xff] %vm1209, %v1142
  %1273 = vst.msk [vmem:[#allocation3 + $0x5e8] sm:$0xff] %vm1209, %v1144
  %v1274 = vld [vmem:[#allocation2 + $0x2] sm:$0xff]
  %v1275 = vld [vmem:[#allocation2 + $0xa] sm:$0xff]
  %v1276 = vld [vmem:[#allocation2 + $0x1a] sm:$0xff]
  %v1277 = vld [vmem:[#allocation2 + $0x22] sm:$0xff]
  %v1278 = vld [vmem:[#allocation2 + $0x32] sm:$0xff]
  %v1279 = vld [vmem:[#allocation2 + $0x3a] sm:$0xff]
  %v1280 = vld [vmem:[#allocation2 + $0x4a] sm:$0xff]
  %v1281 = vld [vmem:[#allocation2 + $0x52] sm:$0xff]
  %v1282 = vld [vmem:[#allocation2 + $0x62] sm:$0xff]
  %v1283 = vld [vmem:[#allocation2 + $0x6a] sm:$0xff]
  %v1284 = vld [vmem:[#allocation2 + $0x7a] sm:$0xff]
  %v1285 = vld [vmem:[#allocation2 + $0x82] sm:$0xff]
  %v1286 = vld [vmem:[#allocation2 + $0x92] sm:$0xff]
  %v1287 = vld [vmem:[#allocation2 + $0x9a] sm:$0xff]
  %v1288 = vld [vmem:[#allocation2 + $0xaa] sm:$0xff]
  %v1289 = vld [vmem:[#allocation2 + $0xb2] sm:$0xff]
  %v1290 = vld [vmem:[#allocation2 + $0xc2] sm:$0xff]
  %v1291 = vld [vmem:[#allocation2 + $0xca] sm:$0xff]
  %v1292 = vld [vmem:[#allocation2 + $0xda] sm:$0xff]
  %v1293 = vld [vmem:[#allocation2 + $0xe2] sm:$0xff]
  %v1294 = vld [vmem:[#allocation2 + $0xf2] sm:$0xff]
  %v1295 = vld [vmem:[#allocation2 + $0xfa] sm:$0xff]
  %v1296 = vld [vmem:[#allocation2 + $0x10a] sm:$0xff]
  %v1297 = vld [vmem:[#allocation2 + $0x112] sm:$0xff]
  %v1298 = vld [vmem:[#allocation2 + $0x122] sm:$0xff]
  %v1299 = vld [vmem:[#allocation2 + $0x12a] sm:$0xff]
  %v1300 = vld [vmem:[#allocation2 + $0x13a] sm:$0xff]
  %v1301 = vld [vmem:[#allocation2 + $0x142] sm:$0xff]
  %v1302 = vld [vmem:[#allocation2 + $0x152] sm:$0xff]
  %v1303 = vld [vmem:[#allocation2 + $0x15a] sm:$0xff]
  %v1304 = vld [vmem:[#allocation2 + $0x16a] sm:$0xff]
  %v1305 = vld [vmem:[#allocation2 + $0x172] sm:$0xff]
  %v1306 = vld [vmem:[#allocation2 + $0x1b2] sm:$0xff]
  %v1307 = vld [vmem:[#allocation2 + $0x1ba] sm:$0xff]
  %v1308 = vld [vmem:[#allocation2 + $0x1ca] sm:$0xff]
  %v1309 = vld [vmem:[#allocation2 + $0x1d2] sm:$0xff]
  %v1310 = vld [vmem:[#allocation2 + $0x1e2] sm:$0xff]
  %v1311 = vld [vmem:[#allocation2 + $0x1ea] sm:$0xff]
  %v1312 = vld [vmem:[#allocation2 + $0x1fa] sm:$0xff]
  %v1313 = vld [vmem:[#allocation2 + $0x202] sm:$0xff]
  %v1314 = vld [vmem:[#allocation2 + $0x212] sm:$0xff]
  %v1315 = vld [vmem:[#allocation2 + $0x21a] sm:$0xff]
  %v1316 = vld [vmem:[#allocation2 + $0x22a] sm:$0xff]
  %v1317 = vld [vmem:[#allocation2 + $0x232] sm:$0xff]
  %v1318 = vld [vmem:[#allocation2 + $0x242] sm:$0xff]
  %v1319 = vld [vmem:[#allocation2 + $0x24a] sm:$0xff]
  %v1320 = vld [vmem:[#allocation2 + $0x25a] sm:$0xff]
  %v1321 = vld [vmem:[#allocation2 + $0x262] sm:$0xff]
  %v1322 = vld [vmem:[#allocation2 + $0x272] sm:$0xff]
  %v1323 = vld [vmem:[#allocation2 + $0x27a] sm:$0xff]
  %v1324 = vld [vmem:[#allocation2 + $0x28a] sm:$0xff]
  %v1325 = vld [vmem:[#allocation2 + $0x292] sm:$0xff]
  %v1326 = vld [vmem:[#allocation2 + $0x2a2] sm:$0xff]
  %v1327 = vld [vmem:[#allocation2 + $0x2aa] sm:$0xff]
  %v1328 = vld [vmem:[#allocation2 + $0x2ba] sm:$0xff]
  %v1329 = vld [vmem:[#allocation2 + $0x2c2] sm:$0xff]
  %v1330 = vld [vmem:[#allocation2 + $0x2d2] sm:$0xff]
  %v1331 = vld [vmem:[#allocation2 + $0x2da] sm:$0xff]
  %v1332 = vld [vmem:[#allocation2 + $0x2ea] sm:$0xff]
  %v1333 = vld [vmem:[#allocation2 + $0x2f2] sm:$0xff]
  %v1334 = vld [vmem:[#allocation2 + $0x302] sm:$0xff]
  %v1335 = vld [vmem:[#allocation2 + $0x30a] sm:$0xff]
  %v1336 = vld [vmem:[#allocation2 + $0x31a] sm:$0xff]
  %v1337 = vld [vmem:[#allocation2 + $0x322] sm:$0xff]
  %1402 = vrot.lane.b32.xlu0 %v1274, 64
  %v1403 = vpop.permute.xlu0 %1402
  %1404 = vrot.lane.b32.xlu0 %v1275, 64
  %v1405 = vpop.permute.xlu0 %1404
  %1406 = vrot.lane.b32.xlu0 %v1276, 64
  %v1407 = vpop.permute.xlu0 %1406
  %1408 = vrot.lane.b32.xlu0 %v1277, 64
  %v1409 = vpop.permute.xlu0 %1408
  %1410 = vrot.lane.b32.xlu0 %v1278, 64
  %v1411 = vpop.permute.xlu0 %1410
  %1412 = vrot.lane.b32.xlu0 %v1279, 64
  %v1413 = vpop.permute.xlu0 %1412
  %1414 = vrot.lane.b32.xlu0 %v1280, 64
  %v1415 = vpop.permute.xlu0 %1414
  %1416 = vrot.lane.b32.xlu0 %v1281, 64
  %v1417 = vpop.permute.xlu0 %1416
  %1418 = vrot.lane.b32.xlu0 %v1282, 64
  %v1419 = vpop.permute.xlu0 %1418
  %1420 = vrot.lane.b32.xlu0 %v1283, 64
  %v1421 = vpop.permute.xlu0 %1420
  %1422 = vrot.lane.b32.xlu0 %v1284, 64
  %v1423 = vpop.permute.xlu0 %1422
  %1424 = vrot.lane.b32.xlu0 %v1285, 64
  %v1425 = vpop.permute.xlu0 %1424
  %1426 = vrot.lane.b32.xlu0 %v1286, 64
  %v1427 = vpop.permute.xlu0 %1426
  %1428 = vrot.lane.b32.xlu0 %v1287, 64
  %v1429 = vpop.permute.xlu0 %1428
  %1430 = vrot.lane.b32.xlu0 %v1288, 64
  %v1431 = vpop.permute.xlu0 %1430
  %1432 = vrot.lane.b32.xlu0 %v1289, 64
  %v1433 = vpop.permute.xlu0 %1432
  %1434 = vrot.lane.b32.xlu0 %v1290, 64
  %v1435 = vpop.permute.xlu0 %1434
  %1436 = vrot.lane.b32.xlu0 %v1291, 64
  %v1437 = vpop.permute.xlu0 %1436
  %1438 = vrot.lane.b32.xlu0 %v1292, 64
  %v1439 = vpop.permute.xlu0 %1438
  %1440 = vrot.lane.b32.xlu0 %v1293, 64
  %v1441 = vpop.permute.xlu0 %1440
  %1442 = vrot.lane.b32.xlu0 %v1294, 64
  %v1443 = vpop.permute.xlu0 %1442
  %1444 = vrot.lane.b32.xlu0 %v1295, 64
  %v1445 = vpop.permute.xlu0 %1444
  %1446 = vrot.lane.b32.xlu0 %v1296, 64
  %v1447 = vpop.permute.xlu0 %1446
  %1448 = vrot.lane.b32.xlu0 %v1297, 64
  %v1449 = vpop.permute.xlu0 %1448
  %1450 = vrot.lane.b32.xlu0 %v1298, 64
  %v1451 = vpop.permute.xlu0 %1450
  %1452 = vrot.lane.b32.xlu0 %v1299, 64
  %v1453 = vpop.permute.xlu0 %1452
  %1454 = vrot.lane.b32.xlu0 %v1300, 64
  %v1455 = vpop.permute.xlu0 %1454
  %1456 = vrot.lane.b32.xlu0 %v1301, 64
  %v1457 = vpop.permute.xlu0 %1456
  %1458 = vrot.lane.b32.xlu0 %v1302, 64
  %v1459 = vpop.permute.xlu0 %1458
  %1460 = vrot.lane.b32.xlu0 %v1303, 64
  %v1461 = vpop.permute.xlu0 %1460
  %1462 = vrot.lane.b32.xlu0 %v1304, 64
  %v1463 = vpop.permute.xlu0 %1462
  %1464 = vrot.lane.b32.xlu0 %v1305, 64
  %v1465 = vpop.permute.xlu0 %1464
  %1466 = vrot.lane.b32.xlu0 %v1306, 64
  %v1467 = vpop.permute.xlu0 %1466
  %1468 = vrot.lane.b32.xlu0 %v1307, 64
  %v1469 = vpop.permute.xlu0 %1468
  %1470 = vrot.lane.b32.xlu0 %v1308, 64
  %v1471 = vpop.permute.xlu0 %1470
  %1472 = vrot.lane.b32.xlu0 %v1309, 64
  %v1473 = vpop.permute.xlu0 %1472
  %1474 = vrot.lane.b32.xlu0 %v1310, 64
  %v1475 = vpop.permute.xlu0 %1474
  %1476 = vrot.lane.b32.xlu0 %v1311, 64
  %v1477 = vpop.permute.xlu0 %1476
  %1478 = vrot.lane.b32.xlu0 %v1312, 64
  %v1479 = vpop.permute.xlu0 %1478
  %1480 = vrot.lane.b32.xlu0 %v1313, 64
  %v1481 = vpop.permute.xlu0 %1480
  %1482 = vrot.lane.b32.xlu0 %v1314, 64
  %v1483 = vpop.permute.xlu0 %1482
  %1484 = vrot.lane.b32.xlu0 %v1315, 64
  %v1485 = vpop.permute.xlu0 %1484
  %1486 = vrot.lane.b32.xlu0 %v1316, 64
  %v1487 = vpop.permute.xlu0 %1486
  %1488 = vrot.lane.b32.xlu0 %v1317, 64
  %v1489 = vpop.permute.xlu0 %1488
  %1490 = vrot.lane.b32.xlu0 %v1318, 64
  %v1491 = vpop.permute.xlu0 %1490
  %1492 = vrot.lane.b32.xlu0 %v1319, 64
  %v1493 = vpop.permute.xlu0 %1492
  %1494 = vrot.lane.b32.xlu0 %v1320, 64
  %v1495 = vpop.permute.xlu0 %1494
  %1496 = vrot.lane.b32.xlu0 %v1321, 64
  %v1497 = vpop.permute.xlu0 %1496
  %1498 = vrot.lane.b32.xlu0 %v1322, 64
  %v1499 = vpop.permute.xlu0 %1498
  %1500 = vrot.lane.b32.xlu0 %v1323, 64
  %v1501 = vpop.permute.xlu0 %1500
  %1502 = vrot.lane.b32.xlu0 %v1324, 64
  %v1503 = vpop.permute.xlu0 %1502
  %1504 = vrot.lane.b32.xlu0 %v1325, 64
  %v1505 = vpop.permute.xlu0 %1504
  %1506 = vrot.lane.b32.xlu0 %v1326, 64
  %v1507 = vpop.permute.xlu0 %1506
  %1508 = vrot.lane.b32.xlu0 %v1327, 64
  %v1509 = vpop.permute.xlu0 %1508
  %1510 = vrot.lane.b32.xlu0 %v1328, 64
  %v1511 = vpop.permute.xlu0 %1510
  %1512 = vrot.lane.b32.xlu0 %v1329, 64
  %v1513 = vpop.permute.xlu0 %1512
  %1514 = vrot.lane.b32.xlu0 %v1330, 64
  %v1515 = vpop.permute.xlu0 %1514
  %1516 = vrot.lane.b32.xlu0 %v1331, 64
  %v1517 = vpop.permute.xlu0 %1516
  %1518 = vrot.lane.b32.xlu0 %v1332, 64
  %v1519 = vpop.permute.xlu0 %1518
  %1520 = vrot.lane.b32.xlu0 %v1333, 64
  %v1521 = vpop.permute.xlu0 %1520
  %1522 = vrot.lane.b32.xlu0 %v1334, 64
  %v1523 = vpop.permute.xlu0 %1522
  %1524 = vrot.lane.b32.xlu0 %v1335, 64
  %v1525 = vpop.permute.xlu0 %1524
  %1526 = vrot.lane.b32.xlu0 %v1336, 64
  %v1527 = vpop.permute.xlu0 %1526
  %1528 = vrot.lane.b32.xlu0 %v1337, 64
  %v1529 = vpop.permute.xlu0 %1528
  %vm1594 = vcmask 785920
  %1595 = vst.msk [vmem:[#allocation3] sm:$0xff] %vm1594, %v1403
  %1596 = vst.msk [vmem:[#allocation3 + $0x18] sm:$0xff] %vm1594, %v1405
  %1597 = vst.msk [vmem:[#allocation3 + $0x30] sm:$0xff] %vm1594, %v1407
  %1598 = vst.msk [vmem:[#allocation3 + $0x48] sm:$0xff] %vm1594, %v1409
  %1599 = vst.msk [vmem:[#allocation3 + $0x60] sm:$0xff] %vm1594, %v1411
  %1600 = vst.msk [vmem:[#allocation3 + $0x78] sm:$0xff] %vm1594, %v1413
  %1601 = vst.msk [vmem:[#allocation3 + $0x90] sm:$0xff] %vm1594, %v1415
  %1602 = vst.msk [vmem:[#allocation3 + $0xa8] sm:$0xff] %vm1594, %v1417
  %1603 = vst.msk [vmem:[#allocation3 + $0xc0] sm:$0xff] %vm1594, %v1419
  %1604 = vst.msk [vmem:[#allocation3 + $0xd8] sm:$0xff] %vm1594, %v1421
  %1605 = vst.msk [vmem:[#allocation3 + $0xf0] sm:$0xff] %vm1594, %v1423
  %1606 = vst.msk [vmem:[#allocation3 + $0x108] sm:$0xff] %vm1594, %v1425
  %1607 = vst.msk [vmem:[#allocation3 + $0x120] sm:$0xff] %vm1594, %v1427
  %1608 = vst.msk [vmem:[#allocation3 + $0x138] sm:$0xff] %vm1594, %v1429
  %1609 = vst.msk [vmem:[#allocation3 + $0x150] sm:$0xff] %vm1594, %v1431
  %1610 = vst.msk [vmem:[#allocation3 + $0x168] sm:$0xff] %vm1594, %v1433
  %1611 = vst.msk [vmem:[#allocation3 + $0x180] sm:$0xff] %vm1594, %v1435
  %1612 = vst.msk [vmem:[#allocation3 + $0x198] sm:$0xff] %vm1594, %v1437
  %1613 = vst.msk [vmem:[#allocation3 + $0x1b0] sm:$0xff] %vm1594, %v1439
  %1614 = vst.msk [vmem:[#allocation3 + $0x1c8] sm:$0xff] %vm1594, %v1441
  %1615 = vst.msk [vmem:[#allocation3 + $0x1e0] sm:$0xff] %vm1594, %v1443
  %1616 = vst.msk [vmem:[#allocation3 + $0x1f8] sm:$0xff] %vm1594, %v1445
  %1617 = vst.msk [vmem:[#allocation3 + $0x210] sm:$0xff] %vm1594, %v1447
  %1618 = vst.msk [vmem:[#allocation3 + $0x228] sm:$0xff] %vm1594, %v1449
  %1619 = vst.msk [vmem:[#allocation3 + $0x240] sm:$0xff] %vm1594, %v1451
  %1620 = vst.msk [vmem:[#allocation3 + $0x258] sm:$0xff] %vm1594, %v1453
  %1621 = vst.msk [vmem:[#allocation3 + $0x270] sm:$0xff] %vm1594, %v1455
  %1622 = vst.msk [vmem:[#allocation3 + $0x288] sm:$0xff] %vm1594, %v1457
  %1623 = vst.msk [vmem:[#allocation3 + $0x2a0] sm:$0xff] %vm1594, %v1459
  %1624 = vst.msk [vmem:[#allocation3 + $0x2b8] sm:$0xff] %vm1594, %v1461
  %1625 = vst.msk [vmem:[#allocation3 + $0x2d0] sm:$0xff] %vm1594, %v1463
  %1626 = vst.msk [vmem:[#allocation3 + $0x2e8] sm:$0xff] %vm1594, %v1465
  %1627 = vst.msk [vmem:[#allocation3 + $0x300] sm:$0xff] %vm1594, %v1467
  %1628 = vst.msk [vmem:[#allocation3 + $0x318] sm:$0xff] %vm1594, %v1469
  %1629 = vst.msk [vmem:[#allocation3 + $0x330] sm:$0xff] %vm1594, %v1471
  %1630 = vst.msk [vmem:[#allocation3 + $0x348] sm:$0xff] %vm1594, %v1473
  %1631 = vst.msk [vmem:[#allocation3 + $0x360] sm:$0xff] %vm1594, %v1475
  %1632 = vst.msk [vmem:[#allocation3 + $0x378] sm:$0xff] %vm1594, %v1477
  %1633 = vst.msk [vmem:[#allocation3 + $0x390] sm:$0xff] %vm1594, %v1479
  %1634 = vst.msk [vmem:[#allocation3 + $0x3a8] sm:$0xff] %vm1594, %v1481
  %1635 = vst.msk [vmem:[#allocation3 + $0x3c0] sm:$0xff] %vm1594, %v1483
  %1636 = vst.msk [vmem:[#allocation3 + $0x3d8] sm:$0xff] %vm1594, %v1485
  %1637 = vst.msk [vmem:[#allocation3 + $0x3f0] sm:$0xff] %vm1594, %v1487
  %1638 = vst.msk [vmem:[#allocation3 + $0x408] sm:$0xff] %vm1594, %v1489
  %1639 = vst.msk [vmem:[#allocation3 + $0x420] sm:$0xff] %vm1594, %v1491
  %1640 = vst.msk [vmem:[#allocation3 + $0x438] sm:$0xff] %vm1594, %v1493
  %1641 = vst.msk [vmem:[#allocation3 + $0x450] sm:$0xff] %vm1594, %v1495
  %1642 = vst.msk [vmem:[#allocation3 + $0x468] sm:$0xff] %vm1594, %v1497
  %1643 = vst.msk [vmem:[#allocation3 + $0x480] sm:$0xff] %vm1594, %v1499
  %1644 = vst.msk [vmem:[#allocation3 + $0x498] sm:$0xff] %vm1594, %v1501
  %1645 = vst.msk [vmem:[#allocation3 + $0x4b0] sm:$0xff] %vm1594, %v1503
  %1646 = vst.msk [vmem:[#allocation3 + $0x4c8] sm:$0xff] %vm1594, %v1505
  %1647 = vst.msk [vmem:[#allocation3 + $0x4e0] sm:$0xff] %vm1594, %v1507
  %1648 = vst.msk [vmem:[#allocation3 + $0x4f8] sm:$0xff] %vm1594, %v1509
  %1649 = vst.msk [vmem:[#allocation3 + $0x510] sm:$0xff] %vm1594, %v1511
  %1650 = vst.msk [vmem:[#allocation3 + $0x528] sm:$0xff] %vm1594, %v1513
  %1651 = vst.msk [vmem:[#allocation3 + $0x540] sm:$0xff] %vm1594, %v1515
  %1652 = vst.msk [vmem:[#allocation3 + $0x558] sm:$0xff] %vm1594, %v1517
  %1653 = vst.msk [vmem:[#allocation3 + $0x570] sm:$0xff] %vm1594, %v1519
  %1654 = vst.msk [vmem:[#allocation3 + $0x588] sm:$0xff] %vm1594, %v1521
  %1655 = vst.msk [vmem:[#allocation3 + $0x5a0] sm:$0xff] %vm1594, %v1523
  %1656 = vst.msk [vmem:[#allocation3 + $0x5b8] sm:$0xff] %vm1594, %v1525
  %1657 = vst.msk [vmem:[#allocation3 + $0x5d0] sm:$0xff] %vm1594, %v1527
  %1658 = vst.msk [vmem:[#allocation3 + $0x5e8] sm:$0xff] %vm1594, %v1529
  %v1659 = vld [vmem:[%s696] sm:$0xff]
  %v1660 = vld [vmem:[%s696 + $0x8] sm:$0xff]
  %v1661 = vld [vmem:[%s696 + $0x18] sm:$0xff]
  %v1662 = vld [vmem:[%s696 + $0x20] sm:$0xff]
  %v1663 = vld [vmem:[%s696 + $0x30] sm:$0xff]
  %v1664 = vld [vmem:[%s696 + $0x38] sm:$0xff]
  %v1665 = vld [vmem:[%s696 + $0x48] sm:$0xff]
  %v1666 = vld [vmem:[%s696 + $0x50] sm:$0xff]
  %v1667 = vld [vmem:[%s696 + $0x60] sm:$0xff]
  %v1668 = vld [vmem:[%s696 + $0x68] sm:$0xff]
  %v1669 = vld [vmem:[%s696 + $0x78] sm:$0xff]
  %v1670 = vld [vmem:[%s696 + $0x80] sm:$0xff]
  %v1671 = vld [vmem:[%s696 + $0x90] sm:$0xff]
  %v1672 = vld [vmem:[%s696 + $0x98] sm:$0xff]
  %v1673 = vld [vmem:[%s696 + $0xa8] sm:$0xff]
  %v1674 = vld [vmem:[%s696 + $0xb0] sm:$0xff]
  %v1675 = vld [vmem:[%s696 + $0xc0] sm:$0xff]
  %v1676 = vld [vmem:[%s696 + $0xc8] sm:$0xff]
  %v1677 = vld [vmem:[%s696 + $0xd8] sm:$0xff]
  %v1678 = vld [vmem:[%s696 + $0xe0] sm:$0xff]
  %v1679 = vld [vmem:[%s696 + $0xf0] sm:$0xff]
  %v1680 = vld [vmem:[%s696 + $0xf8] sm:$0xff]
  %v1681 = vld [vmem:[%s696 + $0x108] sm:$0xff]
  %v1682 = vld [vmem:[%s696 + $0x110] sm:$0xff]
  %v1683 = vld [vmem:[%s696 + $0x120] sm:$0xff]
  %v1684 = vld [vmem:[%s696 + $0x128] sm:$0xff]
  %v1685 = vld [vmem:[%s696 + $0x138] sm:$0xff]
  %v1686 = vld [vmem:[%s696 + $0x140] sm:$0xff]
  %v1687 = vld [vmem:[%s696 + $0x150] sm:$0xff]
  %v1688 = vld [vmem:[%s696 + $0x158] sm:$0xff]
  %v1689 = vld [vmem:[%s696 + $0x168] sm:$0xff]
  %v1690 = vld [vmem:[%s696 + $0x170] sm:$0xff]
  %v1691 = vld [vmem:[%s696 + $0x1b0] sm:$0xff]
  %v1692 = vld [vmem:[%s696 + $0x1b8] sm:$0xff]
  %v1693 = vld [vmem:[%s696 + $0x1c8] sm:$0xff]
  %v1694 = vld [vmem:[%s696 + $0x1d0] sm:$0xff]
  %v1695 = vld [vmem:[%s696 + $0x1e0] sm:$0xff]
  %v1696 = vld [vmem:[%s696 + $0x1e8] sm:$0xff]
  %v1697 = vld [vmem:[%s696 + $0x1f8] sm:$0xff]
  %v1698 = vld [vmem:[%s696 + $0x200] sm:$0xff]
  %v1699 = vld [vmem:[%s696 + $0x210] sm:$0xff]
  %v1700 = vld [vmem:[%s696 + $0x218] sm:$0xff]
  %v1701 = vld [vmem:[%s696 + $0x228] sm:$0xff]
  %v1702 = vld [vmem:[%s696 + $0x230] sm:$0xff]
  %v1703 = vld [vmem:[%s696 + $0x240] sm:$0xff]
  %v1704 = vld [vmem:[%s696 + $0x248] sm:$0xff]
  %v1705 = vld [vmem:[%s696 + $0x258] sm:$0xff]
  %v1706 = vld [vmem:[%s696 + $0x260] sm:$0xff]
  %v1707 = vld [vmem:[%s696 + $0x270] sm:$0xff]
  %v1708 = vld [vmem:[%s696 + $0x278] sm:$0xff]
  %v1709 = vld [vmem:[%s696 + $0x288] sm:$0xff]
  %v1710 = vld [vmem:[%s696 + $0x290] sm:$0xff]
  %v1711 = vld [vmem:[%s696 + $0x2a0] sm:$0xff]
  %v1712 = vld [vmem:[%s696 + $0x2a8] sm:$0xff]
  %v1713 = vld [vmem:[%s696 + $0x2b8] sm:$0xff]
  %v1714 = vld [vmem:[%s696 + $0x2c0] sm:$0xff]
  %v1715 = vld [vmem:[%s696 + $0x2d0] sm:$0xff]
  %v1716 = vld [vmem:[%s696 + $0x2d8] sm:$0xff]
  %v1717 = vld [vmem:[%s696 + $0x2e8] sm:$0xff]
  %v1718 = vld [vmem:[%s696 + $0x2f0] sm:$0xff]
  %v1719 = vld [vmem:[%s696 + $0x300] sm:$0xff]
  %v1720 = vld [vmem:[%s696 + $0x308] sm:$0xff]
  %v1721 = vld [vmem:[%s696 + $0x318] sm:$0xff]
  %v1722 = vld [vmem:[%s696 + $0x320] sm:$0xff]
  %1787 = vrot.lane.b32.xlu0 %v1659, 96
  %v1788 = vpop.permute.xlu0 %1787
  %1789 = vrot.lane.b32.xlu0 %v1660, 96
  %v1790 = vpop.permute.xlu0 %1789
  %1791 = vrot.lane.b32.xlu0 %v1661, 96
  %v1792 = vpop.permute.xlu0 %1791
  %1793 = vrot.lane.b32.xlu0 %v1662, 96
  %v1794 = vpop.permute.xlu0 %1793
  %1795 = vrot.lane.b32.xlu0 %v1663, 96
  %v1796 = vpop.permute.xlu0 %1795
  %1797 = vrot.lane.b32.xlu0 %v1664, 96
  %v1798 = vpop.permute.xlu0 %1797
  %1799 = vrot.lane.b32.xlu0 %v1665, 96
  %v1800 = vpop.permute.xlu0 %1799
  %1801 = vrot.lane.b32.xlu0 %v1666, 96
  %v1802 = vpop.permute.xlu0 %1801
  %1803 = vrot.lane.b32.xlu0 %v1667, 96
  %v1804 = vpop.permute.xlu0 %1803
  %1805 = vrot.lane.b32.xlu0 %v1668, 96
  %v1806 = vpop.permute.xlu0 %1805
  %1807 = vrot.lane.b32.xlu0 %v1669, 96
  %v1808 = vpop.permute.xlu0 %1807
  %1809 = vrot.lane.b32.xlu0 %v1670, 96
  %v1810 = vpop.permute.xlu0 %1809
  %1811 = vrot.lane.b32.xlu0 %v1671, 96
  %v1812 = vpop.permute.xlu0 %1811
  %1813 = vrot.lane.b32.xlu0 %v1672, 96
  %v1814 = vpop.permute.xlu0 %1813
  %1815 = vrot.lane.b32.xlu0 %v1673, 96
  %v1816 = vpop.permute.xlu0 %1815
  %1817 = vrot.lane.b32.xlu0 %v1674, 96
  %v1818 = vpop.permute.xlu0 %1817
  %1819 = vrot.lane.b32.xlu0 %v1675, 96
  %v1820 = vpop.permute.xlu0 %1819
  %1821 = vrot.lane.b32.xlu0 %v1676, 96
  %v1822 = vpop.permute.xlu0 %1821
  %1823 = vrot.lane.b32.xlu0 %v1677, 96
  %v1824 = vpop.permute.xlu0 %1823
  %1825 = vrot.lane.b32.xlu0 %v1678, 96
  %v1826 = vpop.permute.xlu0 %1825
  %1827 = vrot.lane.b32.xlu0 %v1679, 96
  %v1828 = vpop.permute.xlu0 %1827
  %1829 = vrot.lane.b32.xlu0 %v1680, 96
  %v1830 = vpop.permute.xlu0 %1829
  %1831 = vrot.lane.b32.xlu0 %v1681, 96
  %v1832 = vpop.permute.xlu0 %1831
  %1833 = vrot.lane.b32.xlu0 %v1682, 96
  %v1834 = vpop.permute.xlu0 %1833
  %1835 = vrot.lane.b32.xlu0 %v1683, 96
  %v1836 = vpop.permute.xlu0 %1835
  %1837 = vrot.lane.b32.xlu0 %v1684, 96
  %v1838 = vpop.permute.xlu0 %1837
  %1839 = vrot.lane.b32.xlu0 %v1685, 96
  %v1840 = vpop.permute.xlu0 %1839
  %1841 = vrot.lane.b32.xlu0 %v1686, 96
  %v1842 = vpop.permute.xlu0 %1841
  %1843 = vrot.lane.b32.xlu0 %v1687, 96
  %v1844 = vpop.permute.xlu0 %1843
  %1845 = vrot.lane.b32.xlu0 %v1688, 96
  %v1846 = vpop.permute.xlu0 %1845
  %1847 = vrot.lane.b32.xlu0 %v1689, 96
  %v1848 = vpop.permute.xlu0 %1847
  %1849 = vrot.lane.b32.xlu0 %v1690, 96
  %v1850 = vpop.permute.xlu0 %1849
  %1851 = vrot.lane.b32.xlu0 %v1691, 96
  %v1852 = vpop.permute.xlu0 %1851
  %1853 = vrot.lane.b32.xlu0 %v1692, 96
  %v1854 = vpop.permute.xlu0 %1853
  %1855 = vrot.lane.b32.xlu0 %v1693, 96
  %v1856 = vpop.permute.xlu0 %1855
  %1857 = vrot.lane.b32.xlu0 %v1694, 96
  %v1858 = vpop.permute.xlu0 %1857
  %1859 = vrot.lane.b32.xlu0 %v1695, 96
  %v1860 = vpop.permute.xlu0 %1859
  %1861 = vrot.lane.b32.xlu0 %v1696, 96
  %v1862 = vpop.permute.xlu0 %1861
  %1863 = vrot.lane.b32.xlu0 %v1697, 96
  %v1864 = vpop.permute.xlu0 %1863
  %1865 = vrot.lane.b32.xlu0 %v1698, 96
  %v1866 = vpop.permute.xlu0 %1865
  %1867 = vrot.lane.b32.xlu0 %v1699, 96
  %v1868 = vpop.permute.xlu0 %1867
  %1869 = vrot.lane.b32.xlu0 %v1700, 96
  %v1870 = vpop.permute.xlu0 %1869
  %1871 = vrot.lane.b32.xlu0 %v1701, 96
  %v1872 = vpop.permute.xlu0 %1871
  %1873 = vrot.lane.b32.xlu0 %v1702, 96
  %v1874 = vpop.permute.xlu0 %1873
  %1875 = vrot.lane.b32.xlu0 %v1703, 96
  %v1876 = vpop.permute.xlu0 %1875
  %1877 = vrot.lane.b32.xlu0 %v1704, 96
  %v1878 = vpop.permute.xlu0 %1877
  %1879 = vrot.lane.b32.xlu0 %v1705, 96
  %v1880 = vpop.permute.xlu0 %1879
  %1881 = vrot.lane.b32.xlu0 %v1706, 96
  %v1882 = vpop.permute.xlu0 %1881
  %1883 = vrot.lane.b32.xlu0 %v1707, 96
  %v1884 = vpop.permute.xlu0 %1883
  %1885 = vrot.lane.b32.xlu0 %v1708, 96
  %v1886 = vpop.permute.xlu0 %1885
  %1887 = vrot.lane.b32.xlu0 %v1709, 96
  %v1888 = vpop.permute.xlu0 %1887
  %1889 = vrot.lane.b32.xlu0 %v1710, 96
  %v1890 = vpop.permute.xlu0 %1889
  %1891 = vrot.lane.b32.xlu0 %v1711, 96
  %v1892 = vpop.permute.xlu0 %1891
  %1893 = vrot.lane.b32.xlu0 %v1712, 96
  %v1894 = vpop.permute.xlu0 %1893
  %1895 = vrot.lane.b32.xlu0 %v1713, 96
  %v1896 = vpop.permute.xlu0 %1895
  %1897 = vrot.lane.b32.xlu0 %v1714, 96
  %v1898 = vpop.permute.xlu0 %1897
  %1899 = vrot.lane.b32.xlu0 %v1715, 96
  %v1900 = vpop.permute.xlu0 %1899
  %1901 = vrot.lane.b32.xlu0 %v1716, 96
  %v1902 = vpop.permute.xlu0 %1901
  %1903 = vrot.lane.b32.xlu0 %v1717, 96
  %v1904 = vpop.permute.xlu0 %1903
  %1905 = vrot.lane.b32.xlu0 %v1718, 96
  %v1906 = vpop.permute.xlu0 %1905
  %1907 = vrot.lane.b32.xlu0 %v1719, 96
  %v1908 = vpop.permute.xlu0 %1907
  %1909 = vrot.lane.b32.xlu0 %v1720, 96
  %v1910 = vpop.permute.xlu0 %1909
  %1911 = vrot.lane.b32.xlu0 %v1721, 96
  %v1912 = vpop.permute.xlu0 %1911
  %1913 = vrot.lane.b32.xlu0 %v1722, 96
  %v1914 = vpop.permute.xlu0 %1913
  %vm1979 = vcmask 1048320
  %1980 = vst.msk [vmem:[#allocation3] sm:$0xff] %vm1979, %v1788
  %1981 = vst.msk [vmem:[#allocation3 + $0x18] sm:$0xff] %vm1979, %v1790
  %1982 = vst.msk [vmem:[#allocation3 + $0x30] sm:$0xff] %vm1979, %v1792
  %1983 = vst.msk [vmem:[#allocation3 + $0x48] sm:$0xff] %vm1979, %v1794
  %1984 = vst.msk [vmem:[#allocation3 + $0x60] sm:$0xff] %vm1979, %v1796
  %1985 = vst.msk [vmem:[#allocation3 + $0x78] sm:$0xff] %vm1979, %v1798
  %1986 = vst.msk [vmem:[#allocation3 + $0x90] sm:$0xff] %vm1979, %v1800
  %1987 = vst.msk [vmem:[#allocation3 + $0xa8] sm:$0xff] %vm1979, %v1802
  %1988 = vst.msk [vmem:[#allocation3 + $0xc0] sm:$0xff] %vm1979, %v1804
  %1989 = vst.msk [vmem:[#allocation3 + $0xd8] sm:$0xff] %vm1979, %v1806
  %1990 = vst.msk [vmem:[#allocation3 + $0xf0] sm:$0xff] %vm1979, %v1808
  %1991 = vst.msk [vmem:[#allocation3 + $0x108] sm:$0xff] %vm1979, %v1810
  %1992 = vst.msk [vmem:[#allocation3 + $0x120] sm:$0xff] %vm1979, %v1812
  %1993 = vst.msk [vmem:[#allocation3 + $0x138] sm:$0xff] %vm1979, %v1814
  %1994 = vst.msk [vmem:[#allocation3 + $0x150] sm:$0xff] %vm1979, %v1816
  %1995 = vst.msk [vmem:[#allocation3 + $0x168] sm:$0xff] %vm1979, %v1818
  %1996 = vst.msk [vmem:[#allocation3 + $0x180] sm:$0xff] %vm1979, %v1820
  %1997 = vst.msk [vmem:[#allocation3 + $0x198] sm:$0xff] %vm1979, %v1822
  %1998 = vst.msk [vmem:[#allocation3 + $0x1b0] sm:$0xff] %vm1979, %v1824
  %1999 = vst.msk [vmem:[#allocation3 + $0x1c8] sm:$0xff] %vm1979, %v1826
  %2000 = vst.msk [vmem:[#allocation3 + $0x1e0] sm:$0xff] %vm1979, %v1828
  %2001 = vst.msk [vmem:[#allocation3 + $0x1f8] sm:$0xff] %vm1979, %v1830
  %2002 = vst.msk [vmem:[#allocation3 + $0x210] sm:$0xff] %vm1979, %v1832
  %2003 = vst.msk [vmem:[#allocation3 + $0x228] sm:$0xff] %vm1979, %v1834
  %2004 = vst.msk [vmem:[#allocation3 + $0x240] sm:$0xff] %vm1979, %v1836
  %2005 = vst.msk [vmem:[#allocation3 + $0x258] sm:$0xff] %vm1979, %v1838
  %2006 = vst.msk [vmem:[#allocation3 + $0x270] sm:$0xff] %vm1979, %v1840
  %2007 = vst.msk [vmem:[#allocation3 + $0x288] sm:$0xff] %vm1979, %v1842
  %2008 = vst.msk [vmem:[#allocation3 + $0x2a0] sm:$0xff] %vm1979, %v1844
  %2009 = vst.msk [vmem:[#allocation3 + $0x2b8] sm:$0xff] %vm1979, %v1846
  %2010 = vst.msk [vmem:[#allocation3 + $0x2d0] sm:$0xff] %vm1979, %v1848
  %2011 = vst.msk [vmem:[#allocation3 + $0x2e8] sm:$0xff] %vm1979, %v1850
  %2012 = vst.msk [vmem:[#allocation3 + $0x300] sm:$0xff] %vm1979, %v1852
  %2013 = vst.msk [vmem:[#allocation3 + $0x318] sm:$0xff] %vm1979, %v1854
  %2014 = vst.msk [vmem:[#allocation3 + $0x330] sm:$0xff] %vm1979, %v1856
  %2015 = vst.msk [vmem:[#allocation3 + $0x348] sm:$0xff] %vm1979, %v1858
  %2016 = vst.msk [vmem:[#allocation3 + $0x360] sm:$0xff] %vm1979, %v1860
  %2017 = vst.msk [vmem:[#allocation3 + $0x378] sm:$0xff] %vm1979, %v1862
  %2018 = vst.msk [vmem:[#allocation3 + $0x390] sm:$0xff] %vm1979, %v1864
  %2019 = vst.msk [vmem:[#allocation3 + $0x3a8] sm:$0xff] %vm1979, %v1866
  %2020 = vst.msk [vmem:[#allocation3 + $0x3c0] sm:$0xff] %vm1979, %v1868
  %2021 = vst.msk [vmem:[#allocation3 + $0x3d8] sm:$0xff] %vm1979, %v1870
  %2022 = vst.msk [vmem:[#allocation3 + $0x3f0] sm:$0xff] %vm1979, %v1872
  %2023 = vst.msk [vmem:[#allocation3 + $0x408] sm:$0xff] %vm1979, %v1874
  %2024 = vst.msk [vmem:[#allocation3 + $0x420] sm:$0xff] %vm1979, %v1876
  %2025 = vst.msk [vmem:[#allocation3 + $0x438] sm:$0xff] %vm1979, %v1878
  %2026 = vst.msk [vmem:[#allocation3 + $0x450] sm:$0xff] %vm1979, %v1880
  %2027 = vst.msk [vmem:[#allocation3 + $0x468] sm:$0xff] %vm1979, %v1882
  %2028 = vst.msk [vmem:[#allocation3 + $0x480] sm:$0xff] %vm1979, %v1884
  %2029 = vst.msk [vmem:[#allocation3 + $0x498] sm:$0xff] %vm1979, %v1886
  %2030 = vst.msk [vmem:[#allocation3 + $0x4b0] sm:$0xff] %vm1979, %v1888
  %2031 = vst.msk [vmem:[#allocation3 + $0x4c8] sm:$0xff] %vm1979, %v1890
  %2032 = vst.msk [vmem:[#allocation3 + $0x4e0] sm:$0xff] %vm1979, %v1892
  %2033 = vst.msk [vmem:[#allocation3 + $0x4f8] sm:$0xff] %vm1979, %v1894
  %2034 = vst.msk [vmem:[#allocation3 + $0x510] sm:$0xff] %vm1979, %v1896
  %2035 = vst.msk [vmem:[#allocation3 + $0x528] sm:$0xff] %vm1979, %v1898
  %2036 = vst.msk [vmem:[#allocation3 + $0x540] sm:$0xff] %vm1979, %v1900
  %2037 = vst.msk [vmem:[#allocation3 + $0x558] sm:$0xff] %vm1979, %v1902
  %2038 = vst.msk [vmem:[#allocation3 + $0x570] sm:$0xff] %vm1979, %v1904
  %2039 = vst.msk [vmem:[#allocation3 + $0x588] sm:$0xff] %vm1979, %v1906
  %2040 = vst.msk [vmem:[#allocation3 + $0x5a0] sm:$0xff] %vm1979, %v1908
  %2041 = vst.msk [vmem:[#allocation3 + $0x5b8] sm:$0xff] %vm1979, %v1910
  %2042 = vst.msk [vmem:[#allocation3 + $0x5d0] sm:$0xff] %vm1979, %v1912
  %2043 = vst.msk [vmem:[#allocation3 + $0x5e8] sm:$0xff] %vm1979, %v1914
  %v2044 = vld [vmem:[%s696 + $0x1] sm:$0xff]
  %v2045 = vld [vmem:[%s696 + $0x9] sm:$0xff]
  %v2046 = vld [vmem:[%s696 + $0x19] sm:$0xff]
  %v2047 = vld [vmem:[%s696 + $0x21] sm:$0xff]
  %v2048 = vld [vmem:[%s696 + $0x31] sm:$0xff]
  %v2049 = vld [vmem:[%s696 + $0x39] sm:$0xff]
  %v2050 = vld [vmem:[%s696 + $0x49] sm:$0xff]
  %v2051 = vld [vmem:[%s696 + $0x51] sm:$0xff]
  %v2052 = vld [vmem:[%s696 + $0x61] sm:$0xff]
  %v2053 = vld [vmem:[%s696 + $0x69] sm:$0xff]
  %v2054 = vld [vmem:[%s696 + $0x79] sm:$0xff]
  %v2055 = vld [vmem:[%s696 + $0x81] sm:$0xff]
  %v2056 = vld [vmem:[%s696 + $0x91] sm:$0xff]
  %v2057 = vld [vmem:[%s696 + $0x99] sm:$0xff]
  %v2058 = vld [vmem:[%s696 + $0xa9] sm:$0xff]
  %v2059 = vld [vmem:[%s696 + $0xb1] sm:$0xff]
  %v2060 = vld [vmem:[%s696 + $0xc1] sm:$0xff]
  %v2061 = vld [vmem:[%s696 + $0xc9] sm:$0xff]
  %v2062 = vld [vmem:[%s696 + $0xd9] sm:$0xff]
  %v2063 = vld [vmem:[%s696 + $0xe1] sm:$0xff]
  %v2064 = vld [vmem:[%s696 + $0xf1] sm:$0xff]
  %v2065 = vld [vmem:[%s696 + $0xf9] sm:$0xff]
  %v2066 = vld [vmem:[%s696 + $0x109] sm:$0xff]
  %v2067 = vld [vmem:[%s696 + $0x111] sm:$0xff]
  %v2068 = vld [vmem:[%s696 + $0x121] sm:$0xff]
  %v2069 = vld [vmem:[%s696 + $0x129] sm:$0xff]
  %v2070 = vld [vmem:[%s696 + $0x139] sm:$0xff]
  %v2071 = vld [vmem:[%s696 + $0x141] sm:$0xff]
  %v2072 = vld [vmem:[%s696 + $0x151] sm:$0xff]
  %v2073 = vld [vmem:[%s696 + $0x159] sm:$0xff]
  %v2074 = vld [vmem:[%s696 + $0x169] sm:$0xff]
  %v2075 = vld [vmem:[%s696 + $0x171] sm:$0xff]
  %v2076 = vld [vmem:[%s696 + $0x1b1] sm:$0xff]
  %v2077 = vld [vmem:[%s696 + $0x1b9] sm:$0xff]
  %v2078 = vld [vmem:[%s696 + $0x1c9] sm:$0xff]
  %v2079 = vld [vmem:[%s696 + $0x1d1] sm:$0xff]
  %v2080 = vld [vmem:[%s696 + $0x1e1] sm:$0xff]
  %v2081 = vld [vmem:[%s696 + $0x1e9] sm:$0xff]
  %v2082 = vld [vmem:[%s696 + $0x1f9] sm:$0xff]
  %v2083 = vld [vmem:[%s696 + $0x201] sm:$0xff]
  %v2084 = vld [vmem:[%s696 + $0x211] sm:$0xff]
  %v2085 = vld [vmem:[%s696 + $0x219] sm:$0xff]
  %v2086 = vld [vmem:[%s696 + $0x229] sm:$0xff]
  %v2087 = vld [vmem:[%s696 + $0x231] sm:$0xff]
  %v2088 = vld [vmem:[%s696 + $0x241] sm:$0xff]
  %v2089 = vld [vmem:[%s696 + $0x249] sm:$0xff]
  %v2090 = vld [vmem:[%s696 + $0x259] sm:$0xff]
  %v2091 = vld [vmem:[%s696 + $0x261] sm:$0xff]
  %v2092 = vld [vmem:[%s696 + $0x271] sm:$0xff]
  %v2093 = vld [vmem:[%s696 + $0x279] sm:$0xff]
  %v2094 = vld [vmem:[%s696 + $0x289] sm:$0xff]
  %v2095 = vld [vmem:[%s696 + $0x291] sm:$0xff]
  %v2096 = vld [vmem:[%s696 + $0x2a1] sm:$0xff]
  %v2097 = vld [vmem:[%s696 + $0x2a9] sm:$0xff]
  %v2098 = vld [vmem:[%s696 + $0x2b9] sm:$0xff]
  %v2099 = vld [vmem:[%s696 + $0x2c1] sm:$0xff]
  %v2100 = vld [vmem:[%s696 + $0x2d1] sm:$0xff]
  %v2101 = vld [vmem:[%s696 + $0x2d9] sm:$0xff]
  %v2102 = vld [vmem:[%s696 + $0x2e9] sm:$0xff]
  %v2103 = vld [vmem:[%s696 + $0x2f1] sm:$0xff]
  %v2104 = vld [vmem:[%s696 + $0x301] sm:$0xff]
  %v2105 = vld [vmem:[%s696 + $0x309] sm:$0xff]
  %v2106 = vld [vmem:[%s696 + $0x319] sm:$0xff]
  %v2107 = vld [vmem:[%s696 + $0x321] sm:$0xff]
  %2108 = vst.msk [vmem:[#allocation3 + $0x8] sm:$0xff] %vm257, %v2044
  %2109 = vst.msk [vmem:[#allocation3 + $0x20] sm:$0xff] %vm257, %v2045
  %2110 = vst.msk [vmem:[#allocation3 + $0x38] sm:$0xff] %vm257, %v2046
  %2111 = vst.msk [vmem:[#allocation3 + $0x50] sm:$0xff] %vm257, %v2047
  %2112 = vst.msk [vmem:[#allocation3 + $0x68] sm:$0xff] %vm257, %v2048
  %2113 = vst.msk [vmem:[#allocation3 + $0x80] sm:$0xff] %vm257, %v2049
  %2114 = vst.msk [vmem:[#allocation3 + $0x98] sm:$0xff] %vm257, %v2050
  %2115 = vst.msk [vmem:[#allocation3 + $0xb0] sm:$0xff] %vm257, %v2051
  %2116 = vst.msk [vmem:[#allocation3 + $0xc8] sm:$0xff] %vm257, %v2052
  %2117 = vst.msk [vmem:[#allocation3 + $0xe0] sm:$0xff] %vm257, %v2053
  %2118 = vst.msk [vmem:[#allocation3 + $0xf8] sm:$0xff] %vm257, %v2054
  %2119 = vst.msk [vmem:[#allocation3 + $0x110] sm:$0xff] %vm257, %v2055
  %2120 = vst.msk [vmem:[#allocation3 + $0x128] sm:$0xff] %vm257, %v2056
  %2121 = vst.msk [vmem:[#allocation3 + $0x140] sm:$0xff] %vm257, %v2057
  %2122 = vst.msk [vmem:[#allocation3 + $0x158] sm:$0xff] %vm257, %v2058
  %2123 = vst.msk [vmem:[#allocation3 + $0x170] sm:$0xff] %vm257, %v2059
  %2124 = vst.msk [vmem:[#allocation3 + $0x188] sm:$0xff] %vm257, %v2060
  %2125 = vst.msk [vmem:[#allocation3 + $0x1a0] sm:$0xff] %vm257, %v2061
  %2126 = vst.msk [vmem:[#allocation3 + $0x1b8] sm:$0xff] %vm257, %v2062
  %2127 = vst.msk [vmem:[#allocation3 + $0x1d0] sm:$0xff] %vm257, %v2063
  %2128 = vst.msk [vmem:[#allocation3 + $0x1e8] sm:$0xff] %vm257, %v2064
  %2129 = vst.msk [vmem:[#allocation3 + $0x200] sm:$0xff] %vm257, %v2065
  %2130 = vst.msk [vmem:[#allocation3 + $0x218] sm:$0xff] %vm257, %v2066
  %2131 = vst.msk [vmem:[#allocation3 + $0x230] sm:$0xff] %vm257, %v2067
  %2132 = vst.msk [vmem:[#allocation3 + $0x248] sm:$0xff] %vm257, %v2068
  %2133 = vst.msk [vmem:[#allocation3 + $0x260] sm:$0xff] %vm257, %v2069
  %2134 = vst.msk [vmem:[#allocation3 + $0x278] sm:$0xff] %vm257, %v2070
  %2135 = vst.msk [vmem:[#allocation3 + $0x290] sm:$0xff] %vm257, %v2071
  %2136 = vst.msk [vmem:[#allocation3 + $0x2a8] sm:$0xff] %vm257, %v2072
  %2137 = vst.msk [vmem:[#allocation3 + $0x2c0] sm:$0xff] %vm257, %v2073
  %2138 = vst.msk [vmem:[#allocation3 + $0x2d8] sm:$0xff] %vm257, %v2074
  %2139 = vst.msk [vmem:[#allocation3 + $0x2f0] sm:$0xff] %vm257, %v2075
  %2140 = vst.msk [vmem:[#allocation3 + $0x308] sm:$0xff] %vm257, %v2076
  %2141 = vst.msk [vmem:[#allocation3 + $0x320] sm:$0xff] %vm257, %v2077
  %2142 = vst.msk [vmem:[#allocation3 + $0x338] sm:$0xff] %vm257, %v2078
  %2143 = vst.msk [vmem:[#allocation3 + $0x350] sm:$0xff] %vm257, %v2079
  %2144 = vst.msk [vmem:[#allocation3 + $0x368] sm:$0xff] %vm257, %v2080
  %2145 = vst.msk [vmem:[#allocation3 + $0x380] sm:$0xff] %vm257, %v2081
  %2146 = vst.msk [vmem:[#allocation3 + $0x398] sm:$0xff] %vm257, %v2082
  %2147 = vst.msk [vmem:[#allocation3 + $0x3b0] sm:$0xff] %vm257, %v2083
  %2148 = vst.msk [vmem:[#allocation3 + $0x3c8] sm:$0xff] %vm257, %v2084
  %2149 = vst.msk [vmem:[#allocation3 + $0x3e0] sm:$0xff] %vm257, %v2085
  %2150 = vst.msk [vmem:[#allocation3 + $0x3f8] sm:$0xff] %vm257, %v2086
  %2151 = vst.msk [vmem:[#allocation3 + $0x410] sm:$0xff] %vm257, %v2087
  %2152 = vst.msk [vmem:[#allocation3 + $0x428] sm:$0xff] %vm257, %v2088
  %2153 = vst.msk [vmem:[#allocation3 + $0x440] sm:$0xff] %vm257, %v2089
  %2154 = vst.msk [vmem:[#allocation3 + $0x458] sm:$0xff] %vm257, %v2090
  %2155 = vst.msk [vmem:[#allocation3 + $0x470] sm:$0xff] %vm257, %v2091
  %2156 = vst.msk [vmem:[#allocation3 + $0x488] sm:$0xff] %vm257, %v2092
  %2157 = vst.msk [vmem:[#allocation3 + $0x4a0] sm:$0xff] %vm257, %v2093
  %2158 = vst.msk [vmem:[#allocation3 + $0x4b8] sm:$0xff] %vm257, %v2094
  %2159 = vst.msk [vmem:[#allocation3 + $0x4d0] sm:$0xff] %vm257, %v2095
  %2160 = vst.msk [vmem:[#allocation3 + $0x4e8] sm:$0xff] %vm257, %v2096
  %2161 = vst.msk [vmem:[#allocation3 + $0x500] sm:$0xff] %vm257, %v2097
  %2162 = vst.msk [vmem:[#allocation3 + $0x518] sm:$0xff] %vm257, %v2098
  %2163 = vst.msk [vmem:[#allocation3 + $0x530] sm:$0xff] %vm257, %v2099
  %2164 = vst.msk [vmem:[#allocation3 + $0x548] sm:$0xff] %vm257, %v2100
  %2165 = vst.msk [vmem:[#allocation3 + $0x560] sm:$0xff] %vm257, %v2101
  %2166 = vst.msk [vmem:[#allocation3 + $0x578] sm:$0xff] %vm257, %v2102
  %2167 = vst.msk [vmem:[#allocation3 + $0x590] sm:$0xff] %vm257, %v2103
  %2168 = vst.msk [vmem:[#allocation3 + $0x5a8] sm:$0xff] %vm257, %v2104
  %2169 = vst.msk [vmem:[#allocation3 + $0x5c0] sm:$0xff] %vm257, %v2105
  %2170 = vst.msk [vmem:[#allocation3 + $0x5d8] sm:$0xff] %vm257, %v2106
  %2171 = vst.msk [vmem:[#allocation3 + $0x5f0] sm:$0xff] %vm257, %v2107
  %v2172 = vld [vmem:[%s696 + $0x2] sm:$0xff]
  %v2173 = vld [vmem:[%s696 + $0xa] sm:$0xff]
  %v2174 = vld [vmem:[%s696 + $0x1a] sm:$0xff]
  %v2175 = vld [vmem:[%s696 + $0x22] sm:$0xff]
  %v2176 = vld [vmem:[%s696 + $0x32] sm:$0xff]
  %v2177 = vld [vmem:[%s696 + $0x3a] sm:$0xff]
  %v2178 = vld [vmem:[%s696 + $0x4a] sm:$0xff]
  %v2179 = vld [vmem:[%s696 + $0x52] sm:$0xff]
  %v2180 = vld [vmem:[%s696 + $0x62] sm:$0xff]
  %v2181 = vld [vmem:[%s696 + $0x6a] sm:$0xff]
  %v2182 = vld [vmem:[%s696 + $0x7a] sm:$0xff]
  %v2183 = vld [vmem:[%s696 + $0x82] sm:$0xff]
  %v2184 = vld [vmem:[%s696 + $0x92] sm:$0xff]
  %v2185 = vld [vmem:[%s696 + $0x9a] sm:$0xff]
  %v2186 = vld [vmem:[%s696 + $0xaa] sm:$0xff]
  %v2187 = vld [vmem:[%s696 + $0xb2] sm:$0xff]
  %v2188 = vld [vmem:[%s696 + $0xc2] sm:$0xff]
  %v2189 = vld [vmem:[%s696 + $0xca] sm:$0xff]
  %v2190 = vld [vmem:[%s696 + $0xda] sm:$0xff]
  %v2191 = vld [vmem:[%s696 + $0xe2] sm:$0xff]
  %v2192 = vld [vmem:[%s696 + $0xf2] sm:$0xff]
  %v2193 = vld [vmem:[%s696 + $0xfa] sm:$0xff]
  %v2194 = vld [vmem:[%s696 + $0x10a] sm:$0xff]
  %v2195 = vld [vmem:[%s696 + $0x112] sm:$0xff]
  %v2196 = vld [vmem:[%s696 + $0x122] sm:$0xff]
  %v2197 = vld [vmem:[%s696 + $0x12a] sm:$0xff]
  %v2198 = vld [vmem:[%s696 + $0x13a] sm:$0xff]
  %v2199 = vld [vmem:[%s696 + $0x142] sm:$0xff]
  %v2200 = vld [vmem:[%s696 + $0x152] sm:$0xff]
  %v2201 = vld [vmem:[%s696 + $0x15a] sm:$0xff]
  %v2202 = vld [vmem:[%s696 + $0x16a] sm:$0xff]
  %v2203 = vld [vmem:[%s696 + $0x172] sm:$0xff]
  %v2204 = vld [vmem:[%s696 + $0x1b2] sm:$0xff]
  %v2205 = vld [vmem:[%s696 + $0x1ba] sm:$0xff]
  %v2206 = vld [vmem:[%s696 + $0x1ca] sm:$0xff]
  %v2207 = vld [vmem:[%s696 + $0x1d2] sm:$0xff]
  %v2208 = vld [vmem:[%s696 + $0x1e2] sm:$0xff]
  %v2209 = vld [vmem:[%s696 + $0x1ea] sm:$0xff]
  %v2210 = vld [vmem:[%s696 + $0x1fa] sm:$0xff]
  %v2211 = vld [vmem:[%s696 + $0x202] sm:$0xff]
  %v2212 = vld [vmem:[%s696 + $0x212] sm:$0xff]
  %v2213 = vld [vmem:[%s696 + $0x21a] sm:$0xff]
  %v2214 = vld [vmem:[%s696 + $0x22a] sm:$0xff]
  %v2215 = vld [vmem:[%s696 + $0x232] sm:$0xff]
  %v2216 = vld [vmem:[%s696 + $0x242] sm:$0xff]
  %v2217 = vld [vmem:[%s696 + $0x24a] sm:$0xff]
  %v2218 = vld [vmem:[%s696 + $0x25a] sm:$0xff]
  %v2219 = vld [vmem:[%s696 + $0x262] sm:$0xff]
  %v2220 = vld [vmem:[%s696 + $0x272] sm:$0xff]
  %v2221 = vld [vmem:[%s696 + $0x27a] sm:$0xff]
  %v2222 = vld [vmem:[%s696 + $0x28a] sm:$0xff]
  %v2223 = vld [vmem:[%s696 + $0x292] sm:$0xff]
  %v2224 = vld [vmem:[%s696 + $0x2a2] sm:$0xff]
  %v2225 = vld [vmem:[%s696 + $0x2aa] sm:$0xff]
  %v2226 = vld [vmem:[%s696 + $0x2ba] sm:$0xff]
  %v2227 = vld [vmem:[%s696 + $0x2c2] sm:$0xff]
  %v2228 = vld [vmem:[%s696 + $0x2d2] sm:$0xff]
  %v2229 = vld [vmem:[%s696 + $0x2da] sm:$0xff]
  %v2230 = vld [vmem:[%s696 + $0x2ea] sm:$0xff]
  %v2231 = vld [vmem:[%s696 + $0x2f2] sm:$0xff]
  %v2232 = vld [vmem:[%s696 + $0x302] sm:$0xff]
  %v2233 = vld [vmem:[%s696 + $0x30a] sm:$0xff]
  %v2234 = vld [vmem:[%s696 + $0x31a] sm:$0xff]
  %v2235 = vld [vmem:[%s696 + $0x322] sm:$0xff]
  %2300 = vrot.lane.b32.xlu0 %v2172, 32
  %v2301 = vpop.permute.xlu0 %2300
  %2302 = vrot.lane.b32.xlu0 %v2173, 32
  %v2303 = vpop.permute.xlu0 %2302
  %2304 = vrot.lane.b32.xlu0 %v2174, 32
  %v2305 = vpop.permute.xlu0 %2304
  %2306 = vrot.lane.b32.xlu0 %v2175, 32
  %v2307 = vpop.permute.xlu0 %2306
  %2308 = vrot.lane.b32.xlu0 %v2176, 32
  %v2309 = vpop.permute.xlu0 %2308
  %2310 = vrot.lane.b32.xlu0 %v2177, 32
  %v2311 = vpop.permute.xlu0 %2310
  %2312 = vrot.lane.b32.xlu0 %v2178, 32
  %v2313 = vpop.permute.xlu0 %2312
  %2314 = vrot.lane.b32.xlu0 %v2179, 32
  %v2315 = vpop.permute.xlu0 %2314
  %2316 = vrot.lane.b32.xlu0 %v2180, 32
  %v2317 = vpop.permute.xlu0 %2316
  %2318 = vrot.lane.b32.xlu0 %v2181, 32
  %v2319 = vpop.permute.xlu0 %2318
  %2320 = vrot.lane.b32.xlu0 %v2182, 32
  %v2321 = vpop.permute.xlu0 %2320
  %2322 = vrot.lane.b32.xlu0 %v2183, 32
  %v2323 = vpop.permute.xlu0 %2322
  %2324 = vrot.lane.b32.xlu0 %v2184, 32
  %v2325 = vpop.permute.xlu0 %2324
  %2326 = vrot.lane.b32.xlu0 %v2185, 32
  %v2327 = vpop.permute.xlu0 %2326
  %2328 = vrot.lane.b32.xlu0 %v2186, 32
  %v2329 = vpop.permute.xlu0 %2328
  %2330 = vrot.lane.b32.xlu0 %v2187, 32
  %v2331 = vpop.permute.xlu0 %2330
  %2332 = vrot.lane.b32.xlu0 %v2188, 32
  %v2333 = vpop.permute.xlu0 %2332
  %2334 = vrot.lane.b32.xlu0 %v2189, 32
  %v2335 = vpop.permute.xlu0 %2334
  %2336 = vrot.lane.b32.xlu0 %v2190, 32
  %v2337 = vpop.permute.xlu0 %2336
  %2338 = vrot.lane.b32.xlu0 %v2191, 32
  %v2339 = vpop.permute.xlu0 %2338
  %2340 = vrot.lane.b32.xlu0 %v2192, 32
  %v2341 = vpop.permute.xlu0 %2340
  %2342 = vrot.lane.b32.xlu0 %v2193, 32
  %v2343 = vpop.permute.xlu0 %2342
  %2344 = vrot.lane.b32.xlu0 %v2194, 32
  %v2345 = vpop.permute.xlu0 %2344
  %2346 = vrot.lane.b32.xlu0 %v2195, 32
  %v2347 = vpop.permute.xlu0 %2346
  %2348 = vrot.lane.b32.xlu0 %v2196, 32
  %v2349 = vpop.permute.xlu0 %2348
  %2350 = vrot.lane.b32.xlu0 %v2197, 32
  %v2351 = vpop.permute.xlu0 %2350
  %2352 = vrot.lane.b32.xlu0 %v2198, 32
  %v2353 = vpop.permute.xlu0 %2352
  %2354 = vrot.lane.b32.xlu0 %v2199, 32
  %v2355 = vpop.permute.xlu0 %2354
  %2356 = vrot.lane.b32.xlu0 %v2200, 32
  %v2357 = vpop.permute.xlu0 %2356
  %2358 = vrot.lane.b32.xlu0 %v2201, 32
  %v2359 = vpop.permute.xlu0 %2358
  %2360 = vrot.lane.b32.xlu0 %v2202, 32
  %v2361 = vpop.permute.xlu0 %2360
  %2362 = vrot.lane.b32.xlu0 %v2203, 32
  %v2363 = vpop.permute.xlu0 %2362
  %2364 = vrot.lane.b32.xlu0 %v2204, 32
  %v2365 = vpop.permute.xlu0 %2364
  %2366 = vrot.lane.b32.xlu0 %v2205, 32
  %v2367 = vpop.permute.xlu0 %2366
  %2368 = vrot.lane.b32.xlu0 %v2206, 32
  %v2369 = vpop.permute.xlu0 %2368
  %2370 = vrot.lane.b32.xlu0 %v2207, 32
  %v2371 = vpop.permute.xlu0 %2370
  %2372 = vrot.lane.b32.xlu0 %v2208, 32
  %v2373 = vpop.permute.xlu0 %2372
  %2374 = vrot.lane.b32.xlu0 %v2209, 32
  %v2375 = vpop.permute.xlu0 %2374
  %2376 = vrot.lane.b32.xlu0 %v2210, 32
  %v2377 = vpop.permute.xlu0 %2376
  %2378 = vrot.lane.b32.xlu0 %v2211, 32
  %v2379 = vpop.permute.xlu0 %2378
  %2380 = vrot.lane.b32.xlu0 %v2212, 32
  %v2381 = vpop.permute.xlu0 %2380
  %2382 = vrot.lane.b32.xlu0 %v2213, 32
  %v2383 = vpop.permute.xlu0 %2382
  %2384 = vrot.lane.b32.xlu0 %v2214, 32
  %v2385 = vpop.permute.xlu0 %2384
  %2386 = vrot.lane.b32.xlu0 %v2215, 32
  %v2387 = vpop.permute.xlu0 %2386
  %2388 = vrot.lane.b32.xlu0 %v2216, 32
  %v2389 = vpop.permute.xlu0 %2388
  %2390 = vrot.lane.b32.xlu0 %v2217, 32
  %v2391 = vpop.permute.xlu0 %2390
  %2392 = vrot.lane.b32.xlu0 %v2218, 32
  %v2393 = vpop.permute.xlu0 %2392
  %2394 = vrot.lane.b32.xlu0 %v2219, 32
  %v2395 = vpop.permute.xlu0 %2394
  %2396 = vrot.lane.b32.xlu0 %v2220, 32
  %v2397 = vpop.permute.xlu0 %2396
  %2398 = vrot.lane.b32.xlu0 %v2221, 32
  %v2399 = vpop.permute.xlu0 %2398
  %2400 = vrot.lane.b32.xlu0 %v2222, 32
  %v2401 = vpop.permute.xlu0 %2400
  %2402 = vrot.lane.b32.xlu0 %v2223, 32
  %v2403 = vpop.permute.xlu0 %2402
  %2404 = vrot.lane.b32.xlu0 %v2224, 32
  %v2405 = vpop.permute.xlu0 %2404
  %2406 = vrot.lane.b32.xlu0 %v2225, 32
  %v2407 = vpop.permute.xlu0 %2406
  %2408 = vrot.lane.b32.xlu0 %v2226, 32
  %v2409 = vpop.permute.xlu0 %2408
  %2410 = vrot.lane.b32.xlu0 %v2227, 32
  %v2411 = vpop.permute.xlu0 %2410
  %2412 = vrot.lane.b32.xlu0 %v2228, 32
  %v2413 = vpop.permute.xlu0 %2412
  %2414 = vrot.lane.b32.xlu0 %v2229, 32
  %v2415 = vpop.permute.xlu0 %2414
  %2416 = vrot.lane.b32.xlu0 %v2230, 32
  %v2417 = vpop.permute.xlu0 %2416
  %2418 = vrot.lane.b32.xlu0 %v2231, 32
  %v2419 = vpop.permute.xlu0 %2418
  %2420 = vrot.lane.b32.xlu0 %v2232, 32
  %v2421 = vpop.permute.xlu0 %2420
  %2422 = vrot.lane.b32.xlu0 %v2233, 32
  %v2423 = vpop.permute.xlu0 %2422
  %2424 = vrot.lane.b32.xlu0 %v2234, 32
  %v2425 = vpop.permute.xlu0 %2424
  %2426 = vrot.lane.b32.xlu0 %v2235, 32
  %v2427 = vpop.permute.xlu0 %2426
  %2492 = vst.msk [vmem:[#allocation3 + $0x8] sm:$0xff] %vm1209, %v2301
  %2493 = vst.msk [vmem:[#allocation3 + $0x20] sm:$0xff] %vm1209, %v2303
  %2494 = vst.msk [vmem:[#allocation3 + $0x38] sm:$0xff] %vm1209, %v2305
  %2495 = vst.msk [vmem:[#allocation3 + $0x50] sm:$0xff] %vm1209, %v2307
  %2496 = vst.msk [vmem:[#allocation3 + $0x68] sm:$0xff] %vm1209, %v2309
  %2497 = vst.msk [vmem:[#allocation3 + $0x80] sm:$0xff] %vm1209, %v2311
  %2498 = vst.msk [vmem:[#allocation3 + $0x98] sm:$0xff] %vm1209, %v2313
  %2499 = vst.msk [vmem:[#allocation3 + $0xb0] sm:$0xff] %vm1209, %v2315
  %2500 = vst.msk [vmem:[#allocation3 + $0xc8] sm:$0xff] %vm1209, %v2317
  %2501 = vst.msk [vmem:[#allocation3 + $0xe0] sm:$0xff] %vm1209, %v2319
  %2502 = vst.msk [vmem:[#allocation3 + $0xf8] sm:$0xff] %vm1209, %v2321
  %2503 = vst.msk [vmem:[#allocation3 + $0x110] sm:$0xff] %vm1209, %v2323
  %2504 = vst.msk [vmem:[#allocation3 + $0x128] sm:$0xff] %vm1209, %v2325
  %2505 = vst.msk [vmem:[#allocation3 + $0x140] sm:$0xff] %vm1209, %v2327
  %2506 = vst.msk [vmem:[#allocation3 + $0x158] sm:$0xff] %vm1209, %v2329
  %2507 = vst.msk [vmem:[#allocation3 + $0x170] sm:$0xff] %vm1209, %v2331
  %2508 = vst.msk [vmem:[#allocation3 + $0x188] sm:$0xff] %vm1209, %v2333
  %2509 = vst.msk [vmem:[#allocation3 + $0x1a0] sm:$0xff] %vm1209, %v2335
  %2510 = vst.msk [vmem:[#allocation3 + $0x1b8] sm:$0xff] %vm1209, %v2337
  %2511 = vst.msk [vmem:[#allocation3 + $0x1d0] sm:$0xff] %vm1209, %v2339
  %2512 = vst.msk [vmem:[#allocation3 + $0x1e8] sm:$0xff] %vm1209, %v2341
  %2513 = vst.msk [vmem:[#allocation3 + $0x200] sm:$0xff] %vm1209, %v2343
  %2514 = vst.msk [vmem:[#allocation3 + $0x218] sm:$0xff] %vm1209, %v2345
  %2515 = vst.msk [vmem:[#allocation3 + $0x230] sm:$0xff] %vm1209, %v2347
  %2516 = vst.msk [vmem:[#allocation3 + $0x248] sm:$0xff] %vm1209, %v2349
  %2517 = vst.msk [vmem:[#allocation3 + $0x260] sm:$0xff] %vm1209, %v2351
  %2518 = vst.msk [vmem:[#allocation3 + $0x278] sm:$0xff] %vm1209, %v2353
  %2519 = vst.msk [vmem:[#allocation3 + $0x290] sm:$0xff] %vm1209, %v2355
  %2520 = vst.msk [vmem:[#allocation3 + $0x2a8] sm:$0xff] %vm1209, %v2357
  %2521 = vst.msk [vmem:[#allocation3 + $0x2c0] sm:$0xff] %vm1209, %v2359
  %2522 = vst.msk [vmem:[#allocation3 + $0x2d8] sm:$0xff] %vm1209, %v2361
  %2523 = vst.msk [vmem:[#allocation3 + $0x2f0] sm:$0xff] %vm1209, %v2363
  %2524 = vst.msk [vmem:[#allocation3 + $0x308] sm:$0xff] %vm1209, %v2365
  %2525 = vst.msk [vmem:[#allocation3 + $0x320] sm:$0xff] %vm1209, %v2367
  %2526 = vst.msk [vmem:[#allocation3 + $0x338] sm:$0xff] %vm1209, %v2369
  %2527 = vst.msk [vmem:[#allocation3 + $0x350] sm:$0xff] %vm1209, %v2371
  %2528 = vst.msk [vmem:[#allocation3 + $0x368] sm:$0xff] %vm1209, %v2373
  %2529 = vst.msk [vmem:[#allocation3 + $0x380] sm:$0xff] %vm1209, %v2375
  %2530 = vst.msk [vmem:[#allocation3 + $0x398] sm:$0xff] %vm1209, %v2377
  %2531 = vst.msk [vmem:[#allocation3 + $0x3b0] sm:$0xff] %vm1209, %v2379
  %2532 = vst.msk [vmem:[#allocation3 + $0x3c8] sm:$0xff] %vm1209, %v2381
  %2533 = vst.msk [vmem:[#allocation3 + $0x3e0] sm:$0xff] %vm1209, %v2383
  %2534 = vst.msk [vmem:[#allocation3 + $0x3f8] sm:$0xff] %vm1209, %v2385
  %2535 = vst.msk [vmem:[#allocation3 + $0x410] sm:$0xff] %vm1209, %v2387
  %2536 = vst.msk [vmem:[#allocation3 + $0x428] sm:$0xff] %vm1209, %v2389
  %2537 = vst.msk [vmem:[#allocation3 + $0x440] sm:$0xff] %vm1209, %v2391
  %2538 = vst.msk [vmem:[#allocation3 + $0x458] sm:$0xff] %vm1209, %v2393
  %2539 = vst.msk [vmem:[#allocation3 + $0x470] sm:$0xff] %vm1209, %v2395
  %2540 = vst.msk [vmem:[#allocation3 + $0x488] sm:$0xff] %vm1209, %v2397
  %2541 = vst.msk [vmem:[#allocation3 + $0x4a0] sm:$0xff] %vm1209, %v2399
  %2542 = vst.msk [vmem:[#allocation3 + $0x4b8] sm:$0xff] %vm1209, %v2401
  %2543 = vst.msk [vmem:[#allocation3 + $0x4d0] sm:$0xff] %vm1209, %v2403
  %2544 = vst.msk [vmem:[#allocation3 + $0x4e8] sm:$0xff] %vm1209, %v2405
  %2545 = vst.msk [vmem:[#allocation3 + $0x500] sm:$0xff] %vm1209, %v2407
  %2546 = vst.msk [vmem:[#allocation3 + $0x518] sm:$0xff] %vm1209, %v2409
  %2547 = vst.msk [vmem:[#allocation3 + $0x530] sm:$0xff] %vm1209, %v2411
  %2548 = vst.msk [vmem:[#allocation3 + $0x548] sm:$0xff] %vm1209, %v2413
  %2549 = vst.msk [vmem:[#allocation3 + $0x560] sm:$0xff] %vm1209, %v2415
  %2550 = vst.msk [vmem:[#allocation3 + $0x578] sm:$0xff] %vm1209, %v2417
  %2551 = vst.msk [vmem:[#allocation3 + $0x590] sm:$0xff] %vm1209, %v2419
  %2552 = vst.msk [vmem:[#allocation3 + $0x5a8] sm:$0xff] %vm1209, %v2421
  %2553 = vst.msk [vmem:[#allocation3 + $0x5c0] sm:$0xff] %vm1209, %v2423
  %2554 = vst.msk [vmem:[#allocation3 + $0x5d8] sm:$0xff] %vm1209, %v2425
  %2555 = vst.msk [vmem:[#allocation3 + $0x5f0] sm:$0xff] %vm1209, %v2427
  %s2556 = scalar_lea.vmem [#allocation2], 48
  %v2557 = vld [vmem:[%s2556] sm:$0xff]
  %v2558 = vld [vmem:[%s2556 + $0x8] sm:$0xff]
  %v2559 = vld [vmem:[%s2556 + $0x18] sm:$0xff]
  %v2560 = vld [vmem:[%s2556 + $0x20] sm:$0xff]
  %v2561 = vld [vmem:[%s2556 + $0x30] sm:$0xff]
  %v2562 = vld [vmem:[%s2556 + $0x38] sm:$0xff]
  %v2563 = vld [vmem:[%s2556 + $0x48] sm:$0xff]
  %v2564 = vld [vmem:[%s2556 + $0x50] sm:$0xff]
  %v2565 = vld [vmem:[%s2556 + $0x60] sm:$0xff]
  %v2566 = vld [vmem:[%s2556 + $0x68] sm:$0xff]
  %v2567 = vld [vmem:[%s2556 + $0x78] sm:$0xff]
  %v2568 = vld [vmem:[%s2556 + $0x80] sm:$0xff]
  %v2569 = vld [vmem:[%s2556 + $0x90] sm:$0xff]
  %v2570 = vld [vmem:[%s2556 + $0x98] sm:$0xff]
  %v2571 = vld [vmem:[%s2556 + $0xa8] sm:$0xff]
  %v2572 = vld [vmem:[%s2556 + $0xb0] sm:$0xff]
  %v2573 = vld [vmem:[%s2556 + $0xc0] sm:$0xff]
  %v2574 = vld [vmem:[%s2556 + $0xc8] sm:$0xff]
  %v2575 = vld [vmem:[%s2556 + $0xd8] sm:$0xff]
  %v2576 = vld [vmem:[%s2556 + $0xe0] sm:$0xff]
  %v2577 = vld [vmem:[%s2556 + $0xf0] sm:$0xff]
  %v2578 = vld [vmem:[%s2556 + $0xf8] sm:$0xff]
  %v2579 = vld [vmem:[%s2556 + $0x108] sm:$0xff]
  %v2580 = vld [vmem:[%s2556 + $0x110] sm:$0xff]
  %v2581 = vld [vmem:[%s2556 + $0x120] sm:$0xff]
  %v2582 = vld [vmem:[%s2556 + $0x128] sm:$0xff]
  %v2583 = vld [vmem:[%s2556 + $0x138] sm:$0xff]
  %v2584 = vld [vmem:[%s2556 + $0x140] sm:$0xff]
  %v2585 = vld [vmem:[%s2556 + $0x150] sm:$0xff]
  %v2586 = vld [vmem:[%s2556 + $0x158] sm:$0xff]
  %v2587 = vld [vmem:[%s2556 + $0x168] sm:$0xff]
  %v2588 = vld [vmem:[%s2556 + $0x170] sm:$0xff]
  %v2589 = vld [vmem:[%s2556 + $0x1b0] sm:$0xff]
  %v2590 = vld [vmem:[%s2556 + $0x1b8] sm:$0xff]
  %v2591 = vld [vmem:[%s2556 + $0x1c8] sm:$0xff]
  %v2592 = vld [vmem:[%s2556 + $0x1d0] sm:$0xff]
  %v2593 = vld [vmem:[%s2556 + $0x1e0] sm:$0xff]
  %v2594 = vld [vmem:[%s2556 + $0x1e8] sm:$0xff]
  %v2595 = vld [vmem:[%s2556 + $0x1f8] sm:$0xff]
  %v2596 = vld [vmem:[%s2556 + $0x200] sm:$0xff]
  %v2597 = vld [vmem:[%s2556 + $0x210] sm:$0xff]
  %v2598 = vld [vmem:[%s2556 + $0x218] sm:$0xff]
  %v2599 = vld [vmem:[%s2556 + $0x228] sm:$0xff]
  %v2600 = vld [vmem:[%s2556 + $0x230] sm:$0xff]
  %v2601 = vld [vmem:[%s2556 + $0x240] sm:$0xff]
  %v2602 = vld [vmem:[%s2556 + $0x248] sm:$0xff]
  %v2603 = vld [vmem:[%s2556 + $0x258] sm:$0xff]
  %v2604 = vld [vmem:[%s2556 + $0x260] sm:$0xff]
  %v2605 = vld [vmem:[%s2556 + $0x270] sm:$0xff]
  %v2606 = vld [vmem:[%s2556 + $0x278] sm:$0xff]
  %v2607 = vld [vmem:[%s2556 + $0x288] sm:$0xff]
  %v2608 = vld [vmem:[%s2556 + $0x290] sm:$0xff]
  %v2609 = vld [vmem:[%s2556 + $0x2a0] sm:$0xff]
  %v2610 = vld [vmem:[%s2556 + $0x2a8] sm:$0xff]
  %v2611 = vld [vmem:[%s2556 + $0x2b8] sm:$0xff]
  %v2612 = vld [vmem:[%s2556 + $0x2c0] sm:$0xff]
  %v2613 = vld [vmem:[%s2556 + $0x2d0] sm:$0xff]
  %v2614 = vld [vmem:[%s2556 + $0x2d8] sm:$0xff]
  %v2615 = vld [vmem:[%s2556 + $0x2e8] sm:$0xff]
  %v2616 = vld [vmem:[%s2556 + $0x2f0] sm:$0xff]
  %v2617 = vld [vmem:[%s2556 + $0x300] sm:$0xff]
  %v2618 = vld [vmem:[%s2556 + $0x308] sm:$0xff]
  %v2619 = vld [vmem:[%s2556 + $0x318] sm:$0xff]
  %v2620 = vld [vmem:[%s2556 + $0x320] sm:$0xff]
  %2685 = vrot.lane.b32.xlu0 %v2557, 64
  %v2686 = vpop.permute.xlu0 %2685
  %2687 = vrot.lane.b32.xlu0 %v2558, 64
  %v2688 = vpop.permute.xlu0 %2687
  %2689 = vrot.lane.b32.xlu0 %v2559, 64
  %v2690 = vpop.permute.xlu0 %2689
  %2691 = vrot.lane.b32.xlu0 %v2560, 64
  %v2692 = vpop.permute.xlu0 %2691
  %2693 = vrot.lane.b32.xlu0 %v2561, 64
  %v2694 = vpop.permute.xlu0 %2693
  %2695 = vrot.lane.b32.xlu0 %v2562, 64
  %v2696 = vpop.permute.xlu0 %2695
  %2697 = vrot.lane.b32.xlu0 %v2563, 64
  %v2698 = vpop.permute.xlu0 %2697
  %2699 = vrot.lane.b32.xlu0 %v2564, 64
  %v2700 = vpop.permute.xlu0 %2699
  %2701 = vrot.lane.b32.xlu0 %v2565, 64
  %v2702 = vpop.permute.xlu0 %2701
  %2703 = vrot.lane.b32.xlu0 %v2566, 64
  %v2704 = vpop.permute.xlu0 %2703
  %2705 = vrot.lane.b32.xlu0 %v2567, 64
  %v2706 = vpop.permute.xlu0 %2705
  %2707 = vrot.lane.b32.xlu0 %v2568, 64
  %v2708 = vpop.permute.xlu0 %2707
  %2709 = vrot.lane.b32.xlu0 %v2569, 64
  %v2710 = vpop.permute.xlu0 %2709
  %2711 = vrot.lane.b32.xlu0 %v2570, 64
  %v2712 = vpop.permute.xlu0 %2711
  %2713 = vrot.lane.b32.xlu0 %v2571, 64
  %v2714 = vpop.permute.xlu0 %2713
  %2715 = vrot.lane.b32.xlu0 %v2572, 64
  %v2716 = vpop.permute.xlu0 %2715
  %2717 = vrot.lane.b32.xlu0 %v2573, 64
  %v2718 = vpop.permute.xlu0 %2717
  %2719 = vrot.lane.b32.xlu0 %v2574, 64
  %v2720 = vpop.permute.xlu0 %2719
  %2721 = vrot.lane.b32.xlu0 %v2575, 64
  %v2722 = vpop.permute.xlu0 %2721
  %2723 = vrot.lane.b32.xlu0 %v2576, 64
  %v2724 = vpop.permute.xlu0 %2723
  %2725 = vrot.lane.b32.xlu0 %v2577, 64
  %v2726 = vpop.permute.xlu0 %2725
  %2727 = vrot.lane.b32.xlu0 %v2578, 64
  %v2728 = vpop.permute.xlu0 %2727
  %2729 = vrot.lane.b32.xlu0 %v2579, 64
  %v2730 = vpop.permute.xlu0 %2729
  %2731 = vrot.lane.b32.xlu0 %v2580, 64
  %v2732 = vpop.permute.xlu0 %2731
  %2733 = vrot.lane.b32.xlu0 %v2581, 64
  %v2734 = vpop.permute.xlu0 %2733
  %2735 = vrot.lane.b32.xlu0 %v2582, 64
  %v2736 = vpop.permute.xlu0 %2735
  %2737 = vrot.lane.b32.xlu0 %v2583, 64
  %v2738 = vpop.permute.xlu0 %2737
  %2739 = vrot.lane.b32.xlu0 %v2584, 64
  %v2740 = vpop.permute.xlu0 %2739
  %2741 = vrot.lane.b32.xlu0 %v2585, 64
  %v2742 = vpop.permute.xlu0 %2741
  %2743 = vrot.lane.b32.xlu0 %v2586, 64
  %v2744 = vpop.permute.xlu0 %2743
  %2745 = vrot.lane.b32.xlu0 %v2587, 64
  %v2746 = vpop.permute.xlu0 %2745
  %2747 = vrot.lane.b32.xlu0 %v2588, 64
  %v2748 = vpop.permute.xlu0 %2747
  %2749 = vrot.lane.b32.xlu0 %v2589, 64
  %v2750 = vpop.permute.xlu0 %2749
  %2751 = vrot.lane.b32.xlu0 %v2590, 64
  %v2752 = vpop.permute.xlu0 %2751
  %2753 = vrot.lane.b32.xlu0 %v2591, 64
  %v2754 = vpop.permute.xlu0 %2753
  %2755 = vrot.lane.b32.xlu0 %v2592, 64
  %v2756 = vpop.permute.xlu0 %2755
  %2757 = vrot.lane.b32.xlu0 %v2593, 64
  %v2758 = vpop.permute.xlu0 %2757
  %2759 = vrot.lane.b32.xlu0 %v2594, 64
  %v2760 = vpop.permute.xlu0 %2759
  %2761 = vrot.lane.b32.xlu0 %v2595, 64
  %v2762 = vpop.permute.xlu0 %2761
  %2763 = vrot.lane.b32.xlu0 %v2596, 64
  %v2764 = vpop.permute.xlu0 %2763
  %2765 = vrot.lane.b32.xlu0 %v2597, 64
  %v2766 = vpop.permute.xlu0 %2765
  %2767 = vrot.lane.b32.xlu0 %v2598, 64
  %v2768 = vpop.permute.xlu0 %2767
  %2769 = vrot.lane.b32.xlu0 %v2599, 64
  %v2770 = vpop.permute.xlu0 %2769
  %2771 = vrot.lane.b32.xlu0 %v2600, 64
  %v2772 = vpop.permute.xlu0 %2771
  %2773 = vrot.lane.b32.xlu0 %v2601, 64
  %v2774 = vpop.permute.xlu0 %2773
  %2775 = vrot.lane.b32.xlu0 %v2602, 64
  %v2776 = vpop.permute.xlu0 %2775
  %2777 = vrot.lane.b32.xlu0 %v2603, 64
  %v2778 = vpop.permute.xlu0 %2777
  %2779 = vrot.lane.b32.xlu0 %v2604, 64
  %v2780 = vpop.permute.xlu0 %2779
  %2781 = vrot.lane.b32.xlu0 %v2605, 64
  %v2782 = vpop.permute.xlu0 %2781
  %2783 = vrot.lane.b32.xlu0 %v2606, 64
  %v2784 = vpop.permute.xlu0 %2783
  %2785 = vrot.lane.b32.xlu0 %v2607, 64
  %v2786 = vpop.permute.xlu0 %2785
  %2787 = vrot.lane.b32.xlu0 %v2608, 64
  %v2788 = vpop.permute.xlu0 %2787
  %2789 = vrot.lane.b32.xlu0 %v2609, 64
  %v2790 = vpop.permute.xlu0 %2789
  %2791 = vrot.lane.b32.xlu0 %v2610, 64
  %v2792 = vpop.permute.xlu0 %2791
  %2793 = vrot.lane.b32.xlu0 %v2611, 64
  %v2794 = vpop.permute.xlu0 %2793
  %2795 = vrot.lane.b32.xlu0 %v2612, 64
  %v2796 = vpop.permute.xlu0 %2795
  %2797 = vrot.lane.b32.xlu0 %v2613, 64
  %v2798 = vpop.permute.xlu0 %2797
  %2799 = vrot.lane.b32.xlu0 %v2614, 64
  %v2800 = vpop.permute.xlu0 %2799
  %2801 = vrot.lane.b32.xlu0 %v2615, 64
  %v2802 = vpop.permute.xlu0 %2801
  %2803 = vrot.lane.b32.xlu0 %v2616, 64
  %v2804 = vpop.permute.xlu0 %2803
  %2805 = vrot.lane.b32.xlu0 %v2617, 64
  %v2806 = vpop.permute.xlu0 %2805
  %2807 = vrot.lane.b32.xlu0 %v2618, 64
  %v2808 = vpop.permute.xlu0 %2807
  %2809 = vrot.lane.b32.xlu0 %v2619, 64
  %v2810 = vpop.permute.xlu0 %2809
  %2811 = vrot.lane.b32.xlu0 %v2620, 64
  %v2812 = vpop.permute.xlu0 %2811
  %2877 = vst.msk [vmem:[#allocation3 + $0x8] sm:$0xff] %vm1594, %v2686
  %2878 = vst.msk [vmem:[#allocation3 + $0x20] sm:$0xff] %vm1594, %v2688
  %2879 = vst.msk [vmem:[#allocation3 + $0x38] sm:$0xff] %vm1594, %v2690
  %2880 = vst.msk [vmem:[#allocation3 + $0x50] sm:$0xff] %vm1594, %v2692
  %2881 = vst.msk [vmem:[#allocation3 + $0x68] sm:$0xff] %vm1594, %v2694
  %2882 = vst.msk [vmem:[#allocation3 + $0x80] sm:$0xff] %vm1594, %v2696
  %2883 = vst.msk [vmem:[#allocation3 + $0x98] sm:$0xff] %vm1594, %v2698
  %2884 = vst.msk [vmem:[#allocation3 + $0xb0] sm:$0xff] %vm1594, %v2700
  %2885 = vst.msk [vmem:[#allocation3 + $0xc8] sm:$0xff] %vm1594, %v2702
  %2886 = vst.msk [vmem:[#allocation3 + $0xe0] sm:$0xff] %vm1594, %v2704
  %2887 = vst.msk [vmem:[#allocation3 + $0xf8] sm:$0xff] %vm1594, %v2706
  %2888 = vst.msk [vmem:[#allocation3 + $0x110] sm:$0xff] %vm1594, %v2708
  %2889 = vst.msk [vmem:[#allocation3 + $0x128] sm:$0xff] %vm1594, %v2710
  %2890 = vst.msk [vmem:[#allocation3 + $0x140] sm:$0xff] %vm1594, %v2712
  %2891 = vst.msk [vmem:[#allocation3 + $0x158] sm:$0xff] %vm1594, %v2714
  %2892 = vst.msk [vmem:[#allocation3 + $0x170] sm:$0xff] %vm1594, %v2716
  %2893 = vst.msk [vmem:[#allocation3 + $0x188] sm:$0xff] %vm1594, %v2718
  %2894 = vst.msk [vmem:[#allocation3 + $0x1a0] sm:$0xff] %vm1594, %v2720
  %2895 = vst.msk [vmem:[#allocation3 + $0x1b8] sm:$0xff] %vm1594, %v2722
  %2896 = vst.msk [vmem:[#allocation3 + $0x1d0] sm:$0xff] %vm1594, %v2724
  %2897 = vst.msk [vmem:[#allocation3 + $0x1e8] sm:$0xff] %vm1594, %v2726
  %2898 = vst.msk [vmem:[#allocation3 + $0x200] sm:$0xff] %vm1594, %v2728
  %2899 = vst.msk [vmem:[#allocation3 + $0x218] sm:$0xff] %vm1594, %v2730
  %2900 = vst.msk [vmem:[#allocation3 + $0x230] sm:$0xff] %vm1594, %v2732
  %2901 = vst.msk [vmem:[#allocation3 + $0x248] sm:$0xff] %vm1594, %v2734
  %2902 = vst.msk [vmem:[#allocation3 + $0x260] sm:$0xff] %vm1594, %v2736
  %2903 = vst.msk [vmem:[#allocation3 + $0x278] sm:$0xff] %vm1594, %v2738
  %2904 = vst.msk [vmem:[#allocation3 + $0x290] sm:$0xff] %vm1594, %v2740
  %2905 = vst.msk [vmem:[#allocation3 + $0x2a8] sm:$0xff] %vm1594, %v2742
  %2906 = vst.msk [vmem:[#allocation3 + $0x2c0] sm:$0xff] %vm1594, %v2744
  %2907 = vst.msk [vmem:[#allocation3 + $0x2d8] sm:$0xff] %vm1594, %v2746
  %2908 = vst.msk [vmem:[#allocation3 + $0x2f0] sm:$0xff] %vm1594, %v2748
  %2909 = vst.msk [vmem:[#allocation3 + $0x308] sm:$0xff] %vm1594, %v2750
  %2910 = vst.msk [vmem:[#allocation3 + $0x320] sm:$0xff] %vm1594, %v2752
  %2911 = vst.msk [vmem:[#allocation3 + $0x338] sm:$0xff] %vm1594, %v2754
  %2912 = vst.msk [vmem:[#allocation3 + $0x350] sm:$0xff] %vm1594, %v2756
  %2913 = vst.msk [vmem:[#allocation3 + $0x368] sm:$0xff] %vm1594, %v2758
  %2914 = vst.msk [vmem:[#allocation3 + $0x380] sm:$0xff] %vm1594, %v2760
  %2915 = vst.msk [vmem:[#allocation3 + $0x398] sm:$0xff] %vm1594, %v2762
  %2916 = vst.msk [vmem:[#allocation3 + $0x3b0] sm:$0xff] %vm1594, %v2764
  %2917 = vst.msk [vmem:[#allocation3 + $0x3c8] sm:$0xff] %vm1594, %v2766
  %2918 = vst.msk [vmem:[#allocation3 + $0x3e0] sm:$0xff] %vm1594, %v2768
  %2919 = vst.msk [vmem:[#allocation3 + $0x3f8] sm:$0xff] %vm1594, %v2770
  %2920 = vst.msk [vmem:[#allocation3 + $0x410] sm:$0xff] %vm1594, %v2772
  %2921 = vst.msk [vmem:[#allocation3 + $0x428] sm:$0xff] %vm1594, %v2774
  %2922 = vst.msk [vmem:[#allocation3 + $0x440] sm:$0xff] %vm1594, %v2776
  %2923 = vst.msk [vmem:[#allocation3 + $0x458] sm:$0xff] %vm1594, %v2778
  %2924 = vst.msk [vmem:[#allocation3 + $0x470] sm:$0xff] %vm1594, %v2780
  %2925 = vst.msk [vmem:[#allocation3 + $0x488] sm:$0xff] %vm1594, %v2782
  %2926 = vst.msk [vmem:[#allocation3 + $0x4a0] sm:$0xff] %vm1594, %v2784
  %2927 = vst.msk [vmem:[#allocation3 + $0x4b8] sm:$0xff] %vm1594, %v2786
  %2928 = vst.msk [vmem:[#allocation3 + $0x4d0] sm:$0xff] %vm1594, %v2788
  %2929 = vst.msk [vmem:[#allocation3 + $0x4e8] sm:$0xff] %vm1594, %v2790
  %2930 = vst.msk [vmem:[#allocation3 + $0x500] sm:$0xff] %vm1594, %v2792
  %2931 = vst.msk [vmem:[#allocation3 + $0x518] sm:$0xff] %vm1594, %v2794
  %2932 = vst.msk [vmem:[#allocation3 + $0x530] sm:$0xff] %vm1594, %v2796
  %2933 = vst.msk [vmem:[#allocation3 + $0x548] sm:$0xff] %vm1594, %v2798
  %2934 = vst.msk [vmem:[#allocation3 + $0x560] sm:$0xff] %vm1594, %v2800
  %2935 = vst.msk [vmem:[#allocation3 + $0x578] sm:$0xff] %vm1594, %v2802
  %2936 = vst.msk [vmem:[#allocation3 + $0x590] sm:$0xff] %vm1594, %v2804
  %2937 = vst.msk [vmem:[#allocation3 + $0x5a8] sm:$0xff] %vm1594, %v2806
  %2938 = vst.msk [vmem:[#allocation3 + $0x5c0] sm:$0xff] %vm1594, %v2808
  %2939 = vst.msk [vmem:[#allocation3 + $0x5d8] sm:$0xff] %vm1594, %v2810
  %2940 = vst.msk [vmem:[#allocation3 + $0x5f0] sm:$0xff] %vm1594, %v2812
  %v2941 = vld [vmem:[%s2556 + $0x1] sm:$0xff]
  %v2942 = vld [vmem:[%s2556 + $0x9] sm:$0xff]
  %v2943 = vld [vmem:[%s2556 + $0x19] sm:$0xff]
  %v2944 = vld [vmem:[%s2556 + $0x21] sm:$0xff]
  %v2945 = vld [vmem:[%s2556 + $0x31] sm:$0xff]
  %v2946 = vld [vmem:[%s2556 + $0x39] sm:$0xff]
  %v2947 = vld [vmem:[%s2556 + $0x49] sm:$0xff]
  %v2948 = vld [vmem:[%s2556 + $0x51] sm:$0xff]
  %v2949 = vld [vmem:[%s2556 + $0x61] sm:$0xff]
  %v2950 = vld [vmem:[%s2556 + $0x69] sm:$0xff]
  %v2951 = vld [vmem:[%s2556 + $0x79] sm:$0xff]
  %v2952 = vld [vmem:[%s2556 + $0x81] sm:$0xff]
  %v2953 = vld [vmem:[%s2556 + $0x91] sm:$0xff]
  %v2954 = vld [vmem:[%s2556 + $0x99] sm:$0xff]
  %v2955 = vld [vmem:[%s2556 + $0xa9] sm:$0xff]
  %v2956 = vld [vmem:[%s2556 + $0xb1] sm:$0xff]
  %v2957 = vld [vmem:[%s2556 + $0xc1] sm:$0xff]
  %v2958 = vld [vmem:[%s2556 + $0xc9] sm:$0xff]
  %v2959 = vld [vmem:[%s2556 + $0xd9] sm:$0xff]
  %v2960 = vld [vmem:[%s2556 + $0xe1] sm:$0xff]
  %v2961 = vld [vmem:[%s2556 + $0xf1] sm:$0xff]
  %v2962 = vld [vmem:[%s2556 + $0xf9] sm:$0xff]
  %v2963 = vld [vmem:[%s2556 + $0x109] sm:$0xff]
  %v2964 = vld [vmem:[%s2556 + $0x111] sm:$0xff]
  %v2965 = vld [vmem:[%s2556 + $0x121] sm:$0xff]
  %v2966 = vld [vmem:[%s2556 + $0x129] sm:$0xff]
  %v2967 = vld [vmem:[%s2556 + $0x139] sm:$0xff]
  %v2968 = vld [vmem:[%s2556 + $0x141] sm:$0xff]
  %v2969 = vld [vmem:[%s2556 + $0x151] sm:$0xff]
  %v2970 = vld [vmem:[%s2556 + $0x159] sm:$0xff]
  %v2971 = vld [vmem:[%s2556 + $0x169] sm:$0xff]
  %v2972 = vld [vmem:[%s2556 + $0x171] sm:$0xff]
  %v2973 = vld [vmem:[%s2556 + $0x1b1] sm:$0xff]
  %v2974 = vld [vmem:[%s2556 + $0x1b9] sm:$0xff]
  %v2975 = vld [vmem:[%s2556 + $0x1c9] sm:$0xff]
  %v2976 = vld [vmem:[%s2556 + $0x1d1] sm:$0xff]
  %v2977 = vld [vmem:[%s2556 + $0x1e1] sm:$0xff]
  %v2978 = vld [vmem:[%s2556 + $0x1e9] sm:$0xff]
  %v2979 = vld [vmem:[%s2556 + $0x1f9] sm:$0xff]
  %v2980 = vld [vmem:[%s2556 + $0x201] sm:$0xff]
  %v2981 = vld [vmem:[%s2556 + $0x211] sm:$0xff]
  %v2982 = vld [vmem:[%s2556 + $0x219] sm:$0xff]
  %v2983 = vld [vmem:[%s2556 + $0x229] sm:$0xff]
  %v2984 = vld [vmem:[%s2556 + $0x231] sm:$0xff]
  %v2985 = vld [vmem:[%s2556 + $0x241] sm:$0xff]
  %v2986 = vld [vmem:[%s2556 + $0x249] sm:$0xff]
  %v2987 = vld [vmem:[%s2556 + $0x259] sm:$0xff]
  %v2988 = vld [vmem:[%s2556 + $0x261] sm:$0xff]
  %v2989 = vld [vmem:[%s2556 + $0x271] sm:$0xff]
  %v2990 = vld [vmem:[%s2556 + $0x279] sm:$0xff]
  %v2991 = vld [vmem:[%s2556 + $0x289] sm:$0xff]
  %v2992 = vld [vmem:[%s2556 + $0x291] sm:$0xff]
  %v2993 = vld [vmem:[%s2556 + $0x2a1] sm:$0xff]
  %v2994 = vld [vmem:[%s2556 + $0x2a9] sm:$0xff]
  %v2995 = vld [vmem:[%s2556 + $0x2b9] sm:$0xff]
  %v2996 = vld [vmem:[%s2556 + $0x2c1] sm:$0xff]
  %v2997 = vld [vmem:[%s2556 + $0x2d1] sm:$0xff]
  %v2998 = vld [vmem:[%s2556 + $0x2d9] sm:$0xff]
  %v2999 = vld [vmem:[%s2556 + $0x2e9] sm:$0xff]
  %v3000 = vld [vmem:[%s2556 + $0x2f1] sm:$0xff]
  %v3001 = vld [vmem:[%s2556 + $0x301] sm:$0xff]
  %v3002 = vld [vmem:[%s2556 + $0x309] sm:$0xff]
  %v3003 = vld [vmem:[%s2556 + $0x319] sm:$0xff]
  %v3004 = vld [vmem:[%s2556 + $0x321] sm:$0xff]
  %3069 = vrot.lane.b32.xlu0 %v2941, 96
  %v3070 = vpop.permute.xlu0 %3069
  %3071 = vrot.lane.b32.xlu0 %v2942, 96
  %v3072 = vpop.permute.xlu0 %3071
  %3073 = vrot.lane.b32.xlu0 %v2943, 96
  %v3074 = vpop.permute.xlu0 %3073
  %3075 = vrot.lane.b32.xlu0 %v2944, 96
  %v3076 = vpop.permute.xlu0 %3075
  %3077 = vrot.lane.b32.xlu0 %v2945, 96
  %v3078 = vpop.permute.xlu0 %3077
  %3079 = vrot.lane.b32.xlu0 %v2946, 96
  %v3080 = vpop.permute.xlu0 %3079
  %3081 = vrot.lane.b32.xlu0 %v2947, 96
  %v3082 = vpop.permute.xlu0 %3081
  %3083 = vrot.lane.b32.xlu0 %v2948, 96
  %v3084 = vpop.permute.xlu0 %3083
  %3085 = vrot.lane.b32.xlu0 %v2949, 96
  %v3086 = vpop.permute.xlu0 %3085
  %3087 = vrot.lane.b32.xlu0 %v2950, 96
  %v3088 = vpop.permute.xlu0 %3087
  %3089 = vrot.lane.b32.xlu0 %v2951, 96
  %v3090 = vpop.permute.xlu0 %3089
  %3091 = vrot.lane.b32.xlu0 %v2952, 96
  %v3092 = vpop.permute.xlu0 %3091
  %3093 = vrot.lane.b32.xlu0 %v2953, 96
  %v3094 = vpop.permute.xlu0 %3093
  %3095 = vrot.lane.b32.xlu0 %v2954, 96
  %v3096 = vpop.permute.xlu0 %3095
  %3097 = vrot.lane.b32.xlu0 %v2955, 96
  %v3098 = vpop.permute.xlu0 %3097
  %3099 = vrot.lane.b32.xlu0 %v2956, 96
  %v3100 = vpop.permute.xlu0 %3099
  %3101 = vrot.lane.b32.xlu0 %v2957, 96
  %v3102 = vpop.permute.xlu0 %3101
  %3103 = vrot.lane.b32.xlu0 %v2958, 96
  %v3104 = vpop.permute.xlu0 %3103
  %3105 = vrot.lane.b32.xlu0 %v2959, 96
  %v3106 = vpop.permute.xlu0 %3105
  %3107 = vrot.lane.b32.xlu0 %v2960, 96
  %v3108 = vpop.permute.xlu0 %3107
  %3109 = vrot.lane.b32.xlu0 %v2961, 96
  %v3110 = vpop.permute.xlu0 %3109
  %3111 = vrot.lane.b32.xlu0 %v2962, 96
  %v3112 = vpop.permute.xlu0 %3111
  %3113 = vrot.lane.b32.xlu0 %v2963, 96
  %v3114 = vpop.permute.xlu0 %3113
  %3115 = vrot.lane.b32.xlu0 %v2964, 96
  %v3116 = vpop.permute.xlu0 %3115
  %3117 = vrot.lane.b32.xlu0 %v2965, 96
  %v3118 = vpop.permute.xlu0 %3117
  %3119 = vrot.lane.b32.xlu0 %v2966, 96
  %v3120 = vpop.permute.xlu0 %3119
  %3121 = vrot.lane.b32.xlu0 %v2967, 96
  %v3122 = vpop.permute.xlu0 %3121
  %3123 = vrot.lane.b32.xlu0 %v2968, 96
  %v3124 = vpop.permute.xlu0 %3123
  %3125 = vrot.lane.b32.xlu0 %v2969, 96
  %v3126 = vpop.permute.xlu0 %3125
  %3127 = vrot.lane.b32.xlu0 %v2970, 96
  %v3128 = vpop.permute.xlu0 %3127
  %3129 = vrot.lane.b32.xlu0 %v2971, 96
  %v3130 = vpop.permute.xlu0 %3129
  %3131 = vrot.lane.b32.xlu0 %v2972, 96
  %v3132 = vpop.permute.xlu0 %3131
  %3133 = vrot.lane.b32.xlu0 %v2973, 96
  %v3134 = vpop.permute.xlu0 %3133
  %3135 = vrot.lane.b32.xlu0 %v2974, 96
  %v3136 = vpop.permute.xlu0 %3135
  %3137 = vrot.lane.b32.xlu0 %v2975, 96
  %v3138 = vpop.permute.xlu0 %3137
  %3139 = vrot.lane.b32.xlu0 %v2976, 96
  %v3140 = vpop.permute.xlu0 %3139
  %3141 = vrot.lane.b32.xlu0 %v2977, 96
  %v3142 = vpop.permute.xlu0 %3141
  %3143 = vrot.lane.b32.xlu0 %v2978, 96
  %v3144 = vpop.permute.xlu0 %3143
  %3145 = vrot.lane.b32.xlu0 %v2979, 96
  %v3146 = vpop.permute.xlu0 %3145
  %3147 = vrot.lane.b32.xlu0 %v2980, 96
  %v3148 = vpop.permute.xlu0 %3147
  %3149 = vrot.lane.b32.xlu0 %v2981, 96
  %v3150 = vpop.permute.xlu0 %3149
  %3151 = vrot.lane.b32.xlu0 %v2982, 96
  %v3152 = vpop.permute.xlu0 %3151
  %3153 = vrot.lane.b32.xlu0 %v2983, 96
  %v3154 = vpop.permute.xlu0 %3153
  %3155 = vrot.lane.b32.xlu0 %v2984, 96
  %v3156 = vpop.permute.xlu0 %3155
  %3157 = vrot.lane.b32.xlu0 %v2985, 96
  %v3158 = vpop.permute.xlu0 %3157
  %3159 = vrot.lane.b32.xlu0 %v2986, 96
  %v3160 = vpop.permute.xlu0 %3159
  %3161 = vrot.lane.b32.xlu0 %v2987, 96
  %v3162 = vpop.permute.xlu0 %3161
  %3163 = vrot.lane.b32.xlu0 %v2988, 96
  %v3164 = vpop.permute.xlu0 %3163
  %3165 = vrot.lane.b32.xlu0 %v2989, 96
  %v3166 = vpop.permute.xlu0 %3165
  %3167 = vrot.lane.b32.xlu0 %v2990, 96
  %v3168 = vpop.permute.xlu0 %3167
  %3169 = vrot.lane.b32.xlu0 %v2991, 96
  %v3170 = vpop.permute.xlu0 %3169
  %3171 = vrot.lane.b32.xlu0 %v2992, 96
  %v3172 = vpop.permute.xlu0 %3171
  %3173 = vrot.lane.b32.xlu0 %v2993, 96
  %v3174 = vpop.permute.xlu0 %3173
  %3175 = vrot.lane.b32.xlu0 %v2994, 96
  %v3176 = vpop.permute.xlu0 %3175
  %3177 = vrot.lane.b32.xlu0 %v2995, 96
  %v3178 = vpop.permute.xlu0 %3177
  %3179 = vrot.lane.b32.xlu0 %v2996, 96
  %v3180 = vpop.permute.xlu0 %3179
  %3181 = vrot.lane.b32.xlu0 %v2997, 96
  %v3182 = vpop.permute.xlu0 %3181
  %3183 = vrot.lane.b32.xlu0 %v2998, 96
  %v3184 = vpop.permute.xlu0 %3183
  %3185 = vrot.lane.b32.xlu0 %v2999, 96
  %v3186 = vpop.permute.xlu0 %3185
  %3187 = vrot.lane.b32.xlu0 %v3000, 96
  %v3188 = vpop.permute.xlu0 %3187
  %3189 = vrot.lane.b32.xlu0 %v3001, 96
  %v3190 = vpop.permute.xlu0 %3189
  %3191 = vrot.lane.b32.xlu0 %v3002, 96
  %v3192 = vpop.permute.xlu0 %3191
  %3193 = vrot.lane.b32.xlu0 %v3003, 96
  %v3194 = vpop.permute.xlu0 %3193
  %3195 = vrot.lane.b32.xlu0 %v3004, 96
  %v3196 = vpop.permute.xlu0 %3195
  %3261 = vst.msk [vmem:[#allocation3 + $0x8] sm:$0xff] %vm1979, %v3070
  %3262 = vst.msk [vmem:[#allocation3 + $0x20] sm:$0xff] %vm1979, %v3072
  %3263 = vst.msk [vmem:[#allocation3 + $0x38] sm:$0xff] %vm1979, %v3074
  %3264 = vst.msk [vmem:[#allocation3 + $0x50] sm:$0xff] %vm1979, %v3076
  %3265 = vst.msk [vmem:[#allocation3 + $0x68] sm:$0xff] %vm1979, %v3078
  %3266 = vst.msk [vmem:[#allocation3 + $0x80] sm:$0xff] %vm1979, %v3080
  %3267 = vst.msk [vmem:[#allocation3 + $0x98] sm:$0xff] %vm1979, %v3082
  %3268 = vst.msk [vmem:[#allocation3 + $0xb0] sm:$0xff] %vm1979, %v3084
  %3269 = vst.msk [vmem:[#allocation3 + $0xc8] sm:$0xff] %vm1979, %v3086
  %3270 = vst.msk [vmem:[#allocation3 + $0xe0] sm:$0xff] %vm1979, %v3088
  %3271 = vst.msk [vmem:[#allocation3 + $0xf8] sm:$0xff] %vm1979, %v3090
  %3272 = vst.msk [vmem:[#allocation3 + $0x110] sm:$0xff] %vm1979, %v3092
  %3273 = vst.msk [vmem:[#allocation3 + $0x128] sm:$0xff] %vm1979, %v3094
  %3274 = vst.msk [vmem:[#allocation3 + $0x140] sm:$0xff] %vm1979, %v3096
  %3275 = vst.msk [vmem:[#allocation3 + $0x158] sm:$0xff] %vm1979, %v3098
  %3276 = vst.msk [vmem:[#allocation3 + $0x170] sm:$0xff] %vm1979, %v3100
  %3277 = vst.msk [vmem:[#allocation3 + $0x188] sm:$0xff] %vm1979, %v3102
  %3278 = vst.msk [vmem:[#allocation3 + $0x1a0] sm:$0xff] %vm1979, %v3104
  %3279 = vst.msk [vmem:[#allocation3 + $0x1b8] sm:$0xff] %vm1979, %v3106
  %3280 = vst.msk [vmem:[#allocation3 + $0x1d0] sm:$0xff] %vm1979, %v3108
  %3281 = vst.msk [vmem:[#allocation3 + $0x1e8] sm:$0xff] %vm1979, %v3110
  %3282 = vst.msk [vmem:[#allocation3 + $0x200] sm:$0xff] %vm1979, %v3112
  %3283 = vst.msk [vmem:[#allocation3 + $0x218] sm:$0xff] %vm1979, %v3114
  %3284 = vst.msk [vmem:[#allocation3 + $0x230] sm:$0xff] %vm1979, %v3116
  %3285 = vst.msk [vmem:[#allocation3 + $0x248] sm:$0xff] %vm1979, %v3118
  %3286 = vst.msk [vmem:[#allocation3 + $0x260] sm:$0xff] %vm1979, %v3120
  %3287 = vst.msk [vmem:[#allocation3 + $0x278] sm:$0xff] %vm1979, %v3122
  %3288 = vst.msk [vmem:[#allocation3 + $0x290] sm:$0xff] %vm1979, %v3124
  %3289 = vst.msk [vmem:[#allocation3 + $0x2a8] sm:$0xff] %vm1979, %v3126
  %3290 = vst.msk [vmem:[#allocation3 + $0x2c0] sm:$0xff] %vm1979, %v3128
  %3291 = vst.msk [vmem:[#allocation3 + $0x2d8] sm:$0xff] %vm1979, %v3130
  %3292 = vst.msk [vmem:[#allocation3 + $0x2f0] sm:$0xff] %vm1979, %v3132
  %3293 = vst.msk [vmem:[#allocation3 + $0x308] sm:$0xff] %vm1979, %v3134
  %3294 = vst.msk [vmem:[#allocation3 + $0x320] sm:$0xff] %vm1979, %v3136
  %3295 = vst.msk [vmem:[#allocation3 + $0x338] sm:$0xff] %vm1979, %v3138
  %3296 = vst.msk [vmem:[#allocation3 + $0x350] sm:$0xff] %vm1979, %v3140
  %3297 = vst.msk [vmem:[#allocation3 + $0x368] sm:$0xff] %vm1979, %v3142
  %3298 = vst.msk [vmem:[#allocation3 + $0x380] sm:$0xff] %vm1979, %v3144
  %3299 = vst.msk [vmem:[#allocation3 + $0x398] sm:$0xff] %vm1979, %v3146
  %3300 = vst.msk [vmem:[#allocation3 + $0x3b0] sm:$0xff] %vm1979, %v3148
  %3301 = vst.msk [vmem:[#allocation3 + $0x3c8] sm:$0xff] %vm1979, %v3150
  %3302 = vst.msk [vmem:[#allocation3 + $0x3e0] sm:$0xff] %vm1979, %v3152
  %3303 = vst.msk [vmem:[#allocation3 + $0x3f8] sm:$0xff] %vm1979, %v3154
  %3304 = vst.msk [vmem:[#allocation3 + $0x410] sm:$0xff] %vm1979, %v3156
  %3305 = vst.msk [vmem:[#allocation3 + $0x428] sm:$0xff] %vm1979, %v3158
  %3306 = vst.msk [vmem:[#allocation3 + $0x440] sm:$0xff] %vm1979, %v3160
  %3307 = vst.msk [vmem:[#allocation3 + $0x458] sm:$0xff] %vm1979, %v3162
  %3308 = vst.msk [vmem:[#allocation3 + $0x470] sm:$0xff] %vm1979, %v3164
  %3309 = vst.msk [vmem:[#allocation3 + $0x488] sm:$0xff] %vm1979, %v3166
  %3310 = vst.msk [vmem:[#allocation3 + $0x4a0] sm:$0xff] %vm1979, %v3168
  %3311 = vst.msk [vmem:[#allocation3 + $0x4b8] sm:$0xff] %vm1979, %v3170
  %3312 = vst.msk [vmem:[#allocation3 + $0x4d0] sm:$0xff] %vm1979, %v3172
  %3313 = vst.msk [vmem:[#allocation3 + $0x4e8] sm:$0xff] %vm1979, %v3174
  %3314 = vst.msk [vmem:[#allocation3 + $0x500] sm:$0xff] %vm1979, %v3176
  %3315 = vst.msk [vmem:[#allocation3 + $0x518] sm:$0xff] %vm1979, %v3178
  %3316 = vst.msk [vmem:[#allocation3 + $0x530] sm:$0xff] %vm1979, %v3180
  %3317 = vst.msk [vmem:[#allocation3 + $0x548] sm:$0xff] %vm1979, %v3182
  %3318 = vst.msk [vmem:[#allocation3 + $0x560] sm:$0xff] %vm1979, %v3184
  %3319 = vst.msk [vmem:[#allocation3 + $0x578] sm:$0xff] %vm1979, %v3186
  %3320 = vst.msk [vmem:[#allocation3 + $0x590] sm:$0xff] %vm1979, %v3188
  %3321 = vst.msk [vmem:[#allocation3 + $0x5a8] sm:$0xff] %vm1979, %v3190
  %3322 = vst.msk [vmem:[#allocation3 + $0x5c0] sm:$0xff] %vm1979, %v3192
  %3323 = vst.msk [vmem:[#allocation3 + $0x5d8] sm:$0xff] %vm1979, %v3194
  %3324 = vst.msk [vmem:[#allocation3 + $0x5f0] sm:$0xff] %vm1979, %v3196
  %v3325 = vld [vmem:[%s2556 + $0x2] sm:$0xff]
  %v3326 = vld [vmem:[%s2556 + $0xa] sm:$0xff]
  %v3327 = vld [vmem:[%s2556 + $0x1a] sm:$0xff]
  %v3328 = vld [vmem:[%s2556 + $0x22] sm:$0xff]
  %v3329 = vld [vmem:[%s2556 + $0x32] sm:$0xff]
  %v3330 = vld [vmem:[%s2556 + $0x3a] sm:$0xff]
  %v3331 = vld [vmem:[%s2556 + $0x4a] sm:$0xff]
  %v3332 = vld [vmem:[%s2556 + $0x52] sm:$0xff]
  %v3333 = vld [vmem:[%s2556 + $0x62] sm:$0xff]
  %v3334 = vld [vmem:[%s2556 + $0x6a] sm:$0xff]
  %v3335 = vld [vmem:[%s2556 + $0x7a] sm:$0xff]
  %v3336 = vld [vmem:[%s2556 + $0x82] sm:$0xff]
  %v3337 = vld [vmem:[%s2556 + $0x92] sm:$0xff]
  %v3338 = vld [vmem:[%s2556 + $0x9a] sm:$0xff]
  %v3339 = vld [vmem:[%s2556 + $0xaa] sm:$0xff]
  %v3340 = vld [vmem:[%s2556 + $0xb2] sm:$0xff]
  %v3341 = vld [vmem:[%s2556 + $0xc2] sm:$0xff]
  %v3342 = vld [vmem:[%s2556 + $0xca] sm:$0xff]
  %v3343 = vld [vmem:[%s2556 + $0xda] sm:$0xff]
  %v3344 = vld [vmem:[%s2556 + $0xe2] sm:$0xff]
  %v3345 = vld [vmem:[%s2556 + $0xf2] sm:$0xff]
  %v3346 = vld [vmem:[%s2556 + $0xfa] sm:$0xff]
  %v3347 = vld [vmem:[%s2556 + $0x10a] sm:$0xff]
  %v3348 = vld [vmem:[%s2556 + $0x112] sm:$0xff]
  %v3349 = vld [vmem:[%s2556 + $0x122] sm:$0xff]
  %v3350 = vld [vmem:[%s2556 + $0x12a] sm:$0xff]
  %v3351 = vld [vmem:[%s2556 + $0x13a] sm:$0xff]
  %v3352 = vld [vmem:[%s2556 + $0x142] sm:$0xff]
  %v3353 = vld [vmem:[%s2556 + $0x152] sm:$0xff]
  %v3354 = vld [vmem:[%s2556 + $0x15a] sm:$0xff]
  %v3355 = vld [vmem:[%s2556 + $0x16a] sm:$0xff]
  %v3356 = vld [vmem:[%s2556 + $0x172] sm:$0xff]
  %v3357 = vld [vmem:[%s2556 + $0x1b2] sm:$0xff]
  %v3358 = vld [vmem:[%s2556 + $0x1ba] sm:$0xff]
  %v3359 = vld [vmem:[%s2556 + $0x1ca] sm:$0xff]
  %v3360 = vld [vmem:[%s2556 + $0x1d2] sm:$0xff]
  %v3361 = vld [vmem:[%s2556 + $0x1e2] sm:$0xff]
  %v3362 = vld [vmem:[%s2556 + $0x1ea] sm:$0xff]
  %v3363 = vld [vmem:[%s2556 + $0x1fa] sm:$0xff]
  %v3364 = vld [vmem:[%s2556 + $0x202] sm:$0xff]
  %v3365 = vld [vmem:[%s2556 + $0x212] sm:$0xff]
  %v3366 = vld [vmem:[%s2556 + $0x21a] sm:$0xff]
  %v3367 = vld [vmem:[%s2556 + $0x22a] sm:$0xff]
  %v3368 = vld [vmem:[%s2556 + $0x232] sm:$0xff]
  %v3369 = vld [vmem:[%s2556 + $0x242] sm:$0xff]
  %v3370 = vld [vmem:[%s2556 + $0x24a] sm:$0xff]
  %v3371 = vld [vmem:[%s2556 + $0x25a] sm:$0xff]
  %v3372 = vld [vmem:[%s2556 + $0x262] sm:$0xff]
  %v3373 = vld [vmem:[%s2556 + $0x272] sm:$0xff]
  %v3374 = vld [vmem:[%s2556 + $0x27a] sm:$0xff]
  %v3375 = vld [vmem:[%s2556 + $0x28a] sm:$0xff]
  %v3376 = vld [vmem:[%s2556 + $0x292] sm:$0xff]
  %v3377 = vld [vmem:[%s2556 + $0x2a2] sm:$0xff]
  %v3378 = vld [vmem:[%s2556 + $0x2aa] sm:$0xff]
  %v3379 = vld [vmem:[%s2556 + $0x2ba] sm:$0xff]
  %v3380 = vld [vmem:[%s2556 + $0x2c2] sm:$0xff]
  %v3381 = vld [vmem:[%s2556 + $0x2d2] sm:$0xff]
  %v3382 = vld [vmem:[%s2556 + $0x2da] sm:$0xff]
  %v3383 = vld [vmem:[%s2556 + $0x2ea] sm:$0xff]
  %v3384 = vld [vmem:[%s2556 + $0x2f2] sm:$0xff]
  %v3385 = vld [vmem:[%s2556 + $0x302] sm:$0xff]
  %v3386 = vld [vmem:[%s2556 + $0x30a] sm:$0xff]
  %v3387 = vld [vmem:[%s2556 + $0x31a] sm:$0xff]
  %v3388 = vld [vmem:[%s2556 + $0x322] sm:$0xff]
  %3389 = vst.msk [vmem:[#allocation3 + $0x10] sm:$0xff] %vm257, %v3325
  %3390 = vst.msk [vmem:[#allocation3 + $0x28] sm:$0xff] %vm257, %v3326
  %3391 = vst.msk [vmem:[#allocation3 + $0x40] sm:$0xff] %vm257, %v3327
  %3392 = vst.msk [vmem:[#allocation3 + $0x58] sm:$0xff] %vm257, %v3328
  %3393 = vst.msk [vmem:[#allocation3 + $0x70] sm:$0xff] %vm257, %v3329
  %3394 = vst.msk [vmem:[#allocation3 + $0x88] sm:$0xff] %vm257, %v3330
  %3395 = vst.msk [vmem:[#allocation3 + $0xa0] sm:$0xff] %vm257, %v3331
  %3396 = vst.msk [vmem:[#allocation3 + $0xb8] sm:$0xff] %vm257, %v3332
  %3397 = vst.msk [vmem:[#allocation3 + $0xd0] sm:$0xff] %vm257, %v3333
  %3398 = vst.msk [vmem:[#allocation3 + $0xe8] sm:$0xff] %vm257, %v3334
  %3399 = vst.msk [vmem:[#allocation3 + $0x100] sm:$0xff] %vm257, %v3335
  %3400 = vst.msk [vmem:[#allocation3 + $0x118] sm:$0xff] %vm257, %v3336
  %3401 = vst.msk [vmem:[#allocation3 + $0x130] sm:$0xff] %vm257, %v3337
  %3402 = vst.msk [vmem:[#allocation3 + $0x148] sm:$0xff] %vm257, %v3338
  %3403 = vst.msk [vmem:[#allocation3 + $0x160] sm:$0xff] %vm257, %v3339
  %3404 = vst.msk [vmem:[#allocation3 + $0x178] sm:$0xff] %vm257, %v3340
  %3405 = vst.msk [vmem:[#allocation3 + $0x190] sm:$0xff] %vm257, %v3341
  %3406 = vst.msk [vmem:[#allocation3 + $0x1a8] sm:$0xff] %vm257, %v3342
  %3407 = vst.msk [vmem:[#allocation3 + $0x1c0] sm:$0xff] %vm257, %v3343
  %3408 = vst.msk [vmem:[#allocation3 + $0x1d8] sm:$0xff] %vm257, %v3344
  %3409 = vst.msk [vmem:[#allocation3 + $0x1f0] sm:$0xff] %vm257, %v3345
  %3410 = vst.msk [vmem:[#allocation3 + $0x208] sm:$0xff] %vm257, %v3346
  %3411 = vst.msk [vmem:[#allocation3 + $0x220] sm:$0xff] %vm257, %v3347
  %3412 = vst.msk [vmem:[#allocation3 + $0x238] sm:$0xff] %vm257, %v3348
  %3413 = vst.msk [vmem:[#allocation3 + $0x250] sm:$0xff] %vm257, %v3349
  %3414 = vst.msk [vmem:[#allocation3 + $0x268] sm:$0xff] %vm257, %v3350
  %3415 = vst.msk [vmem:[#allocation3 + $0x280] sm:$0xff] %vm257, %v3351
  %3416 = vst.msk [vmem:[#allocation3 + $0x298] sm:$0xff] %vm257, %v3352
  %3417 = vst.msk [vmem:[#allocation3 + $0x2b0] sm:$0xff] %vm257, %v3353
  %3418 = vst.msk [vmem:[#allocation3 + $0x2c8] sm:$0xff] %vm257, %v3354
  %3419 = vst.msk [vmem:[#allocation3 + $0x2e0] sm:$0xff] %vm257, %v3355
  %3420 = vst.msk [vmem:[#allocation3 + $0x2f8] sm:$0xff] %vm257, %v3356
  %3421 = vst.msk [vmem:[#allocation3 + $0x310] sm:$0xff] %vm257, %v3357
  %3422 = vst.msk [vmem:[#allocation3 + $0x328] sm:$0xff] %vm257, %v3358
  %3423 = vst.msk [vmem:[#allocation3 + $0x340] sm:$0xff] %vm257, %v3359
  %3424 = vst.msk [vmem:[#allocation3 + $0x358] sm:$0xff] %vm257, %v3360
  %3425 = vst.msk [vmem:[#allocation3 + $0x370] sm:$0xff] %vm257, %v3361
  %3426 = vst.msk [vmem:[#allocation3 + $0x388] sm:$0xff] %vm257, %v3362
  %3427 = vst.msk [vmem:[#allocation3 + $0x3a0] sm:$0xff] %vm257, %v3363
  %3428 = vst.msk [vmem:[#allocation3 + $0x3b8] sm:$0xff] %vm257, %v3364
  %3429 = vst.msk [vmem:[#allocation3 + $0x3d0] sm:$0xff] %vm257, %v3365
  %3430 = vst.msk [vmem:[#allocation3 + $0x3e8] sm:$0xff] %vm257, %v3366
  %3431 = vst.msk [vmem:[#allocation3 + $0x400] sm:$0xff] %vm257, %v3367
  %3432 = vst.msk [vmem:[#allocation3 + $0x418] sm:$0xff] %vm257, %v3368
  %3433 = vst.msk [vmem:[#allocation3 + $0x430] sm:$0xff] %vm257, %v3369
  %3434 = vst.msk [vmem:[#allocation3 + $0x448] sm:$0xff] %vm257, %v3370
  %3435 = vst.msk [vmem:[#allocation3 + $0x460] sm:$0xff] %vm257, %v3371
  %3436 = vst.msk [vmem:[#allocation3 + $0x478] sm:$0xff] %vm257, %v3372
  %3437 = vst.msk [vmem:[#allocation3 + $0x490] sm:$0xff] %vm257, %v3373
  %3438 = vst.msk [vmem:[#allocation3 + $0x4a8] sm:$0xff] %vm257, %v3374
  %3439 = vst.msk [vmem:[#allocation3 + $0x4c0] sm:$0xff] %vm257, %v3375
  %3440 = vst.msk [vmem:[#allocation3 + $0x4d8] sm:$0xff] %vm257, %v3376
  %3441 = vst.msk [vmem:[#allocation3 + $0x4f0] sm:$0xff] %vm257, %v3377
  %3442 = vst.msk [vmem:[#allocation3 + $0x508] sm:$0xff] %vm257, %v3378
  %3443 = vst.msk [vmem:[#allocation3 + $0x520] sm:$0xff] %vm257, %v3379
  %3444 = vst.msk [vmem:[#allocation3 + $0x538] sm:$0xff] %vm257, %v3380
  %3445 = vst.msk [vmem:[#allocation3 + $0x550] sm:$0xff] %vm257, %v3381
  %3446 = vst.msk [vmem:[#allocation3 + $0x568] sm:$0xff] %vm257, %v3382
  %3447 = vst.msk [vmem:[#allocation3 + $0x580] sm:$0xff] %vm257, %v3383
  %3448 = vst.msk [vmem:[#allocation3 + $0x598] sm:$0xff] %vm257, %v3384
  %3449 = vst.msk [vmem:[#allocation3 + $0x5b0] sm:$0xff] %vm257, %v3385
  %3450 = vst.msk [vmem:[#allocation3 + $0x5c8] sm:$0xff] %vm257, %v3386
  %3451 = vst.msk [vmem:[#allocation3 + $0x5e0] sm:$0xff] %vm257, %v3387
  %3452 = vst.msk [vmem:[#allocation3 + $0x5f8] sm:$0xff] %vm257, %v3388
  %v3453 = vld [vmem:[#allocation3] sm:$0xff]
  %v3454 = vld [vmem:[#allocation3 + $0x8] sm:$0xff]
  %v3455 = vld [vmem:[#allocation3 + $0x10] sm:$0xff]
  %v3456 = vld [vmem:[#allocation3 + $0x18] sm:$0xff]
  %v3457 = vld [vmem:[#allocation3 + $0x20] sm:$0xff]
  %v3458 = vld [vmem:[#allocation3 + $0x28] sm:$0xff]
  %v3459 = vld [vmem:[#allocation3 + $0x30] sm:$0xff]
  %v3460 = vld [vmem:[#allocation3 + $0x38] sm:$0xff]
  %v3461 = vld [vmem:[#allocation3 + $0x40] sm:$0xff]
  %v3462 = vld [vmem:[#allocation3 + $0x48] sm:$0xff]
  %v3463 = vld [vmem:[#allocation3 + $0x50] sm:$0xff]
  %v3464 = vld [vmem:[#allocation3 + $0x58] sm:$0xff]
  %v3465 = vld [vmem:[#allocation3 + $0x60] sm:$0xff]
  %v3466 = vld [vmem:[#allocation3 + $0x68] sm:$0xff]
  %v3467 = vld [vmem:[#allocation3 + $0x70] sm:$0xff]
  %v3468 = vld [vmem:[#allocation3 + $0x78] sm:$0xff]
  %v3469 = vld [vmem:[#allocation3 + $0x80] sm:$0xff]
  %v3470 = vld [vmem:[#allocation3 + $0x88] sm:$0xff]
  %v3471 = vld [vmem:[#allocation3 + $0x90] sm:$0xff]
  %v3472 = vld [vmem:[#allocation3 + $0x98] sm:$0xff]
  %v3473 = vld [vmem:[#allocation3 + $0xa0] sm:$0xff]
  %v3474 = vld [vmem:[#allocation3 + $0xa8] sm:$0xff]
  %v3475 = vld [vmem:[#allocation3 + $0xb0] sm:$0xff]
  %v3476 = vld [vmem:[#allocation3 + $0xb8] sm:$0xff]
  %v3477 = vld [vmem:[#allocation3 + $0xc0] sm:$0xff]
  %v3478 = vld [vmem:[#allocation3 + $0xc8] sm:$0xff]
  %v3479 = vld [vmem:[#allocation3 + $0xd0] sm:$0xff]
  %v3480 = vld [vmem:[#allocation3 + $0xd8] sm:$0xff]
  %v3481 = vld [vmem:[#allocation3 + $0xe0] sm:$0xff]
  %v3482 = vld [vmem:[#allocation3 + $0xe8] sm:$0xff]
  %v3483 = vld [vmem:[#allocation3 + $0xf0] sm:$0xff]
  %v3484 = vld [vmem:[#allocation3 + $0xf8] sm:$0xff]
  %v3485 = vld [vmem:[#allocation3 + $0x100] sm:$0xff]
  %v3486 = vld [vmem:[#allocation3 + $0x108] sm:$0xff]
  %v3487 = vld [vmem:[#allocation3 + $0x110] sm:$0xff]
  %v3488 = vld [vmem:[#allocation3 + $0x118] sm:$0xff]
  %v3489 = vld [vmem:[#allocation3 + $0x120] sm:$0xff]
  %v3490 = vld [vmem:[#allocation3 + $0x128] sm:$0xff]
  %v3491 = vld [vmem:[#allocation3 + $0x130] sm:$0xff]
  %v3492 = vld [vmem:[#allocation3 + $0x138] sm:$0xff]
  %v3493 = vld [vmem:[#allocation3 + $0x140] sm:$0xff]
  %v3494 = vld [vmem:[#allocation3 + $0x148] sm:$0xff]
  %v3495 = vld [vmem:[#allocation3 + $0x150] sm:$0xff]
  %v3496 = vld [vmem:[#allocation3 + $0x158] sm:$0xff]
  %v3497 = vld [vmem:[#allocation3 + $0x160] sm:$0xff]
  %v3498 = vld [vmem:[#allocation3 + $0x168] sm:$0xff]
  %v3499 = vld [vmem:[#allocation3 + $0x170] sm:$0xff]
  %v3500 = vld [vmem:[#allocation3 + $0x178] sm:$0xff]
  %v3501 = vld [vmem:[#allocation3 + $0x180] sm:$0xff]
  %v3502 = vld [vmem:[#allocation3 + $0x188] sm:$0xff]
  %v3503 = vld [vmem:[#allocation3 + $0x190] sm:$0xff]
  %v3504 = vld [vmem:[#allocation3 + $0x198] sm:$0xff]
  %v3505 = vld [vmem:[#allocation3 + $0x1a0] sm:$0xff]
  %v3506 = vld [vmem:[#allocation3 + $0x1a8] sm:$0xff]
  %v3507 = vld [vmem:[#allocation3 + $0x1b0] sm:$0xff]
  %v3508 = vld [vmem:[#allocation3 + $0x1b8] sm:$0xff]
  %v3509 = vld [vmem:[#allocation3 + $0x1c0] sm:$0xff]
  %v3510 = vld [vmem:[#allocation3 + $0x1c8] sm:$0xff]
  %v3511 = vld [vmem:[#allocation3 + $0x1d0] sm:$0xff]
  %v3512 = vld [vmem:[#allocation3 + $0x1d8] sm:$0xff]
  %v3513 = vld [vmem:[#allocation3 + $0x1e0] sm:$0xff]
  %v3514 = vld [vmem:[#allocation3 + $0x1e8] sm:$0xff]
  %v3515 = vld [vmem:[#allocation3 + $0x1f0] sm:$0xff]
  %v3516 = vld [vmem:[#allocation3 + $0x1f8] sm:$0xff]
  %v3517 = vld [vmem:[#allocation3 + $0x200] sm:$0xff]
  %v3518 = vld [vmem:[#allocation3 + $0x208] sm:$0xff]
  %v3519 = vld [vmem:[#allocation3 + $0x210] sm:$0xff]
  %v3520 = vld [vmem:[#allocation3 + $0x218] sm:$0xff]
  %v3521 = vld [vmem:[#allocation3 + $0x220] sm:$0xff]
  %v3522 = vld [vmem:[#allocation3 + $0x228] sm:$0xff]
  %v3523 = vld [vmem:[#allocation3 + $0x230] sm:$0xff]
  %v3524 = vld [vmem:[#allocation3 + $0x238] sm:$0xff]
  %v3525 = vld [vmem:[#allocation3 + $0x240] sm:$0xff]
  %v3526 = vld [vmem:[#allocation3 + $0x248] sm:$0xff]
  %v3527 = vld [vmem:[#allocation3 + $0x250] sm:$0xff]
  %v3528 = vld [vmem:[#allocation3 + $0x258] sm:$0xff]
  %v3529 = vld [vmem:[#allocation3 + $0x260] sm:$0xff]
  %v3530 = vld [vmem:[#allocation3 + $0x268] sm:$0xff]
  %v3531 = vld [vmem:[#allocation3 + $0x270] sm:$0xff]
  %v3532 = vld [vmem:[#allocation3 + $0x278] sm:$0xff]
  %v3533 = vld [vmem:[#allocation3 + $0x280] sm:$0xff]
  %v3534 = vld [vmem:[#allocation3 + $0x288] sm:$0xff]
  %v3535 = vld [vmem:[#allocation3 + $0x290] sm:$0xff]
  %v3536 = vld [vmem:[#allocation3 + $0x298] sm:$0xff]
  %v3537 = vld [vmem:[#allocation3 + $0x2a0] sm:$0xff]
  %v3538 = vld [vmem:[#allocation3 + $0x2a8] sm:$0xff]
  %v3539 = vld [vmem:[#allocation3 + $0x2b0] sm:$0xff]
  %v3540 = vld [vmem:[#allocation3 + $0x2b8] sm:$0xff]
  %v3541 = vld [vmem:[#allocation3 + $0x2c0] sm:$0xff]
  %v3542 = vld [vmem:[#allocation3 + $0x2c8] sm:$0xff]
  %v3543 = vld [vmem:[#allocation3 + $0x2d0] sm:$0xff]
  %v3544 = vld [vmem:[#allocation3 + $0x2d8] sm:$0xff]
  %v3545 = vld [vmem:[#allocation3 + $0x2e0] sm:$0xff]
  %v3546 = vld [vmem:[#allocation3 + $0x2e8] sm:$0xff]
  %v3547 = vld [vmem:[#allocation3 + $0x2f0] sm:$0xff]
  %v3548 = vld [vmem:[#allocation3 + $0x2f8] sm:$0xff]
  %v3549 = vld [vmem:[#allocation3 + $0x300] sm:$0xff]
  %v3550 = vld [vmem:[#allocation3 + $0x308] sm:$0xff]
  %v3551 = vld [vmem:[#allocation3 + $0x310] sm:$0xff]
  %v3552 = vld [vmem:[#allocation3 + $0x318] sm:$0xff]
  %v3553 = vld [vmem:[#allocation3 + $0x320] sm:$0xff]
  %v3554 = vld [vmem:[#allocation3 + $0x328] sm:$0xff]
  %v3555 = vld [vmem:[#allocation3 + $0x330] sm:$0xff]
  %v3556 = vld [vmem:[#allocation3 + $0x338] sm:$0xff]
  %v3557 = vld [vmem:[#allocation3 + $0x340] sm:$0xff]
  %v3558 = vld [vmem:[#allocation3 + $0x348] sm:$0xff]
  %v3559 = vld [vmem:[#allocation3 + $0x350] sm:$0xff]
  %v3560 = vld [vmem:[#allocation3 + $0x358] sm:$0xff]
  %v3561 = vld [vmem:[#allocation3 + $0x360] sm:$0xff]
  %v3562 = vld [vmem:[#allocation3 + $0x368] sm:$0xff]
  %v3563 = vld [vmem:[#allocation3 + $0x370] sm:$0xff]
  %v3564 = vld [vmem:[#allocation3 + $0x378] sm:$0xff]
  %v3565 = vld [vmem:[#allocation3 + $0x380] sm:$0xff]
  %v3566 = vld [vmem:[#allocation3 + $0x388] sm:$0xff]
  %v3567 = vld [vmem:[#allocation3 + $0x390] sm:$0xff]
  %v3568 = vld [vmem:[#allocation3 + $0x398] sm:$0xff]
  %v3569 = vld [vmem:[#allocation3 + $0x3a0] sm:$0xff]
  %v3570 = vld [vmem:[#allocation3 + $0x3a8] sm:$0xff]
  %v3571 = vld [vmem:[#allocation3 + $0x3b0] sm:$0xff]
  %v3572 = vld [vmem:[#allocation3 + $0x3b8] sm:$0xff]
  %v3573 = vld [vmem:[#allocation3 + $0x3c0] sm:$0xff]
  %v3574 = vld [vmem:[#allocation3 + $0x3c8] sm:$0xff]
  %v3575 = vld [vmem:[#allocation3 + $0x3d0] sm:$0xff]
  %v3576 = vld [vmem:[#allocation3 + $0x3d8] sm:$0xff]
  %v3577 = vld [vmem:[#allocation3 + $0x3e0] sm:$0xff]
  %v3578 = vld [vmem:[#allocation3 + $0x3e8] sm:$0xff]
  %v3579 = vld [vmem:[#allocation3 + $0x3f0] sm:$0xff]
  %v3580 = vld [vmem:[#allocation3 + $0x3f8] sm:$0xff]
  %v3581 = vld [vmem:[#allocation3 + $0x400] sm:$0xff]
  %v3582 = vld [vmem:[#allocation3 + $0x408] sm:$0xff]
  %v3583 = vld [vmem:[#allocation3 + $0x410] sm:$0xff]
  %v3584 = vld [vmem:[#allocation3 + $0x418] sm:$0xff]
  %v3585 = vld [vmem:[#allocation3 + $0x420] sm:$0xff]
  %v3586 = vld [vmem:[#allocation3 + $0x428] sm:$0xff]
  %v3587 = vld [vmem:[#allocation3 + $0x430] sm:$0xff]
  %v3588 = vld [vmem:[#allocation3 + $0x438] sm:$0xff]
  %v3589 = vld [vmem:[#allocation3 + $0x440] sm:$0xff]
  %v3590 = vld [vmem:[#allocation3 + $0x448] sm:$0xff]
  %v3591 = vld [vmem:[#allocation3 + $0x450] sm:$0xff]
  %v3592 = vld [vmem:[#allocation3 + $0x458] sm:$0xff]
  %v3593 = vld [vmem:[#allocation3 + $0x460] sm:$0xff]
  %v3594 = vld [vmem:[#allocation3 + $0x468] sm:$0xff]
  %v3595 = vld [vmem:[#allocation3 + $0x470] sm:$0xff]
  %v3596 = vld [vmem:[#allocation3 + $0x478] sm:$0xff]
  %v3597 = vld [vmem:[#allocation3 + $0x480] sm:$0xff]
  %v3598 = vld [vmem:[#allocation3 + $0x488] sm:$0xff]
  %v3599 = vld [vmem:[#allocation3 + $0x490] sm:$0xff]
  %v3600 = vld [vmem:[#allocation3 + $0x498] sm:$0xff]
  %v3601 = vld [vmem:[#allocation3 + $0x4a0] sm:$0xff]
  %v3602 = vld [vmem:[#allocation3 + $0x4a8] sm:$0xff]
  %v3603 = vld [vmem:[#allocation3 + $0x4b0] sm:$0xff]
  %v3604 = vld [vmem:[#allocation3 + $0x4b8] sm:$0xff]
  %v3605 = vld [vmem:[#allocation3 + $0x4c0] sm:$0xff]
  %v3606 = vld [vmem:[#allocation3 + $0x4c8] sm:$0xff]
  %v3607 = vld [vmem:[#allocation3 + $0x4d0] sm:$0xff]
  %v3608 = vld [vmem:[#allocation3 + $0x4d8] sm:$0xff]
  %v3609 = vld [vmem:[#allocation3 + $0x4e0] sm:$0xff]
  %v3610 = vld [vmem:[#allocation3 + $0x4e8] sm:$0xff]
  %v3611 = vld [vmem:[#allocation3 + $0x4f0] sm:$0xff]
  %v3612 = vld [vmem:[#allocation3 + $0x4f8] sm:$0xff]
  %v3613 = vld [vmem:[#allocation3 + $0x500] sm:$0xff]
  %v3614 = vld [vmem:[#allocation3 + $0x508] sm:$0xff]
  %v3615 = vld [vmem:[#allocation3 + $0x510] sm:$0xff]
  %v3616 = vld [vmem:[#allocation3 + $0x518] sm:$0xff]
  %v3617 = vld [vmem:[#allocation3 + $0x520] sm:$0xff]
  %v3618 = vld [vmem:[#allocation3 + $0x528] sm:$0xff]
  %v3619 = vld [vmem:[#allocation3 + $0x530] sm:$0xff]
  %v3620 = vld [vmem:[#allocation3 + $0x538] sm:$0xff]
  %v3621 = vld [vmem:[#allocation3 + $0x540] sm:$0xff]
  %v3622 = vld [vmem:[#allocation3 + $0x548] sm:$0xff]
  %v3623 = vld [vmem:[#allocation3 + $0x550] sm:$0xff]
  %v3624 = vld [vmem:[#allocation3 + $0x558] sm:$0xff]
  %v3625 = vld [vmem:[#allocation3 + $0x560] sm:$0xff]
  %v3626 = vld [vmem:[#allocation3 + $0x568] sm:$0xff]
  %v3627 = vld [vmem:[#allocation3 + $0x570] sm:$0xff]
  %v3628 = vld [vmem:[#allocation3 + $0x578] sm:$0xff]
  %v3629 = vld [vmem:[#allocation3 + $0x580] sm:$0xff]
  %v3630 = vld [vmem:[#allocation3 + $0x588] sm:$0xff]
  %v3631 = vld [vmem:[#allocation3 + $0x590] sm:$0xff]
  %v3632 = vld [vmem:[#allocation3 + $0x598] sm:$0xff]
  %v3633 = vld [vmem:[#allocation3 + $0x5a0] sm:$0xff]
  %v3634 = vld [vmem:[#allocation3 + $0x5a8] sm:$0xff]
  %v3635 = vld [vmem:[#allocation3 + $0x5b0] sm:$0xff]
  %v3636 = vld [vmem:[#allocation3 + $0x5b8] sm:$0xff]
  %v3637 = vld [vmem:[#allocation3 + $0x5c0] sm:$0xff]
  %v3638 = vld [vmem:[#allocation3 + $0x5c8] sm:$0xff]
  %v3639 = vld [vmem:[#allocation3 + $0x5d0] sm:$0xff]
  %v3640 = vld [vmem:[#allocation3 + $0x5d8] sm:$0xff]
  %v3641 = vld [vmem:[#allocation3 + $0x5e0] sm:$0xff]
  %v3642 = vld [vmem:[#allocation3 + $0x5e8] sm:$0xff]
  %v3643 = vld [vmem:[#allocation3 + $0x5f0] sm:$0xff]
  %v3644 = vld [vmem:[#allocation3 + $0x5f8] sm:$0xff]
  %v3645 = vpack.c.bf16 %v3456, %v3453
  %v3646 = vpack.c.bf16 %v3457, %v3454
  %v3647 = vpack.c.bf16 %v3458, %v3455
  %v3648 = vpack.c.bf16 %v3462, %v3459
  %v3649 = vpack.c.bf16 %v3463, %v3460
  %v3650 = vpack.c.bf16 %v3464, %v3461
  %v3651 = vpack.c.bf16 %v3468, %v3465
  %v3652 = vpack.c.bf16 %v3469, %v3466
  %v3653 = vpack.c.bf16 %v3470, %v3467
  %v3654 = vpack.c.bf16 %v3474, %v3471
  %v3655 = vpack.c.bf16 %v3475, %v3472
  %v3656 = vpack.c.bf16 %v3476, %v3473
  %v3657 = vpack.c.bf16 %v3480, %v3477
  %v3658 = vpack.c.bf16 %v3481, %v3478
  %v3659 = vpack.c.bf16 %v3482, %v3479
  %v3660 = vpack.c.bf16 %v3486, %v3483
  %v3661 = vpack.c.bf16 %v3487, %v3484
  %v3662 = vpack.c.bf16 %v3488, %v3485
  %v3663 = vpack.c.bf16 %v3492, %v3489
  %v3664 = vpack.c.bf16 %v3493, %v3490
  %v3665 = vpack.c.bf16 %v3494, %v3491
  %v3666 = vpack.c.bf16 %v3498, %v3495
  %v3667 = vpack.c.bf16 %v3499, %v3496
  %v3668 = vpack.c.bf16 %v3500, %v3497
  %v3669 = vpack.c.bf16 %v3504, %v3501
  %v3670 = vpack.c.bf16 %v3505, %v3502
  %v3671 = vpack.c.bf16 %v3506, %v3503
  %v3672 = vpack.c.bf16 %v3510, %v3507
  %v3673 = vpack.c.bf16 %v3511, %v3508
  %v3674 = vpack.c.bf16 %v3512, %v3509
  %v3675 = vpack.c.bf16 %v3516, %v3513
  %v3676 = vpack.c.bf16 %v3517, %v3514
  %v3677 = vpack.c.bf16 %v3518, %v3515
  %v3678 = vpack.c.bf16 %v3522, %v3519
  %v3679 = vpack.c.bf16 %v3523, %v3520
  %v3680 = vpack.c.bf16 %v3524, %v3521
  %v3681 = vpack.c.bf16 %v3528, %v3525
  %v3682 = vpack.c.bf16 %v3529, %v3526
  %v3683 = vpack.c.bf16 %v3530, %v3527
  %v3684 = vpack.c.bf16 %v3534, %v3531
  %v3685 = vpack.c.bf16 %v3535, %v3532
  %v3686 = vpack.c.bf16 %v3536, %v3533
  %v3687 = vpack.c.bf16 %v3540, %v3537
  %v3688 = vpack.c.bf16 %v3541, %v3538
  %v3689 = vpack.c.bf16 %v3542, %v3539
  %v3690 = vpack.c.bf16 %v3546, %v3543
  %v3691 = vpack.c.bf16 %v3547, %v3544
  %v3692 = vpack.c.bf16 %v3548, %v3545
  %v3693 = vpack.c.bf16 %v3552, %v3549
  %v3694 = vpack.c.bf16 %v3553, %v3550
  %v3695 = vpack.c.bf16 %v3554, %v3551
  %v3696 = vpack.c.bf16 %v3558, %v3555
  %v3697 = vpack.c.bf16 %v3559, %v3556
  %v3698 = vpack.c.bf16 %v3560, %v3557
  %v3699 = vpack.c.bf16 %v3564, %v3561
  %v3700 = vpack.c.bf16 %v3565, %v3562
  %v3701 = vpack.c.bf16 %v3566, %v3563
  %v3702 = vpack.c.bf16 %v3570, %v3567
  %v3703 = vpack.c.bf16 %v3571, %v3568
  %v3704 = vpack.c.bf16 %v3572, %v3569
  %v3705 = vpack.c.bf16 %v3576, %v3573
  %v3706 = vpack.c.bf16 %v3577, %v3574
  %v3707 = vpack.c.bf16 %v3578, %v3575
  %v3708 = vpack.c.bf16 %v3582, %v3579
  %v3709 = vpack.c.bf16 %v3583, %v3580
  %v3710 = vpack.c.bf16 %v3584, %v3581
  %v3711 = vpack.c.bf16 %v3588, %v3585
  %v3712 = vpack.c.bf16 %v3589, %v3586
  %v3713 = vpack.c.bf16 %v3590, %v3587
  %v3714 = vpack.c.bf16 %v3594, %v3591
  %v3715 = vpack.c.bf16 %v3595, %v3592
  %v3716 = vpack.c.bf16 %v3596, %v3593
  %v3717 = vpack.c.bf16 %v3600, %v3597
  %v3718 = vpack.c.bf16 %v3601, %v3598
  %v3719 = vpack.c.bf16 %v3602, %v3599
  %v3720 = vpack.c.bf16 %v3606, %v3603
  %v3721 = vpack.c.bf16 %v3607, %v3604
  %v3722 = vpack.c.bf16 %v3608, %v3605
  %v3723 = vpack.c.bf16 %v3612, %v3609
  %v3724 = vpack.c.bf16 %v3613, %v3610
  %v3725 = vpack.c.bf16 %v3614, %v3611
  %v3726 = vpack.c.bf16 %v3618, %v3615
  %v3727 = vpack.c.bf16 %v3619, %v3616
  %v3728 = vpack.c.bf16 %v3620, %v3617
  %v3729 = vpack.c.bf16 %v3624, %v3621
  %v3730 = vpack.c.bf16 %v3625, %v3622
  %v3731 = vpack.c.bf16 %v3626, %v3623
  %v3732 = vpack.c.bf16 %v3630, %v3627
  %v3733 = vpack.c.bf16 %v3631, %v3628
  %v3734 = vpack.c.bf16 %v3632, %v3629
  %v3735 = vpack.c.bf16 %v3636, %v3633
  %v3736 = vpack.c.bf16 %v3637, %v3634
  %v3737 = vpack.c.bf16 %v3638, %v3635
  %v3738 = vpack.c.bf16 %v3642, %v3639
  %v3739 = vpack.c.bf16 %v3643, %v3640
  %v3740 = vpack.c.bf16 %v3644, %v3641
  %v3741 = vld [vmem:[%s1 + $0x10] sm:$0xf]
  %v3742 = vld [vmem:[%s1 + $0x14] sm:$0xf]
  %v3743 = vld [vmem:[%s1 + $0x18] sm:$0xf]
  %v3744 = vld [vmem:[%s1 + $0x1c] sm:$0xf]
  %v3745 = vld [vmem:[%s1 + $0x20] sm:$0xf]
  %v3746 = vld [vmem:[%s1 + $0x24] sm:$0xf]
  %v3747 = vld [vmem:[%s1 + $0x28] sm:$0xf]
  %v3748 = vld [vmem:[%s1 + $0x2c] sm:$0xf]
  %v3749 = vld [vmem:[%s1 + $0x30] sm:$0xf]
  %v3750 = vld [vmem:[%s1 + $0x34] sm:$0xf]
  %v3751 = vld [vmem:[%s1 + $0x38] sm:$0xf]
  %v3752 = vld [vmem:[%s1 + $0x3c] sm:$0xf]
  %v3753 = vld [vmem:[%s1 + $0x40] sm:$0xf]
  %v3754 = vld [vmem:[%s1 + $0x44] sm:$0xf]
  %v3755 = vld [vmem:[%s1 + $0x48] sm:$0xf]
  %v3756 = vld [vmem:[%s1 + $0x4c] sm:$0xf]
  %v3757 = vld [vmem:[%s1 + $0x50] sm:$0xf]
  %v3758 = vld [vmem:[%s1 + $0x54] sm:$0xf]
  %v3759 = vld [vmem:[%s1 + $0x58] sm:$0xf]
  %v3760 = vld [vmem:[%s1 + $0x5c] sm:$0xf]
  %v3761 = vld [vmem:[%s1 + $0x60] sm:$0xf]
  %v3762 = vld [vmem:[%s1 + $0x64] sm:$0xf]
  %v3763 = vld [vmem:[%s1 + $0x68] sm:$0xf]
  %v3764 = vld [vmem:[%s1 + $0x6c] sm:$0xf]
  %v3765 = vld [vmem:[%s1 + $0x70] sm:$0xf]
  %v3766 = vld [vmem:[%s1 + $0x74] sm:$0xf]
  %v3767 = vld [vmem:[%s1 + $0x78] sm:$0xf]
  %v3768 = vld [vmem:[%s1 + $0x7c] sm:$0xf]
  %v3769 = vld [vmem:[%s1 + $0x80] sm:$0xf]
  %v3770 = vld [vmem:[%s1 + $0x84] sm:$0xf]
  %v3771 = vld [vmem:[%s1 + $0x88] sm:$0xf]
  %v3772 = vld [vmem:[%s1 + $0x8c] sm:$0xf]
  %v3773 = vld [vmem:[%s1 + $0x90] sm:$0xf]
  %v3774 = vld [vmem:[%s1 + $0x94] sm:$0xf]
  %v3775 = vld [vmem:[%s1 + $0x98] sm:$0xf]
  %v3776 = vld [vmem:[%s1 + $0x9c] sm:$0xf]
  %v3777 = vld [vmem:[%s2 + $0x1] sm:$0x1]
  %v3778 = vperm.slane %v3777, 0
  %v3815 = vunpack.c.l.b16 %v3741
  %v3816 = vunpack.c.l.b16 %v3742
  %v3817 = vunpack.c.l.b16 %v3743
  %v3818 = vunpack.c.l.b16 %v3744
  %v3819 = vunpack.c.l.b16 %v3745
  %v3820 = vunpack.c.l.b16 %v3746
  %v3821 = vunpack.c.l.b16 %v3747
  %v3822 = vunpack.c.l.b16 %v3748
  %v3823 = vunpack.c.l.b16 %v3749
  %v3824 = vunpack.c.l.b16 %v3750
  %v3825 = vunpack.c.l.b16 %v3751
  %v3826 = vunpack.c.l.b16 %v3752
  %v3827 = vunpack.c.l.b16 %v3753
  %v3828 = vunpack.c.l.b16 %v3754
  %v3829 = vunpack.c.l.b16 %v3755
  %v3830 = vunpack.c.l.b16 %v3756
  %v3831 = vunpack.c.l.b16 %v3757
  %v3832 = vunpack.c.l.b16 %v3758
  %v3833 = vunpack.c.l.b16 %v3759
  %v3834 = vunpack.c.l.b16 %v3760
  %v3835 = vunpack.c.l.b16 %v3761
  %v3836 = vunpack.c.l.b16 %v3762
  %v3837 = vunpack.c.l.b16 %v3763
  %v3838 = vunpack.c.l.b16 %v3764
  %v3839 = vunpack.c.l.b16 %v3765
  %v3840 = vunpack.c.l.b16 %v3766
  %v3841 = vunpack.c.l.b16 %v3767
  %v3842 = vunpack.c.l.b16 %v3768
  %v3843 = vunpack.c.l.b16 %v3769
  %v3844 = vunpack.c.l.b16 %v3770
  %v3845 = vunpack.c.l.b16 %v3771
  %v3846 = vunpack.c.l.b16 %v3772
  %v3847 = vunpack.c.l.b16 %v3773
  %v3848 = vunpack.c.l.b16 %v3774
  %v3849 = vunpack.c.l.b16 %v3775
  %v3850 = vunpack.c.l.b16 %v3776
  %v3851 = vpack.c.b16 %v3816, %v3815
  %v3852 = vpack.c.b16 %v3818, %v3817
  %v3853 = vpack.c.b16 %v3820, %v3819
  %v3854 = vpack.c.b16 %v3822, %v3821
  %v3855 = vpack.c.b16 %v3824, %v3823
  %v3856 = vpack.c.b16 %v3826, %v3825
  %v3857 = vpack.c.b16 %v3828, %v3827
  %v3858 = vpack.c.b16 %v3830, %v3829
  %v3859 = vpack.c.b16 %v3832, %v3831
  %v3860 = vpack.c.b16 %v3834, %v3833
  %v3861 = vpack.c.b16 %v3836, %v3835
  %v3862 = vpack.c.b16 %v3838, %v3837
  %v3863 = vpack.c.b16 %v3840, %v3839
  %v3864 = vpack.c.b16 %v3842, %v3841
  %v3865 = vpack.c.b16 %v3844, %v3843
  %v3866 = vpack.c.b16 %v3846, %v3845
  %v3867 = vpack.c.b16 %v3848, %v3847
  %v3868 = vpack.c.b16 %v3850, %v3849
  %v3888 = vsel %vm257, %v3647, 0
  %v3891 = vsel %vm257, %v3650, 0
  %v3894 = vsel %vm257, %v3653, 0
  %v3897 = vsel %vm257, %v3656, 0
  %v3900 = vsel %vm257, %v3659, 0
  %v3903 = vsel %vm257, %v3662, 0
  %v3906 = vsel %vm257, %v3665, 0
  %v3909 = vsel %vm257, %v3668, 0
  %v3912 = vsel %vm257, %v3671, 0
  %v3915 = vsel %vm257, %v3674, 0
  %v3918 = vsel %vm257, %v3677, 0
  %v3921 = vsel %vm257, %v3680, 0
  %v3924 = vsel %vm257, %v3683, 0
  %v3927 = vsel %vm257, %v3686, 0
  %v3930 = vsel %vm257, %v3689, 0
  %v3933 = vsel %vm257, %v3692, 0
  %v3936 = vsel %vm257, %v3695, 0
  %v3939 = vsel %vm257, %v3698, 0
  %v3942 = vsel %vm257, %v3701, 0
  %v3945 = vsel %vm257, %v3704, 0
  %v3948 = vsel %vm257, %v3707, 0
  %v3951 = vsel %vm257, %v3710, 0
  %v3954 = vsel %vm257, %v3713, 0
  %v3957 = vsel %vm257, %v3716, 0
  %v3960 = vsel %vm257, %v3719, 0
  %v3963 = vsel %vm257, %v3722, 0
  %v3966 = vsel %vm257, %v3725, 0
  %v3969 = vsel %vm257, %v3728, 0
  %v3972 = vsel %vm257, %v3731, 0
  %v3975 = vsel %vm257, %v3734, 0
  %v3978 = vsel %vm257, %v3737, 0
  %v3981 = vsel %vm257, %v3740, 0
  %3983 = vmatpush.bf16.msra.mxu0 %v3858
  %3984 = vmatpush.bf16.msra.mxu0 %v3857
  %3985 = vmatpush.bf16.msra.mxu0 %v3856
  %3986 = vmatpush.bf16.msra.mxu0 %v3855
  %3987 = vmatpush.bf16.msra.mxu0 %v3854
  %3988 = vmatpush.bf16.msra.mxu0 %v3853
  %3989 = vmatpush.bf16.msra.mxu0 %v3852
  %3990 = vmatpush.bf16.msra.mxu0 %v3851
  %3991 = vmatmul.bf16.gmra.mxu0 %v3645
  %v3992 = vpop.f32.mrf.mxu0
  %v3993 = vadd.f32 %v3778, %v3992
  %v3994 = vpop.f32.mrf.mxu0
  %v3995 = vadd.f32 %v3778, %v3994
  %3996 = vmatmul.bf16.gmra.mxu0 %v3648
  %v3997 = vpop.f32.mrf.mxu0
  %v3998 = vadd.f32 %v3778, %v3997
  %v3999 = vpop.f32.mrf.mxu0
  %v4000 = vadd.f32 %v3778, %v3999
  %4001 = vmatmul.bf16.gmra.mxu0 %v3651
  %v4002 = vpop.f32.mrf.mxu0
  %v4003 = vadd.f32 %v3778, %v4002
  %v4004 = vpop.f32.mrf.mxu0
  %v4005 = vadd.f32 %v3778, %v4004
  %4006 = vmatmul.bf16.gmra.mxu0 %v3654
  %v4007 = vpop.f32.mrf.mxu0
  %v4008 = vadd.f32 %v3778, %v4007
  %v4009 = vpop.f32.mrf.mxu0
  %v4010 = vadd.f32 %v3778, %v4009
  %4011 = vmatmul.bf16.gmra.mxu0 %v3657
  %v4012 = vpop.f32.mrf.mxu0
  %v4013 = vadd.f32 %v3778, %v4012
  %v4014 = vpop.f32.mrf.mxu0
  %v4015 = vadd.f32 %v3778, %v4014
  %4016 = vmatmul.bf16.gmra.mxu0 %v3660
  %v4017 = vpop.f32.mrf.mxu0
  %v4018 = vadd.f32 %v3778, %v4017
  %v4019 = vpop.f32.mrf.mxu0
  %v4020 = vadd.f32 %v3778, %v4019
  %4021 = vmatmul.bf16.gmra.mxu0 %v3663
  %v4022 = vpop.f32.mrf.mxu0
  %v4023 = vadd.f32 %v3778, %v4022
  %v4024 = vpop.f32.mrf.mxu0
  %v4025 = vadd.f32 %v3778, %v4024
  %4026 = vmatmul.bf16.gmra.mxu0 %v3666
  %v4027 = vpop.f32.mrf.mxu0
  %v4028 = vadd.f32 %v3778, %v4027
  %v4029 = vpop.f32.mrf.mxu0
  %v4030 = vadd.f32 %v3778, %v4029
  %4031 = vmatmul.bf16.gmra.mxu0 %v3669
  %v4032 = vpop.f32.mrf.mxu0
  %v4033 = vadd.f32 %v3778, %v4032
  %v4034 = vpop.f32.mrf.mxu0
  %v4035 = vadd.f32 %v3778, %v4034
  %4036 = vmatmul.bf16.gmra.mxu0 %v3672
  %v4037 = vpop.f32.mrf.mxu0
  %v4038 = vadd.f32 %v3778, %v4037
  %v4039 = vpop.f32.mrf.mxu0
  %v4040 = vadd.f32 %v3778, %v4039
  %4041 = vmatmul.bf16.gmra.mxu0 %v3675
  %v4042 = vpop.f32.mrf.mxu0
  %v4043 = vadd.f32 %v3778, %v4042
  %v4044 = vpop.f32.mrf.mxu0
  %v4045 = vadd.f32 %v3778, %v4044
  %4046 = vmatmul.bf16.gmra.mxu0 %v3678
  %v4047 = vpop.f32.mrf.mxu0
  %v4048 = vadd.f32 %v3778, %v4047
  %v4049 = vpop.f32.mrf.mxu0
  %v4050 = vadd.f32 %v3778, %v4049
  %4051 = vmatmul.bf16.gmra.mxu0 %v3681
  %v4052 = vpop.f32.mrf.mxu0
  %v4053 = vadd.f32 %v3778, %v4052
  %v4054 = vpop.f32.mrf.mxu0
  %v4055 = vadd.f32 %v3778, %v4054
  %4056 = vmatmul.bf16.gmra.mxu0 %v3684
  %v4057 = vpop.f32.mrf.mxu0
  %v4058 = vadd.f32 %v3778, %v4057
  %v4059 = vpop.f32.mrf.mxu0
  %v4060 = vadd.f32 %v3778, %v4059
  %4061 = vmatmul.bf16.gmra.mxu0 %v3687
  %v4062 = vpop.f32.mrf.mxu0
  %v4063 = vadd.f32 %v3778, %v4062
  %v4064 = vpop.f32.mrf.mxu0
  %v4065 = vadd.f32 %v3778, %v4064
  %4066 = vmatmul.bf16.gmra.mxu0 %v3690
  %v4067 = vpop.f32.mrf.mxu0
  %v4068 = vadd.f32 %v3778, %v4067
  %v4069 = vpop.f32.mrf.mxu0
  %v4070 = vadd.f32 %v3778, %v4069
  %4071 = vmatmul.bf16.gmra.mxu0 %v3693
  %v4072 = vpop.f32.mrf.mxu0
  %v4073 = vadd.f32 %v3778, %v4072
  %v4074 = vpop.f32.mrf.mxu0
  %v4075 = vadd.f32 %v3778, %v4074
  %4076 = vmatmul.bf16.gmra.mxu0 %v3696
  %v4077 = vpop.f32.mrf.mxu0
  %v4078 = vadd.f32 %v3778, %v4077
  %v4079 = vpop.f32.mrf.mxu0
  %v4080 = vadd.f32 %v3778, %v4079
  %4081 = vmatmul.bf16.gmra.mxu0 %v3699
  %v4082 = vpop.f32.mrf.mxu0
  %v4083 = vadd.f32 %v3778, %v4082
  %v4084 = vpop.f32.mrf.mxu0
  %v4085 = vadd.f32 %v3778, %v4084
  %4086 = vmatmul.bf16.gmra.mxu0 %v3702
  %v4087 = vpop.f32.mrf.mxu0
  %v4088 = vadd.f32 %v3778, %v4087
  %v4089 = vpop.f32.mrf.mxu0
  %v4090 = vadd.f32 %v3778, %v4089
  %4091 = vmatmul.bf16.gmra.mxu0 %v3705
  %v4092 = vpop.f32.mrf.mxu0
  %v4093 = vadd.f32 %v3778, %v4092
  %v4094 = vpop.f32.mrf.mxu0
  %v4095 = vadd.f32 %v3778, %v4094
  %4096 = vmatmul.bf16.gmra.mxu0 %v3708
  %v4097 = vpop.f32.mrf.mxu0
  %v4098 = vadd.f32 %v3778, %v4097
  %v4099 = vpop.f32.mrf.mxu0
  %v4100 = vadd.f32 %v3778, %v4099
  %4101 = vmatmul.bf16.gmra.mxu0 %v3711
  %v4102 = vpop.f32.mrf.mxu0
  %v4103 = vadd.f32 %v3778, %v4102
  %v4104 = vpop.f32.mrf.mxu0
  %v4105 = vadd.f32 %v3778, %v4104
  %4106 = vmatmul.bf16.gmra.mxu0 %v3714
  %v4107 = vpop.f32.mrf.mxu0
  %v4108 = vadd.f32 %v3778, %v4107
  %v4109 = vpop.f32.mrf.mxu0
  %v4110 = vadd.f32 %v3778, %v4109
  %4111 = vmatmul.bf16.gmra.mxu0 %v3717
  %v4112 = vpop.f32.mrf.mxu0
  %v4113 = vadd.f32 %v3778, %v4112
  %v4114 = vpop.f32.mrf.mxu0
  %v4115 = vadd.f32 %v3778, %v4114
  %4116 = vmatmul.bf16.gmra.mxu0 %v3720
  %v4117 = vpop.f32.mrf.mxu0
  %v4118 = vadd.f32 %v3778, %v4117
  %v4119 = vpop.f32.mrf.mxu0
  %v4120 = vadd.f32 %v3778, %v4119
  %4121 = vmatmul.bf16.gmra.mxu0 %v3723
  %v4122 = vpop.f32.mrf.mxu0
  %v4123 = vadd.f32 %v3778, %v4122
  %v4124 = vpop.f32.mrf.mxu0
  %v4125 = vadd.f32 %v3778, %v4124
  %4126 = vmatmul.bf16.gmra.mxu0 %v3726
  %v4127 = vpop.f32.mrf.mxu0
  %v4128 = vadd.f32 %v3778, %v4127
  %v4129 = vpop.f32.mrf.mxu0
  %v4130 = vadd.f32 %v3778, %v4129
  %4131 = vmatmul.bf16.gmra.mxu0 %v3729
  %v4132 = vpop.f32.mrf.mxu0
  %v4133 = vadd.f32 %v3778, %v4132
  %v4134 = vpop.f32.mrf.mxu0
  %v4135 = vadd.f32 %v3778, %v4134
  %4136 = vmatmul.bf16.gmra.mxu0 %v3732
  %v4137 = vpop.f32.mrf.mxu0
  %v4138 = vadd.f32 %v3778, %v4137
  %v4139 = vpop.f32.mrf.mxu0
  %v4140 = vadd.f32 %v3778, %v4139
  %4141 = vmatmul.bf16.gmra.mxu0 %v3735
  %v4142 = vpop.f32.mrf.mxu0
  %v4143 = vadd.f32 %v3778, %v4142
  %v4144 = vpop.f32.mrf.mxu0
  %v4145 = vadd.f32 %v3778, %v4144
  %4146 = vmatmul.bf16.gmra.mxu0 %v3738
  %v4147 = vpop.f32.mrf.mxu0
  %v4148 = vadd.f32 %v3778, %v4147
  %v4149 = vpop.f32.mrf.mxu0
  %v4150 = vadd.f32 %v3778, %v4149
  %4151 = vdwg.mxu0
  %4152 = vmatpush.bf16.msra.mxu0 %v3866
  %4153 = vmatpush.bf16.msra.mxu0 %v3865
  %4154 = vmatpush.bf16.msra.mxu0 %v3864
  %4155 = vmatpush.bf16.msra.mxu0 %v3863
  %4156 = vmatpush.bf16.msra.mxu0 %v3862
  %4157 = vmatpush.bf16.msra.mxu0 %v3861
  %4158 = vmatpush.bf16.msra.mxu0 %v3860
  %4159 = vmatpush.bf16.msra.mxu0 %v3859
  %4160 = vmatmul.bf16.gmra.mxu0 %v3646
  %v4161 = vpop.f32.mrf.mxu0
  %v4162 = vadd.f32 %v3993, %v4161
  %v4163 = vpop.f32.mrf.mxu0
  %v4164 = vadd.f32 %v3995, %v4163
  %4165 = vmatmul.bf16.gmra.mxu0 %v3649
  %v4166 = vpop.f32.mrf.mxu0
  %v4167 = vadd.f32 %v3998, %v4166
  %v4168 = vpop.f32.mrf.mxu0
  %v4169 = vadd.f32 %v4000, %v4168
  %4170 = vmatmul.bf16.gmra.mxu0 %v3652
  %v4171 = vpop.f32.mrf.mxu0
  %v4172 = vadd.f32 %v4003, %v4171
  %v4173 = vpop.f32.mrf.mxu0
  %v4174 = vadd.f32 %v4005, %v4173
  %4175 = vmatmul.bf16.gmra.mxu0 %v3655
  %v4176 = vpop.f32.mrf.mxu0
  %v4177 = vadd.f32 %v4008, %v4176
  %v4178 = vpop.f32.mrf.mxu0
  %v4179 = vadd.f32 %v4010, %v4178
  %4180 = vmatmul.bf16.gmra.mxu0 %v3658
  %v4181 = vpop.f32.mrf.mxu0
  %v4182 = vadd.f32 %v4013, %v4181
  %v4183 = vpop.f32.mrf.mxu0
  %v4184 = vadd.f32 %v4015, %v4183
  %4185 = vmatmul.bf16.gmra.mxu0 %v3661
  %v4186 = vpop.f32.mrf.mxu0
  %v4187 = vadd.f32 %v4018, %v4186
  %v4188 = vpop.f32.mrf.mxu0
  %v4189 = vadd.f32 %v4020, %v4188
  %4190 = vmatmul.bf16.gmra.mxu0 %v3664
  %v4191 = vpop.f32.mrf.mxu0
  %v4192 = vadd.f32 %v4023, %v4191
  %v4193 = vpop.f32.mrf.mxu0
  %v4194 = vadd.f32 %v4025, %v4193
  %4195 = vmatmul.bf16.gmra.mxu0 %v3667
  %v4196 = vpop.f32.mrf.mxu0
  %v4197 = vadd.f32 %v4028, %v4196
  %v4198 = vpop.f32.mrf.mxu0
  %v4199 = vadd.f32 %v4030, %v4198
  %4200 = vmatmul.bf16.gmra.mxu0 %v3670
  %v4201 = vpop.f32.mrf.mxu0
  %v4202 = vadd.f32 %v4033, %v4201
  %v4203 = vpop.f32.mrf.mxu0
  %v4204 = vadd.f32 %v4035, %v4203
  %4205 = vmatmul.bf16.gmra.mxu0 %v3673
  %v4206 = vpop.f32.mrf.mxu0
  %v4207 = vadd.f32 %v4038, %v4206
  %v4208 = vpop.f32.mrf.mxu0
  %v4209 = vadd.f32 %v4040, %v4208
  %4210 = vmatmul.bf16.gmra.mxu0 %v3676
  %v4211 = vpop.f32.mrf.mxu0
  %v4212 = vadd.f32 %v4043, %v4211
  %v4213 = vpop.f32.mrf.mxu0
  %v4214 = vadd.f32 %v4045, %v4213
  %4215 = vmatmul.bf16.gmra.mxu0 %v3679
  %v4216 = vpop.f32.mrf.mxu0
  %v4217 = vadd.f32 %v4048, %v4216
  %v4218 = vpop.f32.mrf.mxu0
  %v4219 = vadd.f32 %v4050, %v4218
  %4220 = vmatmul.bf16.gmra.mxu0 %v3682
  %v4221 = vpop.f32.mrf.mxu0
  %v4222 = vadd.f32 %v4053, %v4221
  %v4223 = vpop.f32.mrf.mxu0
  %v4224 = vadd.f32 %v4055, %v4223
  %4225 = vmatmul.bf16.gmra.mxu0 %v3685
  %v4226 = vpop.f32.mrf.mxu0
  %v4227 = vadd.f32 %v4058, %v4226
  %v4228 = vpop.f32.mrf.mxu0
  %v4229 = vadd.f32 %v4060, %v4228
  %4230 = vmatmul.bf16.gmra.mxu0 %v3688
  %v4231 = vpop.f32.mrf.mxu0
  %v4232 = vadd.f32 %v4063, %v4231
  %v4233 = vpop.f32.mrf.mxu0
  %v4234 = vadd.f32 %v4065, %v4233
  %4235 = vmatmul.bf16.gmra.mxu0 %v3691
  %v4236 = vpop.f32.mrf.mxu0
  %v4237 = vadd.f32 %v4068, %v4236
  %v4238 = vpop.f32.mrf.mxu0
  %v4239 = vadd.f32 %v4070, %v4238
  %4240 = vmatmul.bf16.gmra.mxu0 %v3694
  %v4241 = vpop.f32.mrf.mxu0
  %v4242 = vadd.f32 %v4073, %v4241
  %v4243 = vpop.f32.mrf.mxu0
  %v4244 = vadd.f32 %v4075, %v4243
  %4245 = vmatmul.bf16.gmra.mxu0 %v3697
  %v4246 = vpop.f32.mrf.mxu0
  %v4247 = vadd.f32 %v4078, %v4246
  %v4248 = vpop.f32.mrf.mxu0
  %v4249 = vadd.f32 %v4080, %v4248
  %4250 = vmatmul.bf16.gmra.mxu0 %v3700
  %v4251 = vpop.f32.mrf.mxu0
  %v4252 = vadd.f32 %v4083, %v4251
  %v4253 = vpop.f32.mrf.mxu0
  %v4254 = vadd.f32 %v4085, %v4253
  %4255 = vmatmul.bf16.gmra.mxu0 %v3703
  %v4256 = vpop.f32.mrf.mxu0
  %v4257 = vadd.f32 %v4088, %v4256
  %v4258 = vpop.f32.mrf.mxu0
  %v4259 = vadd.f32 %v4090, %v4258
  %4260 = vmatmul.bf16.gmra.mxu0 %v3706
  %v4261 = vpop.f32.mrf.mxu0
  %v4262 = vadd.f32 %v4093, %v4261
  %v4263 = vpop.f32.mrf.mxu0
  %v4264 = vadd.f32 %v4095, %v4263
  %4265 = vmatmul.bf16.gmra.mxu0 %v3709
  %v4266 = vpop.f32.mrf.mxu0
  %v4267 = vadd.f32 %v4098, %v4266
  %v4268 = vpop.f32.mrf.mxu0
  %v4269 = vadd.f32 %v4100, %v4268
  %4270 = vmatmul.bf16.gmra.mxu0 %v3712
  %v4271 = vpop.f32.mrf.mxu0
  %v4272 = vadd.f32 %v4103, %v4271
  %v4273 = vpop.f32.mrf.mxu0
  %v4274 = vadd.f32 %v4105, %v4273
  %4275 = vmatmul.bf16.gmra.mxu0 %v3715
  %v4276 = vpop.f32.mrf.mxu0
  %v4277 = vadd.f32 %v4108, %v4276
  %v4278 = vpop.f32.mrf.mxu0
  %v4279 = vadd.f32 %v4110, %v4278
  %4280 = vmatmul.bf16.gmra.mxu0 %v3718
  %v4281 = vpop.f32.mrf.mxu0
  %v4282 = vadd.f32 %v4113, %v4281
  %v4283 = vpop.f32.mrf.mxu0
  %v4284 = vadd.f32 %v4115, %v4283
  %4285 = vmatmul.bf16.gmra.mxu0 %v3721
  %v4286 = vpop.f32.mrf.mxu0
  %v4287 = vadd.f32 %v4118, %v4286
  %v4288 = vpop.f32.mrf.mxu0
  %v4289 = vadd.f32 %v4120, %v4288
  %4290 = vmatmul.bf16.gmra.mxu0 %v3724
  %v4291 = vpop.f32.mrf.mxu0
  %v4292 = vadd.f32 %v4123, %v4291
  %v4293 = vpop.f32.mrf.mxu0
  %v4294 = vadd.f32 %v4125, %v4293
  %4295 = vmatmul.bf16.gmra.mxu0 %v3727
  %v4296 = vpop.f32.mrf.mxu0
  %v4297 = vadd.f32 %v4128, %v4296
  %v4298 = vpop.f32.mrf.mxu0
  %v4299 = vadd.f32 %v4130, %v4298
  %4300 = vmatmul.bf16.gmra.mxu0 %v3730
  %v4301 = vpop.f32.mrf.mxu0
  %v4302 = vadd.f32 %v4133, %v4301
  %v4303 = vpop.f32.mrf.mxu0
  %v4304 = vadd.f32 %v4135, %v4303
  %4305 = vmatmul.bf16.gmra.mxu0 %v3733
  %v4306 = vpop.f32.mrf.mxu0
  %v4307 = vadd.f32 %v4138, %v4306
  %v4308 = vpop.f32.mrf.mxu0
  %v4309 = vadd.f32 %v4140, %v4308
  %4310 = vmatmul.bf16.gmra.mxu0 %v3736
  %v4311 = vpop.f32.mrf.mxu0
  %v4312 = vadd.f32 %v4143, %v4311
  %v4313 = vpop.f32.mrf.mxu0
  %v4314 = vadd.f32 %v4145, %v4313
  %4315 = vmatmul.bf16.gmra.mxu0 %v3739
  %v4316 = vpop.f32.mrf.mxu0
  %v4317 = vadd.f32 %v4148, %v4316
  %v4318 = vpop.f32.mrf.mxu0
  %v4319 = vadd.f32 %v4150, %v4318
  %4320 = vdwg.mxu0
  %4321 = vmatpush.bf16.msra.mxu0 0
  %4322 = vmatpush.bf16.msra.mxu0 0
  %4323 = vmatpush.bf16.msra.mxu0 0
  %4324 = vmatpush.bf16.msra.mxu0 0
  %4325 = vmatpush.bf16.msra.mxu0 0
  %4326 = vmatpush.bf16.msra.mxu0 0
  %4327 = vmatpush.bf16.msra.mxu0 %v3868
  %4328 = vmatpush.bf16.msra.mxu0 %v3867
  %4329 = vmatmul.bf16.gmra.mxu0 %v3888
  %v4330 = vpop.f32.mrf.mxu0
  %v4331 = vadd.f32 %v4162, %v4330
  %v4332 = vpop.f32.mrf.mxu0
  %v4333 = vadd.f32 %v4164, %v4332
  %4334 = vmatmul.bf16.gmra.mxu0 %v3891
  %v4335 = vpop.f32.mrf.mxu0
  %v4336 = vadd.f32 %v4167, %v4335
  %v4337 = vpop.f32.mrf.mxu0
  %v4338 = vadd.f32 %v4169, %v4337
  %4339 = vmatmul.bf16.gmra.mxu0 %v3894
  %v4340 = vpop.f32.mrf.mxu0
  %v4341 = vadd.f32 %v4172, %v4340
  %v4342 = vpop.f32.mrf.mxu0
  %v4343 = vadd.f32 %v4174, %v4342
  %4344 = vmatmul.bf16.gmra.mxu0 %v3897
  %v4345 = vpop.f32.mrf.mxu0
  %v4346 = vadd.f32 %v4177, %v4345
  %v4347 = vpop.f32.mrf.mxu0
  %v4348 = vadd.f32 %v4179, %v4347
  %4349 = vmatmul.bf16.gmra.mxu0 %v3900
  %v4350 = vpop.f32.mrf.mxu0
  %v4351 = vadd.f32 %v4182, %v4350
  %v4352 = vpop.f32.mrf.mxu0
  %v4353 = vadd.f32 %v4184, %v4352
  %4354 = vmatmul.bf16.gmra.mxu0 %v3903
  %v4355 = vpop.f32.mrf.mxu0
  %v4356 = vadd.f32 %v4187, %v4355
  %v4357 = vpop.f32.mrf.mxu0
  %v4358 = vadd.f32 %v4189, %v4357
  %4359 = vmatmul.bf16.gmra.mxu0 %v3906
  %v4360 = vpop.f32.mrf.mxu0
  %v4361 = vadd.f32 %v4192, %v4360
  %v4362 = vpop.f32.mrf.mxu0
  %v4363 = vadd.f32 %v4194, %v4362
  %4364 = vmatmul.bf16.gmra.mxu0 %v3909
  %v4365 = vpop.f32.mrf.mxu0
  %v4366 = vadd.f32 %v4197, %v4365
  %v4367 = vpop.f32.mrf.mxu0
  %v4368 = vadd.f32 %v4199, %v4367
  %4369 = vmatmul.bf16.gmra.mxu0 %v3912
  %v4370 = vpop.f32.mrf.mxu0
  %v4371 = vadd.f32 %v4202, %v4370
  %v4372 = vpop.f32.mrf.mxu0
  %v4373 = vadd.f32 %v4204, %v4372
  %4374 = vmatmul.bf16.gmra.mxu0 %v3915
  %v4375 = vpop.f32.mrf.mxu0
  %v4376 = vadd.f32 %v4207, %v4375
  %v4377 = vpop.f32.mrf.mxu0
  %v4378 = vadd.f32 %v4209, %v4377
  %4379 = vmatmul.bf16.gmra.mxu0 %v3918
  %v4380 = vpop.f32.mrf.mxu0
  %v4381 = vadd.f32 %v4212, %v4380
  %v4382 = vpop.f32.mrf.mxu0
  %v4383 = vadd.f32 %v4214, %v4382
  %4384 = vmatmul.bf16.gmra.mxu0 %v3921
  %v4385 = vpop.f32.mrf.mxu0
  %v4386 = vadd.f32 %v4217, %v4385
  %v4387 = vpop.f32.mrf.mxu0
  %v4388 = vadd.f32 %v4219, %v4387
  %4389 = vmatmul.bf16.gmra.mxu0 %v3924
  %v4390 = vpop.f32.mrf.mxu0
  %v4391 = vadd.f32 %v4222, %v4390
  %v4392 = vpop.f32.mrf.mxu0
  %v4393 = vadd.f32 %v4224, %v4392
  %4394 = vmatmul.bf16.gmra.mxu0 %v3927
  %v4395 = vpop.f32.mrf.mxu0
  %v4396 = vadd.f32 %v4227, %v4395
  %v4397 = vpop.f32.mrf.mxu0
  %v4398 = vadd.f32 %v4229, %v4397
  %4399 = vmatmul.bf16.gmra.mxu0 %v3930
  %v4400 = vpop.f32.mrf.mxu0
  %v4401 = vadd.f32 %v4232, %v4400
  %v4402 = vpop.f32.mrf.mxu0
  %v4403 = vadd.f32 %v4234, %v4402
  %4404 = vmatmul.bf16.gmra.mxu0 %v3933
  %v4405 = vpop.f32.mrf.mxu0
  %v4406 = vadd.f32 %v4237, %v4405
  %v4407 = vpop.f32.mrf.mxu0
  %v4408 = vadd.f32 %v4239, %v4407
  %4409 = vmatmul.bf16.gmra.mxu0 %v3936
  %v4410 = vpop.f32.mrf.mxu0
  %v4411 = vadd.f32 %v4242, %v4410
  %v4412 = vpop.f32.mrf.mxu0
  %v4413 = vadd.f32 %v4244, %v4412
  %4414 = vmatmul.bf16.gmra.mxu0 %v3939
  %v4415 = vpop.f32.mrf.mxu0
  %v4416 = vadd.f32 %v4247, %v4415
  %v4417 = vpop.f32.mrf.mxu0
  %v4418 = vadd.f32 %v4249, %v4417
  %4419 = vmatmul.bf16.gmra.mxu0 %v3942
  %v4420 = vpop.f32.mrf.mxu0
  %v4421 = vadd.f32 %v4252, %v4420
  %v4422 = vpop.f32.mrf.mxu0
  %v4423 = vadd.f32 %v4254, %v4422
  %4424 = vmatmul.bf16.gmra.mxu0 %v3945
  %v4425 = vpop.f32.mrf.mxu0
  %v4426 = vadd.f32 %v4257, %v4425
  %v4427 = vpop.f32.mrf.mxu0
  %v4428 = vadd.f32 %v4259, %v4427
  %4429 = vmatmul.bf16.gmra.mxu0 %v3948
  %v4430 = vpop.f32.mrf.mxu0
  %v4431 = vadd.f32 %v4262, %v4430
  %v4432 = vpop.f32.mrf.mxu0
  %v4433 = vadd.f32 %v4264, %v4432
  %4434 = vmatmul.bf16.gmra.mxu0 %v3951
  %v4435 = vpop.f32.mrf.mxu0
  %v4436 = vadd.f32 %v4267, %v4435
  %v4437 = vpop.f32.mrf.mxu0
  %v4438 = vadd.f32 %v4269, %v4437
  %4439 = vmatmul.bf16.gmra.mxu0 %v3954
  %v4440 = vpop.f32.mrf.mxu0
  %v4441 = vadd.f32 %v4272, %v4440
  %v4442 = vpop.f32.mrf.mxu0
  %v4443 = vadd.f32 %v4274, %v4442
  %4444 = vmatmul.bf16.gmra.mxu0 %v3957
  %v4445 = vpop.f32.mrf.mxu0
  %v4446 = vadd.f32 %v4277, %v4445
  %v4447 = vpop.f32.mrf.mxu0
  %v4448 = vadd.f32 %v4279, %v4447
  %4449 = vmatmul.bf16.gmra.mxu0 %v3960
  %v4450 = vpop.f32.mrf.mxu0
  %v4451 = vadd.f32 %v4282, %v4450
  %v4452 = vpop.f32.mrf.mxu0
  %v4453 = vadd.f32 %v4284, %v4452
  %4454 = vmatmul.bf16.gmra.mxu0 %v3963
  %v4455 = vpop.f32.mrf.mxu0
  %v4456 = vadd.f32 %v4287, %v4455
  %v4457 = vpop.f32.mrf.mxu0
  %v4458 = vadd.f32 %v4289, %v4457
  %4459 = vmatmul.bf16.gmra.mxu0 %v3966
  %v4460 = vpop.f32.mrf.mxu0
  %v4461 = vadd.f32 %v4292, %v4460
  %v4462 = vpop.f32.mrf.mxu0
  %v4463 = vadd.f32 %v4294, %v4462
  %4464 = vmatmul.bf16.gmra.mxu0 %v3969
  %v4465 = vpop.f32.mrf.mxu0
  %v4466 = vadd.f32 %v4297, %v4465
  %v4467 = vpop.f32.mrf.mxu0
  %v4468 = vadd.f32 %v4299, %v4467
  %4469 = vmatmul.bf16.gmra.mxu0 %v3972
  %v4470 = vpop.f32.mrf.mxu0
  %v4471 = vadd.f32 %v4302, %v4470
  %v4472 = vpop.f32.mrf.mxu0
  %v4473 = vadd.f32 %v4304, %v4472
  %4474 = vmatmul.bf16.gmra.mxu0 %v3975
  %v4475 = vpop.f32.mrf.mxu0
  %v4476 = vadd.f32 %v4307, %v4475
  %v4477 = vpop.f32.mrf.mxu0
  %v4478 = vadd.f32 %v4309, %v4477
  %4479 = vmatmul.bf16.gmra.mxu0 %v3978
  %v4480 = vpop.f32.mrf.mxu0
  %v4481 = vadd.f32 %v4312, %v4480
  %v4482 = vpop.f32.mrf.mxu0
  %v4483 = vadd.f32 %v4314, %v4482
  %4484 = vmatmul.bf16.gmra.mxu0 %v3981
  %v4485 = vpop.f32.mrf.mxu0
  %v4486 = vadd.f32 %v4317, %v4485
  %v4487 = vpop.f32.mrf.mxu0
  %v4488 = vadd.f32 %v4319, %v4487
  %4489 = vdwg.mxu0
  %v4490 = vmax.f32 %v4331, 0.0
  %v4491 = vmax.f32 %v4333, 0.0
  %v4492 = vmax.f32 %v4336, 0.0
  %v4493 = vmax.f32 %v4338, 0.0
  %v4494 = vmax.f32 %v4341, 0.0
  %v4495 = vmax.f32 %v4343, 0.0
  %v4496 = vmax.f32 %v4346, 0.0
  %v4497 = vmax.f32 %v4348, 0.0
  %v4498 = vmax.f32 %v4351, 0.0
  %v4499 = vmax.f32 %v4353, 0.0
  %v4500 = vmax.f32 %v4356, 0.0
  %v4501 = vmax.f32 %v4358, 0.0
  %v4502 = vmax.f32 %v4361, 0.0
  %v4503 = vmax.f32 %v4363, 0.0
  %v4504 = vmax.f32 %v4366, 0.0
  %v4505 = vmax.f32 %v4368, 0.0
  %v4506 = vmax.f32 %v4371, 0.0
  %v4507 = vmax.f32 %v4373, 0.0
  %v4508 = vmax.f32 %v4376, 0.0
  %v4509 = vmax.f32 %v4378, 0.0
  %v4510 = vmax.f32 %v4381, 0.0
  %v4511 = vmax.f32 %v4383, 0.0
  %v4512 = vmax.f32 %v4386, 0.0
  %v4513 = vmax.f32 %v4388, 0.0
  %v4514 = vmax.f32 %v4391, 0.0
  %v4515 = vmax.f32 %v4393, 0.0
  %v4516 = vmax.f32 %v4396, 0.0
  %v4517 = vmax.f32 %v4398, 0.0
  %v4518 = vmax.f32 %v4401, 0.0
  %v4519 = vmax.f32 %v4403, 0.0
  %v4520 = vmax.f32 %v4406, 0.0
  %v4521 = vmax.f32 %v4408, 0.0
  %v4522 = vmax.f32 %v4411, 0.0
  %v4523 = vmax.f32 %v4413, 0.0
  %v4524 = vmax.f32 %v4416, 0.0
  %v4525 = vmax.f32 %v4418, 0.0
  %v4526 = vmax.f32 %v4421, 0.0
  %v4527 = vmax.f32 %v4423, 0.0
  %v4528 = vmax.f32 %v4426, 0.0
  %v4529 = vmax.f32 %v4428, 0.0
  %v4530 = vmax.f32 %v4431, 0.0
  %v4531 = vmax.f32 %v4433, 0.0
  %v4532 = vmax.f32 %v4436, 0.0
  %v4533 = vmax.f32 %v4438, 0.0
  %v4534 = vmax.f32 %v4441, 0.0
  %v4535 = vmax.f32 %v4443, 0.0
  %v4536 = vmax.f32 %v4446, 0.0
  %v4537 = vmax.f32 %v4448, 0.0
  %v4538 = vmax.f32 %v4451, 0.0
  %v4539 = vmax.f32 %v4453, 0.0
  %v4540 = vmax.f32 %v4456, 0.0
  %v4541 = vmax.f32 %v4458, 0.0
  %v4542 = vmax.f32 %v4461, 0.0
  %v4543 = vmax.f32 %v4463, 0.0
  %v4544 = vmax.f32 %v4466, 0.0
  %v4545 = vmax.f32 %v4468, 0.0
  %v4546 = vmax.f32 %v4471, 0.0
  %v4547 = vmax.f32 %v4473, 0.0
  %v4548 = vmax.f32 %v4476, 0.0
  %v4549 = vmax.f32 %v4478, 0.0
  %v4550 = vmax.f32 %v4481, 0.0
  %v4551 = vmax.f32 %v4483, 0.0
  %v4552 = vmax.f32 %v4486, 0.0
  %v4553 = vmax.f32 %v4488, 0.0
  %4554 = vst.msk [vmem:[%s3] sm:$0xff] %vm257, %v4490
  %4555 = vst.msk [vmem:[%s3 + $0x8] sm:$0xff] %vm257, %v4491
  %4556 = vst.msk [vmem:[%s3 + $0x10] sm:$0xff] %vm257, %v4492
  %4557 = vst.msk [vmem:[%s3 + $0x18] sm:$0xff] %vm257, %v4493
  %4558 = vst.msk [vmem:[%s3 + $0x20] sm:$0xff] %vm257, %v4494
  %4559 = vst.msk [vmem:[%s3 + $0x28] sm:$0xff] %vm257, %v4495
  %4560 = vst.msk [vmem:[%s3 + $0x30] sm:$0xff] %vm257, %v4496
  %4561 = vst.msk [vmem:[%s3 + $0x38] sm:$0xff] %vm257, %v4497
  %4562 = vst.msk [vmem:[%s3 + $0x40] sm:$0xff] %vm257, %v4498
  %4563 = vst.msk [vmem:[%s3 + $0x48] sm:$0xff] %vm257, %v4499
  %4564 = vst.msk [vmem:[%s3 + $0x50] sm:$0xff] %vm257, %v4500
  %4565 = vst.msk [vmem:[%s3 + $0x58] sm:$0xff] %vm257, %v4501
  %4566 = vst.msk [vmem:[%s3 + $0x60] sm:$0xff] %vm257, %v4502
  %4567 = vst.msk [vmem:[%s3 + $0x68] sm:$0xff] %vm257, %v4503
  %4568 = vst.msk [vmem:[%s3 + $0x70] sm:$0xff] %vm257, %v4504
  %4569 = vst.msk [vmem:[%s3 + $0x78] sm:$0xff] %vm257, %v4505
  %4570 = vst.msk [vmem:[%s3 + $0x80] sm:$0xff] %vm257, %v4506
  %4571 = vst.msk [vmem:[%s3 + $0x88] sm:$0xff] %vm257, %v4507
  %4572 = vst.msk [vmem:[%s3 + $0x90] sm:$0xff] %vm257, %v4508
  %4573 = vst.msk [vmem:[%s3 + $0x98] sm:$0xff] %vm257, %v4509
  %4574 = vst.msk [vmem:[%s3 + $0xa0] sm:$0xff] %vm257, %v4510
  %4575 = vst.msk [vmem:[%s3 + $0xa8] sm:$0xff] %vm257, %v4511
  %4576 = vst.msk [vmem:[%s3 + $0xb0] sm:$0xff] %vm257, %v4512
  %4577 = vst.msk [vmem:[%s3 + $0xb8] sm:$0xff] %vm257, %v4513
  %4578 = vst.msk [vmem:[%s3 + $0xc0] sm:$0xff] %vm257, %v4514
  %4579 = vst.msk [vmem:[%s3 + $0xc8] sm:$0xff] %vm257, %v4515
  %4580 = vst.msk [vmem:[%s3 + $0xd0] sm:$0xff] %vm257, %v4516
  %4581 = vst.msk [vmem:[%s3 + $0xd8] sm:$0xff] %vm257, %v4517
  %4582 = vst.msk [vmem:[%s3 + $0xe0] sm:$0xff] %vm257, %v4518
  %4583 = vst.msk [vmem:[%s3 + $0xe8] sm:$0xff] %vm257, %v4519
  %4584 = vst.msk [vmem:[%s3 + $0xf0] sm:$0xff] %vm257, %v4520
  %4585 = vst.msk [vmem:[%s3 + $0xf8] sm:$0xff] %vm257, %v4521
  %4586 = vst.msk [vmem:[%s3 + $0x100] sm:$0xff] %vm257, %v4522
  %4587 = vst.msk [vmem:[%s3 + $0x108] sm:$0xff] %vm257, %v4523
  %4588 = vst.msk [vmem:[%s3 + $0x110] sm:$0xff] %vm257, %v4524
  %4589 = vst.msk [vmem:[%s3 + $0x118] sm:$0xff] %vm257, %v4525
  %4590 = vst.msk [vmem:[%s3 + $0x120] sm:$0xff] %vm257, %v4526
  %4591 = vst.msk [vmem:[%s3 + $0x128] sm:$0xff] %vm257, %v4527
  %4592 = vst.msk [vmem:[%s3 + $0x130] sm:$0xff] %vm257, %v4528
  %4593 = vst.msk [vmem:[%s3 + $0x138] sm:$0xff] %vm257, %v4529
  %4594 = vst.msk [vmem:[%s3 + $0x140] sm:$0xff] %vm257, %v4530
  %4595 = vst.msk [vmem:[%s3 + $0x148] sm:$0xff] %vm257, %v4531
  %4596 = vst.msk [vmem:[%s3 + $0x150] sm:$0xff] %vm257, %v4532
  %4597 = vst.msk [vmem:[%s3 + $0x158] sm:$0xff] %vm257, %v4533
  %4598 = vst.msk [vmem:[%s3 + $0x160] sm:$0xff] %vm257, %v4534
  %4599 = vst.msk [vmem:[%s3 + $0x168] sm:$0xff] %vm257, %v4535
  %4600 = vst.msk [vmem:[%s3 + $0x170] sm:$0xff] %vm257, %v4536
  %4601 = vst.msk [vmem:[%s3 + $0x178] sm:$0xff] %vm257, %v4537
  %4602 = vst.msk [vmem:[%s3 + $0x180] sm:$0xff] %vm257, %v4538
  %4603 = vst.msk [vmem:[%s3 + $0x188] sm:$0xff] %vm257, %v4539
  %4604 = vst.msk [vmem:[%s3 + $0x190] sm:$0xff] %vm257, %v4540
  %4605 = vst.msk [vmem:[%s3 + $0x198] sm:$0xff] %vm257, %v4541
  %4606 = vst.msk [vmem:[%s3 + $0x1a0] sm:$0xff] %vm257, %v4542
  %4607 = vst.msk [vmem:[%s3 + $0x1a8] sm:$0xff] %vm257, %v4543
  %4608 = vst.msk [vmem:[%s3 + $0x1b0] sm:$0xff] %vm257, %v4544
  %4609 = vst.msk [vmem:[%s3 + $0x1b8] sm:$0xff] %vm257, %v4545
  %4610 = vst.msk [vmem:[%s3 + $0x1c0] sm:$0xff] %vm257, %v4546
  %4611 = vst.msk [vmem:[%s3 + $0x1c8] sm:$0xff] %vm257, %v4547
  %4612 = vst.msk [vmem:[%s3 + $0x1d0] sm:$0xff] %vm257, %v4548
  %4613 = vst.msk [vmem:[%s3 + $0x1d8] sm:$0xff] %vm257, %v4549
  %4614 = vst.msk [vmem:[%s3 + $0x1e0] sm:$0xff] %vm257, %v4550
  %4615 = vst.msk [vmem:[%s3 + $0x1e8] sm:$0xff] %vm257, %v4551
  %4616 = vst.msk [vmem:[%s3 + $0x1f0] sm:$0xff] %vm257, %v4552
  %4617 = vst.msk [vmem:[%s3 + $0x1f8] sm:$0xff] %vm257, %v4553
  // Predicated region
  $region14: #{patch_embed_forward.3} parent=0 // pred_check
    _
  $region15: #{patch_embed_forward.3} parent=0 // pred_check_branch
    %4619 = sbr.rel (0) target = $region17
  $region16: #{patch_embed_forward.3} parent=0 // pred_region
    _
  $region17: #{patch_embed_forward.3} parent=0 // pred_fallthru
    _
  // Predicated region
  $region18: #{patch_embed_forward.3} parent=0 // pred_check
    _
  $region19: #{patch_embed_forward.3} parent=0 // pred_check_branch
    %4621 = sbr.rel (0) target = $region21
  $region20: #{patch_embed_forward.3} parent=0 // pred_region
    _
  $region21: #{patch_embed_forward.3} parent=0 // pred_fallthru
    _

// kernel: patch_embed_forward.5
$region0: #{patch_embed_forward.5}
  #allocation0 [shape = 'u32[]', space=smem, size = 0x4, offset = 0x4, fixed_abs, tag = 'smem constant byte address 0x4 - core index']
  #allocation1 [shape = 'u32[72,128]{1,0:T(1,128)}', space=vmem, size = 0x9000, scoped, tag = 'internal scratch']
  #allocation2 [shape = 'f32[2,10,10,32]{3,2,1,0:T(8,128)}', space=vmem, size = 0x28000, scoped, tag = 'scratch operand']
  #allocation3 [shape = 'f32[128,288]{1,0:T(8,128)}', space=vmem, size = 0x30000, scoped, tag = 'scratch operand']
  %s0 = inlined_call_operand.vmem [shape: bf16[128,256], index: 0, kind: input, shape index: {}]
  %s1 = inlined_call_operand.vmem [shape: bf16[864,32], index: 1, kind: input, shape index: {}]
  %s2 = inlined_call_operand.vmem [shape: f32[6,32], index: 2, kind: input, shape index: {}]
  %s3 = inlined_call_operand.vmem [shape: f32[2,64,32], index: 3, kind: output, shape index: {}]
  %s4 = sld [smem:[#allocation0]]
  $region22: #{patch_embed_forward.5} parent=0
    _
  %s6 = ssub.s32 1, %s4
  %s7 = scalar_select 0, %s6, %s4
  // Predicated region
  $region2: #{patch_embed_forward.5} parent=0 // pred_check
    _
  $region3: #{patch_embed_forward.5} parent=0 // pred_check_branch
    %9 = sbr.rel (0) target = $region5
  $region4: #{patch_embed_forward.5} parent=0 // pred_region
    _
  $region5: #{patch_embed_forward.5} parent=0 // pred_fallthru
    _
  // Predicated region
  $region6: #{patch_embed_forward.5} parent=0 // pred_check
    _
  $region7: #{patch_embed_forward.5} parent=0 // pred_check_branch
    %11 = sbr.rel (0) target = $region9
  $region8: #{patch_embed_forward.5} parent=0 // pred_region
    _
  $region9: #{patch_embed_forward.5} parent=0 // pred_fallthru
    _
  // Predicated region
  $region10: #{patch_embed_forward.5} parent=0 // pred_check
    _
  $region11: #{patch_embed_forward.5} parent=0 // pred_check_branch
    %13 = sbr.rel (0) target = $region13
  $region12: #{patch_embed_forward.5} parent=0 // pred_region
    _
  $region13: #{patch_embed_forward.5} parent=0 // pred_fallthru
    _
  %v15 = vld [vmem:[%s0] sm:$0xff]
  %v16 = vld [vmem:[%s0 + $0x8] sm:$0xff]
  %v17 = vld [vmem:[%s0 + $0x10] sm:$0xff]
  %v18 = vld [vmem:[%s0 + $0x18] sm:$0xff]
  %v19 = vld [vmem:[%s0 + $0x20] sm:$0xff]
  %v20 = vld [vmem:[%s0 + $0x28] sm:$0xff]
  %v21 = vld [vmem:[%s0 + $0x30] sm:$0xff]
  %v22 = vld [vmem:[%s0 + $0x38] sm:$0xff]
  %v23 = vld [vmem:[%s0 + $0x40] sm:$0xff]
  %v24 = vld [vmem:[%s0 + $0x48] sm:$0xff]
  %v25 = vld [vmem:[%s0 + $0x50] sm:$0xff]
  %v26 = vld [vmem:[%s0 + $0x58] sm:$0xff]
  %v27 = vld [vmem:[%s0 + $0x60] sm:$0xff]
  %v28 = vld [vmem:[%s0 + $0x68] sm:$0xff]
  %v29 = vld [vmem:[%s0 + $0x70] sm:$0xff]
  %v30 = vld [vmem:[%s0 + $0x78] sm:$0xff]
  %v31 = vld [vmem:[%s1] sm:$0xf]
  %v32 = vld [vmem:[%s1 + $0x4] sm:$0xf]
  %v33 = vld [vmem:[%s1 + $0x8] sm:$0xf]
  %v34 = vld [vmem:[%s1 + $0xc] sm:$0xf]
  %v35 = vld [vmem:[%s1 + $0x10] sm:$0xf]
  %v36 = vld [vmem:[%s1 + $0x14] sm:$0xf]
  %v37 = vld [vmem:[%s1 + $0x18] sm:$0xf]
  %v38 = vld [vmem:[%s1 + $0x1c] sm:$0xf]
  %v39 = vld [vmem:[%s1 + $0x20] sm:$0xf]
  %v40 = vld [vmem:[%s1 + $0x24] sm:$0xf]
  %v41 = vld [vmem:[%s1 + $0x28] sm:$0xf]
  %v42 = vld [vmem:[%s1 + $0x2c] sm:$0xf]
  %v43 = vld [vmem:[%s1 + $0x30] sm:$0xf]
  %v44 = vld [vmem:[%s1 + $0x34] sm:$0xf]
  %v45 = vld [vmem:[%s1 + $0x38] sm:$0xf]
  %v46 = vld [vmem:[%s1 + $0x3c] sm:$0xf]
  %v47 = vld [vmem:[%s1 + $0x40] sm:$0xf]
  %v48 = vld [vmem:[%s1 + $0x44] sm:$0xf]
  %v49 = vld [vmem:[%s1 + $0x48] sm:$0xf]
  %v50 = vld [vmem:[%s1 + $0x4c] sm:$0xf]
  %v51 = vld [vmem:[%s1 + $0x50] sm:$0xf]
  %v52 = vld [vmem:[%s1 + $0x54] sm:$0xf]
  %v53 = vld [vmem:[%s1 + $0x58] sm:$0xf]
  %v54 = vld [vmem:[%s1 + $0x5c] sm:$0xf]
  %v55 = vld [vmem:[%s1 + $0x60] sm:$0xf]
  %v56 = vld [vmem:[%s1 + $0x64] sm:$0xf]
  %v57 = vld [vmem:[%s1 + $0x68] sm:$0xf]
  %v58 = vld [vmem:[%s1 + $0x6c] sm:$0xf]
  %v59 = vld [vmem:[%s1 + $0x70] sm:$0xf]
  %v60 = vld [vmem:[%s1 + $0x74] sm:$0xf]
  %v61 = vld [vmem:[%s1 + $0x78] sm:$0xf]
  %v62 = vld [vmem:[%s1 + $0x7c] sm:$0xf]
  %v63 = vld [vmem:[%s2] sm:$0x1]
  %v64 = vperm.slane %v63, 0
  %v81 = vunpack.c.l.b16 %v15
  %v82 = vunpack.c.h.b16 %v15
  %v83 = vunpack.c.l.b16 %v16
  %v84 = vunpack.c.h.b16 %v16
  %v85 = vunpack.c.l.b16 %v17
  %v86 = vunpack.c.h.b16 %v17
  %v87 = vunpack.c.l.b16 %v18
  %v88 = vunpack.c.h.b16 %v18
  %v89 = vunpack.c.l.b16 %v19
  %v90 = vunpack.c.h.b16 %v19
  %v91 = vunpack.c.l.b16 %v20
  %v92 = vunpack.c.h.b16 %v20
  %v93 = vunpack.c.l.b16 %v21
  %v94 = vunpack.c.h.b16 %v21
  %v95 = vunpack.c.l.b16 %v22
  %v96 = vunpack.c.h.b16 %v22
  %v97 = vunpack.c.l.b16 %v23
  %v98 = vunpack.c.h.b16 %v23
  %v99 = vunpack.c.l.b16 %v24
  %v100 = vunpack.c.h.b16 %v24
  %v101 = vunpack.c.l.b16 %v25
  %v102 = vunpack.c.h.b16 %v25
  %v103 = vunpack.c.l.b16 %v26
  %v104 = vunpack.c.h.b16 %v26
  %v105 = vunpack.c.l.b16 %v27
  %v106 = vunpack.c.h.b16 %v27
  %v107 = vunpack.c.l.b16 %v28
  %v108 = vunpack.c.h.b16 %v28
  %v109 = vunpack.c.l.b16 %v29
  %v110 = vunpack.c.h.b16 %v29
  %v111 = vunpack.c.l.b16 %v30
  %v112 = vunpack.c.h.b16 %v30
  %v113 = vpack.c.b16 %v83, %v81
  %v114 = vpack.c.b16 %v84, %v82
  %v115 = vpack.c.b16 %v87, %v85
  %v116 = vpack.c.b16 %v88, %v86
  %v117 = vpack.c.b16 %v91, %v89
  %v118 = vpack.c.b16 %v92, %v90
  %v119 = vpack.c.b16 %v95, %v93
  %v120 = vpack.c.b16 %v96, %v94
  %v121 = vpack.c.b16 %v99, %v97
  %v122 = vpack.c.b16 %v100, %v98
  %v123 = vpack.c.b16 %v103, %v101
  %v124 = vpack.c.b16 %v104, %v102
  %v125 = vpack.c.b16 %v107, %v105
  %v126 = vpack.c.b16 %v108, %v106
  %v127 = vpack.c.b16 %v111, %v109
  %v128 = vpack.c.b16 %v112, %v110
  %v177 = vunpack.c.l.b16 %v31
  %v178 = vunpack.c.l.b16 %v32
  %v179 = vunpack.c.l.b16 %v33
  %v180 = vunpack.c.l.b16 %v34
  %v181 = vunpack.c.l.b16 %v35
  %v182 = vunpack.c.l.b16 %v36
  %v183 = vunpack.c.l.b16 %v37
  %v184 = vunpack.c.l.b16 %v38
  %v185 = vunpack.c.l.b16 %v39
  %v186 = vunpack.c.l.b16 %v40
  %v187 = vunpack.c.l.b16 %v41
  %v188 = vunpack.c.l.b16 %v42
  %v189 = vunpack.c.l.b16 %v43
  %v190 = vunpack.c.l.b16 %v44
  %v191 = vunpack.c.l.b16 %v45
  %v192 = vunpack.c.l.b16 %v46
  %v193 = vunpack.c.l.b16 %v47
  %v194 = vunpack.c.l.b16 %v48
  %v195 = vunpack.c.l.b16 %v49
  %v196 = vunpack.c.l.b16 %v50
  %v197 = vunpack.c.l.b16 %v51
  %v198 = vunpack.c.l.b16 %v52
  %v199 = vunpack.c.l.b16 %v53
  %v200 = vunpack.c.l.b16 %v54
  %v201 = vunpack.c.l.b16 %v55
  %v202 = vunpack.c.l.b16 %v56
  %v203 = vunpack.c.l.b16 %v57
  %v204 = vunpack.c.l.b16 %v58
  %v205 = vunpack.c.l.b16 %v59
  %v206 = vunpack.c.l.b16 %v60
  %v207 = vunpack.c.l.b16 %v61
  %v208 = vunpack.c.l.b16 %v62
  %v209 = vpack.c.b16 %v178, %v177
  %v210 = vpack.c.b16 %v180, %v179
  %v211 = vpack.c.b16 %v182, %v181
  %v212 = vpack.c.b16 %v184, %v183
  %v213 = vpack.c.b16 %v186, %v185
  %v214 = vpack.c.b16 %v188, %v187
  %v215 = vpack.c.b16 %v190, %v189
  %v216 = vpack.c.b16 %v192, %v191
  %v217 = vpack.c.b16 %v194, %v193
  %v218 = vpack.c.b16 %v196, %v195
  %v219 = vpack.c.b16 %v198, %v197
  %v220 = vpack.c.b16 %v200, %v199
  %v221 = vpack.c.b16 %v202, %v201
  %v222 = vpack.c.b16 %v204, %v203
  %v223 = vpack.c.b16 %v206, %v205
  %v224 = vpack.c.b16 %v208, %v207
  %241 = vmatpush.bf16.msra.mxu0 %v216
  %242 = vmatpush.bf16.msra.mxu0 %v215
  %243 = vmatpush.bf16.msra.mxu0 %v214
  %244 = vmatpush.bf16.msra.mxu0 %v213
  %245 = vmatpush.bf16.msra.mxu0 %v212
  %246 = vmatpush.bf16.msra.mxu0 %v211
  %247 = vmatpush.bf16.msra.mxu0 %v210
  %248 = vmatpush.bf16.msra.mxu0 %v209
  %249 = vmatmul.bf16.gmra.mxu0 %v113
  %v250 = vpop.f32.mrf.mxu0
  %v251 = vadd.f32 %v64, %v250
  %v252 = vpop.f32.mrf.mxu0
  %v253 = vadd.f32 %v64, %v252
  %254 = vmatmul.bf16.gmra.mxu0 %v115
  %v255 = vpop.f32.mrf.mxu0
  %v256 = vadd.f32 %v64, %v255
  %v257 = vpop.f32.mrf.mxu0
  %v258 = vadd.f32 %v64, %v257
  %259 = vmatmul.bf16.gmra.mxu0 %v117
  %v260 = vpop.f32.mrf.mxu0
  %v261 = vadd.f32 %v64, %v260
  %v262 = vpop.f32.mrf.mxu0
  %v263 = vadd.f32 %v64, %v262
  %264 = vmatmul.bf16.gmra.mxu0 %v119
  %v265 = vpop.f32.mrf.mxu0
  %v266 = vadd.f32 %v64, %v265
  %v267 = vpop.f32.mrf.mxu0
  %v268 = vadd.f32 %v64, %v267
  %269 = vmatmul.bf16.gmra.mxu0 %v121
  %v270 = vpop.f32.mrf.mxu0
  %v271 = vadd.f32 %v64, %v270
  %v272 = vpop.f32.mrf.mxu0
  %v273 = vadd.f32 %v64, %v272
  %274 = vmatmul.bf16.gmra.mxu0 %v123
  %v275 = vpop.f32.mrf.mxu0
  %v276 = vadd.f32 %v64, %v275
  %v277 = vpop.f32.mrf.mxu0
  %v278 = vadd.f32 %v64, %v277
  %279 = vmatmul.bf16.gmra.mxu0 %v125
  %v280 = vpop.f32.mrf.mxu0
  %v281 = vadd.f32 %v64, %v280
  %v282 = vpop.f32.mrf.mxu0
  %v283 = vadd.f32 %v64, %v282
  %284 = vmatmul.bf16.gmra.mxu0 %v127
  %v285 = vpop.f32.mrf.mxu0
  %v286 = vadd.f32 %v64, %v285
  %v287 = vpop.f32.mrf.mxu0
  %v288 = vadd.f32 %v64, %v287
  %289 = vdwg.mxu0
  %290 = vmatpush.bf16.msra.mxu0 %v224
  %291 = vmatpush.bf16.msra.mxu0 %v223
  %292 = vmatpush.bf16.msra.mxu0 %v222
  %293 = vmatpush.bf16.msra.mxu0 %v221
  %294 = vmatpush.bf16.msra.mxu0 %v220
  %295 = vmatpush.bf16.msra.mxu0 %v219
  %296 = vmatpush.bf16.msra.mxu0 %v218
  %297 = vmatpush.bf16.msra.mxu0 %v217
  %298 = vmatmul.bf16.gmra.mxu0 %v114
  %v299 = vpop.f32.mrf.mxu0
  %v300 = vadd.f32 %v251, %v299
  %v301 = vpop.f32.mrf.mxu0
  %v302 = vadd.f32 %v253, %v301
  %303 = vmatmul.bf16.gmra.mxu0 %v116
  %v304 = vpop.f32.mrf.mxu0
  %v305 = vadd.f32 %v256, %v304
  %v306 = vpop.f32.mrf.mxu0
  %v307 = vadd.f32 %v258, %v306
  %308 = vmatmul.bf16.gmra.mxu0 %v118
  %v309 = vpop.f32.mrf.mxu0
  %v310 = vadd.f32 %v261, %v309
  %v311 = vpop.f32.mrf.mxu0
  %v312 = vadd.f32 %v263, %v311
  %313 = vmatmul.bf16.gmra.mxu0 %v120
  %v314 = vpop.f32.mrf.mxu0
  %v315 = vadd.f32 %v266, %v314
  %v316 = vpop.f32.mrf.mxu0
  %v317 = vadd.f32 %v268, %v316
  %318 = vmatmul.bf16.gmra.mxu0 %v122
  %v319 = vpop.f32.mrf.mxu0
  %v320 = vadd.f32 %v271, %v319
  %v321 = vpop.f32.mrf.mxu0
  %v322 = vadd.f32 %v273, %v321
  %323 = vmatmul.bf16.gmra.mxu0 %v124
  %v324 = vpop.f32.mrf.mxu0
  %v325 = vadd.f32 %v276, %v324
  %v326 = vpop.f32.mrf.mxu0
  %v327 = vadd.f32 %v278, %v326
  %328 = vmatmul.bf16.gmra.mxu0 %v126
  %v329 = vpop.f32.mrf.mxu0
  %v330 = vadd.f32 %v281, %v329
  %v331 = vpop.f32.mrf.mxu0
  %v332 = vadd.f32 %v283, %v331
  %333 = vmatmul.bf16.gmra.mxu0 %v128
  %v334 = vpop.f32.mrf.mxu0
  %v335 = vadd.f32 %v286, %v334
  %v336 = vpop.f32.mrf.mxu0
  %v337 = vadd.f32 %v288, %v336
  %338 = vdwg.mxu0
  %vm339 = vcmask 261120
  %340 = vst.msk [vmem:[#allocation2] sm:$0xff] %vm339, 0.0
  %vm341 = vcmask 254976
  %342 = vst.msk [vmem:[#allocation2 + $0x8] sm:$0x3] %vm341, 0.0
  %343 = vst.msk [vmem:[#allocation2 + $0x10] sm:$0xff] %vm339, 0.0
  %344 = vst.msk [vmem:[#allocation2 + $0x18] sm:$0x3] %vm341, 0.0
  %345 = vst.msk [vmem:[#allocation2 + $0x20] sm:$0xff] %vm339, 0.0
  %346 = vst.msk [vmem:[#allocation2 + $0x28] sm:$0x3] %vm341, 0.0
  %347 = vst.msk [vmem:[#allocation2 + $0x30] sm:$0xff] %vm339, 0.0
  %348 = vst.msk [vmem:[#allocation2 + $0x38] sm:$0x3] %vm341, 0.0
  %349 = vst.msk [vmem:[#allocation2 + $0x40] sm:$0xff] %vm339, 0.0
  %350 = vst.msk [vmem:[#allocation2 + $0x48] sm:$0x3] %vm341, 0.0
  %351 = vst.msk [vmem:[#allocation2 + $0x50] sm:$0xff] %vm339, 0.0
  %352 = vst.msk [vmem:[#allocation2 + $0x58] sm:$0x3] %vm341, 0.0
  %353 = vst.msk [vmem:[#allocation2 + $0x60] sm:$0xff] %vm339, 0.0
  %354 = vst.msk [vmem:[#allocation2 + $0x68] sm:$0x3] %vm341, 0.0
  %355 = vst.msk [vmem:[#allocation2 + $0x70] sm:$0xff] %vm339, 0.0
  %356 = vst.msk [vmem:[#allocation2 + $0x78] sm:$0x3] %vm341, 0.0
  %357 = vst.msk [vmem:[#allocation2 + $0x80] sm:$0xff] %vm339, 0.0
  %358 = vst.msk [vmem:[#allocation2 + $0x88] sm:$0x3] %vm341, 0.0
  %359 = vst.msk [vmem:[#allocation2 + $0x90] sm:$0xff] %vm339, 0.0
  %360 = vst.msk [vmem:[#allocation2 + $0x98] sm:$0x3] %vm341, 0.0
  %361 = vst.msk [vmem:[#allocation2 + $0xa0] sm:$0xff] %vm339, 0.0
  %362 = vst.msk [vmem:[#allocation2 + $0xa8] sm:$0x3] %vm341, 0.0
  %363 = vst.msk [vmem:[#allocation2 + $0xb0] sm:$0xff] %vm339, 0.0
  %364 = vst.msk [vmem:[#allocation2 + $0xb8] sm:$0x3] %vm341, 0.0
  %365 = vst.msk [vmem:[#allocation2 + $0xc0] sm:$0xff] %vm339, 0.0
  %366 = vst.msk [vmem:[#allocation2 + $0xc8] sm:$0x3] %vm341, 0.0
  %367 = vst.msk [vmem:[#allocation2 + $0xd0] sm:$0xff] %vm339, 0.0
  %368 = vst.msk [vmem:[#allocation2 + $0xd8] sm:$0x3] %vm341, 0.0
  %369 = vst.msk [vmem:[#allocation2 + $0xe0] sm:$0xff] %vm339, 0.0
  %370 = vst.msk [vmem:[#allocation2 + $0xe8] sm:$0x3] %vm341, 0.0
  %371 = vst.msk [vmem:[#allocation2 + $0xf0] sm:$0xff] %vm339, 0.0
  %372 = vst.msk [vmem:[#allocation2 + $0xf8] sm:$0x3] %vm341, 0.0
  %373 = vst.msk [vmem:[#allocation2 + $0x100] sm:$0xff] %vm339, 0.0
  %374 = vst.msk [vmem:[#allocation2 + $0x108] sm:$0x3] %vm341, 0.0
  %375 = vst.msk [vmem:[#allocation2 + $0x110] sm:$0xff] %vm339, 0.0
  %376 = vst.msk [vmem:[#allocation2 + $0x118] sm:$0x3] %vm341, 0.0
  %377 = vst.msk [vmem:[#allocation2 + $0x120] sm:$0xff] %vm339, 0.0
  %378 = vst.msk [vmem:[#allocation2 + $0x128] sm:$0x3] %vm341, 0.0
  %379 = vst.msk [vmem:[#allocation2 + $0x130] sm:$0xff] %vm339, 0.0
  %380 = vst.msk [vmem:[#allocation2 + $0x138] sm:$0x3] %vm341, 0.0
  %v381 = vld [vmem:[%s2 + $0x1] sm:$0x1]
  %s382 = scalar_lea.vmem [#allocation2], 16
  %383 = vst.msk [vmem:[%s382 + $0x1] sm:$0xff] %vm339, %v300
  %384 = vst.msk [vmem:[%s382 + $0x11] sm:$0xff] %vm339, %v302
  %385 = vst.msk [vmem:[%s382 + $0x21] sm:$0xff] %vm339, %v305
  %386 = vst.msk [vmem:[%s382 + $0x31] sm:$0xff] %vm339, %v307
  %387 = vst.msk [vmem:[%s382 + $0x41] sm:$0xff] %vm339, %v310
  %388 = vst.msk [vmem:[%s382 + $0x51] sm:$0xff] %vm339, %v312
  %389 = vst.msk [vmem:[%s382 + $0x61] sm:$0xff] %vm339, %v315
  %390 = vst.msk [vmem:[%s382 + $0x71] sm:$0xff] %vm339, %v317
  %391 = vst.msk [vmem:[%s382 + $0xa1] sm:$0xff] %vm339, %v320
  %392 = vst.msk [vmem:[%s382 + $0xb1] sm:$0xff] %vm339, %v322
  %393 = vst.msk [vmem:[%s382 + $0xc1] sm:$0xff] %vm339, %v325
  %394 = vst.msk [vmem:[%s382 + $0xd1] sm:$0xff] %vm339, %v327
  %395 = vst.msk [vmem:[%s382 + $0xe1] sm:$0xff] %vm339, %v330
  %396 = vst.msk [vmem:[%s382 + $0xf1] sm:$0xff] %vm339, %v332
  %397 = vst.msk [vmem:[%s382 + $0x101] sm:$0xff] %vm339, %v335
  %398 = vst.msk [vmem:[%s382 + $0x111] sm:$0xff] %vm339, %v337
  %v399 = vld [vmem:[#allocation2] sm:$0xff]
  %v400 = vld [vmem:[#allocation2 + $0x10] sm:$0xff]
  %v401 = vld [vmem:[#allocation2 + $0x20] sm:$0xff]
  %v402 = vld [vmem:[#allocation2 + $0x30] sm:$0xff]
  %v403 = vld [vmem:[#allocation2 + $0x40] sm:$0xff]
  %v404 = vld [vmem:[#allocation2 + $0x50] sm:$0xff]
  %v405 = vld [vmem:[#allocation2 + $0x60] sm:$0xff]
  %v406 = vld [vmem:[#allocation2 + $0x70] sm:$0xff]
  %v407 = vld [vmem:[#allocation2 + $0xa0] sm:$0xff]
  %v408 = vld [vmem:[#allocation2 + $0xb0] sm:$0xff]
  %v409 = vld [vmem:[#allocation2 + $0xc0] sm:$0xff]
  %v410 = vld [vmem:[#allocation2 + $0xd0] sm:$0xff]
  %v411 = vld [vmem:[#allocation2 + $0xe0] sm:$0xff]
  %v412 = vld [vmem:[#allocation2 + $0xf0] sm:$0xff]
  %v413 = vld [vmem:[#allocation2 + $0x100] sm:$0xff]
  %v414 = vld [vmem:[#allocation2 + $0x110] sm:$0xff]
  %415 = vst.msk [vmem:[#allocation3] sm:$0xff] %vm339, %v399
  %416 = vst.msk [vmem:[#allocation3 + $0x18] sm:$0xff] %vm339, %v400
  %417 = vst.msk [vmem:[#allocation3 + $0x30] sm:$0xff] %vm339, %v401
  %418 = vst.msk [vmem:[#allocation3 + $0x48] sm:$0xff] %vm339, %v402
  %419 = vst.msk [vmem:[#allocation3 + $0x60] sm:$0xff] %vm339, %v403
  %420 = vst.msk [vmem:[#allocation3 + $0x78] sm:$0xff] %vm339, %v404
  %421 = vst.msk [vmem:[#allocation3 + $0x90] sm:$0xff] %vm339, %v405
  %422 = vst.msk [vmem:[#allocation3 + $0xa8] sm:$0xff] %vm339, %v406
  %423 = vst.msk [vmem:[#allocation3 + $0xc0] sm:$0xff] %vm339, %v407
  %424 = vst.msk [vmem:[#allocation3 + $0xd8] sm:$0xff] %vm339, %v408
  %425 = vst.msk [vmem:[#allocation3 + $0xf0] sm:$0xff] %vm339, %v409
  %426 = vst.msk [vmem:[#allocation3 + $0x108] sm:$0xff] %vm339, %v410
  %427 = vst.msk [vmem:[#allocation3 + $0x120] sm:$0xff] %vm339, %v411
  %428 = vst.msk [vmem:[#allocation3 + $0x138] sm:$0xff] %vm339, %v412
  %429 = vst.msk [vmem:[#allocation3 + $0x150] sm:$0xff] %vm339, %v413
  %430 = vst.msk [vmem:[#allocation3 + $0x168] sm:$0xff] %vm339, %v414
  %v431 = vld [vmem:[#allocation2 + $0x1] sm:$0xff]
  %v432 = vld [vmem:[#allocation2 + $0x11] sm:$0xff]
  %v433 = vld [vmem:[#allocation2 + $0x21] sm:$0xff]
  %v434 = vld [vmem:[#allocation2 + $0x31] sm:$0xff]
  %v435 = vld [vmem:[#allocation2 + $0x41] sm:$0xff]
  %v436 = vld [vmem:[#allocation2 + $0x51] sm:$0xff]
  %v437 = vld [vmem:[#allocation2 + $0x61] sm:$0xff]
  %v438 = vld [vmem:[#allocation2 + $0x71] sm:$0xff]
  %v439 = vld [vmem:[#allocation2 + $0xa1] sm:$0xff]
  %v440 = vld [vmem:[#allocation2 + $0xb1] sm:$0xff]
  %v441 = vld [vmem:[#allocation2 + $0xc1] sm:$0xff]
  %v442 = vld [vmem:[#allocation2 + $0xd1] sm:$0xff]
  %v443 = vld [vmem:[#allocation2 + $0xe1] sm:$0xff]
  %v444 = vld [vmem:[#allocation2 + $0xf1] sm:$0xff]
  %v445 = vld [vmem:[#allocation2 + $0x101] sm:$0xff]
  %v446 = vld [vmem:[#allocation2 + $0x111] sm:$0xff]
  %463 = vrot.lane.b32.xlu0 %v431, 32
  %v464 = vpop.permute.xlu0 %463
  %465 = vrot.lane.b32.xlu0 %v432, 32
  %v466 = vpop.permute.xlu0 %465
  %467 = vrot.lane.b32.xlu0 %v433, 32
  %v468 = vpop.permute.xlu0 %467
  %469 = vrot.lane.b32.xlu0 %v434, 32
  %v470 = vpop.permute.xlu0 %469
  %471 = vrot.lane.b32.xlu0 %v435, 32
  %v472 = vpop.permute.xlu0 %471
  %473 = vrot.lane.b32.xlu0 %v436, 32
  %v474 = vpop.permute.xlu0 %473
  %475 = vrot.lane.b32.xlu0 %v437, 32
  %v476 = vpop.permute.xlu0 %475
  %477 = vrot.lane.b32.xlu0 %v438, 32
  %v478 = vpop.permute.xlu0 %477
  %479 = vrot.lane.b32.xlu0 %v439, 32
  %v480 = vpop.permute.xlu0 %479
  %481 = vrot.lane.b32.xlu0 %v440, 32
  %v482 = vpop.permute.xlu0 %481
  %483 = vrot.lane.b32.xlu0 %v441, 32
  %v484 = vpop.permute.xlu0 %483
  %485 = vrot.lane.b32.xlu0 %v442, 32
  %v486 = vpop.permute.xlu0 %485
  %487 = vrot.lane.b32.xlu0 %v443, 32
  %v488 = vpop.permute.xlu0 %487
  %489 = vrot.lane.b32.xlu0 %v444, 32
  %v490 = vpop.permute.xlu0 %489
  %491 = vrot.lane.b32.xlu0 %v445, 32
  %v492 = vpop.permute.xlu0 %491
  %493 = vrot.lane.b32.xlu0 %v446, 32
  %v494 = vpop.permute.xlu0 %493
  %vm511 = vcmask 523520
  %512 = vst.msk [vmem:[#allocation3] sm:$0xff] %vm511, %v464
  %513 = vst.msk [vmem:[#allocation3 + $0x18] sm:$0xff] %vm511, %v466
  %514 = vst.msk [vmem:[#allocation3 + $0x30] sm:$0xff] %vm511, %v468
  %515 = vst.msk [vmem:[#allocation3 + $0x48] sm:$0xff] %vm511, %v470
  %516 = vst.msk [vmem:[#allocation3 + $0x60] sm:$0xff] %vm511, %v472
  %517 = vst.msk [vmem:[#allocation3 + $0x78] sm:$0xff] %vm511, %v474
  %518 = vst.msk [vmem:[#allocation3 + $0x90] sm:$0xff] %vm511, %v476
  %519 = vst.msk [vmem:[#allocation3 + $0xa8] sm:$0xff] %vm511, %v478
  %520 = vst.msk [vmem:[#allocation3 + $0xc0] sm:$0xff] %vm511, %v480
  %521 = vst.msk [vmem:[#allocation3 + $0xd8] sm:$0xff] %vm511, %v482
  %522 = vst.msk [vmem:[#allocation3 + $0xf0] sm:$0xff] %vm511, %v484
  %523 = vst.msk [vmem:[#allocation3 + $0x108] sm:$0xff] %vm511, %v486
  %524 = vst.msk [vmem:[#allocation3 + $0x120] sm:$0xff] %vm511, %v488
  %525 = vst.msk [vmem:[#allocation3 + $0x138] sm:$0xff] %vm511, %v490
  %526 = vst.msk [vmem:[#allocation3 + $0x150] sm:$0xff] %vm511, %v492
  %527 = vst.msk [vmem:[#allocation3 + $0x168] sm:$0xff] %vm511, %v494
  %v528 = vld [vmem:[#allocation2 + $0x2] sm:$0xff]
  %v529 = vld [vmem:[#allocation2 + $0x12] sm:$0xff]
  %v530 = vld [vmem:[#allocation2 + $0x22] sm:$0xff]
  %v531 = vld [vmem:[#allocation2 + $0x32] sm:$0xff]
  %v532 = vld [vmem:[#allocation2 + $0x42] sm:$0xff]
  %v533 = vld [vmem:[#allocation2 + $0x52] sm:$0xff]
  %v534 = vld [vmem:[#allocation2 + $0x62] sm:$0xff]
  %v535 = vld [vmem:[#allocation2 + $0x72] sm:$0xff]
  %v536 = vld [vmem:[#allocation2 + $0xa2] sm:$0xff]
  %v537 = vld [vmem:[#allocation2 + $0xb2] sm:$0xff]
  %v538 = vld [vmem:[#allocation2 + $0xc2] sm:$0xff]
  %v539 = vld [vmem:[#allocation2 + $0xd2] sm:$0xff]
  %v540 = vld [vmem:[#allocation2 + $0xe2] sm:$0xff]
  %v541 = vld [vmem:[#allocation2 + $0xf2] sm:$0xff]
  %v542 = vld [vmem:[#allocation2 + $0x102] sm:$0xff]
  %v543 = vld [vmem:[#allocation2 + $0x112] sm:$0xff]
  %560 = vrot.lane.b32.xlu0 %v528, 64
  %v561 = vpop.permute.xlu0 %560
  %562 = vrot.lane.b32.xlu0 %v529, 64
  %v563 = vpop.permute.xlu0 %562
  %564 = vrot.lane.b32.xlu0 %v530, 64
  %v565 = vpop.permute.xlu0 %564
  %566 = vrot.lane.b32.xlu0 %v531, 64
  %v567 = vpop.permute.xlu0 %566
  %568 = vrot.lane.b32.xlu0 %v532, 64
  %v569 = vpop.permute.xlu0 %568
  %570 = vrot.lane.b32.xlu0 %v533, 64
  %v571 = vpop.permute.xlu0 %570
  %572 = vrot.lane.b32.xlu0 %v534, 64
  %v573 = vpop.permute.xlu0 %572
  %574 = vrot.lane.b32.xlu0 %v535, 64
  %v575 = vpop.permute.xlu0 %574
  %576 = vrot.lane.b32.xlu0 %v536, 64
  %v577 = vpop.permute.xlu0 %576
  %578 = vrot.lane.b32.xlu0 %v537, 64
  %v579 = vpop.permute.xlu0 %578
  %580 = vrot.lane.b32.xlu0 %v538, 64
  %v581 = vpop.permute.xlu0 %580
  %582 = vrot.lane.b32.xlu0 %v539, 64
  %v583 = vpop.permute.xlu0 %582
  %584 = vrot.lane.b32.xlu0 %v540, 64
  %v585 = vpop.permute.xlu0 %584
  %586 = vrot.lane.b32.xlu0 %v541, 64
  %v587 = vpop.permute.xlu0 %586
  %588 = vrot.lane.b32.xlu0 %v542, 64
  %v589 = vpop.permute.xlu0 %588
  %590 = vrot.lane.b32.xlu0 %v543, 64
  %v591 = vpop.permute.xlu0 %590
  %vm608 = vcmask 785920
  %609 = vst.msk [vmem:[#allocation3] sm:$0xff] %vm608, %v561
  %610 = vst.msk [vmem:[#allocation3 + $0x18] sm:$0xff] %vm608, %v563
  %611 = vst.msk [vmem:[#allocation3 + $0x30] sm:$0xff] %vm608, %v565
  %612 = vst.msk [vmem:[#allocation3 + $0x48] sm:$0xff] %vm608, %v567
  %613 = vst.msk [vmem:[#allocation3 + $0x60] sm:$0xff] %vm608, %v569
  %614 = vst.msk [vmem:[#allocation3 + $0x78] sm:$0xff] %vm608, %v571
  %615 = vst.msk [vmem:[#allocation3 + $0x90] sm:$0xff] %vm608, %v573
  %616 = vst.msk [vmem:[#allocation3 + $0xa8] sm:$0xff] %vm608, %v575
  %617 = vst.msk [vmem:[#allocation3 + $0xc0] sm:$0xff] %vm608, %v577
  %618 = vst.msk [vmem:[#allocation3 + $0xd8] sm:$0xff] %vm608, %v579
  %619 = vst.msk [vmem:[#allocation3 + $0xf0] sm:$0xff] %vm608, %v581
  %620 = vst.msk [vmem:[#allocation3 + $0x108] sm:$0xff] %vm608, %v583
  %621 = vst.msk [vmem:[#allocation3 + $0x120] sm:$0xff] %vm608, %v585
  %622 = vst.msk [vmem:[#allocation3 + $0x138] sm:$0xff] %vm608, %v587
  %623 = vst.msk [vmem:[#allocation3 + $0x150] sm:$0xff] %vm608, %v589
  %624 = vst.msk [vmem:[#allocation3 + $0x168] sm:$0xff] %vm608, %v591
  %v625 = vld [vmem:[%s382] sm:$0xff]
  %v626 = vld [vmem:[%s382 + $0x10] sm:$0xff]
  %v627 = vld [vmem:[%s382 + $0x20] sm:$0xff]
  %v628 = vld [vmem:[%s382 + $0x30] sm:$0xff]
  %v629 = vld [vmem:[%s382 + $0x40] sm:$0xff]
  %v630 = vld [vmem:[%s382 + $0x50] sm:$0xff]
  %v631 = vld [vmem:[%s382 + $0x60] sm:$0xff]
  %v632 = vld [vmem:[%s382 + $0x70] sm:$0xff]
  %v633 = vld [vmem:[%s382 + $0xa0] sm:$0xff]
  %v634 = vld [vmem:[%s382 + $0xb0] sm:$0xff]
  %v635 = vld [vmem:[%s382 + $0xc0] sm:$0xff]
  %v636 = vld [vmem:[%s382 + $0xd0] sm:$0xff]
  %v637 = vld [vmem:[%s382 + $0xe0] sm:$0xff]
  %v638 = vld [vmem:[%s382 + $0xf0] sm:$0xff]
  %v639 = vld [vmem:[%s382 + $0x100] sm:$0xff]
  %v640 = vld [vmem:[%s382 + $0x110] sm:$0xff]
  %657 = vrot.lane.b32.xlu0 %v625, 96
  %v658 = vpop.permute.xlu0 %657
  %659 = vrot.lane.b32.xlu0 %v626, 96
  %v660 = vpop.permute.xlu0 %659
  %661 = vrot.lane.b32.xlu0 %v627, 96
  %v662 = vpop.permute.xlu0 %661
  %663 = vrot.lane.b32.xlu0 %v628, 96
  %v664 = vpop.permute.xlu0 %663
  %665 = vrot.lane.b32.xlu0 %v629, 96
  %v666 = vpop.permute.xlu0 %665
  %667 = vrot.lane.b32.xlu0 %v630, 96
  %v668 = vpop.permute.xlu0 %667
  %669 = vrot.lane.b32.xlu0 %v631, 96
  %v670 = vpop.permute.xlu0 %669
  %671 = vrot.lane.b32.xlu0 %v632, 96
  %v672 = vpop.permute.xlu0 %671
  %673 = vrot.lane.b32.xlu0 %v633, 96
  %v674 = vpop.permute.xlu0 %673
  %675 = vrot.lane.b32.xlu0 %v634, 96
  %v676 = vpop.permute.xlu0 %675
  %677 = vrot.lane.b32.xlu0 %v635, 96
  %v678 = vpop.permute.xlu0 %677
  %679 = vrot.lane.b32.xlu0 %v636, 96
  %v680 = vpop.permute.xlu0 %679
  %681 = vrot.lane.b32.xlu0 %v637, 96
  %v682 = vpop.permute.xlu0 %681
  %683 = vrot.lane.b32.xlu0 %v638, 96
  %v684 = vpop.permute.xlu0 %683
  %685 = vrot.lane.b32.xlu0 %v639, 96
  %v686 = vpop.permute.xlu0 %685
  %687 = vrot.lane.b32.xlu0 %v640, 96
  %v688 = vpop.permute.xlu0 %687
  %vm705 = vcmask 1048320
  %706 = vst.msk [vmem:[#allocation3] sm:$0xff] %vm705, %v658
  %707 = vst.msk [vmem:[#allocation3 + $0x18] sm:$0xff] %vm705, %v660
  %708 = vst.msk [vmem:[#allocation3 + $0x30] sm:$0xff] %vm705, %v662
  %709 = vst.msk [vmem:[#allocation3 + $0x48] sm:$0xff] %vm705, %v664
  %710 = vst.msk [vmem:[#allocation3 + $0x60] sm:$0xff] %vm705, %v666
  %711 = vst.msk [vmem:[#allocation3 + $0x78] sm:$0xff] %vm705, %v668
  %712 = vst.msk [vmem:[#allocation3 + $0x90] sm:$0xff] %vm705, %v670
  %713 = vst.msk [vmem:[#allocation3 + $0xa8] sm:$0xff] %vm705, %v672
  %714 = vst.msk [vmem:[#allocation3 + $0xc0] sm:$0xff] %vm705, %v674
  %715 = vst.msk [vmem:[#allocation3 + $0xd8] sm:$0xff] %vm705, %v676
  %716 = vst.msk [vmem:[#allocation3 + $0xf0] sm:$0xff] %vm705, %v678
  %717 = vst.msk [vmem:[#allocation3 + $0x108] sm:$0xff] %vm705, %v680
  %718 = vst.msk [vmem:[#allocation3 + $0x120] sm:$0xff] %vm705, %v682
  %719 = vst.msk [vmem:[#allocation3 + $0x138] sm:$0xff] %vm705, %v684
  %720 = vst.msk [vmem:[#allocation3 + $0x150] sm:$0xff] %vm705, %v686
  %721 = vst.msk [vmem:[#allocation3 + $0x168] sm:$0xff] %vm705, %v688
  %v722 = vld [vmem:[%s382 + $0x1] sm:$0xff]
  %v723 = vld [vmem:[%s382 + $0x11] sm:$0xff]
  %v724 = vld [vmem:[%s382 + $0x21] sm:$0xff]
  %v725 = vld [vmem:[%s382 + $0x31] sm:$0xff]
  %v726 = vld [vmem:[%s382 + $0x41] sm:$0xff]
  %v727 = vld [vmem:[%s382 + $0x51] sm:$0xff]
  %v728 = vld [vmem:[%s382 + $0x61] sm:$0xff]
  %v729 = vld [vmem:[%s382 + $0x71] sm:$0xff]
  %v730 = vld [vmem:[%s382 + $0xa1] sm:$0xff]
  %v731 = vld [vmem:[%s382 + $0xb1] sm:$0xff]
  %v732 = vld [vmem:[%s382 + $0xc1] sm:$0xff]
  %v733 = vld [vmem:[%s382 + $0xd1] sm:$0xff]
  %v734 = vld [vmem:[%s382 + $0xe1] sm:$0xff]
  %v735 = vld [vmem:[%s382 + $0xf1] sm:$0xff]
  %v736 = vld [vmem:[%s382 + $0x101] sm:$0xff]
  %v737 = vld [vmem:[%s382 + $0x111] sm:$0xff]
  %738 = vst.msk [vmem:[#allocation3 + $0x8] sm:$0xff] %vm339, %v722
  %739 = vst.msk [vmem:[#allocation3 + $0x20] sm:$0xff] %vm339, %v723
  %740 = vst.msk [vmem:[#allocation3 + $0x38] sm:$0xff] %vm339, %v724
  %741 = vst.msk [vmem:[#allocation3 + $0x50] sm:$0xff] %vm339, %v725
  %742 = vst.msk [vmem:[#allocation3 + $0x68] sm:$0xff] %vm339, %v726
  %743 = vst.msk [vmem:[#allocation3 + $0x80] sm:$0xff] %vm339, %v727
  %744 = vst.msk [vmem:[#allocation3 + $0x98] sm:$0xff] %vm339, %v728
  %745 = vst.msk [vmem:[#allocation3 + $0xb0] sm:$0xff] %vm339, %v729
  %746 = vst.msk [vmem:[#allocation3 + $0xc8] sm:$0xff] %vm339, %v730
  %747 = vst.msk [vmem:[#allocation3 + $0xe0] sm:$0xff] %vm339, %v731
  %748 = vst.msk [vmem:[#allocation3 + $0xf8] sm:$0xff] %vm339, %v732
  %749 = vst.msk [vmem:[#allocation3 + $0x110] sm:$0xff] %vm339, %v733
  %750 = vst.msk [vmem:[#allocation3 + $0x128] sm:$0xff] %vm339, %v734
  %751 = vst.msk [vmem:[#allocation3 + $0x140] sm:$0xff] %vm339, %v735
  %752 = vst.msk [vmem:[#allocation3 + $0x158] sm:$0xff] %vm339, %v736
  %753 = vst.msk [vmem:[#allocation3 + $0x170] sm:$0xff] %vm339, %v737
  %v754 = vld [vmem:[%s382 + $0x2] sm:$0xff]
  %v755 = vld [vmem:[%s382 + $0x12] sm:$0xff]
  %v756 = vld [vmem:[%s382 + $0x22] sm:$0xff]
  %v757 = vld [vmem:[%s382 + $0x32] sm:$0xff]
  %v758 = vld [vmem:[%s382 + $0x42] sm:$0xff]
  %v759 = vld [vmem:[%s382 + $0x52] sm:$0xff]
  %v760 = vld [vmem:[%s382 + $0x62] sm:$0xff]
  %v761 = vld [vmem:[%s382 + $0x72] sm:$0xff]
  %v762 = vld [vmem:[%s382 + $0xa2] sm:$0xff]
  %v763 = vld [vmem:[%s382 + $0xb2] sm:$0xff]
  %v764 = vld [vmem:[%s382 + $0xc2] sm:$0xff]
  %v765 = vld [vmem:[%s382 + $0xd2] sm:$0xff]
  %v766 = vld [vmem:[%s382 + $0xe2] sm:$0xff]
  %v767 = vld [vmem:[%s382 + $0xf2] sm:$0xff]
  %v768 = vld [vmem:[%s382 + $0x102] sm:$0xff]
  %v769 = vld [vmem:[%s382 + $0x112] sm:$0xff]
  %786 = vrot.lane.b32.xlu0 %v754, 32
  %v787 = vpop.permute.xlu0 %786
  %788 = vrot.lane.b32.xlu0 %v755, 32
  %v789 = vpop.permute.xlu0 %788
  %790 = vrot.lane.b32.xlu0 %v756, 32
  %v791 = vpop.permute.xlu0 %790
  %792 = vrot.lane.b32.xlu0 %v757, 32
  %v793 = vpop.permute.xlu0 %792
  %794 = vrot.lane.b32.xlu0 %v758, 32
  %v795 = vpop.permute.xlu0 %794
  %796 = vrot.lane.b32.xlu0 %v759, 32
  %v797 = vpop.permute.xlu0 %796
  %798 = vrot.lane.b32.xlu0 %v760, 32
  %v799 = vpop.permute.xlu0 %798
  %800 = vrot.lane.b32.xlu0 %v761, 32
  %v801 = vpop.permute.xlu0 %800
  %802 = vrot.lane.b32.xlu0 %v762, 32
  %v803 = vpop.permute.xlu0 %802
  %804 = vrot.lane.b32.xlu0 %v763, 32
  %v805 = vpop.permute.xlu0 %804
  %806 = vrot.lane.b32.xlu0 %v764, 32
  %v807 = vpop.permute.xlu0 %806
  %808 = vrot.lane.b32.xlu0 %v765, 32
  %v809 = vpop.permute.xlu0 %808
  %810 = vrot.lane.b32.xlu0 %v766, 32
  %v811 = vpop.permute.xlu0 %810
  %812 = vrot.lane.b32.xlu0 %v767, 32
  %v813 = vpop.permute.xlu0 %812
  %814 = vrot.lane.b32.xlu0 %v768, 32
  %v815 = vpop.permute.xlu0 %814
  %816 = vrot.lane.b32.xlu0 %v769, 32
  %v817 = vpop.permute.xlu0 %816
  %834 = vst.msk [vmem:[#allocation3 + $0x8] sm:$0xff] %vm511, %v787
  %835 = vst.msk [vmem:[#allocation3 + $0x20] sm:$0xff] %vm511, %v789
  %836 = vst.msk [vmem:[#allocation3 + $0x38] sm:$0xff] %vm511, %v791
  %837 = vst.msk [vmem:[#allocation3 + $0x50] sm:$0xff] %vm511, %v793
  %838 = vst.msk [vmem:[#allocation3 + $0x68] sm:$0xff] %vm511, %v795
  %839 = vst.msk [vmem:[#allocation3 + $0x80] sm:$0xff] %vm511, %v797
  %840 = vst.msk [vmem:[#allocation3 + $0x98] sm:$0xff] %vm511, %v799
  %841 = vst.msk [vmem:[#allocation3 + $0xb0] sm:$0xff] %vm511, %v801
  %842 = vst.msk [vmem:[#allocation3 + $0xc8] sm:$0xff] %vm511, %v803
  %843 = vst.msk [vmem:[#allocation3 + $0xe0] sm:$0xff] %vm511, %v805
  %844 = vst.msk [vmem:[#allocation3 + $0xf8] sm:$0xff] %vm511, %v807
  %845 = vst.msk [vmem:[#allocation3 + $0x110] sm:$0xff] %vm511, %v809
  %846 = vst.msk [vmem:[#allocation3 + $0x128] sm:$0xff] %vm511, %v811
  %847 = vst.msk [vmem:[#allocation3 + $0x140] sm:$0xff] %vm511, %v813
  %848 = vst.msk [vmem:[#allocation3 + $0x158] sm:$0xff] %vm511, %v815
  %849 = vst.msk [vmem:[#allocation3 + $0x170] sm:$0xff] %vm511, %v817
  %s850 = scalar_lea.vmem [#allocation2], 32
  %v851 = vld [vmem:[%s850] sm:$0xff]
  %v852 = vld [vmem:[%s850 + $0x10] sm:$0xff]
  %v853 = vld [vmem:[%s850 + $0x20] sm:$0xff]
  %v854 = vld [vmem:[%s850 + $0x30] sm:$0xff]
  %v855 = vld [vmem:[%s850 + $0x40] sm:$0xff]
  %v856 = vld [vmem:[%s850 + $0x50] sm:$0xff]
  %v857 = vld [vmem:[%s850 + $0x60] sm:$0xff]
  %v858 = vld [vmem:[%s850 + $0x70] sm:$0xff]
  %v859 = vld [vmem:[%s850 + $0xa0] sm:$0xff]
  %v860 = vld [vmem:[%s850 + $0xb0] sm:$0xff]
  %v861 = vld [vmem:[%s850 + $0xc0] sm:$0xff]
  %v862 = vld [vmem:[%s850 + $0xd0] sm:$0xff]
  %v863 = vld [vmem:[%s850 + $0xe0] sm:$0xff]
  %v864 = vld [vmem:[%s850 + $0xf0] sm:$0xff]
  %v865 = vld [vmem:[%s850 + $0x100] sm:$0xff]
  %v866 = vld [vmem:[%s850 + $0x110] sm:$0xff]
  %883 = vrot.lane.b32.xlu0 %v851, 64
  %v884 = vpop.permute.xlu0 %883
  %885 = vrot.lane.b32.xlu0 %v852, 64
  %v886 = vpop.permute.xlu0 %885
  %887 = vrot.lane.b32.xlu0 %v853, 64
  %v888 = vpop.permute.xlu0 %887
  %889 = vrot.lane.b32.xlu0 %v854, 64
  %v890 = vpop.permute.xlu0 %889
  %891 = vrot.lane.b32.xlu0 %v855, 64
  %v892 = vpop.permute.xlu0 %891
  %893 = vrot.lane.b32.xlu0 %v856, 64
  %v894 = vpop.permute.xlu0 %893
  %895 = vrot.lane.b32.xlu0 %v857, 64
  %v896 = vpop.permute.xlu0 %895
  %897 = vrot.lane.b32.xlu0 %v858, 64
  %v898 = vpop.permute.xlu0 %897
  %899 = vrot.lane.b32.xlu0 %v859, 64
  %v900 = vpop.permute.xlu0 %899
  %901 = vrot.lane.b32.xlu0 %v860, 64
  %v902 = vpop.permute.xlu0 %901
  %903 = vrot.lane.b32.xlu0 %v861, 64
  %v904 = vpop.permute.xlu0 %903
  %905 = vrot.lane.b32.xlu0 %v862, 64
  %v906 = vpop.permute.xlu0 %905
  %907 = vrot.lane.b32.xlu0 %v863, 64
  %v908 = vpop.permute.xlu0 %907
  %909 = vrot.lane.b32.xlu0 %v864, 64
  %v910 = vpop.permute.xlu0 %909
  %911 = vrot.lane.b32.xlu0 %v865, 64
  %v912 = vpop.permute.xlu0 %911
  %913 = vrot.lane.b32.xlu0 %v866, 64
  %v914 = vpop.permute.xlu0 %913
  %931 = vst.msk [vmem:[#allocation3 + $0x8] sm:$0xff] %vm608, %v884
  %932 = vst.msk [vmem:[#allocation3 + $0x20] sm:$0xff] %vm608, %v886
  %933 = vst.msk [vmem:[#allocation3 + $0x38] sm:$0xff] %vm608, %v888
  %934 = vst.msk [vmem:[#allocation3 + $0x50] sm:$0xff] %vm608, %v890
  %935 = vst.msk [vmem:[#allocation3 + $0x68] sm:$0xff] %vm608, %v892
  %936 = vst.msk [vmem:[#allocation3 + $0x80] sm:$0xff] %vm608, %v894
  %937 = vst.msk [vmem:[#allocation3 + $0x98] sm:$0xff] %vm608, %v896
  %938 = vst.msk [vmem:[#allocation3 + $0xb0] sm:$0xff] %vm608, %v898
  %939 = vst.msk [vmem:[#allocation3 + $0xc8] sm:$0xff] %vm608, %v900
  %940 = vst.msk [vmem:[#allocation3 + $0xe0] sm:$0xff] %vm608, %v902
  %941 = vst.msk [vmem:[#allocation3 + $0xf8] sm:$0xff] %vm608, %v904
  %942 = vst.msk [vmem:[#allocation3 + $0x110] sm:$0xff] %vm608, %v906
  %943 = vst.msk [vmem:[#allocation3 + $0x128] sm:$0xff] %vm608, %v908
  %944 = vst.msk [vmem:[#allocation3 + $0x140] sm:$0xff] %vm608, %v910
  %945 = vst.msk [vmem:[#allocation3 + $0x158] sm:$0xff] %vm608, %v912
  %946 = vst.msk [vmem:[#allocation3 + $0x170] sm:$0xff] %vm608, %v914
  %v947 = vld [vmem:[%s850 + $0x1] sm:$0xff]
  %v948 = vld [vmem:[%s850 + $0x11] sm:$0xff]
  %v949 = vld [vmem:[%s850 + $0x21] sm:$0xff]
  %v950 = vld [vmem:[%s850 + $0x31] sm:$0xff]
  %v951 = vld [vmem:[%s850 + $0x41] sm:$0xff]
  %v952 = vld [vmem:[%s850 + $0x51] sm:$0xff]
  %v953 = vld [vmem:[%s850 + $0x61] sm:$0xff]
  %v954 = vld [vmem:[%s850 + $0x71] sm:$0xff]
  %v955 = vld [vmem:[%s850 + $0xa1] sm:$0xff]
  %v956 = vld [vmem:[%s850 + $0xb1] sm:$0xff]
  %v957 = vld [vmem:[%s850 + $0xc1] sm:$0xff]
  %v958 = vld [vmem:[%s850 + $0xd1] sm:$0xff]
  %v959 = vld [vmem:[%s850 + $0xe1] sm:$0xff]
  %v960 = vld [vmem:[%s850 + $0xf1] sm:$0xff]
  %v961 = vld [vmem:[%s850 + $0x101] sm:$0xff]
  %v962 = vld [vmem:[%s850 + $0x111] sm:$0xff]
  %979 = vrot.lane.b32.xlu0 %v947, 96
  %v980 = vpop.permute.xlu0 %979
  %981 = vrot.lane.b32.xlu0 %v948, 96
  %v982 = vpop.permute.xlu0 %981
  %983 = vrot.lane.b32.xlu0 %v949, 96
  %v984 = vpop.permute.xlu0 %983
  %985 = vrot.lane.b32.xlu0 %v950, 96
  %v986 = vpop.permute.xlu0 %985
  %987 = vrot.lane.b32.xlu0 %v951, 96
  %v988 = vpop.permute.xlu0 %987
  %989 = vrot.lane.b32.xlu0 %v952, 96
  %v990 = vpop.permute.xlu0 %989
  %991 = vrot.lane.b32.xlu0 %v953, 96
  %v992 = vpop.permute.xlu0 %991
  %993 = vrot.lane.b32.xlu0 %v954, 96
  %v994 = vpop.permute.xlu0 %993
  %995 = vrot.lane.b32.xlu0 %v955, 96
  %v996 = vpop.permute.xlu0 %995
  %997 = vrot.lane.b32.xlu0 %v956, 96
  %v998 = vpop.permute.xlu0 %997
  %999 = vrot.lane.b32.xlu0 %v957, 96
  %v1000 = vpop.permute.xlu0 %999
  %1001 = vrot.lane.b32.xlu0 %v958, 96
  %v1002 = vpop.permute.xlu0 %1001
  %1003 = vrot.lane.b32.xlu0 %v959, 96
  %v1004 = vpop.permute.xlu0 %1003
  %1005 = vrot.lane.b32.xlu0 %v960, 96
  %v1006 = vpop.permute.xlu0 %1005
  %1007 = vrot.lane.b32.xlu0 %v961, 96
  %v1008 = vpop.permute.xlu0 %1007
  %1009 = vrot.lane.b32.xlu0 %v962, 96
  %v1010 = vpop.permute.xlu0 %1009
  %1027 = vst.msk [vmem:[#allocation3 + $0x8] sm:$0xff] %vm705, %v980
  %1028 = vst.msk [vmem:[#allocation3 + $0x20] sm:$0xff] %vm705, %v982
  %1029 = vst.msk [vmem:[#allocation3 + $0x38] sm:$0xff] %vm705, %v984
  %1030 = vst.msk [vmem:[#allocation3 + $0x50] sm:$0xff] %vm705, %v986
  %1031 = vst.msk [vmem:[#allocation3 + $0x68] sm:$0xff] %vm705, %v988
  %1032 = vst.msk [vmem:[#allocation3 + $0x80] sm:$0xff] %vm705, %v990
  %1033 = vst.msk [vmem:[#allocation3 + $0x98] sm:$0xff] %vm705, %v992
  %1034 = vst.msk [vmem:[#allocation3 + $0xb0] sm:$0xff] %vm705, %v994
  %1035 = vst.msk [vmem:[#allocation3 + $0xc8] sm:$0xff] %vm705, %v996
  %1036 = vst.msk [vmem:[#allocation3 + $0xe0] sm:$0xff] %vm705, %v998
  %1037 = vst.msk [vmem:[#allocation3 + $0xf8] sm:$0xff] %vm705, %v1000
  %1038 = vst.msk [vmem:[#allocation3 + $0x110] sm:$0xff] %vm705, %v1002
  %1039 = vst.msk [vmem:[#allocation3 + $0x128] sm:$0xff] %vm705, %v1004
  %1040 = vst.msk [vmem:[#allocation3 + $0x140] sm:$0xff] %vm705, %v1006
  %1041 = vst.msk [vmem:[#allocation3 + $0x158] sm:$0xff] %vm705, %v1008
  %1042 = vst.msk [vmem:[#allocation3 + $0x170] sm:$0xff] %vm705, %v1010
  %v1043 = vld [vmem:[%s850 + $0x2] sm:$0xff]
  %v1044 = vld [vmem:[%s850 + $0x12] sm:$0xff]
  %v1045 = vld [vmem:[%s850 + $0x22] sm:$0xff]
  %v1046 = vld [vmem:[%s850 + $0x32] sm:$0xff]
  %v1047 = vld [vmem:[%s850 + $0x42] sm:$0xff]
  %v1048 = vld [vmem:[%s850 + $0x52] sm:$0xff]
  %v1049 = vld [vmem:[%s850 + $0x62] sm:$0xff]
  %v1050 = vld [vmem:[%s850 + $0x72] sm:$0xff]
  %v1051 = vld [vmem:[%s850 + $0xa2] sm:$0xff]
  %v1052 = vld [vmem:[%s850 + $0xb2] sm:$0xff]
  %v1053 = vld [vmem:[%s850 + $0xc2] sm:$0xff]
  %v1054 = vld [vmem:[%s850 + $0xd2] sm:$0xff]
  %v1055 = vld [vmem:[%s850 + $0xe2] sm:$0xff]
  %v1056 = vld [vmem:[%s850 + $0xf2] sm:$0xff]
  %v1057 = vld [vmem:[%s850 + $0x102] sm:$0xff]
  %v1058 = vld [vmem:[%s850 + $0x112] sm:$0xff]
  %1059 = vst.msk [vmem:[#allocation3 + $0x10] sm:$0xff] %vm339, %v1043
  %1060 = vst.msk [vmem:[#allocation3 + $0x28] sm:$0xff] %vm339, %v1044
  %1061 = vst.msk [vmem:[#allocation3 + $0x40] sm:$0xff] %vm339, %v1045
  %1062 = vst.msk [vmem:[#allocation3 + $0x58] sm:$0xff] %vm339, %v1046
  %1063 = vst.msk [vmem:[#allocation3 + $0x70] sm:$0xff] %vm339, %v1047
  %1064 = vst.msk [vmem:[#allocation3 + $0x88] sm:$0xff] %vm339, %v1048
  %1065 = vst.msk [vmem:[#allocation3 + $0xa0] sm:$0xff] %vm339, %v1049
  %1066 = vst.msk [vmem:[#allocation3 + $0xb8] sm:$0xff] %vm339, %v1050
  %1067 = vst.msk [vmem:[#allocation3 + $0xd0] sm:$0xff] %vm339, %v1051
  %1068 = vst.msk [vmem:[#allocation3 + $0xe8] sm:$0xff] %vm339, %v1052
  %1069 = vst.msk [vmem:[#allocation3 + $0x100] sm:$0xff] %vm339, %v1053
  %1070 = vst.msk [vmem:[#allocation3 + $0x118] sm:$0xff] %vm339, %v1054
  %1071 = vst.msk [vmem:[#allocation3 + $0x130] sm:$0xff] %vm339, %v1055
  %1072 = vst.msk [vmem:[#allocation3 + $0x148] sm:$0xff] %vm339, %v1056
  %1073 = vst.msk [vmem:[#allocation3 + $0x160] sm:$0xff] %vm339, %v1057
  %1074 = vst.msk [vmem:[#allocation3 + $0x178] sm:$0xff] %vm339, %v1058
  %v1075 = vld [vmem:[#allocation3] sm:$0xff]
  %v1076 = vld [vmem:[#allocation3 + $0x8] sm:$0xff]
  %v1077 = vld [vmem:[#allocation3 + $0x10] sm:$0xff]
  %v1078 = vld [vmem:[#allocation3 + $0x18] sm:$0xff]
  %v1079 = vld [vmem:[#allocation3 + $0x20] sm:$0xff]
  %v1080 = vld [vmem:[#allocation3 + $0x28] sm:$0xff]
  %v1081 = vld [vmem:[#allocation3 + $0x30] sm:$0xff]
  %v1082 = vld [vmem:[#allocation3 + $0x38] sm:$0xff]
  %v1083 = vld [vmem:[#allocation3 + $0x40] sm:$0xff]
  %v1084 = vld [vmem:[#allocation3 + $0x48] sm:$0xff]
  %v1085 = vld [vmem:[#allocation3 + $0x50] sm:$0xff]
  %v1086 = vld [vmem:[#allocation3 + $0x58] sm:$0xff]
  %v1087 = vld [vmem:[#allocation3 + $0x60] sm:$0xff]
  %v1088 = vld [vmem:[#allocation3 + $0x68] sm:$0xff]
  %v1089 = vld [vmem:[#allocation3 + $0x70] sm:$0xff]
  %v1090 = vld [vmem:[#allocation3 + $0x78] sm:$0xff]
  %v1091 = vld [vmem:[#allocation3 + $0x80] sm:$0xff]
  %v1092 = vld [vmem:[#allocation3 + $0x88] sm:$0xff]
  %v1093 = vld [vmem:[#allocation3 + $0x90] sm:$0xff]
  %v1094 = vld [vmem:[#allocation3 + $0x98] sm:$0xff]
  %v1095 = vld [vmem:[#allocation3 + $0xa0] sm:$0xff]
  %v1096 = vld [vmem:[#allocation3 + $0xa8] sm:$0xff]
  %v1097 = vld [vmem:[#allocation3 + $0xb0] sm:$0xff]
  %v1098 = vld [vmem:[#allocation3 + $0xb8] sm:$0xff]
  %v1099 = vld [vmem:[#allocation3 + $0xc0] sm:$0xff]
  %v1100 = vld [vmem:[#allocation3 + $0xc8] sm:$0xff]
  %v1101 = vld [vmem:[#allocation3 + $0xd0] sm:$0xff]
  %v1102 = vld [vmem:[#allocation3 + $0xd8] sm:$0xff]
  %v1103 = vld [vmem:[#allocation3 + $0xe0] sm:$0xff]
  %v1104 = vld [vmem:[#allocation3 + $0xe8] sm:$0xff]
  %v1105 = vld [vmem:[#allocation3 + $0xf0] sm:$0xff]
  %v1106 = vld [vmem:[#allocation3 + $0xf8] sm:$0xff]
  %v1107 = vld [vmem:[#allocation3 + $0x100] sm:$0xff]
  %v1108 = vld [vmem:[#allocation3 + $0x108] sm:$0xff]
  %v1109 = vld [vmem:[#allocation3 + $0x110] sm:$0xff]
  %v1110 = vld [vmem:[#allocation3 + $0x118] sm:$0xff]
  %v1111 = vld [vmem:[#allocation3 + $0x120] sm:$0xff]
  %v1112 = vld [vmem:[#allocation3 + $0x128] sm:$0xff]
  %v1113 = vld [vmem:[#allocation3 + $0x130] sm:$0xff]
  %v1114 = vld [vmem:[#allocation3 + $0x138] sm:$0xff]
  %v1115 = vld [vmem:[#allocation3 + $0x140] sm:$0xff]
  %v1116 = vld [vmem:[#allocation3 + $0x148] sm:$0xff]
  %v1117 = vld [vmem:[#allocation3 + $0x150] sm:$0xff]
  %v1118 = vld [vmem:[#allocation3 + $0x158] sm:$0xff]
  %v1119 = vld [vmem:[#allocation3 + $0x160] sm:$0xff]
  %v1120 = vld [vmem:[#allocation3 + $0x168] sm:$0xff]
  %v1121 = vld [vmem:[#allocation3 + $0x170] sm:$0xff]
  %v1122 = vld [vmem:[#allocation3 + $0x178] sm:$0xff]
  %v1123 = vpack.c.bf16 %v1078, %v1075
  %v1124 = vpack.c.bf16 %v1079, %v1076
  %v1125 = vpack.c.bf16 %v1080, %v1077
  %v1126 = vpack.c.bf16 %v1084, %v1081
  %v1127 = vpack.c.bf16 %v1085, %v1082
  %v1128 = vpack.c.bf16 %v1086, %v1083
  %v1129 = vpack.c.bf16 %v1090, %v1087
  %v1130 = vpack.c.bf16 %v1091, %v1088
  %v1131 = vpack.c.bf16 %v1092, %v1089
  %v1132 = vpack.c.bf16 %v1096, %v1093
  %v1133 = vpack.c.bf16 %v1097, %v1094
  %v1134 = vpack.c.bf16 %v1098, %v1095
  %v1135 = vpack.c.bf16 %v1102, %v1099
  %v1136 = vpack.c.bf16 %v1103, %v1100
  %v1137 = vpack.c.bf16 %v1104, %v1101
  %v1138 = vpack.c.bf16 %v1108, %v1105
  %v1139 = vpack.c.bf16 %v1109, %v1106
  %v1140 = vpack.c.bf16 %v1110, %v1107
  %v1141 = vpack.c.bf16 %v1114, %v1111
  %v1142 = vpack.c.bf16 %v1115, %v1112
  %v1143 = vpack.c.bf16 %v1116, %v1113
  %v1144 = vpack.c.bf16 %v1120, %v1117
  %v1145 = vpack.c.bf16 %v1121, %v1118
  %v1146 = vpack.c.bf16 %v1122, %v1119
  %v1147 = vld [vmem:[%s1 + $0x80] sm:$0xf]
  %v1148 = vld [vmem:[%s1 + $0x84] sm:$0xf]
  %v1149 = vld [vmem:[%s1 + $0x88] sm:$0xf]
  %v1150 = vld [vmem:[%s1 + $0x8c] sm:$0xf]
  %v1151 = vld [vmem:[%s1 + $0x90] sm:$0xf]
  %v1152 = vld [vmem:[%s1 + $0x94] sm:$0xf]
  %v1153 = vld [vmem:[%s1 + $0x98] sm:$0xf]
  %v1154 = vld [vmem:[%s1 + $0x9c] sm:$0xf]
  %v1155 = vld [vmem:[%s1 + $0xa0] sm:$0xf]
  %v1156 = vld [vmem:[%s1 + $0xa4] sm:$0xf]
  %v1157 = vld [vmem:[%s1 + $0xa8] sm:$0xf]
  %v1158 = vld [vmem:[%s1 + $0xac] sm:$0xf]
  %v1159 = vld [vmem:[%s1 + $0xb0] sm:$0xf]
  %v1160 = vld [vmem:[%s1 + $0xb4] sm:$0xf]
  %v1161 = vld [vmem:[%s1 + $0xb8] sm:$0xf]
  %v1162 = vld [vmem:[%s1 + $0xbc] sm:$0xf]
  %v1163 = vld [vmem:[%s1 + $0xc0] sm:$0xf]
  %v1164 = vld [vmem:[%s1 + $0xc4] sm:$0xf]
  %v1165 = vld [vmem:[%s1 + $0xc8] sm:$0xf]
  %v1166 = vld [vmem:[%s1 + $0xcc] sm:$0xf]
  %v1167 = vld [vmem:[%s1 + $0xd0] sm:$0xf]
  %v1168 = vld [vmem:[%s1 + $0xd4] sm:$0xf]
  %v1169 = vld [vmem:[%s1 + $0xd8] sm:$0xf]
  %v1170 = vld [vmem:[%s1 + $0xdc] sm:$0xf]
  %v1171 = vld [vmem:[%s1 + $0xe0] sm:$0xf]
  %v1172 = vld [vmem:[%s1 + $0xe4] sm:$0xf]
  %v1173 = vld [vmem:[%s1 + $0xe8] sm:$0xf]
  %v1174 = vld [vmem:[%s1 + $0xec] sm:$0xf]
  %v1175 = vld [vmem:[%s1 + $0xf0] sm:$0xf]
  %v1176 = vld [vmem:[%s1 + $0xf4] sm:$0xf]
  %v1177 = vld [vmem:[%s1 + $0xf8] sm:$0xf]
  %v1178 = vld [vmem:[%s1 + $0xfc] sm:$0xf]
  %v1179 = vld [vmem:[%s1 + $0x100] sm:$0xf]
  %v1180 = vld [vmem:[%s1 + $0x104] sm:$0xf]
  %v1181 = vld [vmem:[%s1 + $0x108] sm:$0xf]
  %v1182 = vld [vmem:[%s1 + $0x10c] sm:$0xf]
  %v1183 = vperm.slane %v381, 0
  %v1220 = vunpack.c.l.b16 %v1147
  %v1221 = vunpack.c.l.b16 %v1148
  %v1222 = vunpack.c.l.b16 %v1149
  %v1223 = vunpack.c.l.b16 %v1150
  %v1224 = vunpack.c.l.b16 %v1151
  %v1225 = vunpack.c.l.b16 %v1152
  %v1226 = vunpack.c.l.b16 %v1153
  %v1227 = vunpack.c.l.b16 %v1154
  %v1228 = vunpack.c.l.b16 %v1155
  %v1229 = vunpack.c.l.b16 %v1156
  %v1230 = vunpack.c.l.b16 %v1157
  %v1231 = vunpack.c.l.b16 %v1158
  %v1232 = vunpack.c.l.b16 %v1159
  %v1233 = vunpack.c.l.b16 %v1160
  %v1234 = vunpack.c.l.b16 %v1161
  %v1235 = vunpack.c.l.b16 %v1162
  %v1236 = vunpack.c.l.b16 %v1163
  %v1237 = vunpack.c.l.b16 %v1164
  %v1238 = vunpack.c.l.b16 %v1165
  %v1239 = vunpack.c.l.b16 %v1166
  %v1240 = vunpack.c.l.b16 %v1167
  %v1241 = vunpack.c.l.b16 %v1168
  %v1242 = vunpack.c.l.b16 %v1169
  %v1243 = vunpack.c.l.b16 %v1170
  %v1244 = vunpack.c.l.b16 %v1171
  %v1245 = vunpack.c.l.b16 %v1172
  %v1246 = vunpack.c.l.b16 %v1173
  %v1247 = vunpack.c.l.b16 %v1174
  %v1248 = vunpack.c.l.b16 %v1175
  %v1249 = vunpack.c.l.b16 %v1176
  %v1250 = vunpack.c.l.b16 %v1177
  %v1251 = vunpack.c.l.b16 %v1178
  %v1252 = vunpack.c.l.b16 %v1179
  %v1253 = vunpack.c.l.b16 %v1180
  %v1254 = vunpack.c.l.b16 %v1181
  %v1255 = vunpack.c.l.b16 %v1182
  %v1256 = vpack.c.b16 %v1221, %v1220
  %v1257 = vpack.c.b16 %v1223, %v1222
  %v1258 = vpack.c.b16 %v1225, %v1224
  %v1259 = vpack.c.b16 %v1227, %v1226
  %v1260 = vpack.c.b16 %v1229, %v1228
  %v1261 = vpack.c.b16 %v1231, %v1230
  %v1262 = vpack.c.b16 %v1233, %v1232
  %v1263 = vpack.c.b16 %v1235, %v1234
  %v1264 = vpack.c.b16 %v1237, %v1236
  %v1265 = vpack.c.b16 %v1239, %v1238
  %v1266 = vpack.c.b16 %v1241, %v1240
  %v1267 = vpack.c.b16 %v1243, %v1242
  %v1268 = vpack.c.b16 %v1245, %v1244
  %v1269 = vpack.c.b16 %v1247, %v1246
  %v1270 = vpack.c.b16 %v1249, %v1248
  %v1271 = vpack.c.b16 %v1251, %v1250
  %v1272 = vpack.c.b16 %v1253, %v1252
  %v1273 = vpack.c.b16 %v1255, %v1254
  %v1293 = vsel %vm339, %v1125, 0
  %v1296 = vsel %vm339, %v1128, 0
  %v1299 = vsel %vm339, %v1131, 0
  %v1302 = vsel %vm339, %v1134, 0
  %v1305 = vsel %vm339, %v1137, 0
  %v1308 = vsel %vm339, %v1140, 0
  %v1311 = vsel %vm339, %v1143, 0
  %v1314 = vsel %vm339, %v1146, 0
  %1316 = vmatpush.bf16.msra.mxu0 %v1263
  %1317 = vmatpush.bf16.msra.mxu0 %v1262
  %1318 = vmatpush.bf16.msra.mxu0 %v1261
  %1319 = vmatpush.bf16.msra.mxu0 %v1260
  %1320 = vmatpush.bf16.msra.mxu0 %v1259
  %1321 = vmatpush.bf16.msra.mxu0 %v1258
  %1322 = vmatpush.bf16.msra.mxu0 %v1257
  %1323 = vmatpush.bf16.msra.mxu0 %v1256
  %1324 = vmatmul.bf16.gmra.mxu0 %v1123
  %v1325 = vpop.f32.mrf.mxu0
  %v1326 = vadd.f32 %v1183, %v1325
  %v1327 = vpop.f32.mrf.mxu0
  %v1328 = vadd.f32 %v1183, %v1327
  %1329 = vmatmul.bf16.gmra.mxu0 %v1126
  %v1330 = vpop.f32.mrf.mxu0
  %v1331 = vadd.f32 %v1183, %v1330
  %v1332 = vpop.f32.mrf.mxu0
  %v1333 = vadd.f32 %v1183, %v1332
  %1334 = vmatmul.bf16.gmra.mxu0 %v1129
  %v1335 = vpop.f32.mrf.mxu0
  %v1336 = vadd.f32 %v1183, %v1335
  %v1337 = vpop.f32.mrf.mxu0
  %v1338 = vadd.f32 %v1183, %v1337
  %1339 = vmatmul.bf16.gmra.mxu0 %v1132
  %v1340 = vpop.f32.mrf.mxu0
  %v1341 = vadd.f32 %v1183, %v1340
  %v1342 = vpop.f32.mrf.mxu0
  %v1343 = vadd.f32 %v1183, %v1342
  %1344 = vmatmul.bf16.gmra.mxu0 %v1135
  %v1345 = vpop.f32.mrf.mxu0
  %v1346 = vadd.f32 %v1183, %v1345
  %v1347 = vpop.f32.mrf.mxu0
  %v1348 = vadd.f32 %v1183, %v1347
  %1349 = vmatmul.bf16.gmra.mxu0 %v1138
  %v1350 = vpop.f32.mrf.mxu0
  %v1351 = vadd.f32 %v1183, %v1350
  %v1352 = vpop.f32.mrf.mxu0
  %v1353 = vadd.f32 %v1183, %v1352
  %1354 = vmatmul.bf16.gmra.mxu0 %v1141
  %v1355 = vpop.f32.mrf.mxu0
  %v1356 = vadd.f32 %v1183, %v1355
  %v1357 = vpop.f32.mrf.mxu0
  %v1358 = vadd.f32 %v1183, %v1357
  %1359 = vmatmul.bf16.gmra.mxu0 %v1144
  %v1360 = vpop.f32.mrf.mxu0
  %v1361 = vadd.f32 %v1183, %v1360
  %v1362 = vpop.f32.mrf.mxu0
  %v1363 = vadd.f32 %v1183, %v1362
  %1364 = vdwg.mxu0
  %1365 = vmatpush.bf16.msra.mxu0 %v1271
  %1366 = vmatpush.bf16.msra.mxu0 %v1270
  %1367 = vmatpush.bf16.msra.mxu0 %v1269
  %1368 = vmatpush.bf16.msra.mxu0 %v1268
  %1369 = vmatpush.bf16.msra.mxu0 %v1267
  %1370 = vmatpush.bf16.msra.mxu0 %v1266
  %1371 = vmatpush.bf16.msra.mxu0 %v1265
  %1372 = vmatpush.bf16.msra.mxu0 %v1264
  %1373 = vmatmul.bf16.gmra.mxu0 %v1124
  %v1374 = vpop.f32.mrf.mxu0
  %v1375 = vadd.f32 %v1326, %v1374
  %v1376 = vpop.f32.mrf.mxu0
  %v1377 = vadd.f32 %v1328, %v1376
  %1378 = vmatmul.bf16.gmra.mxu0 %v1127
  %v1379 = vpop.f32.mrf.mxu0
  %v1380 = vadd.f32 %v1331, %v1379
  %v1381 = vpop.f32.mrf.mxu0
  %v1382 = vadd.f32 %v1333, %v1381
  %1383 = vmatmul.bf16.gmra.mxu0 %v1130
  %v1384 = vpop.f32.mrf.mxu0
  %v1385 = vadd.f32 %v1336, %v1384
  %v1386 = vpop.f32.mrf.mxu0
  %v1387 = vadd.f32 %v1338, %v1386
  %1388 = vmatmul.bf16.gmra.mxu0 %v1133
  %v1389 = vpop.f32.mrf.mxu0
  %v1390 = vadd.f32 %v1341, %v1389
  %v1391 = vpop.f32.mrf.mxu0
  %v1392 = vadd.f32 %v1343, %v1391
  %1393 = vmatmul.bf16.gmra.mxu0 %v1136
  %v1394 = vpop.f32.mrf.mxu0
  %v1395 = vadd.f32 %v1346, %v1394
  %v1396 = vpop.f32.mrf.mxu0
  %v1397 = vadd.f32 %v1348, %v1396
  %1398 = vmatmul.bf16.gmra.mxu0 %v1139
  %v1399 = vpop.f32.mrf.mxu0
  %v1400 = vadd.f32 %v1351, %v1399
  %v1401 = vpop.f32.mrf.mxu0
  %v1402 = vadd.f32 %v1353, %v1401
  %1403 = vmatmul.bf16.gmra.mxu0 %v1142
  %v1404 = vpop.f32.mrf.mxu0
  %v1405 = vadd.f32 %v1356, %v1404
  %v1406 = vpop.f32.mrf.mxu0
  %v1407 = vadd.f32 %v1358, %v1406
  %1408 = vmatmul.bf16.gmra.mxu0 %v1145
  %v1409 = vpop.f32.mrf.mxu0
  %v1410 = vadd.f32 %v1361, %v1409
  %v1411 = vpop.f32.mrf.mxu0
  %v1412 = vadd.f32 %v1363, %v1411
  %1413 = vdwg.mxu0
  %1414 = vmatpush.bf16.msra.mxu0 0
  %1415 = vmatpush.bf16.msra.mxu0 0
  %1416 = vmatpush.bf16.msra.mxu0 0
  %1417 = vmatpush.bf16.msra.mxu0 0
  %1418 = vmatpush.bf16.msra.mxu0 0
  %1419 = vmatpush.bf16.msra.mxu0 0
  %1420 = vmatpush.bf16.msra.mxu0 %v1273
  %1421 = vmatpush.bf16.msra.mxu0 %v1272
  %1422 = vmatmul.bf16.gmra.mxu0 %v1293
  %v1423 = vpop.f32.mrf.mxu0
  %v1424 = vadd.f32 %v1375, %v1423
  %v1425 = vpop.f32.mrf.mxu0
  %v1426 = vadd.f32 %v1377, %v1425
  %1427 = vmatmul.bf16.gmra.mxu0 %v1296
  %v1428 = vpop.f32.mrf.mxu0
  %v1429 = vadd.f32 %v1380, %v1428
  %v1430 = vpop.f32.mrf.mxu0
  %v1431 = vadd.f32 %v1382, %v1430
  %1432 = vmatmul.bf16.gmra.mxu0 %v1299
  %v1433 = vpop.f32.mrf.mxu0
  %v1434 = vadd.f32 %v1385, %v1433
  %v1435 = vpop.f32.mrf.mxu0
  %v1436 = vadd.f32 %v1387, %v1435
  %1437 = vmatmul.bf16.gmra.mxu0 %v1302
  %v1438 = vpop.f32.mrf.mxu0
  %v1439 = vadd.f32 %v1390, %v1438
  %v1440 = vpop.f32.mrf.mxu0
  %v1441 = vadd.f32 %v1392, %v1440
  %1442 = vmatmul.bf16.gmra.mxu0 %v1305
  %v1443 = vpop.f32.mrf.mxu0
  %v1444 = vadd.f32 %v1395, %v1443
  %v1445 = vpop.f32.mrf.mxu0
  %v1446 = vadd.f32 %v1397, %v1445
  %1447 = vmatmul.bf16.gmra.mxu0 %v1308
  %v1448 = vpop.f32.mrf.mxu0
  %v1449 = vadd.f32 %v1400, %v1448
  %v1450 = vpop.f32.mrf.mxu0
  %v1451 = vadd.f32 %v1402, %v1450
  %1452 = vmatmul.bf16.gmra.mxu0 %v1311
  %v1453 = vpop.f32.mrf.mxu0
  %v1454 = vadd.f32 %v1405, %v1453
  %v1455 = vpop.f32.mrf.mxu0
  %v1456 = vadd.f32 %v1407, %v1455
  %1457 = vmatmul.bf16.gmra.mxu0 %v1314
  %v1458 = vpop.f32.mrf.mxu0
  %v1459 = vadd.f32 %v1410, %v1458
  %v1460 = vpop.f32.mrf.mxu0
  %v1461 = vadd.f32 %v1412, %v1460
  %1462 = vdwg.mxu0
  %v1463 = vmax.f32 %v1424, 0.0
  %v1464 = vmax.f32 %v1426, 0.0
  %v1465 = vmax.f32 %v1429, 0.0
  %v1466 = vmax.f32 %v1431, 0.0
  %v1467 = vmax.f32 %v1434, 0.0
  %v1468 = vmax.f32 %v1436, 0.0
  %v1469 = vmax.f32 %v1439, 0.0
  %v1470 = vmax.f32 %v1441, 0.0
  %v1471 = vmax.f32 %v1444, 0.0
  %v1472 = vmax.f32 %v1446, 0.0
  %v1473 = vmax.f32 %v1449, 0.0
  %v1474 = vmax.f32 %v1451, 0.0
  %v1475 = vmax.f32 %v1454, 0.0
  %v1476 = vmax.f32 %v1456, 0.0
  %v1477 = vmax.f32 %v1459, 0.0
  %v1478 = vmax.f32 %v1461, 0.0
  %v1479 = vld [vmem:[%s2 + $0x2] sm:$0x1]
  %1480 = vst.msk [vmem:[%s382 + $0x1] sm:$0xff] %vm339, %v1463
  %1481 = vst.msk [vmem:[%s382 + $0x11] sm:$0xff] %vm339, %v1464
  %1482 = vst.msk [vmem:[%s382 + $0x21] sm:$0xff] %vm339, %v1465
  %1483 = vst.msk [vmem:[%s382 + $0x31] sm:$0xff] %vm339, %v1466
  %1484 = vst.msk [vmem:[%s382 + $0x41] sm:$0xff] %vm339, %v1467
  %1485 = vst.msk [vmem:[%s382 + $0x51] sm:$0xff] %vm339, %v1468
  %1486 = vst.msk [vmem:[%s382 + $0x61] sm:$0xff] %vm339, %v1469
  %1487 = vst.msk [vmem:[%s382 + $0x71] sm:$0xff] %vm339, %v1470
  %1488 = vst.msk [vmem:[%s382 + $0xa1] sm:$0xff] %vm339, %v1471
  %1489 = vst.msk [vmem:[%s382 + $0xb1] sm:$0xff] %vm339, %v1472
  %1490 = vst.msk [vmem:[%s382 + $0xc1] sm:$0xff] %vm339, %v1473
  %1491 = vst.msk [vmem:[%s382 + $0xd1] sm:$0xff] %vm339, %v1474
  %1492 = vst.msk [vmem:[%s382 + $0xe1] sm:$0xff] %vm339, %v1475
  %1493 = vst.msk [vmem:[%s382 + $0xf1] sm:$0xff] %vm339, %v1476
  %1494 = vst.msk [vmem:[%s382 + $0x101] sm:$0xff] %vm339, %v1477
  %1495 = vst.msk [vmem:[%s382 + $0x111] sm:$0xff] %vm339, %v1478
  %v1496 = vld [vmem:[#allocation2] sm:$0xff]
  %v1497 = vld [vmem:[#allocation2 + $0x10] sm:$0xff]
  %v1498 = vld [vmem:[#allocation2 + $0x20] sm:$0xff]
  %v1499 = vld [vmem:[#allocation2 + $0x30] sm:$0xff]
  %v1500 = vld [vmem:[#allocation2 + $0x40] sm:$0xff]
  %v1501 = vld [vmem:[#allocation2 + $0x50] sm:$0xff]
  %v1502 = vld [vmem:[#allocation2 + $0x60] sm:$0xff]
  %v1503 = vld [vmem:[#allocation2 + $0x70] sm:$0xff]
  %v1504 = vld [vmem:[#allocation2 + $0xa0] sm:$0xff]
  %v1505 = vld [vmem:[#allocation2 + $0xb0] sm:$0xff]
  %v1506 = vld [vmem:[#allocation2 + $0xc0] sm:$0xff]
  %v1507 = vld [vmem:[#allocation2 + $0xd0] sm:$0xff]
  %v1508 = vld [vmem:[#allocation2 + $0xe0] sm:$0xff]
  %v1509 = vld [vmem:[#allocation2 + $0xf0] sm:$0xff]
  %v1510 = vld [vmem:[#allocation2 + $0x100] sm:$0xff]
  %v1511 = vld [vmem:[#allocation2 + $0x110] sm:$0xff]
  %1512 = vst.msk [vmem:[#allocation3] sm:$0xff] %vm339, %v1496
  %1513 = vst.msk [vmem:[#allocation3 + $0x18] sm:$0xff] %vm339, %v1497
  %1514 = vst.msk [vmem:[#allocation3 + $0x30] sm:$0xff] %vm339, %v1498
  %1515 = vst.msk [vmem:[#allocation3 + $0x48] sm:$0xff] %vm339, %v1499
  %1516 = vst.msk [vmem:[#allocation3 + $0x60] sm:$0xff] %vm339, %v1500
  %1517 = vst.msk [vmem:[#allocation3 + $0x78] sm:$0xff] %vm339, %v1501
  %1518 = vst.msk [vmem:[#allocation3 + $0x90] sm:$0xff] %vm339, %v1502
  %1519 = vst.msk [vmem:[#allocation3 + $0xa8] sm:$0xff] %vm339, %v1503
  %1520 = vst.msk [vmem:[#allocation3 + $0xc0] sm:$0xff] %vm339, %v1504
  %1521 = vst.msk [vmem:[#allocation3 + $0xd8] sm:$0xff] %vm339, %v1505
  %1522 = vst.msk [vmem:[#allocation3 + $0xf0] sm:$0xff] %vm339, %v1506
  %1523 = vst.msk [vmem:[#allocation3 + $0x108] sm:$0xff] %vm339, %v1507
  %1524 = vst.msk [vmem:[#allocation3 + $0x120] sm:$0xff] %vm339, %v1508
  %1525 = vst.msk [vmem:[#allocation3 + $0x138] sm:$0xff] %vm339, %v1509
  %1526 = vst.msk [vmem:[#allocation3 + $0x150] sm:$0xff] %vm339, %v1510
  %1527 = vst.msk [vmem:[#allocation3 + $0x168] sm:$0xff] %vm339, %v1511
  %v1528 = vld [vmem:[#allocation2 + $0x1] sm:$0xff]
  %v1529 = vld [vmem:[#allocation2 + $0x11] sm:$0xff]
  %v1530 = vld [vmem:[#allocation2 + $0x21] sm:$0xff]
  %v1531 = vld [vmem:[#allocation2 + $0x31] sm:$0xff]
  %v1532 = vld [vmem:[#allocation2 + $0x41] sm:$0xff]
  %v1533 = vld [vmem:[#allocation2 + $0x51] sm:$0xff]
  %v1534 = vld [vmem:[#allocation2 + $0x61] sm:$0xff]
  %v1535 = vld [vmem:[#allocation2 + $0x71] sm:$0xff]
  %v1536 = vld [vmem:[#allocation2 + $0xa1] sm:$0xff]
  %v1537 = vld [vmem:[#allocation2 + $0xb1] sm:$0xff]
  %v1538 = vld [vmem:[#allocation2 + $0xc1] sm:$0xff]
  %v1539 = vld [vmem:[#allocation2 + $0xd1] sm:$0xff]
  %v1540 = vld [vmem:[#allocation2 + $0xe1] sm:$0xff]
  %v1541 = vld [vmem:[#allocation2 + $0xf1] sm:$0xff]
  %v1542 = vld [vmem:[#allocation2 + $0x101] sm:$0xff]
  %v1543 = vld [vmem:[#allocation2 + $0x111] sm:$0xff]
  %1560 = vrot.lane.b32.xlu0 %v1528, 32
  %v1561 = vpop.permute.xlu0 %1560
  %1562 = vrot.lane.b32.xlu0 %v1529, 32
  %v1563 = vpop.permute.xlu0 %1562
  %1564 = vrot.lane.b32.xlu0 %v1530, 32
  %v1565 = vpop.permute.xlu0 %1564
  %1566 = vrot.lane.b32.xlu0 %v1531, 32
  %v1567 = vpop.permute.xlu0 %1566
  %1568 = vrot.lane.b32.xlu0 %v1532, 32
  %v1569 = vpop.permute.xlu0 %1568
  %1570 = vrot.lane.b32.xlu0 %v1533, 32
  %v1571 = vpop.permute.xlu0 %1570
  %1572 = vrot.lane.b32.xlu0 %v1534, 32
  %v1573 = vpop.permute.xlu0 %1572
  %1574 = vrot.lane.b32.xlu0 %v1535, 32
  %v1575 = vpop.permute.xlu0 %1574
  %1576 = vrot.lane.b32.xlu0 %v1536, 32
  %v1577 = vpop.permute.xlu0 %1576
  %1578 = vrot.lane.b32.xlu0 %v1537, 32
  %v1579 = vpop.permute.xlu0 %1578
  %1580 = vrot.lane.b32.xlu0 %v1538, 32
  %v1581 = vpop.permute.xlu0 %1580
  %1582 = vrot.lane.b32.xlu0 %v1539, 32
  %v1583 = vpop.permute.xlu0 %1582
  %1584 = vrot.lane.b32.xlu0 %v1540, 32
  %v1585 = vpop.permute.xlu0 %1584
  %1586 = vrot.lane.b32.xlu0 %v1541, 32
  %v1587 = vpop.permute.xlu0 %1586
  %1588 = vrot.lane.b32.xlu0 %v1542, 32
  %v1589 = vpop.permute.xlu0 %1588
  %1590 = vrot.lane.b32.xlu0 %v1543, 32
  %v1591 = vpop.permute.xlu0 %1590
  %1608 = vst.msk [vmem:[#allocation3] sm:$0xff] %vm511, %v1561
  %1609 = vst.msk [vmem:[#allocation3 + $0x18] sm:$0xff] %vm511, %v1563
  %1610 = vst.msk [vmem:[#allocation3 + $0x30] sm:$0xff] %vm511, %v1565
  %1611 = vst.msk [vmem:[#allocation3 + $0x48] sm:$0xff] %vm511, %v1567
  %1612 = vst.msk [vmem:[#allocation3 + $0x60] sm:$0xff] %vm511, %v1569
  %1613 = vst.msk [vmem:[#allocation3 + $0x78] sm:$0xff] %vm511, %v1571
  %1614 = vst.msk [vmem:[#allocation3 + $0x90] sm:$0xff] %vm511, %v1573
  %1615 = vst.msk [vmem:[#allocation3 + $0xa8] sm:$0xff] %vm511, %v1575
  %1616 = vst.msk [vmem:[#allocation3 + $0xc0] sm:$0xff] %vm511, %v1577
  %1617 = vst.msk [vmem:[#allocation3 + $0xd8] sm:$0xff] %vm511, %v1579
  %1618 = vst.msk [vmem:[#allocation3 + $0xf0] sm:$0xff] %vm511, %v1581
  %1619 = vst.msk [vmem:[#allocation3 + $0x108] sm:$0xff] %vm511, %v1583
  %1620 = vst.msk [vmem:[#allocation3 + $0x120] sm:$0xff] %vm511, %v1585
  %1621 = vst.msk [vmem:[#allocation3 + $0x138] sm:$0xff] %vm511, %v1587
  %1622 = vst.msk [vmem:[#allocation3 + $0x150] sm:$0xff] %vm511, %v1589
  %1623 = vst.msk [vmem:[#allocation3 + $0x168] sm:$0xff] %vm511, %v1591
  %v1624 = vld [vmem:[#allocation2 + $0x2] sm:$0xff]
  %v1625 = vld [vmem:[#allocation2 + $0x12] sm:$0xff]
  %v1626 = vld [vmem:[#allocation2 + $0x22] sm:$0xff]
  %v1627 = vld [vmem:[#allocation2 + $0x32] sm:$0xff]
  %v1628 = vld [vmem:[#allocation2 + $0x42] sm:$0xff]
  %v1629 = vld [vmem:[#allocation2 + $0x52] sm:$0xff]
  %v1630 = vld [vmem:[#allocation2 + $0x62] sm:$0xff]
  %v1631 = vld [vmem:[#allocation2 + $0x72] sm:$0xff]
  %v1632 = vld [vmem:[#allocation2 + $0xa2] sm:$0xff]
  %v1633 = vld [vmem:[#allocation2 + $0xb2] sm:$0xff]
  %v1634 = vld [vmem:[#allocation2 + $0xc2] sm:$0xff]
  %v1635 = vld [vmem:[#allocation2 + $0xd2] sm:$0xff]
  %v1636 = vld [vmem:[#allocation2 + $0xe2] sm:$0xff]
  %v1637 = vld [vmem:[#allocation2 + $0xf2] sm:$0xff]
  %v1638 = vld [vmem:[#allocation2 + $0x102] sm:$0xff]
  %v1639 = vld [vmem:[#allocation2 + $0x112] sm:$0xff]
  %1656 = vrot.lane.b32.xlu0 %v1624, 64
  %v1657 = vpop.permute.xlu0 %1656
  %1658 = vrot.lane.b32.xlu0 %v1625, 64
  %v1659 = vpop.permute.xlu0 %1658
  %1660 = vrot.lane.b32.xlu0 %v1626, 64
  %v1661 = vpop.permute.xlu0 %1660
  %1662 = vrot.lane.b32.xlu0 %v1627, 64
  %v1663 = vpop.permute.xlu0 %1662
  %1664 = vrot.lane.b32.xlu0 %v1628, 64
  %v1665 = vpop.permute.xlu0 %1664
  %1666 = vrot.lane.b32.xlu0 %v1629, 64
  %v1667 = vpop.permute.xlu0 %1666
  %1668 = vrot.lane.b32.xlu0 %v1630, 64
  %v1669 = vpop.permute.xlu0 %1668
  %1670 = vrot.lane.b32.xlu0 %v1631, 64
  %v1671 = vpop.permute.xlu0 %1670
  %1672 = vrot.lane.b32.xlu0 %v1632, 64
  %v1673 = vpop.permute.xlu0 %1672
  %1674 = vrot.lane.b32.xlu0 %v1633, 64
  %v1675 = vpop.permute.xlu0 %1674
  %1676 = vrot.lane.b32.xlu0 %v1634, 64
  %v1677 = vpop.permute.xlu0 %1676
  %1678 = vrot.lane.b32.xlu0 %v1635, 64
  %v1679 = vpop.permute.xlu0 %1678
  %1680 = vrot.lane.b32.xlu0 %v1636, 64
  %v1681 = vpop.permute.xlu0 %1680
  %1682 = vrot.lane.b32.xlu0 %v1637, 64
  %v1683 = vpop.permute.xlu0 %1682
  %1684 = vrot.lane.b32.xlu0 %v1638, 64
  %v1685 = vpop.permute.xlu0 %1684
  %1686 = vrot.lane.b32.xlu0 %v1639, 64
  %v1687 = vpop.permute.xlu0 %1686
  %1704 = vst.msk [vmem:[#allocation3] sm:$0xff] %vm608, %v1657
  %1705 = vst.msk [vmem:[#allocation3 + $0x18] sm:$0xff] %vm608, %v1659
  %1706 = vst.msk [vmem:[#allocation3 + $0x30] sm:$0xff] %vm608, %v1661
  %1707 = vst.msk [vmem:[#allocation3 + $0x48] sm:$0xff] %vm608, %v1663
  %1708 = vst.msk [vmem:[#allocation3 + $0x60] sm:$0xff] %vm608, %v1665
  %1709 = vst.msk [vmem:[#allocation3 + $0x78] sm:$0xff] %vm608, %v1667
  %1710 = vst.msk [vmem:[#allocation3 + $0x90] sm:$0xff] %vm608, %v1669
  %1711 = vst.msk [vmem:[#allocation3 + $0xa8] sm:$0xff] %vm608, %v1671
  %1712 = vst.msk [vmem:[#allocation3 + $0xc0] sm:$0xff] %vm608, %v1673
  %1713 = vst.msk [vmem:[#allocation3 + $0xd8] sm:$0xff] %vm608, %v1675
  %1714 = vst.msk [vmem:[#allocation3 + $0xf0] sm:$0xff] %vm608, %v1677
  %1715 = vst.msk [vmem:[#allocation3 + $0x108] sm:$0xff] %vm608, %v1679
  %1716 = vst.msk [vmem:[#allocation3 + $0x120] sm:$0xff] %vm608, %v1681
  %1717 = vst.msk [vmem:[#allocation3 + $0x138] sm:$0xff] %vm608, %v1683
  %1718 = vst.msk [vmem:[#allocation3 + $0x150] sm:$0xff] %vm608, %v1685
  %1719 = vst.msk [vmem:[#allocation3 + $0x168] sm:$0xff] %vm608, %v1687
  %v1720 = vld [vmem:[%s382] sm:$0xff]
  %v1721 = vld [vmem:[%s382 + $0x10] sm:$0xff]
  %v1722 = vld [vmem:[%s382 + $0x20] sm:$0xff]
  %v1723 = vld [vmem:[%s382 + $0x30] sm:$0xff]
  %v1724 = vld [vmem:[%s382 + $0x40] sm:$0xff]
  %v1725 = vld [vmem:[%s382 + $0x50] sm:$0xff]
  %v1726 = vld [vmem:[%s382 + $0x60] sm:$0xff]
  %v1727 = vld [vmem:[%s382 + $0x70] sm:$0xff]
  %v1728 = vld [vmem:[%s382 + $0xa0] sm:$0xff]
  %v1729 = vld [vmem:[%s382 + $0xb0] sm:$0xff]
  %v1730 = vld [vmem:[%s382 + $0xc0] sm:$0xff]
  %v1731 = vld [vmem:[%s382 + $0xd0] sm:$0xff]
  %v1732 = vld [vmem:[%s382 + $0xe0] sm:$0xff]
  %v1733 = vld [vmem:[%s382 + $0xf0] sm:$0xff]
  %v1734 = vld [vmem:[%s382 + $0x100] sm:$0xff]
  %v1735 = vld [vmem:[%s382 + $0x110] sm:$0xff]
  %1752 = vrot.lane.b32.xlu0 %v1720, 96
  %v1753 = vpop.permute.xlu0 %1752
  %1754 = vrot.lane.b32.xlu0 %v1721, 96
  %v1755 = vpop.permute.xlu0 %1754
  %1756 = vrot.lane.b32.xlu0 %v1722, 96
  %v1757 = vpop.permute.xlu0 %1756
  %1758 = vrot.lane.b32.xlu0 %v1723, 96
  %v1759 = vpop.permute.xlu0 %1758
  %1760 = vrot.lane.b32.xlu0 %v1724, 96
  %v1761 = vpop.permute.xlu0 %1760
  %1762 = vrot.lane.b32.xlu0 %v1725, 96
  %v1763 = vpop.permute.xlu0 %1762
  %1764 = vrot.lane.b32.xlu0 %v1726, 96
  %v1765 = vpop.permute.xlu0 %1764
  %1766 = vrot.lane.b32.xlu0 %v1727, 96
  %v1767 = vpop.permute.xlu0 %1766
  %1768 = vrot.lane.b32.xlu0 %v1728, 96
  %v1769 = vpop.permute.xlu0 %1768
  %1770 = vrot.lane.b32.xlu0 %v1729, 96
  %v1771 = vpop.permute.xlu0 %1770
  %1772 = vrot.lane.b32.xlu0 %v1730, 96
  %v1773 = vpop.permute.xlu0 %1772
  %1774 = vrot.lane.b32.xlu0 %v1731, 96
  %v1775 = vpop.permute.xlu0 %1774
  %1776 = vrot.lane.b32.xlu0 %v1732, 96
  %v1777 = vpop.permute.xlu0 %1776
  %1778 = vrot.lane.b32.xlu0 %v1733, 96
  %v1779 = vpop.permute.xlu0 %1778
  %1780 = vrot.lane.b32.xlu0 %v1734, 96
  %v1781 = vpop.permute.xlu0 %1780
  %1782 = vrot.lane.b32.xlu0 %v1735, 96
  %v1783 = vpop.permute.xlu0 %1782
  %1800 = vst.msk [vmem:[#allocation3] sm:$0xff] %vm705, %v1753
  %1801 = vst.msk [vmem:[#allocation3 + $0x18] sm:$0xff] %vm705, %v1755
  %1802 = vst.msk [vmem:[#allocation3 + $0x30] sm:$0xff] %vm705, %v1757
  %1803 = vst.msk [vmem:[#allocation3 + $0x48] sm:$0xff] %vm705, %v1759
  %1804 = vst.msk [vmem:[#allocation3 + $0x60] sm:$0xff] %vm705, %v1761
  %1805 = vst.msk [vmem:[#allocation3 + $0x78] sm:$0xff] %vm705, %v1763
  %1806 = vst.msk [vmem:[#allocation3 + $0x90] sm:$0xff] %vm705, %v1765
  %1807 = vst.msk [vmem:[#allocation3 + $0xa8] sm:$0xff] %vm705, %v1767
  %1808 = vst.msk [vmem:[#allocation3 + $0xc0] sm:$0xff] %vm705, %v1769
  %1809 = vst.msk [vmem:[#allocation3 + $0xd8] sm:$0xff] %vm705, %v1771
  %1810 = vst.msk [vmem:[#allocation3 + $0xf0] sm:$0xff] %vm705, %v1773
  %1811 = vst.msk [vmem:[#allocation3 + $0x108] sm:$0xff] %vm705, %v1775
  %1812 = vst.msk [vmem:[#allocation3 + $0x120] sm:$0xff] %vm705, %v1777
  %1813 = vst.msk [vmem:[#allocation3 + $0x138] sm:$0xff] %vm705, %v1779
  %1814 = vst.msk [vmem:[#allocation3 + $0x150] sm:$0xff] %vm705, %v1781
  %1815 = vst.msk [vmem:[#allocation3 + $0x168] sm:$0xff] %vm705, %v1783
  %v1816 = vld [vmem:[%s382 + $0x1] sm:$0xff]
  %v1817 = vld [vmem:[%s382 + $0x11] sm:$0xff]
  %v1818 = vld [vmem:[%s382 + $0x21] sm:$0xff]
  %v1819 = vld [vmem:[%s382 + $0x31] sm:$0xff]
  %v1820 = vld [vmem:[%s382 + $0x41] sm:$0xff]
  %v1821 = vld [vmem:[%s382 + $0x51] sm:$0xff]
  %v1822 = vld [vmem:[%s382 + $0x61] sm:$0xff]
  %v1823 = vld [vmem:[%s382 + $0x71] sm:$0xff]
  %v1824 = vld [vmem:[%s382 + $0xa1] sm:$0xff]
  %v1825 = vld [vmem:[%s382 + $0xb1] sm:$0xff]
  %v1826 = vld [vmem:[%s382 + $0xc1] sm:$0xff]
  %v1827 = vld [vmem:[%s382 + $0xd1] sm:$0xff]
  %v1828 = vld [vmem:[%s382 + $0xe1] sm:$0xff]
  %v1829 = vld [vmem:[%s382 + $0xf1] sm:$0xff]
  %v1830 = vld [vmem:[%s382 + $0x101] sm:$0xff]
  %v1831 = vld [vmem:[%s382 + $0x111] sm:$0xff]
  %1832 = vst.msk [vmem:[#allocation3 + $0x8] sm:$0xff] %vm339, %v1816
  %1833 = vst.msk [vmem:[#allocation3 + $0x20] sm:$0xff] %vm339, %v1817
  %1834 = vst.msk [vmem:[#allocation3 + $0x38] sm:$0xff] %vm339, %v1818
  %1835 = vst.msk [vmem:[#allocation3 + $0x50] sm:$0xff] %vm339, %v1819
  %1836 = vst.msk [vmem:[#allocation3 + $0x68] sm:$0xff] %vm339, %v1820
  %1837 = vst.msk [vmem:[#allocation3 + $0x80] sm:$0xff] %vm339, %v1821
  %1838 = vst.msk [vmem:[#allocation3 + $0x98] sm:$0xff] %vm339, %v1822
  %1839 = vst.msk [vmem:[#allocation3 + $0xb0] sm:$0xff] %vm339, %v1823
  %1840 = vst.msk [vmem:[#allocation3 + $0xc8] sm:$0xff] %vm339, %v1824
  %1841 = vst.msk [vmem:[#allocation3 + $0xe0] sm:$0xff] %vm339, %v1825
  %1842 = vst.msk [vmem:[#allocation3 + $0xf8] sm:$0xff] %vm339, %v1826
  %1843 = vst.msk [vmem:[#allocation3 + $0x110] sm:$0xff] %vm339, %v1827
  %1844 = vst.msk [vmem:[#allocation3 + $0x128] sm:$0xff] %vm339, %v1828
  %1845 = vst.msk [vmem:[#allocation3 + $0x140] sm:$0xff] %vm339, %v1829
  %1846 = vst.msk [vmem:[#allocation3 + $0x158] sm:$0xff] %vm339, %v1830
  %1847 = vst.msk [vmem:[#allocation3 + $0x170] sm:$0xff] %vm339, %v1831
  %v1848 = vld [vmem:[%s382 + $0x2] sm:$0xff]
  %v1849 = vld [vmem:[%s382 + $0x12] sm:$0xff]
  %v1850 = vld [vmem:[%s382 + $0x22] sm:$0xff]
  %v1851 = vld [vmem:[%s382 + $0x32] sm:$0xff]
  %v1852 = vld [vmem:[%s382 + $0x42] sm:$0xff]
  %v1853 = vld [vmem:[%s382 + $0x52] sm:$0xff]
  %v1854 = vld [vmem:[%s382 + $0x62] sm:$0xff]
  %v1855 = vld [vmem:[%s382 + $0x72] sm:$0xff]
  %v1856 = vld [vmem:[%s382 + $0xa2] sm:$0xff]
  %v1857 = vld [vmem:[%s382 + $0xb2] sm:$0xff]
  %v1858 = vld [vmem:[%s382 + $0xc2] sm:$0xff]
  %v1859 = vld [vmem:[%s382 + $0xd2] sm:$0xff]
  %v1860 = vld [vmem:[%s382 + $0xe2] sm:$0xff]
  %v1861 = vld [vmem:[%s382 + $0xf2] sm:$0xff]
  %v1862 = vld [vmem:[%s382 + $0x102] sm:$0xff]
  %v1863 = vld [vmem:[%s382 + $0x112] sm:$0xff]
  %1880 = vrot.lane.b32.xlu0 %v1848, 32
  %v1881 = vpop.permute.xlu0 %1880
  %1882 = vrot.lane.b32.xlu0 %v1849, 32
  %v1883 = vpop.permute.xlu0 %1882
  %1884 = vrot.lane.b32.xlu0 %v1850, 32
  %v1885 = vpop.permute.xlu0 %1884
  %1886 = vrot.lane.b32.xlu0 %v1851, 32
  %v1887 = vpop.permute.xlu0 %1886
  %1888 = vrot.lane.b32.xlu0 %v1852, 32
  %v1889 = vpop.permute.xlu0 %1888
  %1890 = vrot.lane.b32.xlu0 %v1853, 32
  %v1891 = vpop.permute.xlu0 %1890
  %1892 = vrot.lane.b32.xlu0 %v1854, 32
  %v1893 = vpop.permute.xlu0 %1892
  %1894 = vrot.lane.b32.xlu0 %v1855, 32
  %v1895 = vpop.permute.xlu0 %1894
  %1896 = vrot.lane.b32.xlu0 %v1856, 32
  %v1897 = vpop.permute.xlu0 %1896
  %1898 = vrot.lane.b32.xlu0 %v1857, 32
  %v1899 = vpop.permute.xlu0 %1898
  %1900 = vrot.lane.b32.xlu0 %v1858, 32
  %v1901 = vpop.permute.xlu0 %1900
  %1902 = vrot.lane.b32.xlu0 %v1859, 32
  %v1903 = vpop.permute.xlu0 %1902
  %1904 = vrot.lane.b32.xlu0 %v1860, 32
  %v1905 = vpop.permute.xlu0 %1904
  %1906 = vrot.lane.b32.xlu0 %v1861, 32
  %v1907 = vpop.permute.xlu0 %1906
  %1908 = vrot.lane.b32.xlu0 %v1862, 32
  %v1909 = vpop.permute.xlu0 %1908
  %1910 = vrot.lane.b32.xlu0 %v1863, 32
  %v1911 = vpop.permute.xlu0 %1910
  %1928 = vst.msk [vmem:[#allocation3 + $0x8] sm:$0xff] %vm511, %v1881
  %1929 = vst.msk [vmem:[#allocation3 + $0x20] sm:$0xff] %vm511, %v1883
  %1930 = vst.msk [vmem:[#allocation3 + $0x38] sm:$0xff] %vm511, %v1885
  %1931 = vst.msk [vmem:[#allocation3 + $0x50] sm:$0xff] %vm511, %v1887
  %1932 = vst.msk [vmem:[#allocation3 + $0x68] sm:$0xff] %vm511, %v1889
  %1933 = vst.msk [vmem:[#allocation3 + $0x80] sm:$0xff] %vm511, %v1891
  %1934 = vst.msk [vmem:[#allocation3 + $0x98] sm:$0xff] %vm511, %v1893
  %1935 = vst.msk [vmem:[#allocation3 + $0xb0] sm:$0xff] %vm511, %v1895
  %1936 = vst.msk [vmem:[#allocation3 + $0xc8] sm:$0xff] %vm511, %v1897
  %1937 = vst.msk [vmem:[#allocation3 + $0xe0] sm:$0xff] %vm511, %v1899
  %1938 = vst.msk [vmem:[#allocation3 + $0xf8] sm:$0xff] %vm511, %v1901
  %1939 = vst.msk [vmem:[#allocation3 + $0x110] sm:$0xff] %vm511, %v1903
  %1940 = vst.msk [vmem:[#allocation3 + $0x128] sm:$0xff] %vm511, %v1905
  %1941 = vst.msk [vmem:[#allocation3 + $0x140] sm:$0xff] %vm511, %v1907
  %1942 = vst.msk [vmem:[#allocation3 + $0x158] sm:$0xff] %vm511, %v1909
  %1943 = vst.msk [vmem:[#allocation3 + $0x170] sm:$0xff] %vm511, %v1911
  %v1944 = vld [vmem:[%s850] sm:$0xff]
  %v1945 = vld [vmem:[%s850 + $0x10] sm:$0xff]
  %v1946 = vld [vmem:[%s850 + $0x20] sm:$0xff]
  %v1947 = vld [vmem:[%s850 + $0x30] sm:$0xff]
  %v1948 = vld [vmem:[%s850 + $0x40] sm:$0xff]
  %v1949 = vld [vmem:[%s850 + $0x50] sm:$0xff]
  %v1950 = vld [vmem:[%s850 + $0x60] sm:$0xff]
  %v1951 = vld [vmem:[%s850 + $0x70] sm:$0xff]
  %v1952 = vld [vmem:[%s850 + $0xa0] sm:$0xff]
  %v1953 = vld [vmem:[%s850 + $0xb0] sm:$0xff]
  %v1954 = vld [vmem:[%s850 + $0xc0] sm:$0xff]
  %v1955 = vld [vmem:[%s850 + $0xd0] sm:$0xff]
  %v1956 = vld [vmem:[%s850 + $0xe0] sm:$0xff]
  %v1957 = vld [vmem:[%s850 + $0xf0] sm:$0xff]
  %v1958 = vld [vmem:[%s850 + $0x100] sm:$0xff]
  %v1959 = vld [vmem:[%s850 + $0x110] sm:$0xff]
  %1976 = vrot.lane.b32.xlu0 %v1944, 64
  %v1977 = vpop.permute.xlu0 %1976
  %1978 = vrot.lane.b32.xlu0 %v1945, 64
  %v1979 = vpop.permute.xlu0 %1978
  %1980 = vrot.lane.b32.xlu0 %v1946, 64
  %v1981 = vpop.permute.xlu0 %1980
  %1982 = vrot.lane.b32.xlu0 %v1947, 64
  %v1983 = vpop.permute.xlu0 %1982
  %1984 = vrot.lane.b32.xlu0 %v1948, 64
  %v1985 = vpop.permute.xlu0 %1984
  %1986 = vrot.lane.b32.xlu0 %v1949, 64
  %v1987 = vpop.permute.xlu0 %1986
  %1988 = vrot.lane.b32.xlu0 %v1950, 64
  %v1989 = vpop.permute.xlu0 %1988
  %1990 = vrot.lane.b32.xlu0 %v1951, 64
  %v1991 = vpop.permute.xlu0 %1990
  %1992 = vrot.lane.b32.xlu0 %v1952, 64
  %v1993 = vpop.permute.xlu0 %1992
  %1994 = vrot.lane.b32.xlu0 %v1953, 64
  %v1995 = vpop.permute.xlu0 %1994
  %1996 = vrot.lane.b32.xlu0 %v1954, 64
  %v1997 = vpop.permute.xlu0 %1996
  %1998 = vrot.lane.b32.xlu0 %v1955, 64
  %v1999 = vpop.permute.xlu0 %1998
  %2000 = vrot.lane.b32.xlu0 %v1956, 64
  %v2001 = vpop.permute.xlu0 %2000
  %2002 = vrot.lane.b32.xlu0 %v1957, 64
  %v2003 = vpop.permute.xlu0 %2002
  %2004 = vrot.lane.b32.xlu0 %v1958, 64
  %v2005 = vpop.permute.xlu0 %2004
  %2006 = vrot.lane.b32.xlu0 %v1959, 64
  %v2007 = vpop.permute.xlu0 %2006
  %2024 = vst.msk [vmem:[#allocation3 + $0x8] sm:$0xff] %vm608, %v1977
  %2025 = vst.msk [vmem:[#allocation3 + $0x20] sm:$0xff] %vm608, %v1979
  %2026 = vst.msk [vmem:[#allocation3 + $0x38] sm:$0xff] %vm608, %v1981
  %2027 = vst.msk [vmem:[#allocation3 + $0x50] sm:$0xff] %vm608, %v1983
  %2028 = vst.msk [vmem:[#allocation3 + $0x68] sm:$0xff] %vm608, %v1985
  %2029 = vst.msk [vmem:[#allocation3 + $0x80] sm:$0xff] %vm608, %v1987
  %2030 = vst.msk [vmem:[#allocation3 + $0x98] sm:$0xff] %vm608, %v1989
  %2031 = vst.msk [vmem:[#allocation3 + $0xb0] sm:$0xff] %vm608, %v1991
  %2032 = vst.msk [vmem:[#allocation3 + $0xc8] sm:$0xff] %vm608, %v1993
  %2033 = vst.msk [vmem:[#allocation3 + $0xe0] sm:$0xff] %vm608, %v1995
  %2034 = vst.msk [vmem:[#allocation3 + $0xf8] sm:$0xff] %vm608, %v1997
  %2035 = vst.msk [vmem:[#allocation3 + $0x110] sm:$0xff] %vm608, %v1999
  %2036 = vst.msk [vmem:[#allocation3 + $0x128] sm:$0xff] %vm608, %v2001
  %2037 = vst.msk [vmem:[#allocation3 + $0x140] sm:$0xff] %vm608, %v2003
  %2038 = vst.msk [vmem:[#allocation3 + $0x158] sm:$0xff] %vm608, %v2005
  %2039 = vst.msk [vmem:[#allocation3 + $0x170] sm:$0xff] %vm608, %v2007
  %v2040 = vld [vmem:[%s850 + $0x1] sm:$0xff]
  %v2041 = vld [vmem:[%s850 + $0x11] sm:$0xff]
  %v2042 = vld [vmem:[%s850 + $0x21] sm:$0xff]
  %v2043 = vld [vmem:[%s850 + $0x31] sm:$0xff]
  %v2044 = vld [vmem:[%s850 + $0x41] sm:$0xff]
  %v2045 = vld [vmem:[%s850 + $0x51] sm:$0xff]
  %v2046 = vld [vmem:[%s850 + $0x61] sm:$0xff]
  %v2047 = vld [vmem:[%s850 + $0x71] sm:$0xff]
  %v2048 = vld [vmem:[%s850 + $0xa1] sm:$0xff]
  %v2049 = vld [vmem:[%s850 + $0xb1] sm:$0xff]
  %v2050 = vld [vmem:[%s850 + $0xc1] sm:$0xff]
  %v2051 = vld [vmem:[%s850 + $0xd1] sm:$0xff]
  %v2052 = vld [vmem:[%s850 + $0xe1] sm:$0xff]
  %v2053 = vld [vmem:[%s850 + $0xf1] sm:$0xff]
  %v2054 = vld [vmem:[%s850 + $0x101] sm:$0xff]
  %v2055 = vld [vmem:[%s850 + $0x111] sm:$0xff]
  %2072 = vrot.lane.b32.xlu0 %v2040, 96
  %v2073 = vpop.permute.xlu0 %2072
  %2074 = vrot.lane.b32.xlu0 %v2041, 96
  %v2075 = vpop.permute.xlu0 %2074
  %2076 = vrot.lane.b32.xlu0 %v2042, 96
  %v2077 = vpop.permute.xlu0 %2076
  %2078 = vrot.lane.b32.xlu0 %v2043, 96
  %v2079 = vpop.permute.xlu0 %2078
  %2080 = vrot.lane.b32.xlu0 %v2044, 96
  %v2081 = vpop.permute.xlu0 %2080
  %2082 = vrot.lane.b32.xlu0 %v2045, 96
  %v2083 = vpop.permute.xlu0 %2082
  %2084 = vrot.lane.b32.xlu0 %v2046, 96
  %v2085 = vpop.permute.xlu0 %2084
  %2086 = vrot.lane.b32.xlu0 %v2047, 96
  %v2087 = vpop.permute.xlu0 %2086
  %2088 = vrot.lane.b32.xlu0 %v2048, 96
  %v2089 = vpop.permute.xlu0 %2088
  %2090 = vrot.lane.b32.xlu0 %v2049, 96
  %v2091 = vpop.permute.xlu0 %2090
  %2092 = vrot.lane.b32.xlu0 %v2050, 96
  %v2093 = vpop.permute.xlu0 %2092
  %2094 = vrot.lane.b32.xlu0 %v2051, 96
  %v2095 = vpop.permute.xlu0 %2094
  %2096 = vrot.lane.b32.xlu0 %v2052, 96
  %v2097 = vpop.permute.xlu0 %2096
  %2098 = vrot.lane.b32.xlu0 %v2053, 96
  %v2099 = vpop.permute.xlu0 %2098
  %2100 = vrot.lane.b32.xlu0 %v2054, 96
  %v2101 = vpop.permute.xlu0 %2100
  %2102 = vrot.lane.b32.xlu0 %v2055, 96
  %v2103 = vpop.permute.xlu0 %2102
  %2120 = vst.msk [vmem:[#allocation3 + $0x8] sm:$0xff] %vm705, %v2073
  %2121 = vst.msk [vmem:[#allocation3 + $0x20] sm:$0xff] %vm705, %v2075
  %2122 = vst.msk [vmem:[#allocation3 + $0x38] sm:$0xff] %vm705, %v2077
  %2123 = vst.msk [vmem:[#allocation3 + $0x50] sm:$0xff] %vm705, %v2079
  %2124 = vst.msk [vmem:[#allocation3 + $0x68] sm:$0xff] %vm705, %v2081
  %2125 = vst.msk [vmem:[#allocation3 + $0x80] sm:$0xff] %vm705, %v2083
  %2126 = vst.msk [vmem:[#allocation3 + $0x98] sm:$0xff] %vm705, %v2085
  %2127 = vst.msk [vmem:[#allocation3 + $0xb0] sm:$0xff] %vm705, %v2087
  %2128 = vst.msk [vmem:[#allocation3 + $0xc8] sm:$0xff] %vm705, %v2089
  %2129 = vst.msk [vmem:[#allocation3 + $0xe0] sm:$0xff] %vm705, %v2091
  %2130 = vst.msk [vmem:[#allocation3 + $0xf8] sm:$0xff] %vm705, %v2093
  %2131 = vst.msk [vmem:[#allocation3 + $0x110] sm:$0xff] %vm705, %v2095
  %2132 = vst.msk [vmem:[#allocation3 + $0x128] sm:$0xff] %vm705, %v2097
  %2133 = vst.msk [vmem:[#allocation3 + $0x140] sm:$0xff] %vm705, %v2099
  %2134 = vst.msk [vmem:[#allocation3 + $0x158] sm:$0xff] %vm705, %v2101
  %2135 = vst.msk [vmem:[#allocation3 + $0x170] sm:$0xff] %vm705, %v2103
  %v2136 = vld [vmem:[%s850 + $0x2] sm:$0xff]
  %v2137 = vld [vmem:[%s850 + $0x12] sm:$0xff]
  %v2138 = vld [vmem:[%s850 + $0x22] sm:$0xff]
  %v2139 = vld [vmem:[%s850 + $0x32] sm:$0xff]
  %v2140 = vld [vmem:[%s850 + $0x42] sm:$0xff]
  %v2141 = vld [vmem:[%s850 + $0x52] sm:$0xff]
  %v2142 = vld [vmem:[%s850 + $0x62] sm:$0xff]
  %v2143 = vld [vmem:[%s850 + $0x72] sm:$0xff]
  %v2144 = vld [vmem:[%s850 + $0xa2] sm:$0xff]
  %v2145 = vld [vmem:[%s850 + $0xb2] sm:$0xff]
  %v2146 = vld [vmem:[%s850 + $0xc2] sm:$0xff]
  %v2147 = vld [vmem:[%s850 + $0xd2] sm:$0xff]
  %v2148 = vld [vmem:[%s850 + $0xe2] sm:$0xff]
  %v2149 = vld [vmem:[%s850 + $0xf2] sm:$0xff]
  %v2150 = vld [vmem:[%s850 + $0x102] sm:$0xff]
  %v2151 = vld [vmem:[%s850 + $0x112] sm:$0xff]
  %2152 = vst.msk [vmem:[#allocation3 + $0x10] sm:$0xff] %vm339, %v2136
  %2153 = vst.msk [vmem:[#allocation3 + $0x28] sm:$0xff] %vm339, %v2137
  %2154 = vst.msk [vmem:[#allocation3 + $0x40] sm:$0xff] %vm339, %v2138
  %2155 = vst.msk [vmem:[#allocation3 + $0x58] sm:$0xff] %vm339, %v2139
  %2156 = vst.msk [vmem:[#allocation3 + $0x70] sm:$0xff] %vm339, %v2140
  %2157 = vst.msk [vmem:[#allocation3 + $0x88] sm:$0xff] %vm339, %v2141
  %2158 = vst.msk [vmem:[#allocation3 + $0xa0] sm:$0xff] %vm339, %v2142
  %2159 = vst.msk [vmem:[#allocation3 + $0xb8] sm:$0xff] %vm339, %v2143
  %2160 = vst.msk [vmem:[#allocation3 + $0xd0] sm:$0xff] %vm339, %v2144
  %2161 = vst.msk [vmem:[#allocation3 + $0xe8] sm:$0xff] %vm339, %v2145
  %2162 = vst.msk [vmem:[#allocation3 + $0x100] sm:$0xff] %vm339, %v2146
  %2163 = vst.msk [vmem:[#allocation3 + $0x118] sm:$0xff] %vm339, %v2147
  %2164 = vst.msk [vmem:[#allocation3 + $0x130] sm:$0xff] %vm339, %v2148
  %2165 = vst.msk [vmem:[#allocation3 + $0x148] sm:$0xff] %vm339, %v2149
  %2166 = vst.msk [vmem:[#allocation3 + $0x160] sm:$0xff] %vm339, %v2150
  %2167 = vst.msk [vmem:[#allocation3 + $0x178] sm:$0xff] %vm339, %v2151
  %v2168 = vld [vmem:[#allocation3] sm:$0xff]
  %v2169 = vld [vmem:[#allocation3 + $0x8] sm:$0xff]
  %v2170 = vld [vmem:[#allocation3 + $0x10] sm:$0xff]
  %v2171 = vld [vmem:[#allocation3 + $0x18] sm:$0xff]
  %v2172 = vld [vmem:[#allocation3 + $0x20] sm:$0xff]
  %v2173 = vld [vmem:[#allocation3 + $0x28] sm:$0xff]
  %v2174 = vld [vmem:[#allocation3 + $0x30] sm:$0xff]
  %v2175 = vld [vmem:[#allocation3 + $0x38] sm:$0xff]
  %v2176 = vld [vmem:[#allocation3 + $0x40] sm:$0xff]
  %v2177 = vld [vmem:[#allocation3 + $0x48] sm:$0xff]
  %v2178 = vld [vmem:[#allocation3 + $0x50] sm:$0xff]
  %v2179 = vld [vmem:[#allocation3 + $0x58] sm:$0xff]
  %v2180 = vld [vmem:[#allocation3 + $0x60] sm:$0xff]
  %v2181 = vld [vmem:[#allocation3 + $0x68] sm:$0xff]
  %v2182 = vld [vmem:[#allocation3 + $0x70] sm:$0xff]
  %v2183 = vld [vmem:[#allocation3 + $0x78] sm:$0xff]
  %v2184 = vld [vmem:[#allocation3 + $0x80] sm:$0xff]
  %v2185 = vld [vmem:[#allocation3 + $0x88] sm:$0xff]
  %v2186 = vld [vmem:[#allocation3 + $0x90] sm:$0xff]
  %v2187 = vld [vmem:[#allocation3 + $0x98] sm:$0xff]
  %v2188 = vld [vmem:[#allocation3 + $0xa0] sm:$0xff]
  %v2189 = vld [vmem:[#allocation3 + $0xa8] sm:$0xff]
  %v2190 = vld [vmem:[#allocation3 + $0xb0] sm:$0xff]
  %v2191 = vld [vmem:[#allocation3 + $0xb8] sm:$0xff]
  %v2192 = vld [vmem:[#allocation3 + $0xc0] sm:$0xff]
  %v2193 = vld [vmem:[#allocation3 + $0xc8] sm:$0xff]
  %v2194 = vld [vmem:[#allocation3 + $0xd0] sm:$0xff]
  %v2195 = vld [vmem:[#allocation3 + $0xd8] sm:$0xff]
  %v2196 = vld [vmem:[#allocation3 + $0xe0] sm:$0xff]
  %v2197 = vld [vmem:[#allocation3 + $0xe8] sm:$0xff]
  %v2198 = vld [vmem:[#allocation3 + $0xf0] sm:$0xff]
  %v2199 = vld [vmem:[#allocation3 + $0xf8] sm:$0xff]
  %v2200 = vld [vmem:[#allocation3 + $0x100] sm:$0xff]
  %v2201 = vld [vmem:[#allocation3 + $0x108] sm:$0xff]
  %v2202 = vld [vmem:[#allocation3 + $0x110] sm:$0xff]
  %v2203 = vld [vmem:[#allocation3 + $0x118] sm:$0xff]
  %v2204 = vld [vmem:[#allocation3 + $0x120] sm:$0xff]
  %v2205 = vld [vmem:[#allocation3 + $0x128] sm:$0xff]
  %v2206 = vld [vmem:[#allocation3 + $0x130] sm:$0xff]
  %v2207 = vld [vmem:[#allocation3 + $0x138] sm:$0xff]
  %v2208 = vld [vmem:[#allocation3 + $0x140] sm:$0xff]
  %v2209 = vld [vmem:[#allocation3 + $0x148] sm:$0xff]
  %v2210 = vld [vmem:[#allocation3 + $0x150] sm:$0xff]
  %v2211 = vld [vmem:[#allocation3 + $0x158] sm:$0xff]
  %v2212 = vld [vmem:[#allocation3 + $0x160] sm:$0xff]
  %v2213 = vld [vmem:[#allocation3 + $0x168] sm:$0xff]
  %v2214 = vld [vmem:[#allocation3 + $0x170] sm:$0xff]
  %v2215 = vld [vmem:[#allocation3 + $0x178] sm:$0xff]
  %v2216 = vpack.c.bf16 %v2171, %v2168
  %v2217 = vpack.c.bf16 %v2172, %v2169
  %v2218 = vpack.c.bf16 %v2173, %v2170
  %v2219 = vpack.c.bf16 %v2177, %v2174
  %v2220 = vpack.c.bf16 %v2178, %v2175
  %v2221 = vpack.c.bf16 %v2179, %v2176
  %v2222 = vpack.c.bf16 %v2183, %v2180
  %v2223 = vpack.c.bf16 %v2184, %v2181
  %v2224 = vpack.c.bf16 %v2185, %v2182
  %v2225 = vpack.c.bf16 %v2189, %v2186
  %v2226 = vpack.c.bf16 %v2190, %v2187
  %v2227 = vpack.c.bf16 %v2191, %v2188
  %v2228 = vpack.c.bf16 %v2195, %v2192
  %v2229 = vpack.c.bf16 %v2196, %v2193
  %v2230 = vpack.c.bf16 %v2197, %v2194
  %v2231 = vpack.c.bf16 %v2201, %v2198
  %v2232 = vpack.c.bf16 %v2202, %v2199
  %v2233 = vpack.c.bf16 %v2203, %v2200
  %v2234 = vpack.c.bf16 %v2207, %v2204
  %v2235 = vpack.c.bf16 %v2208, %v2205
  %v2236 = vpack.c.bf16 %v2209, %v2206
  %v2237 = vpack.c.bf16 %v2213, %v2210
  %v2238 = vpack.c.bf16 %v2214, %v2211
  %v2239 = vpack.c.bf16 %v2215, %v2212
  %v2240 = vld [vmem:[%s1 + $0x110] sm:$0xf]
  %v2241 = vld [vmem:[%s1 + $0x114] sm:$0xf]
  %v2242 = vld [vmem:[%s1 + $0x118] sm:$0xf]
  %v2243 = vld [vmem:[%s1 + $0x11c] sm:$0xf]
  %v2244 = vld [vmem:[%s1 + $0x120] sm:$0xf]
  %v2245 = vld [vmem:[%s1 + $0x124] sm:$0xf]
  %v2246 = vld [vmem:[%s1 + $0x128] sm:$0xf]
  %v2247 = vld [vmem:[%s1 + $0x12c] sm:$0xf]
  %v2248 = vld [vmem:[%s1 + $0x130] sm:$0xf]
  %v2249 = vld [vmem:[%s1 + $0x134] sm:$0xf]
  %v2250 = vld [vmem:[%s1 + $0x138] sm:$0xf]
  %v2251 = vld [vmem:[%s1 + $0x13c] sm:$0xf]
  %v2252 = vld [vmem:[%s1 + $0x140] sm:$0xf]
  %v2253 = vld [vmem:[%s1 + $0x144] sm:$0xf]
  %v2254 = vld [vmem:[%s1 + $0x148] sm:$0xf]
  %v2255 = vld [vmem:[%s1 + $0x14c] sm:$0xf]
  %v2256 = vld [vmem:[%s1 + $0x150] sm:$0xf]
  %v2257 = vld [vmem:[%s1 + $0x154] sm:$0xf]
  %v2258 = vld [vmem:[%s1 + $0x158] sm:$0xf]
  %v2259 = vld [vmem:[%s1 + $0x15c] sm:$0xf]
  %v2260 = vld [vmem:[%s1 + $0x160] sm:$0xf]
  %v2261 = vld [vmem:[%s1 + $0x164] sm:$0xf]
  %v2262 = vld [vmem:[%s1 + $0x168] sm:$0xf]
  %v2263 = vld [vmem:[%s1 + $0x16c] sm:$0xf]
  %v2264 = vld [vmem:[%s1 + $0x170] sm:$0xf]
  %v2265 = vld [vmem:[%s1 + $0x174] sm:$0xf]
  %v2266 = vld [vmem:[%s1 + $0x178] sm:$0xf]
  %v2267 = vld [vmem:[%s1 + $0x17c] sm:$0xf]
  %v2268 = vld [vmem:[%s1 + $0x180] sm:$0xf]
  %v2269 = vld [vmem:[%s1 + $0x184] sm:$0xf]
  %v2270 = vld [vmem:[%s1 + $0x188] sm:$0xf]
  %v2271 = vld [vmem:[%s1 + $0x18c] sm:$0xf]
  %v2272 = vld [vmem:[%s1 + $0x190] sm:$0xf]
  %v2273 = vld [vmem:[%s1 + $0x194] sm:$0xf]
  %v2274 = vld [vmem:[%s1 + $0x198] sm:$0xf]
  %v2275 = vld [vmem:[%s1 + $0x19c] sm:$0xf]
  %v2276 = vperm.slane %v1479, 0
  %v2313 = vunpack.c.l.b16 %v2240
  %v2314 = vunpack.c.l.b16 %v2241
  %v2315 = vunpack.c.l.b16 %v2242
  %v2316 = vunpack.c.l.b16 %v2243
  %v2317 = vunpack.c.l.b16 %v2244
  %v2318 = vunpack.c.l.b16 %v2245
  %v2319 = vunpack.c.l.b16 %v2246
  %v2320 = vunpack.c.l.b16 %v2247
  %v2321 = vunpack.c.l.b16 %v2248
  %v2322 = vunpack.c.l.b16 %v2249
  %v2323 = vunpack.c.l.b16 %v2250
  %v2324 = vunpack.c.l.b16 %v2251
  %v2325 = vunpack.c.l.b16 %v2252
  %v2326 = vunpack.c.l.b16 %v2253
  %v2327 = vunpack.c.l.b16 %v2254
  %v2328 = vunpack.c.l.b16 %v2255
  %v2329 = vunpack.c.l.b16 %v2256
  %v2330 = vunpack.c.l.b16 %v2257
  %v2331 = vunpack.c.l.b16 %v2258
  %v2332 = vunpack.c.l.b16 %v2259
  %v2333 = vunpack.c.l.b16 %v2260
  %v2334 = vunpack.c.l.b16 %v2261
  %v2335 = vunpack.c.l.b16 %v2262
  %v2336 = vunpack.c.l.b16 %v2263
  %v2337 = vunpack.c.l.b16 %v2264
  %v2338 = vunpack.c.l.b16 %v2265
  %v2339 = vunpack.c.l.b16 %v2266
  %v2340 = vunpack.c.l.b16 %v2267
  %v2341 = vunpack.c.l.b16 %v2268
  %v2342 = vunpack.c.l.b16 %v2269
  %v2343 = vunpack.c.l.b16 %v2270
  %v2344 = vunpack.c.l.b16 %v2271
  %v2345 = vunpack.c.l.b16 %v2272
  %v2346 = vunpack.c.l.b16 %v2273
  %v2347 = vunpack.c.l.b16 %v2274
  %v2348 = vunpack.c.l.b16 %v2275
  %v2349 = vpack.c.b16 %v2314, %v2313
  %v2350 = vpack.c.b16 %v2316, %v2315
  %v2351 = vpack.c.b16 %v2318, %v2317
  %v2352 = vpack.c.b16 %v2320, %v2319
  %v2353 = vpack.c.b16 %v2322, %v2321
  %v2354 = vpack.c.b16 %v2324, %v2323
  %v2355 = vpack.c.b16 %v2326, %v2325
  %v2356 = vpack.c.b16 %v2328, %v2327
  %v2357 = vpack.c.b16 %v2330, %v2329
  %v2358 = vpack.c.b16 %v2332, %v2331
  %v2359 = vpack.c.b16 %v2334, %v2333
  %v2360 = vpack.c.b16 %v2336, %v2335
  %v2361 = vpack.c.b16 %v2338, %v2337
  %v2362 = vpack.c.b16 %v2340, %v2339
  %v2363 = vpack.c.b16 %v2342, %v2341
  %v2364 = vpack.c.b16 %v2344, %v2343
  %v2365 = vpack.c.b16 %v2346, %v2345
  %v2366 = vpack.c.b16 %v2348, %v2347
  %v2386 = vsel %vm339, %v2218, 0
  %v2389 = vsel %vm339, %v2221, 0
  %v2392 = vsel %vm339, %v2224, 0
  %v2395 = vsel %vm339, %v2227, 0
  %v2398 = vsel %vm339, %v2230, 0
  %v2401 = vsel %vm339, %v2233, 0
  %v2404 = vsel %vm339, %v2236, 0
  %v2407 = vsel %vm339, %v2239, 0
  %2409 = vmatpush.bf16.msra.mxu0 %v2356
  %2410 = vmatpush.bf16.msra.mxu0 %v2355
  %2411 = vmatpush.bf16.msra.mxu0 %v2354
  %2412 = vmatpush.bf16.msra.mxu0 %v2353
  %2413 = vmatpush.bf16.msra.mxu0 %v2352
  %2414 = vmatpush.bf16.msra.mxu0 %v2351
  %2415 = vmatpush.bf16.msra.mxu0 %v2350
  %2416 = vmatpush.bf16.msra.mxu0 %v2349
  %2417 = vmatmul.bf16.gmra.mxu0 %v2216
  %v2418 = vpop.f32.mrf.mxu0
  %v2419 = vadd.f32 %v2276, %v2418
  %v2420 = vpop.f32.mrf.mxu0
  %v2421 = vadd.f32 %v2276, %v2420
  %2422 = vmatmul.bf16.gmra.mxu0 %v2219
  %v2423 = vpop.f32.mrf.mxu0
  %v2424 = vadd.f32 %v2276, %v2423
  %v2425 = vpop.f32.mrf.mxu0
  %v2426 = vadd.f32 %v2276, %v2425
  %2427 = vmatmul.bf16.gmra.mxu0 %v2222
  %v2428 = vpop.f32.mrf.mxu0
  %v2429 = vadd.f32 %v2276, %v2428
  %v2430 = vpop.f32.mrf.mxu0
  %v2431 = vadd.f32 %v2276, %v2430
  %2432 = vmatmul.bf16.gmra.mxu0 %v2225
  %v2433 = vpop.f32.mrf.mxu0
  %v2434 = vadd.f32 %v2276, %v2433
  %v2435 = vpop.f32.mrf.mxu0
  %v2436 = vadd.f32 %v2276, %v2435
  %2437 = vmatmul.bf16.gmra.mxu0 %v2228
  %v2438 = vpop.f32.mrf.mxu0
  %v2439 = vadd.f32 %v2276, %v2438
  %v2440 = vpop.f32.mrf.mxu0
  %v2441 = vadd.f32 %v2276, %v2440
  %2442 = vmatmul.bf16.gmra.mxu0 %v2231
  %v2443 = vpop.f32.mrf.mxu0
  %v2444 = vadd.f32 %v2276, %v2443
  %v2445 = vpop.f32.mrf.mxu0
  %v2446 = vadd.f32 %v2276, %v2445
  %2447 = vmatmul.bf16.gmra.mxu0 %v2234
  %v2448 = vpop.f32.mrf.mxu0
  %v2449 = vadd.f32 %v2276, %v2448
  %v2450 = vpop.f32.mrf.mxu0
  %v2451 = vadd.f32 %v2276, %v2450
  %2452 = vmatmul.bf16.gmra.mxu0 %v2237
  %v2453 = vpop.f32.mrf.mxu0
  %v2454 = vadd.f32 %v2276, %v2453
  %v2455 = vpop.f32.mrf.mxu0
  %v2456 = vadd.f32 %v2276, %v2455
  %2457 = vdwg.mxu0
  %2458 = vmatpush.bf16.msra.mxu0 %v2364
  %2459 = vmatpush.bf16.msra.mxu0 %v2363
  %2460 = vmatpush.bf16.msra.mxu0 %v2362
  %2461 = vmatpush.bf16.msra.mxu0 %v2361
  %2462 = vmatpush.bf16.msra.mxu0 %v2360
  %2463 = vmatpush.bf16.msra.mxu0 %v2359
  %2464 = vmatpush.bf16.msra.mxu0 %v2358
  %2465 = vmatpush.bf16.msra.mxu0 %v2357
  %2466 = vmatmul.bf16.gmra.mxu0 %v2217
  %v2467 = vpop.f32.mrf.mxu0
  %v2468 = vadd.f32 %v2419, %v2467
  %v2469 = vpop.f32.mrf.mxu0
  %v2470 = vadd.f32 %v2421, %v2469
  %2471 = vmatmul.bf16.gmra.mxu0 %v2220
  %v2472 = vpop.f32.mrf.mxu0
  %v2473 = vadd.f32 %v2424, %v2472
  %v2474 = vpop.f32.mrf.mxu0
  %v2475 = vadd.f32 %v2426, %v2474
  %2476 = vmatmul.bf16.gmra.mxu0 %v2223
  %v2477 = vpop.f32.mrf.mxu0
  %v2478 = vadd.f32 %v2429, %v2477
  %v2479 = vpop.f32.mrf.mxu0
  %v2480 = vadd.f32 %v2431, %v2479
  %2481 = vmatmul.bf16.gmra.mxu0 %v2226
  %v2482 = vpop.f32.mrf.mxu0
  %v2483 = vadd.f32 %v2434, %v2482
  %v2484 = vpop.f32.mrf.mxu0
  %v2485 = vadd.f32 %v2436, %v2484
  %2486 = vmatmul.bf16.gmra.mxu0 %v2229
  %v2487 = vpop.f32.mrf.mxu0
  %v2488 = vadd.f32 %v2439, %v2487
  %v2489 = vpop.f32.mrf.mxu0
  %v2490 = vadd.f32 %v2441, %v2489
  %2491 = vmatmul.bf16.gmra.mxu0 %v2232
  %v2492 = vpop.f32.mrf.mxu0
  %v2493 = vadd.f32 %v2444, %v2492
  %v2494 = vpop.f32.mrf.mxu0
  %v2495 = vadd.f32 %v2446, %v2494
  %2496 = vmatmul.bf16.gmra.mxu0 %v2235
  %v2497 = vpop.f32.mrf.mxu0
  %v2498 = vadd.f32 %v2449, %v2497
  %v2499 = vpop.f32.mrf.mxu0
  %v2500 = vadd.f32 %v2451, %v2499
  %2501 = vmatmul.bf16.gmra.mxu0 %v2238
  %v2502 = vpop.f32.mrf.mxu0
  %v2503 = vadd.f32 %v2454, %v2502
  %v2504 = vpop.f32.mrf.mxu0
  %v2505 = vadd.f32 %v2456, %v2504
  %2506 = vdwg.mxu0
  %2507 = vmatpush.bf16.msra.mxu0 0
  %2508 = vmatpush.bf16.msra.mxu0 0
  %2509 = vmatpush.bf16.msra.mxu0 0
  %2510 = vmatpush.bf16.msra.mxu0 0
  %2511 = vmatpush.bf16.msra.mxu0 0
  %2512 = vmatpush.bf16.msra.mxu0 0
  %2513 = vmatpush.bf16.msra.mxu0 %v2366
  %2514 = vmatpush.bf16.msra.mxu0 %v2365
  %2515 = vmatmul.bf16.gmra.mxu0 %v2386
  %v2516 = vpop.f32.mrf.mxu0
  %v2517 = vadd.f32 %v2468, %v2516
  %v2518 = vpop.f32.mrf.mxu0
  %v2519 = vadd.f32 %v2470, %v2518
  %2520 = vmatmul.bf16.gmra.mxu0 %v2389
  %v2521 = vpop.f32.mrf.mxu0
  %v2522 = vadd.f32 %v2473, %v2521
  %v2523 = vpop.f32.mrf.mxu0
  %v2524 = vadd.f32 %v2475, %v2523
  %2525 = vmatmul.bf16.gmra.mxu0 %v2392
  %v2526 = vpop.f32.mrf.mxu0
  %v2527 = vadd.f32 %v2478, %v2526
  %v2528 = vpop.f32.mrf.mxu0
  %v2529 = vadd.f32 %v2480, %v2528
  %2530 = vmatmul.bf16.gmra.mxu0 %v2395
  %v2531 = vpop.f32.mrf.mxu0
  %v2532 = vadd.f32 %v2483, %v2531
  %v2533 = vpop.f32.mrf.mxu0
  %v2534 = vadd.f32 %v2485, %v2533
  %2535 = vmatmul.bf16.gmra.mxu0 %v2398
  %v2536 = vpop.f32.mrf.mxu0
  %v2537 = vadd.f32 %v2488, %v2536
  %v2538 = vpop.f32.mrf.mxu0
  %v2539 = vadd.f32 %v2490, %v2538
  %2540 = vmatmul.bf16.gmra.mxu0 %v2401
  %v2541 = vpop.f32.mrf.mxu0
  %v2542 = vadd.f32 %v2493, %v2541
  %v2543 = vpop.f32.mrf.mxu0
  %v2544 = vadd.f32 %v2495, %v2543
  %2545 = vmatmul.bf16.gmra.mxu0 %v2404
  %v2546 = vpop.f32.mrf.mxu0
  %v2547 = vadd.f32 %v2498, %v2546
  %v2548 = vpop.f32.mrf.mxu0
  %v2549 = vadd.f32 %v2500, %v2548
  %2550 = vmatmul.bf16.gmra.mxu0 %v2407
  %v2551 = vpop.f32.mrf.mxu0
  %v2552 = vadd.f32 %v2503, %v2551
  %v2553 = vpop.f32.mrf.mxu0
  %v2554 = vadd.f32 %v2505, %v2553
  %2555 = vdwg.mxu0
  %v2556 = vmax.f32 %v2517, 0.0
  %v2557 = vmax.f32 %v2519, 0.0
  %v2558 = vmax.f32 %v2522, 0.0
  %v2559 = vmax.f32 %v2524, 0.0
  %v2560 = vmax.f32 %v2527, 0.0
  %v2561 = vmax.f32 %v2529, 0.0
  %v2562 = vmax.f32 %v2532, 0.0
  %v2563 = vmax.f32 %v2534, 0.0
  %v2564 = vmax.f32 %v2537, 0.0
  %v2565 = vmax.f32 %v2539, 0.0
  %v2566 = vmax.f32 %v2542, 0.0
  %v2567 = vmax.f32 %v2544, 0.0
  %v2568 = vmax.f32 %v2547, 0.0
  %v2569 = vmax.f32 %v2549, 0.0
  %v2570 = vmax.f32 %v2552, 0.0
  %v2571 = vmax.f32 %v2554, 0.0
  %v2572 = vpack.c.bf16 %v2557, %v2556
  %v2573 = vpack.c.bf16 %v2559, %v2558
  %v2574 = vpack.c.bf16 %v2561, %v2560
  %v2575 = vpack.c.bf16 %v2563, %v2562
  %v2576 = vpack.c.bf16 %v2565, %v2564
  %v2577 = vpack.c.bf16 %v2567, %v2566
  %v2578 = vpack.c.bf16 %v2569, %v2568
  %v2579 = vpack.c.bf16 %v2571, %v2570
  %v2580 = vld [vmem:[%s1 + $0x1a0] sm:$0xf]
  %v2581 = vld [vmem:[%s1 + $0x1a4] sm:$0xf]
  %v2582 = vld [vmem:[%s1 + $0x1a8] sm:$0xf]
  %v2583 = vld [vmem:[%s1 + $0x1ac] sm:$0xf]
  %v2584 = vld [vmem:[%s2 + $0x3] sm:$0x1]
  %v2585 = vperm.slane %v2584, 0
  %v2590 = vunpack.c.l.b16 %v2580
  %v2591 = vunpack.c.l.b16 %v2581
  %v2592 = vunpack.c.l.b16 %v2582
  %v2593 = vunpack.c.l.b16 %v2583
  %v2594 = vpack.c.b16 %v2591, %v2590
  %v2595 = vpack.c.b16 %v2593, %v2592
  %v2599 = vsel %vm339, %v2572, 0
  %v2602 = vsel %vm339, %v2573, 0
  %v2605 = vsel %vm339, %v2574, 0
  %v2608 = vsel %vm339, %v2575, 0
  %v2611 = vsel %vm339, %v2576, 0
  %v2614 = vsel %vm339, %v2577, 0
  %v2617 = vsel %vm339, %v2578, 0
  %v2620 = vsel %vm339, %v2579, 0
  %2622 = vmatpush.bf16.msra.mxu0 0
  %2623 = vmatpush.bf16.msra.mxu0 0
  %2624 = vmatpush.bf16.msra.mxu0 0
  %2625 = vmatpush.bf16.msra.mxu0 0
  %2626 = vmatpush.bf16.msra.mxu0 0
  %2627 = vmatpush.bf16.msra.mxu0 0
  %2628 = vmatpush.bf16.msra.mxu0 %v2595
  %2629 = vmatpush.bf16.msra.mxu0 %v2594
  %2630 = vmatmul.bf16.gmra.mxu0 %v2599
  %v2631 = vpop.f32.mrf.mxu0
  %v2632 = vadd.f32 %v2585, %v2631
  %v2633 = vpop.f32.mrf.mxu0
  %v2634 = vadd.f32 %v2585, %v2633
  %2635 = vmatmul.bf16.gmra.mxu0 %v2602
  %v2636 = vpop.f32.mrf.mxu0
  %v2637 = vadd.f32 %v2585, %v2636
  %v2638 = vpop.f32.mrf.mxu0
  %v2639 = vadd.f32 %v2585, %v2638
  %2640 = vmatmul.bf16.gmra.mxu0 %v2605
  %v2641 = vpop.f32.mrf.mxu0
  %v2642 = vadd.f32 %v2585, %v2641
  %v2643 = vpop.f32.mrf.mxu0
  %v2644 = vadd.f32 %v2585, %v2643
  %2645 = vmatmul.bf16.gmra.mxu0 %v2608
  %v2646 = vpop.f32.mrf.mxu0
  %v2647 = vadd.f32 %v2585, %v2646
  %v2648 = vpop.f32.mrf.mxu0
  %v2649 = vadd.f32 %v2585, %v2648
  %2650 = vmatmul.bf16.gmra.mxu0 %v2611
  %v2651 = vpop.f32.mrf.mxu0
  %v2652 = vadd.f32 %v2585, %v2651
  %v2653 = vpop.f32.mrf.mxu0
  %v2654 = vadd.f32 %v2585, %v2653
  %2655 = vmatmul.bf16.gmra.mxu0 %v2614
  %v2656 = vpop.f32.mrf.mxu0
  %v2657 = vadd.f32 %v2585, %v2656
  %v2658 = vpop.f32.mrf.mxu0
  %v2659 = vadd.f32 %v2585, %v2658
  %2660 = vmatmul.bf16.gmra.mxu0 %v2617
  %v2661 = vpop.f32.mrf.mxu0
  %v2662 = vadd.f32 %v2585, %v2661
  %v2663 = vpop.f32.mrf.mxu0
  %v2664 = vadd.f32 %v2585, %v2663
  %2665 = vmatmul.bf16.gmra.mxu0 %v2620
  %v2666 = vpop.f32.mrf.mxu0
  %v2667 = vadd.f32 %v2585, %v2666
  %v2668 = vpop.f32.mrf.mxu0
  %v2669 = vadd.f32 %v2585, %v2668
  %2670 = vdwg.mxu0
  %v2671 = vsel %vm339, %v2632, 0.0
  %2672 = vadd.xlane.f32.xlu0 %v2671
  %v2673 = vpop.xlane.xlu0 %2672
  %v2674 = vsel %vm339, %v2634, 0.0
  %2675 = vadd.xlane.f32.xlu0 %v2674
  %v2676 = vpop.xlane.xlu0 %2675
  %v2677 = vsel %vm339, %v2637, 0.0
  %2678 = vadd.xlane.f32.xlu0 %v2677
  %v2679 = vpop.xlane.xlu0 %2678
  %v2680 = vsel %vm339, %v2639, 0.0
  %2681 = vadd.xlane.f32.xlu0 %v2680
  %v2682 = vpop.xlane.xlu0 %2681
  %v2683 = vsel %vm339, %v2642, 0.0
  %2684 = vadd.xlane.f32.xlu0 %v2683
  %v2685 = vpop.xlane.xlu0 %2684
  %v2686 = vsel %vm339, %v2644, 0.0
  %2687 = vadd.xlane.f32.xlu0 %v2686
  %v2688 = vpop.xlane.xlu0 %2687
  %v2689 = vsel %vm339, %v2647, 0.0
  %2690 = vadd.xlane.f32.xlu0 %v2689
  %v2691 = vpop.xlane.xlu0 %2690
  %v2692 = vsel %vm339, %v2649, 0.0
  %2693 = vadd.xlane.f32.xlu0 %v2692
  %v2694 = vpop.xlane.xlu0 %2693
  %v2695 = vsel %vm339, %v2652, 0.0
  %2696 = vadd.xlane.f32.xlu0 %v2695
  %v2697 = vpop.xlane.xlu0 %2696
  %v2698 = vsel %vm339, %v2654, 0.0
  %2699 = vadd.xlane.f32.xlu0 %v2698
  %v2700 = vpop.xlane.xlu0 %2699
  %v2701 = vsel %vm339, %v2657, 0.0
  %2702 = vadd.xlane.f32.xlu0 %v2701
  %v2703 = vpop.xlane.xlu0 %2702
  %v2704 = vsel %vm339, %v2659, 0.0
  %2705 = vadd.xlane.f32.xlu0 %v2704
  %v2706 = vpop.xlane.xlu0 %2705
  %v2707 = vsel %vm339, %v2662, 0.0
  %2708 = vadd.xlane.f32.xlu0 %v2707
  %v2709 = vpop.xlane.xlu0 %2708
  %v2710 = vsel %vm339, %v2664, 0.0
  %2711 = vadd.xlane.f32.xlu0 %v2710
  %v2712 = vpop.xlane.xlu0 %2711
  %v2713 = vsel %vm339, %v2667, 0.0
  %2714 = vadd.xlane.f32.xlu0 %v2713
  %v2715 = vpop.xlane.xlu0 %2714
  %v2716 = vsel %vm339, %v2669, 0.0
  %2717 = vadd.xlane.f32.xlu0 %v2716
  %v2718 = vpop.xlane.xlu0 %2717
  %v2719 = vrcp.pop 32.0
  %v2720 = vmul.f32 32.0, %v2719
  %v2721 = vsub.f32 1.0, %v2720
  %v2722 = vmul.f32 %v2719, %v2721
  %v2723 = vadd.f32 %v2719, %v2722
  %vm2724 = vweird.f32 %v2719
  %v2725 = vsel %vm2724, %v2719, %v2723
  %v2726 = vmul.f32 %v2673, %v2725
  %v2727 = vmul.f32 %v2676, %v2725
  %v2728 = vmul.f32 %v2679, %v2725
  %v2729 = vmul.f32 %v2682, %v2725
  %v2730 = vmul.f32 %v2685, %v2725
  %v2731 = vmul.f32 %v2688, %v2725
  %v2732 = vmul.f32 %v2691, %v2725
  %v2733 = vmul.f32 %v2694, %v2725
  %v2734 = vmul.f32 %v2697, %v2725
  %v2735 = vmul.f32 %v2700, %v2725
  %v2736 = vmul.f32 %v2703, %v2725
  %v2737 = vmul.f32 %v2706, %v2725
  %v2738 = vmul.f32 %v2709, %v2725
  %v2739 = vmul.f32 %v2712, %v2725
  %v2740 = vmul.f32 %v2715, %v2725
  %v2741 = vmul.f32 %v2718, %v2725
  %v2742 = vsub.f32 %v2632, %v2726
  %v2743 = vsub.f32 %v2634, %v2727
  %v2744 = vsub.f32 %v2637, %v2728
  %v2745 = vsub.f32 %v2639, %v2729
  %v2746 = vsub.f32 %v2642, %v2730
  %v2747 = vsub.f32 %v2644, %v2731
  %v2748 = vsub.f32 %v2647, %v2732
  %v2749 = vsub.f32 %v2649, %v2733
  %v2750 = vsub.f32 %v2652, %v2734
  %v2751 = vsub.f32 %v2654, %v2735
  %v2752 = vsub.f32 %v2657, %v2736
  %v2753 = vsub.f32 %v2659, %v2737
  %v2754 = vsub.f32 %v2662, %v2738
  %v2755 = vsub.f32 %v2664, %v2739
  %v2756 = vsub.f32 %v2667, %v2740
  %v2757 = vsub.f32 %v2669, %v2741
  %v2758 = vmul.f32 %v2742, %v2742
  %v2759 = vmul.f32 %v2743, %v2743
  %v2760 = vmul.f32 %v2744, %v2744
  %v2761 = vmul.f32 %v2745, %v2745
  %v2762 = vmul.f32 %v2746, %v2746
  %v2763 = vmul.f32 %v2747, %v2747
  %v2764 = vmul.f32 %v2748, %v2748
  %v2765 = vmul.f32 %v2749, %v2749
  %v2766 = vmul.f32 %v2750, %v2750
  %v2767 = vmul.f32 %v2751, %v2751
  %v2768 = vmul.f32 %v2752, %v2752
  %v2769 = vmul.f32 %v2753, %v2753
  %v2770 = vmul.f32 %v2754, %v2754
  %v2771 = vmul.f32 %v2755, %v2755
  %v2772 = vmul.f32 %v2756, %v2756
  %v2773 = vmul.f32 %v2757, %v2757
  %v2774 = vsel %vm339, %v2758, 0.0
  %2775 = vadd.xlane.f32.xlu0 %v2774
  %v2776 = vpop.xlane.xlu0 %2775
  %v2777 = vsel %vm339, %v2759, 0.0
  %2778 = vadd.xlane.f32.xlu0 %v2777
  %v2779 = vpop.xlane.xlu0 %2778
  %v2780 = vsel %vm339, %v2760, 0.0
  %2781 = vadd.xlane.f32.xlu0 %v2780
  %v2782 = vpop.xlane.xlu0 %2781
  %v2783 = vsel %vm339, %v2761, 0.0
  %2784 = vadd.xlane.f32.xlu0 %v2783
  %v2785 = vpop.xlane.xlu0 %2784
  %v2786 = vsel %vm339, %v2762, 0.0
  %2787 = vadd.xlane.f32.xlu0 %v2786
  %v2788 = vpop.xlane.xlu0 %2787
  %v2789 = vsel %vm339, %v2763, 0.0
  %2790 = vadd.xlane.f32.xlu0 %v2789
  %v2791 = vpop.xlane.xlu0 %2790
  %v2792 = vsel %vm339, %v2764, 0.0
  %2793 = vadd.xlane.f32.xlu0 %v2792
  %v2794 = vpop.xlane.xlu0 %2793
  %v2795 = vsel %vm339, %v2765, 0.0
  %2796 = vadd.xlane.f32.xlu0 %v2795
  %v2797 = vpop.xlane.xlu0 %2796
  %v2798 = vsel %vm339, %v2766, 0.0
  %2799 = vadd.xlane.f32.xlu0 %v2798
  %v2800 = vpop.xlane.xlu0 %2799
  %v2801 = vsel %vm339, %v2767, 0.0
  %2802 = vadd.xlane.f32.xlu0 %v2801
  %v2803 = vpop.xlane.xlu0 %2802
  %v2804 = vsel %vm339, %v2768, 0.0
  %2805 = vadd.xlane.f32.xlu0 %v2804
  %v2806 = vpop.xlane.xlu0 %2805
  %v2807 = vsel %vm339, %v2769, 0.0
  %2808 = vadd.xlane.f32.xlu0 %v2807
  %v2809 = vpop.xlane.xlu0 %2808
  %v2810 = vsel %vm339, %v2770, 0.0
  %2811 = vadd.xlane.f32.xlu0 %v2810
  %v2812 = vpop.xlane.xlu0 %2811
  %v2813 = vsel %vm339, %v2771, 0.0
  %2814 = vadd.xlane.f32.xlu0 %v2813
  %v2815 = vpop.xlane.xlu0 %2814
  %v2816 = vsel %vm339, %v2772, 0.0
  %2817 = vadd.xlane.f32.xlu0 %v2816
  %v2818 = vpop.xlane.xlu0 %2817
  %v2819 = vsel %vm339, %v2773, 0.0
  %2820 = vadd.xlane.f32.xlu0 %v2819
  %v2821 = vpop.xlane.xlu0 %2820
  %v2822 = vmul.f32 %v2776, %v2725
  %v2823 = vmul.f32 %v2779, %v2725
  %v2824 = vmul.f32 %v2782, %v2725
  %v2825 = vmul.f32 %v2785, %v2725
  %v2826 = vmul.f32 %v2788, %v2725
  %v2827 = vmul.f32 %v2791, %v2725
  %v2828 = vmul.f32 %v2794, %v2725
  %v2829 = vmul.f32 %v2797, %v2725
  %v2830 = vmul.f32 %v2800, %v2725
  %v2831 = vmul.f32 %v2803, %v2725
  %v2832 = vmul.f32 %v2806, %v2725
  %v2833 = vmul.f32 %v2809, %v2725
  %v2834 = vmul.f32 %v2812, %v2725
  %v2835 = vmul.f32 %v2815, %v2725
  %v2836 = vmul.f32 %v2818, %v2725
  %v2837 = vmul.f32 %v2821, %v2725
  %v2838 = vadd.f32 %v2822, 1e-05
  %v2839 = vadd.f32 %v2823, 1e-05
  %v2840 = vadd.f32 %v2824, 1e-05
  %v2841 = vadd.f32 %v2825, 1e-05
  %v2842 = vadd.f32 %v2826, 1e-05
  %v2843 = vadd.f32 %v2827, 1e-05
  %v2844 = vadd.f32 %v2828, 1e-05
  %v2845 = vadd.f32 %v2829, 1e-05
  %v2846 = vadd.f32 %v2830, 1e-05
  %v2847 = vadd.f32 %v2831, 1e-05
  %v2848 = vadd.f32 %v2832, 1e-05
  %v2849 = vadd.f32 %v2833, 1e-05
  %v2850 = vadd.f32 %v2834, 1e-05
  %v2851 = vadd.f32 %v2835, 1e-05
  %v2852 = vadd.f32 %v2836, 1e-05
  %v2853 = vadd.f32 %v2837, 1e-05
  %v2854 = vrsqrt.pop %v2838
  %v2855 = vmul.f32 %v2854, %v2838
  %v2856 = vmul.f32 %v2855, %v2854
  %v2857 = vmul.f32 0.5, %v2856
  %v2858 = vsub.f32 1.5, %v2857
  %v2859 = vmul.f32 %v2854, %v2858
  %vm2860 = vweird.f32 %v2838
  %vm2861 = vweird.f32 %v2854
  %vm2862 = vmor %vm2860, %vm2861
  %v2863 = vsel %vm2862, %v2854, %v2859
  %v2864 = vrsqrt.pop %v2839
  %v2865 = vmul.f32 %v2864, %v2839
  %v2866 = vmul.f32 %v2865, %v2864
  %v2867 = vmul.f32 0.5, %v2866
  %v2868 = vsub.f32 1.5, %v2867
  %v2869 = vmul.f32 %v2864, %v2868
  %vm2870 = vweird.f32 %v2839
  %vm2871 = vweird.f32 %v2864
  %vm2872 = vmor %vm2870, %vm2871
  %v2873 = vsel %vm2872, %v2864, %v2869
  %v2874 = vrsqrt.pop %v2840
  %v2875 = vmul.f32 %v2874, %v2840
  %v2876 = vmul.f32 %v2875, %v2874
  %v2877 = vmul.f32 0.5, %v2876
  %v2878 = vsub.f32 1.5, %v2877
  %v2879 = vmul.f32 %v2874, %v2878
  %vm2880 = vweird.f32 %v2840
  %vm2881 = vweird.f32 %v2874
  %vm2882 = vmor %vm2880, %vm2881
  %v2883 = vsel %vm2882, %v2874, %v2879
  %v2884 = vrsqrt.pop %v2841
  %v2885 = vmul.f32 %v2884, %v2841
  %v2886 = vmul.f32 %v2885, %v2884
  %v2887 = vmul.f32 0.5, %v2886
  %v2888 = vsub.f32 1.5, %v2887
  %v2889 = vmul.f32 %v2884, %v2888
  %vm2890 = vweird.f32 %v2841
  %vm2891 = vweird.f32 %v2884
  %vm2892 = vmor %vm2890, %vm2891
  %v2893 = vsel %vm2892, %v2884, %v2889
  %v2894 = vrsqrt.pop %v2842
  %v2895 = vmul.f32 %v2894, %v2842
  %v2896 = vmul.f32 %v2895, %v2894
  %v2897 = vmul.f32 0.5, %v2896
  %v2898 = vsub.f32 1.5, %v2897
  %v2899 = vmul.f32 %v2894, %v2898
  %vm2900 = vweird.f32 %v2842
  %vm2901 = vweird.f32 %v2894
  %vm2902 = vmor %vm2900, %vm2901
  %v2903 = vsel %vm2902, %v2894, %v2899
  %v2904 = vrsqrt.pop %v2843
  %v2905 = vmul.f32 %v2904, %v2843
  %v2906 = vmul.f32 %v2905, %v2904
  %v2907 = vmul.f32 0.5, %v2906
  %v2908 = vsub.f32 1.5, %v2907
  %v2909 = vmul.f32 %v2904, %v2908
  %vm2910 = vweird.f32 %v2843
  %vm2911 = vweird.f32 %v2904
  %vm2912 = vmor %vm2910, %vm2911
  %v2913 = vsel %vm2912, %v2904, %v2909
  %v2914 = vrsqrt.pop %v2844
  %v2915 = vmul.f32 %v2914, %v2844
  %v2916 = vmul.f32 %v2915, %v2914
  %v2917 = vmul.f32 0.5, %v2916
  %v2918 = vsub.f32 1.5, %v2917
  %v2919 = vmul.f32 %v2914, %v2918
  %vm2920 = vweird.f32 %v2844
  %vm2921 = vweird.f32 %v2914
  %vm2922 = vmor %vm2920, %vm2921
  %v2923 = vsel %vm2922, %v2914, %v2919
  %v2924 = vrsqrt.pop %v2845
  %v2925 = vmul.f32 %v2924, %v2845
  %v2926 = vmul.f32 %v2925, %v2924
  %v2927 = vmul.f32 0.5, %v2926
  %v2928 = vsub.f32 1.5, %v2927
  %v2929 = vmul.f32 %v2924, %v2928
  %vm2930 = vweird.f32 %v2845
  %vm2931 = vweird.f32 %v2924
  %vm2932 = vmor %vm2930, %vm2931
  %v2933 = vsel %vm2932, %v2924, %v2929
  %v2934 = vrsqrt.pop %v2846
  %v2935 = vmul.f32 %v2934, %v2846
  %v2936 = vmul.f32 %v2935, %v2934
  %v2937 = vmul.f32 0.5, %v2936
  %v2938 = vsub.f32 1.5, %v2937
  %v2939 = vmul.f32 %v2934, %v2938
  %vm2940 = vweird.f32 %v2846
  %vm2941 = vweird.f32 %v2934
  %vm2942 = vmor %vm2940, %vm2941
  %v2943 = vsel %vm2942, %v2934, %v2939
  %v2944 = vrsqrt.pop %v2847
  %v2945 = vmul.f32 %v2944, %v2847
  %v2946 = vmul.f32 %v2945, %v2944
  %v2947 = vmul.f32 0.5, %v2946
  %v2948 = vsub.f32 1.5, %v2947
  %v2949 = vmul.f32 %v2944, %v2948
  %vm2950 = vweird.f32 %v2847
  %vm2951 = vweird.f32 %v2944
  %vm2952 = vmor %vm2950, %vm2951
  %v2953 = vsel %vm2952, %v2944, %v2949
  %v2954 = vrsqrt.pop %v2848
  %v2955 = vmul.f32 %v2954, %v2848
  %v2956 = vmul.f32 %v2955, %v2954
  %v2957 = vmul.f32 0.5, %v2956
  %v2958 = vsub.f32 1.5, %v2957
  %v2959 = vmul.f32 %v2954, %v2958
  %vm2960 = vweird.f32 %v2848
  %vm2961 = vweird.f32 %v2954
  %vm2962 = vmor %vm2960, %vm2961
  %v2963 = vsel %vm2962, %v2954, %v2959
  %v2964 = vrsqrt.pop %v2849
  %v2965 = vmul.f32 %v2964, %v2849
  %v2966 = vmul.f32 %v2965, %v2964
  %v2967 = vmul.f32 0.5, %v2966
  %v2968 = vsub.f32 1.5, %v2967
  %v2969 = vmul.f32 %v2964, %v2968
  %vm2970 = vweird.f32 %v2849
  %vm2971 = vweird.f32 %v2964
  %vm2972 = vmor %vm2970, %vm2971
  %v2973 = vsel %vm2972, %v2964, %v2969
  %v2974 = vrsqrt.pop %v2850
  %v2975 = vmul.f32 %v2974, %v2850
  %v2976 = vmul.f32 %v2975, %v2974
  %v2977 = vmul.f32 0.5, %v2976
  %v2978 = vsub.f32 1.5, %v2977
  %v2979 = vmul.f32 %v2974, %v2978
  %vm2980 = vweird.f32 %v2850
  %vm2981 = vweird.f32 %v2974
  %vm2982 = vmor %vm2980, %vm2981
  %v2983 = vsel %vm2982, %v2974, %v2979
  %v2984 = vrsqrt.pop %v2851
  %v2985 = vmul.f32 %v2984, %v2851
  %v2986 = vmul.f32 %v2985, %v2984
  %v2987 = vmul.f32 0.5, %v2986
  %v2988 = vsub.f32 1.5, %v2987
  %v2989 = vmul.f32 %v2984, %v2988
  %vm2990 = vweird.f32 %v2851
  %vm2991 = vweird.f32 %v2984
  %vm2992 = vmor %vm2990, %vm2991
  %v2993 = vsel %vm2992, %v2984, %v2989
  %v2994 = vrsqrt.pop %v2852
  %v2995 = vmul.f32 %v2994, %v2852
  %v2996 = vmul.f32 %v2995, %v2994
  %v2997 = vmul.f32 0.5, %v2996
  %v2998 = vsub.f32 1.5, %v2997
  %v2999 = vmul.f32 %v2994, %v2998
  %vm3000 = vweird.f32 %v2852
  %vm3001 = vweird.f32 %v2994
  %vm3002 = vmor %vm3000, %vm3001
  %v3003 = vsel %vm3002, %v2994, %v2999
  %v3004 = vrsqrt.pop %v2853
  %v3005 = vmul.f32 %v3004, %v2853
  %v3006 = vmul.f32 %v3005, %v3004
  %v3007 = vmul.f32 0.5, %v3006
  %v3008 = vsub.f32 1.5, %v3007
  %v3009 = vmul.f32 %v3004, %v3008
  %vm3010 = vweird.f32 %v2853
  %vm3011 = vweird.f32 %v3004
  %vm3012 = vmor %vm3010, %vm3011
  %v3013 = vsel %vm3012, %v3004, %v3009
  %v3014 = vmul.f32 %v2742, %v2863
  %v3015 = vmul.f32 %v2743, %v2873
  %v3016 = vmul.f32 %v2744, %v2883
  %v3017 = vmul.f32 %v2745, %v2893
  %v3018 = vmul.f32 %v2746, %v2903
  %v3019 = vmul.f32 %v2747, %v2913
  %v3020 = vmul.f32 %v2748, %v2923
  %v3021 = vmul.f32 %v2749, %v2933
  %v3022 = vmul.f32 %v2750, %v2943
  %v3023 = vmul.f32 %v2751, %v2953
  %v3024 = vmul.f32 %v2752, %v2963
  %v3025 = vmul.f32 %v2753, %v2973
  %v3026 = vmul.f32 %v2754, %v2983
  %v3027 = vmul.f32 %v2755, %v2993
  %v3028 = vmul.f32 %v2756, %v3003
  %v3029 = vmul.f32 %v2757, %v3013
  %v3030 = vld [vmem:[%s2 + $0x4] sm:$0x1]
  %v3031 = vperm.slane %v3030, 0
  %v3032 = vmul.f32 %v3014, %v3031
  %v3033 = vmul.f32 %v3015, %v3031
  %v3034 = vmul.f32 %v3016, %v3031
  %v3035 = vmul.f32 %v3017, %v3031
  %v3036 = vmul.f32 %v3018, %v3031
  %v3037 = vmul.f32 %v3019, %v3031
  %v3038 = vmul.f32 %v3020, %v3031
  %v3039 = vmul.f32 %v3021, %v3031
  %v3040 = vmul.f32 %v3022, %v3031
  %v3041 = vmul.f32 %v3023, %v3031
  %v3042 = vmul.f32 %v3024, %v3031
  %v3043 = vmul.f32 %v3025, %v3031
  %v3044 = vmul.f32 %v3026, %v3031
  %v3045 = vmul.f32 %v3027, %v3031
  %v3046 = vmul.f32 %v3028, %v3031
  %v3047 = vmul.f32 %v3029, %v3031
  %v3048 = vld [vmem:[%s2 + $0x5] sm:$0x1]
  %v3049 = vperm.slane %v3048, 0
  %v3050 = vadd.f32 %v3032, %v3049
  %v3051 = vadd.f32 %v3033, %v3049
  %v3052 = vadd.f32 %v3034, %v3049
  %v3053 = vadd.f32 %v3035, %v3049
  %v3054 = vadd.f32 %v3036, %v3049
  %v3055 = vadd.f32 %v3037, %v3049
  %v3056 = vadd.f32 %v3038, %v3049
  %v3057 = vadd.f32 %v3039, %v3049
  %v3058 = vadd.f32 %v3040, %v3049
  %v3059 = vadd.f32 %v3041, %v3049
  %v3060 = vadd.f32 %v3042, %v3049
  %v3061 = vadd.f32 %v3043, %v3049
  %v3062 = vadd.f32 %v3044, %v3049
  %v3063 = vadd.f32 %v3045, %v3049
  %v3064 = vadd.f32 %v3046, %v3049
  %v3065 = vadd.f32 %v3047, %v3049
  %3066 = vst.msk [vmem:[%s3] sm:$0xff] %vm339, %v3050
  %3067 = vst.msk [vmem:[%s3 + $0x8] sm:$0xff] %vm339, %v3051
  %3068 = vst.msk [vmem:[%s3 + $0x10] sm:$0xff] %vm339, %v3052
  %3069 = vst.msk [vmem:[%s3 + $0x18] sm:$0xff] %vm339, %v3053
  %3070 = vst.msk [vmem:[%s3 + $0x20] sm:$0xff] %vm339, %v3054
  %3071 = vst.msk [vmem:[%s3 + $0x28] sm:$0xff] %vm339, %v3055
  %3072 = vst.msk [vmem:[%s3 + $0x30] sm:$0xff] %vm339, %v3056
  %3073 = vst.msk [vmem:[%s3 + $0x38] sm:$0xff] %vm339, %v3057
  %3074 = vst.msk [vmem:[%s3 + $0x40] sm:$0xff] %vm339, %v3058
  %3075 = vst.msk [vmem:[%s3 + $0x48] sm:$0xff] %vm339, %v3059
  %3076 = vst.msk [vmem:[%s3 + $0x50] sm:$0xff] %vm339, %v3060
  %3077 = vst.msk [vmem:[%s3 + $0x58] sm:$0xff] %vm339, %v3061
  %3078 = vst.msk [vmem:[%s3 + $0x60] sm:$0xff] %vm339, %v3062
  %3079 = vst.msk [vmem:[%s3 + $0x68] sm:$0xff] %vm339, %v3063
  %3080 = vst.msk [vmem:[%s3 + $0x70] sm:$0xff] %vm339, %v3064
  %3081 = vst.msk [vmem:[%s3 + $0x78] sm:$0xff] %vm339, %v3065
  // Predicated region
  $region14: #{patch_embed_forward.5} parent=0 // pred_check
    _
  $region15: #{patch_embed_forward.5} parent=0 // pred_check_branch
    %3083 = sbr.rel (0) target = $region17
  $region16: #{patch_embed_forward.5} parent=0 // pred_region
    _
  $region17: #{patch_embed_forward.5} parent=0 // pred_fallthru
    _
  // Predicated region
  $region18: #{patch_embed_forward.5} parent=0 // pred_check
    _
  $region19: #{patch_embed_forward.5} parent=0 // pred_check_branch
    %3085 = sbr.rel (0) target = $region21
  $region20: #{patch_embed_forward.5} parent=0 // pred_region
    _
  $region21: #{patch_embed_forward.5} parent=0 // pred_fallthru
    _

</llo_original>
